<compile_context>
chip_gen: v5e
topology: v5e:2x2
jax: 0.10.0
libtpu: 0.0.40
codegen_flags: <defaults>
</compile_context>

<pallas_src>
import functools

import numpy as np
import jax
import jax.numpy as jnp
from jax.experimental import pallas as pl
from jax.experimental.pallas import tpu as pltpu

BN_EPS = 1e-5
C = 64        # channels in the conv trunk
H_IN = 16     # input spatial size
H1 = 8        # spatial size after conv1
H2 = 4        # spatial size after conv2


# ---------------------------------------------------------------------------
# The fused Pallas kernel (whole network, single invocation, VMEM resident)
# ---------------------------------------------------------------------------
def _fused_kernel(x_ref, mask_ref, m1_ref, m2_ref, wf1_ref, wf2_ref, wf3_ref,
                  pool_ref, bc_ref, vec_ref, o_ref, *, batch, b_pad):
    f32 = jnp.float32
    bf16 = jnp.bfloat16
    G = 4 * b_pad                      # rows per input slab / conv half / conv2 out

    mask = mask_ref[...]               # (G, 1): 1.0 for real batch rows, 0.0 for pad

    def mm(a, w):
        return jnp.dot(a, w, preferred_element_type=f32)

    def shift_down(t):
        # Row-group shift: output group k gets group k-1, zeros for k == 0.
        # Replaces the old O(B^2) shift matmul with an O(B) aligned slice+concat.
        return jnp.concatenate(
            [jnp.zeros((b_pad, t.shape[1]), f32), t[:G - b_pad, :]], axis=0)

    def bn_scale_shift(acts, pool, bc, n_pos, gamma, beta):
        # Train-mode BatchNorm2d over the full (true) batch.  One-pass
        # sum / sum-of-squares (all f32) pooled to per-channel via a small
        # matmul ((w,c) lanes -> c), then broadcast back with a 0/1 matmul.
        s = None
        s2 = None
        for a in acts:
            am = a * mask                                   # drop padded rows
            cs = jnp.sum(am, axis=0, keepdims=True)
            cq = jnp.sum(am * am, axis=0, keepdims=True)
            s = cs if s is None else s + cs
            s2 = cq if s2 is None else s2 + cq
        tot = jnp.dot(s, pool, preferred_element_type=f32)    # (1, C)
        tot2 = jnp.dot(s2, pool, preferred_element_type=f32)  # (1, C)
        inv_n = 1.0 / float(n_pos)
        mean = tot * inv_n
        var = tot2 * inv_n - mean * mean                      # biased variance
        sc = gamma * jax.lax.rsqrt(var + BN_EPS)
        sh = beta - mean * sc
        sc_l = jnp.dot(sc, bc, preferred_element_type=f32)    # channel -> (w,c) lanes
        sh_l = jnp.dot(sh, bc, preferred_element_type=f32)
        return sc_l, sh_l

    # Input slabs (bf16): slab m holds input rows 4k+m, ordered (k-major, b-minor).
    xe0 = x_ref[0 * G:1 * G, :]        # rows 4k     (kh=1 tap, even half)
    xe1 = x_ref[1 * G:2 * G, :]        # rows 4k + 1 (kh=2 even / kh=0 odd)
    xo0 = x_ref[2 * G:3 * G, :]        # rows 4k + 2 (kh=1 tap, odd half)
    xo1 = x_ref[3 * G:4 * G, :]        # rows 4k + 3 (kh=2 odd / kh=0 even, shifted)

    m1k0, m1k1, m1k2 = m1_ref[0], m1_ref[1], m1_ref[2]
    m2k0, m2k1, m2k2 = m2_ref[0], m2_ref[1], m2_ref[2]

    # ---------------- conv1 (+ bias + ReLU + BN) ----------------
    # Even half: output rows oh1 = 2k; odd half: oh1 = 2k+1 (k-major, batch-minor).
    b1 = vec_ref[0:1, 0:H1 * C]
    a1e = mm(xe0, m1k1) + mm(xe1, m1k2) + shift_down(mm(xo1, m1k0)) + b1
    a1o = mm(xo0, m1k1) + mm(xo1, m1k2) + mm(xe1, m1k0) + b1
    a1e = jnp.maximum(a1e, 0.0)        # ConvBlock applies activation BEFORE BN
    a1o = jnp.maximum(a1o, 0.0)

    sc1, sh1 = bn_scale_shift(
        [a1e, a1o], pool_ref[0:H1 * C, :], bc_ref[0:C, 0:H1 * C],
        batch * H1 * H1, vec_ref[1:2, 0:C], vec_ref[2:3, 0:C])
    y1e = (a1e * sc1 + sh1).astype(bf16)
    y1o = (a1o * sc1 + sh1).astype(bf16)

    # ---------------- conv2 (+ bias + ReLU + BN) ----------------
    b2 = vec_ref[3:4, 0:H2 * C]
    a2 = mm(y1e, m2k1) + mm(y1o, m2k2) + shift_down(mm(y1o, m2k0)) + b2
    a2 = jnp.maximum(a2, 0.0)

    sc2, sh2 = bn_scale_shift(
        [a2], pool_ref[H1 * C:H1 * C + H2 * C, :], bc_ref[C:2 * C, 0:H2 * C],
        batch * H2 * H2, vec_ref[4:5, 0:C], vec_ref[5:6, 0:C])
    y2 = (a2 * sc2 + sh2).astype(bf16)                         # (4*b_pad, 256)

    # ---------------- flatten + fc1 ----------------
    # y2 rows are (oh2-major, batch-minor) so the per-spatial-row blocks are
    # contiguous static slices; the NCHW flatten permutation is folded into wf1.
    blk = H2 * C
    h = vec_ref[6:7, 0:256]
    for r in range(H2):
        h = h + jnp.dot(y2[r * b_pad:(r + 1) * b_pad, :],
                        wf1_ref[r * blk:(r + 1) * blk, :],
                        preferred_element_type=f32)
    h = jnp.maximum(h, 0.0)                                    # (b_pad, 256)

    # ---------------- fc2 / fc3 (small, kept f32) ----------------
    h = jnp.maximum(mm(h, wf2_ref[...]) + vec_ref[7:8, 0:128], 0.0)
    h = jnp.maximum(mm(h, wf3_ref[...]) + vec_ref[8:9, 0:C], 0.0)
    o_ref[...] = h.astype(o_ref.dtype)


# ---------------------------------------------------------------------------
# Parameter packing (all layout transforms happen ONCE here, not per call)
# ---------------------------------------------------------------------------
def _conv_toeplitz(w_oihw, w_in, w_out):
    """Fold kw taps, stride-2 column subsampling and W-padding into per-kh
    (w_in*Cin, w_out*Cout) block-Toeplitz matrices."""
    O, I, KH, KW = w_oihw.shape
    m = np.zeros((KH, w_in, I, w_out, O), np.float32)
    for kh in range(KH):
        for kw in range(KW):
            for ow in range(w_out):
                w = 2 * ow + kw - 1
                if 0 <= w < w_in:
                    m[kh, w, :, ow, :] = w_oihw[:, :, kh, kw].T
    return m.reshape(KH, w_in * I, w_out * O)


def pack_params(params):
    w1, b1, g1, be1 = [np.asarray(t, np.float32) for t in params["conv1"]]
    w2, b2, g2, be2 = [np.asarray(t, np.float32) for t in params["conv2"]]
    wf1, bf1 = [np.asarray(t, np.float32) for t in params["fc1"]]
    wf2, bf2 = [np.asarray(t, np.float32) for t in params["fc2"]]
    wf3, bf3 = [np.asarray(t, np.float32) for t in params["fc3"]]

    m1 = _conv_toeplitz(w1, H_IN, H1)                 # (3, 1024, 512)
    m2 = _conv_toeplitz(w2, H1, H2)                   # (3, 512, 256)

    # fc1: fold the NCHW-contiguous flatten permutation into the weight rows.
    #   kernel feature order  q = oh2*(H2*C) + ow2*C + co
    #   torch flatten order   f = co*(H2*H2) + oh2*H2 + ow2
    perm = np.zeros((H2 * H2 * C,), np.int64)
    for oh2 in range(H2):
        for ow2 in range(H2):
            for co in range(C):
                perm[oh2 * H2 * C + ow2 * C + co] = co * H2 * H2 + oh2 * H2 + ow2
    wf1p = wf1[:, perm].T                             # (1024, 256)

    eye = np.eye(C, dtype=np.float32)
    # channel pooling:  (w,c) lanes -> c        (conv1 rows 0:512, conv2 rows 512:768)
    pool = np.concatenate([np.tile(eye, (H1, 1)), np.tile(eye, (H2, 1))], 0)  # (768, 64)
    # channel broadcast: c -> (w,c) lanes       (conv1 rows 0:64, conv2 rows 64:128)
    bcast = np.zeros((2 * C, H1 * C), np.float32)                              # (128, 512)
    bcast[0:C, 0:H1 * C] = np.tile(eye, (1, H1))
    bcast[C:2 * C, 0:H2 * C] = np.tile(eye, (1, H2))

    # All the tiny per-channel vectors packed into one (9, 512) table.
    smalls = np.zeros((9, H1 * C), np.float32)
    smalls[0, :H1 * C] = np.tile(b1, H1)    # conv1 bias, (w,c)-tiled
    smalls[1, :C] = g1
    smalls[2, :C] = be1
    smalls[3, :H2 * C] = np.tile(b2, H2)    # conv2 bias, (w,c)-tiled
    smalls[4, :C] = g2
    smalls[5, :C] = be2
    smalls[6, :256] = bf1
    smalls[7, :128] = bf2
    smalls[8, :C] = bf3

    return (jnp.asarray(m1, jnp.bfloat16),
            jnp.asarray(m2, jnp.bfloat16),
            jnp.asarray(wf1p, jnp.bfloat16),
            jnp.asarray(wf2.T, jnp.float32),
            jnp.asarray(wf3.T, jnp.float32),
            jnp.asarray(pool, jnp.float32),
            jnp.asarray(bcast, jnp.float32),
            jnp.asarray(smalls, jnp.float32))


# ---------------------------------------------------------------------------
# Forward wrapper (only glue left: one transpose/reshape, no pad/gather/dup)
# ---------------------------------------------------------------------------
def global_features(x_nchw, packed):
    batch = x_nchw.shape[0]
    b_pad = -(-batch // 8) * 8          # pad batch so in-kernel slices stay (8,128)-aligned
    if b_pad != batch:
        x_nchw = jnp.pad(x_nchw, ((0, b_pad - batch), (0, 0), (0, 0), (0, 0)))

    # NCHW -> per-row (w,c)-packed lanes, then regroup rows into the 4 residue
    # slabs (input row = 4k + m), each ordered (k-major, batch-minor).
    xh = jnp.transpose(x_nchw, (0, 2, 3, 1)).reshape(b_pad, H_IN, H_IN * C)
    x4 = (xh.reshape(b_pad, H_IN // 4, 4, H_IN * C)
            .transpose(2, 1, 0, 3)
            .reshape(H_IN * b_pad, H_IN * C)
            .astype(jnp.bfloat16))

    # 1.0 for real batch rows, 0.0 for pad rows (row = k*b_pad + b, k = 0..3).
    mask = jnp.asarray(
        np.tile((np.arange(b_pad) < batch).astype(np.float32), 4).reshape(4 * b_pad, 1))

    kernel = functools.partial(_fused_kernel, batch=batch, b_pad=b_pad)
    out = pl.pallas_call(
        kernel,
        out_shape=jax.ShapeDtypeStruct((b_pad, C), jnp.float32),
        compiler_params=pltpu.CompilerParams(vmem_limit_bytes=32 * 1024 * 1024),
    )(x4, mask, *packed)
    return out[:batch]


# ---------------------------------------------------------------------------
# Deterministic parameter init (PyTorch default-style uniform fan-in bounds)
# ---------------------------------------------------------------------------
def init_params(key):
    ks = jax.random.split(key, 5)

    def conv_p(k, inc, outc, ksz):
        k1, k2 = jax.random.split(k)
        bound = 1.0 / np.sqrt(inc * ksz * ksz)
        w = jax.random.uniform(k1, (outc, inc, ksz, ksz), jnp.float32, -bound, bound)
        b = jax.random.uniform(k2, (outc,), jnp.float32, -bound, bound)
        return (w, b, jnp.ones((outc,), jnp.float32), jnp.zeros((outc,), jnp.float32))

    def fc_p(k, inc, outc):
        k1, k2 = jax.random.split(k)
        bound = 1.0 / np.sqrt(inc)
        w = jax.random.uniform(k1, (outc, inc), jnp.float32, -bound, bound)
        b = jax.random.uniform(k2, (outc,), jnp.float32, -bound, bound)
        return (w, b)

    return {
        "conv1": conv_p(ks[0], 64, 64, 3),
        "conv2": conv_p(ks[1], 64, 64, 3),
        "fc1": fc_p(ks[2], 64 * 4 * 4, 256),
        "fc2": fc_p(ks[3], 256, 128),
        "fc3": fc_p(ks[4], 128, 64),
    }


# ---------------------------------------------------------------------------
# Pure-JAX reference.  mm_dtype=bf16 mimics the kernel's matmul-input rounding
# (f32 accumulation), mm_dtype=f32 is the exact module semantics.
# ---------------------------------------------------------------------------
def reference(x_nchw, params, mm_dtype=jnp.float32):
    def conv_bn(x, w, b, g, beta):
        y = jax.lax.conv_general_dilated(
            x.astype(mm_dtype), w.astype(mm_dtype),
            window_strides=(2, 2), padding=((1, 1), (1, 1)),
            dimension_numbers=("NCHW", "OIHW", "NCHW"),
            preferred_element_type=jnp.float32)
        y = y + b[None, :, None, None]
        y = jnp.maximum(y, 0.0)
        mean = jnp.mean(y, axis=(0, 2, 3), keepdims=True)
        var = jnp.mean((y - mean) ** 2, axis=(0, 2, 3), keepdims=True)
        return ((y - mean) * jax.lax.rsqrt(var + BN_EPS)
                * g[None, :, None, None] + beta[None, :, None, None])

    x = conv_bn(x_nchw, *params["conv1"])
    x = conv_bn(x, *params["conv2"])
    x = x.reshape(x.shape[0], -1)              # NCHW-contiguous flatten (== .view)
    w, b = params["fc1"]
    x = jnp.maximum(jnp.dot(x.astype(mm_dtype), w.T.astype(mm_dtype),
                            preferred_element_type=jnp.float32) + b, 0.0)
    for name in ("fc2", "fc3"):                # kernel keeps these in f32 too
        w, b = params[name]
        x = jnp.maximum(x @ w.T + b, 0.0)
    return x


if __name__ == "__main__":
    key = jax.random.PRNGKey(0)
    pkey, xkey = jax.random.split(key)
    params = init_params(pkey)
    packed = pack_params(params)               # one-time weight layout transforms

    # Input implied by the module: 64 channels, 16x16 spatial (-> 4x4 after two stride-2 convs)
    x = jax.random.normal(xkey, (2, 64, 16, 16), jnp.float32)

    fwd = jax.jit(global_features)
    out = jax.block_until_ready(fwd(x, packed))
    assert out.shape == (2, 64), out.shape
    out_np = np.asarray(out)

    # Tight check against a reference with the same bf16 matmul-input rounding.
    ref_bf16 = np.asarray(jax.block_until_ready(reference(x, params, jnp.bfloat16)))
    np.testing.assert_allclose(out_np, ref_bf16, rtol=5e-3, atol=5e-3)

    # Looser sanity check against the full-f32 module semantics
    # (slack covers bf16-vs-f32 matmul precision of the weight storage).
    ref_f32 = np.asarray(jax.block_until_ready(reference(x, params, jnp.float32)))
    np.testing.assert_allclose(out_np, ref_f32, rtol=6e-2, atol=6e-2)

    print("KERNEL_OK")
</pallas_src>

<mosaic_0001>
module attributes {stable_mosaic.version = 11 : i64} {
  func.func @_fused_kernel(%arg0: memref<128x1024xbf16, #tpu.memory_space<vmem>>, %arg1: memref<32x1xf32, #tpu.memory_space<vmem>>, %arg2: memref<3x1024x512xbf16, #tpu.memory_space<vmem>>, %arg3: memref<3x512x256xbf16, #tpu.memory_space<vmem>>, %arg4: memref<1024x256xbf16, #tpu.memory_space<vmem>>, %arg5: memref<256x128xf32, #tpu.memory_space<vmem>>, %arg6: memref<128x64xf32, #tpu.memory_space<vmem>>, %arg7: memref<768x64xf32, #tpu.memory_space<vmem>>, %arg8: memref<128x512xf32, #tpu.memory_space<vmem>>, %arg9: memref<9x512xf32, #tpu.memory_space<vmem>>, %arg10: memref<8x64xf32, #tpu.memory_space<vmem>>) attributes {dimension_semantics = [], scalar_prefetch = 0 : i64, scratch_operands = 0 : i64, tpu.core_type = #tpu.core_type<tc>} {
    %c0 = arith.constant 0 : index
    %c0_0 = arith.constant 0 : index
    %0 = vector.load %arg1[%c0, %c0_0] : memref<32x1xf32, #tpu.memory_space<vmem>>, vector<32x1xf32>
    %c0_1 = arith.constant 0 : index
    %c0_2 = arith.constant 0 : index
    %1 = vector.load %arg0[%c0_1, %c0_2] : memref<128x1024xbf16, #tpu.memory_space<vmem>>, vector<32x1024xbf16>
    %c32 = arith.constant 32 : index
    %c0_3 = arith.constant 0 : index
    %2 = vector.load %arg0[%c32, %c0_3] : memref<128x1024xbf16, #tpu.memory_space<vmem>>, vector<32x1024xbf16>
    %c64 = arith.constant 64 : index
    %c0_4 = arith.constant 0 : index
    %3 = vector.load %arg0[%c64, %c0_4] : memref<128x1024xbf16, #tpu.memory_space<vmem>>, vector<32x1024xbf16>
    %c96 = arith.constant 96 : index
    %c0_5 = arith.constant 0 : index
    %4 = vector.load %arg0[%c96, %c0_5] : memref<128x1024xbf16, #tpu.memory_space<vmem>>, vector<32x1024xbf16>
    %c0_6 = arith.constant 0 : index
    %c0_7 = arith.constant 0 : index
    %c0_8 = arith.constant 0 : index
    %5 = vector.load %arg2[%c0_6, %c0_7, %c0_8] : memref<3x1024x512xbf16, #tpu.memory_space<vmem>>, vector<1x1024x512xbf16>
    %6 = vector.shape_cast %5 : vector<1x1024x512xbf16> to vector<1024x512xbf16>
    %c1 = arith.constant 1 : index
    %c0_9 = arith.constant 0 : index
    %c0_10 = arith.constant 0 : index
    %7 = vector.load %arg2[%c1, %c0_9, %c0_10] : memref<3x1024x512xbf16, #tpu.memory_space<vmem>>, vector<1x1024x512xbf16>
    %8 = vector.shape_cast %7 : vector<1x1024x512xbf16> to vector<1024x512xbf16>
    %c2 = arith.constant 2 : index
    %c0_11 = arith.constant 0 : index
    %c0_12 = arith.constant 0 : index
    %9 = vector.load %arg2[%c2, %c0_11, %c0_12] : memref<3x1024x512xbf16, #tpu.memory_space<vmem>>, vector<1x1024x512xbf16>
    %10 = vector.shape_cast %9 : vector<1x1024x512xbf16> to vector<1024x512xbf16>
    %c0_13 = arith.constant 0 : index
    %c0_14 = arith.constant 0 : index
    %c0_15 = arith.constant 0 : index
    %11 = vector.load %arg3[%c0_13, %c0_14, %c0_15] : memref<3x512x256xbf16, #tpu.memory_space<vmem>>, vector<1x512x256xbf16>
    %12 = vector.shape_cast %11 : vector<1x512x256xbf16> to vector<512x256xbf16>
    %c1_16 = arith.constant 1 : index
    %c0_17 = arith.constant 0 : index
    %c0_18 = arith.constant 0 : index
    %13 = vector.load %arg3[%c1_16, %c0_17, %c0_18] : memref<3x512x256xbf16, #tpu.memory_space<vmem>>, vector<1x512x256xbf16>
    %14 = vector.shape_cast %13 : vector<1x512x256xbf16> to vector<512x256xbf16>
    %c2_19 = arith.constant 2 : index
    %c0_20 = arith.constant 0 : index
    %c0_21 = arith.constant 0 : index
    %15 = vector.load %arg3[%c2_19, %c0_20, %c0_21] : memref<3x512x256xbf16, #tpu.memory_space<vmem>>, vector<1x512x256xbf16>
    %16 = vector.shape_cast %15 : vector<1x512x256xbf16> to vector<512x256xbf16>
    %c0_22 = arith.constant 0 : index
    %c0_23 = arith.constant 0 : index
    %17 = vector.load %arg9[%c0_22, %c0_23] : memref<9x512xf32, #tpu.memory_space<vmem>>, vector<1x512xf32>
    %cst = arith.constant dense<0.000000e+00> : vector<32x512xf32>
    %18 = tpu.matmul %1, %8, %cst {dimension_numbers = #tpu.dot_dimension_numbers<[1], [0], [0], [1], [0, 0, 1, 1], [], []>} : vector<32x1024xbf16>, vector<1024x512xbf16>, vector<32x512xf32> -> vector<32x512xf32>
    %cst_24 = arith.constant dense<0.000000e+00> : vector<32x512xf32>
    %19 = tpu.matmul %2, %10, %cst_24 {dimension_numbers = #tpu.dot_dimension_numbers<[1], [0], [0], [1], [0, 0, 1, 1], [], []>} : vector<32x1024xbf16>, vector<1024x512xbf16>, vector<32x512xf32> -> vector<32x512xf32>
    %20 = arith.addf %18, %19 : vector<32x512xf32>
    %cst_25 = arith.constant dense<0.000000e+00> : vector<32x512xf32>
    %21 = tpu.matmul %4, %6, %cst_25 {dimension_numbers = #tpu.dot_dimension_numbers<[1], [0], [0], [1], [0, 0, 1, 1], [], []>} : vector<32x1024xbf16>, vector<1024x512xbf16>, vector<32x512xf32> -> vector<32x512xf32>
    %cst_26 = arith.constant 0.000000e+00 : f32
    %22 = vector.broadcast %cst_26 : f32 to vector<8x512xf32>
    %23 = vector.extract_strided_slice %21 {offsets = [0, 0], sizes = [24, 512], strides = [1, 1]} : vector<32x512xf32> to vector<24x512xf32>
    %24 = tpu.concatenate %22, %23 in 0 : vector<8x512xf32>, vector<24x512xf32> -> vector<32x512xf32>
    %25 = arith.addf %20, %24 : vector<32x512xf32>
    %26 = vector.broadcast %17 : vector<1x512xf32> to vector<32x512xf32>
    %27 = arith.addf %25, %26 : vector<32x512xf32>
    %cst_27 = arith.constant dense<0.000000e+00> : vector<32x512xf32>
    %28 = tpu.matmul %3, %8, %cst_27 {dimension_numbers = #tpu.dot_dimension_numbers<[1], [0], [0], [1], [0, 0, 1, 1], [], []>} : vector<32x1024xbf16>, vector<1024x512xbf16>, vector<32x512xf32> -> vector<32x512xf32>
    %cst_28 = arith.constant dense<0.000000e+00> : vector<32x512xf32>
    %29 = tpu.matmul %4, %10, %cst_28 {dimension_numbers = #tpu.dot_dimension_numbers<[1], [0], [0], [1], [0, 0, 1, 1], [], []>} : vector<32x1024xbf16>, vector<1024x512xbf16>, vector<32x512xf32> -> vector<32x512xf32>
    %30 = arith.addf %28, %29 : vector<32x512xf32>
    %cst_29 = arith.constant dense<0.000000e+00> : vector<32x512xf32>
    %31 = tpu.matmul %2, %6, %cst_29 {dimension_numbers = #tpu.dot_dimension_numbers<[1], [0], [0], [1], [0, 0, 1, 1], [], []>} : vector<32x1024xbf16>, vector<1024x512xbf16>, vector<32x512xf32> -> vector<32x512xf32>
    %32 = arith.addf %30, %31 : vector<32x512xf32>
    %33 = vector.broadcast %17 : vector<1x512xf32> to vector<32x512xf32>
    %34 = arith.addf %32, %33 : vector<32x512xf32>
    %cst_30 = arith.constant 0.000000e+00 : f32
    %35 = vector.broadcast %cst_30 : f32 to vector<32x512xf32>
    %36 = arith.maximumf %27, %35 : vector<32x512xf32>
    %cst_31 = arith.constant 0.000000e+00 : f32
    %37 = vector.broadcast %cst_31 : f32 to vector<32x512xf32>
    %38 = arith.maximumf %34, %37 : vector<32x512xf32>
    %c0_32 = arith.constant 0 : index
    %c0_33 = arith.constant 0 : index
    %39 = vector.load %arg7[%c0_32, %c0_33] : memref<768x64xf32, #tpu.memory_space<vmem>>, vector<512x64xf32>
    %c0_34 = arith.constant 0 : index
    %c0_35 = arith.constant 0 : index
    %40 = vector.load %arg8[%c0_34, %c0_35] : memref<128x512xf32, #tpu.memory_space<vmem>>, vector<64x512xf32>
    %c1_36 = arith.constant 1 : index
    %c0_37 = arith.constant 0 : index
    %41 = vector.load %arg9[%c1_36, %c0_37] : memref<9x512xf32, #tpu.memory_space<vmem>>, vector<1x64xf32>
    %c2_38 = arith.constant 2 : index
    %c0_39 = arith.constant 0 : index
    %42 = vector.load %arg9[%c2_38, %c0_39] : memref<9x512xf32, #tpu.memory_space<vmem>>, vector<1x64xf32>
    %43 = vector.broadcast %0 : vector<32x1xf32> to vector<32x512xf32>
    %44 = arith.mulf %36, %43 : vector<32x512xf32>
    %cst_40 = arith.constant dense<0.000000e+00> : vector<512xf32>
    %45 = vector.multi_reduction <add>, %44, %cst_40 [0] : vector<32x512xf32> to vector<512xf32>
    %46 = vector.shape_cast %45 : vector<512xf32> to vector<1x512xf32>
    %47 = arith.mulf %44, %44 : vector<32x512xf32>
    %cst_41 = arith.constant dense<0.000000e+00> : vector<512xf32>
    %48 = vector.multi_reduction <add>, %47, %cst_41 [0] : vector<32x512xf32> to vector<512xf32>
    %49 = vector.shape_cast %48 : vector<512xf32> to vector<1x512xf32>
    %50 = vector.broadcast %0 : vector<32x1xf32> to vector<32x512xf32>
    %51 = arith.mulf %38, %50 : vector<32x512xf32>
    %cst_42 = arith.constant dense<0.000000e+00> : vector<512xf32>
    %52 = vector.multi_reduction <add>, %51, %cst_42 [0] : vector<32x512xf32> to vector<512xf32>
    %53 = vector.shape_cast %52 : vector<512xf32> to vector<1x512xf32>
    %54 = arith.mulf %51, %51 : vector<32x512xf32>
    %cst_43 = arith.constant dense<0.000000e+00> : vector<512xf32>
    %55 = vector.multi_reduction <add>, %54, %cst_43 [0] : vector<32x512xf32> to vector<512xf32>
    %56 = vector.shape_cast %55 : vector<512xf32> to vector<1x512xf32>
    %57 = arith.addf %46, %53 : vector<1x512xf32>
    %58 = arith.addf %49, %56 : vector<1x512xf32>
    %cst_44 = arith.constant dense<0.000000e+00> : vector<1x64xf32>
    %59 = tpu.matmul %57, %39, %cst_44 {dimension_numbers = #tpu.dot_dimension_numbers<[1], [0], [0], [1], [0, 0, 1, 1], [], []>} : vector<1x512xf32>, vector<512x64xf32>, vector<1x64xf32> -> vector<1x64xf32>
    %cst_45 = arith.constant dense<0.000000e+00> : vector<1x64xf32>
    %60 = tpu.matmul %58, %39, %cst_45 {dimension_numbers = #tpu.dot_dimension_numbers<[1], [0], [0], [1], [0, 0, 1, 1], [], []>} : vector<1x512xf32>, vector<512x64xf32>, vector<1x64xf32> -> vector<1x64xf32>
    %cst_46 = arith.constant 7.812500e-03 : f32
    %61 = vector.broadcast %cst_46 : f32 to vector<1x64xf32>
    %62 = arith.mulf %59, %61 : vector<1x64xf32>
    %cst_47 = arith.constant 7.812500e-03 : f32
    %63 = vector.broadcast %cst_47 : f32 to vector<1x64xf32>
    %64 = arith.mulf %60, %63 : vector<1x64xf32>
    %65 = arith.mulf %62, %62 : vector<1x64xf32>
    %66 = arith.subf %64, %65 : vector<1x64xf32>
    %cst_48 = arith.constant 9.99999974E-6 : f32
    %67 = vector.broadcast %cst_48 : f32 to vector<1x64xf32>
    %68 = arith.addf %66, %67 : vector<1x64xf32>
    %69 = math.rsqrt %68 : vector<1x64xf32>
    %70 = arith.mulf %41, %69 : vector<1x64xf32>
    %71 = arith.mulf %62, %70 : vector<1x64xf32>
    %72 = arith.subf %42, %71 : vector<1x64xf32>
    %cst_49 = arith.constant dense<0.000000e+00> : vector<1x512xf32>
    %73 = tpu.matmul %70, %40, %cst_49 {dimension_numbers = #tpu.dot_dimension_numbers<[1], [0], [0], [1], [0, 0, 1, 1], [], []>} : vector<1x64xf32>, vector<64x512xf32>, vector<1x512xf32> -> vector<1x512xf32>
    %cst_50 = arith.constant dense<0.000000e+00> : vector<1x512xf32>
    %74 = tpu.matmul %72, %40, %cst_50 {dimension_numbers = #tpu.dot_dimension_numbers<[1], [0], [0], [1], [0, 0, 1, 1], [], []>} : vector<1x64xf32>, vector<64x512xf32>, vector<1x512xf32> -> vector<1x512xf32>
    %75 = vector.broadcast %73 : vector<1x512xf32> to vector<32x512xf32>
    %76 = arith.mulf %36, %75 : vector<32x512xf32>
    %77 = vector.broadcast %74 : vector<1x512xf32> to vector<32x512xf32>
    %78 = arith.addf %76, %77 : vector<32x512xf32>
    %79 = arith.truncf %78 : vector<32x512xf32> to vector<32x512xbf16>
    %80 = vector.broadcast %73 : vector<1x512xf32> to vector<32x512xf32>
    %81 = arith.mulf %38, %80 : vector<32x512xf32>
    %82 = vector.broadcast %74 : vector<1x512xf32> to vector<32x512xf32>
    %83 = arith.addf %81, %82 : vector<32x512xf32>
    %84 = arith.truncf %83 : vector<32x512xf32> to vector<32x512xbf16>
    %c3 = arith.constant 3 : index
    %c0_51 = arith.constant 0 : index
    %85 = vector.load %arg9[%c3, %c0_51] : memref<9x512xf32, #tpu.memory_space<vmem>>, vector<1x256xf32>
    %cst_52 = arith.constant dense<0.000000e+00> : vector<32x256xf32>
    %86 = tpu.matmul %79, %14, %cst_52 {dimension_numbers = #tpu.dot_dimension_numbers<[1], [0], [0], [1], [0, 0, 1, 1], [], []>} : vector<32x512xbf16>, vector<512x256xbf16>, vector<32x256xf32> -> vector<32x256xf32>
    %cst_53 = arith.constant dense<0.000000e+00> : vector<32x256xf32>
    %87 = tpu.matmul %84, %16, %cst_53 {dimension_numbers = #tpu.dot_dimension_numbers<[1], [0], [0], [1], [0, 0, 1, 1], [], []>} : vector<32x512xbf16>, vector<512x256xbf16>, vector<32x256xf32> -> vector<32x256xf32>
    %88 = arith.addf %86, %87 : vector<32x256xf32>
    %cst_54 = arith.constant dense<0.000000e+00> : vector<32x256xf32>
    %89 = tpu.matmul %84, %12, %cst_54 {dimension_numbers = #tpu.dot_dimension_numbers<[1], [0], [0], [1], [0, 0, 1, 1], [], []>} : vector<32x512xbf16>, vector<512x256xbf16>, vector<32x256xf32> -> vector<32x256xf32>
    %cst_55 = arith.constant 0.000000e+00 : f32
    %90 = vector.broadcast %cst_55 : f32 to vector<8x256xf32>
    %91 = vector.extract_strided_slice %89 {offsets = [0, 0], sizes = [24, 256], strides = [1, 1]} : vector<32x256xf32> to vector<24x256xf32>
    %92 = tpu.concatenate %90, %91 in 0 : vector<8x256xf32>, vector<24x256xf32> -> vector<32x256xf32>
    %93 = arith.addf %88, %92 : vector<32x256xf32>
    %94 = vector.broadcast %85 : vector<1x256xf32> to vector<32x256xf32>
    %95 = arith.addf %93, %94 : vector<32x256xf32>
    %cst_56 = arith.constant 0.000000e+00 : f32
    %96 = vector.broadcast %cst_56 : f32 to vector<32x256xf32>
    %97 = arith.maximumf %95, %96 : vector<32x256xf32>
    %c512 = arith.constant 512 : index
    %c0_57 = arith.constant 0 : index
    %98 = vector.load %arg7[%c512, %c0_57] : memref<768x64xf32, #tpu.memory_space<vmem>>, vector<256x64xf32>
    %c64_58 = arith.constant 64 : index
    %c0_59 = arith.constant 0 : index
    %99 = vector.load %arg8[%c64_58, %c0_59] : memref<128x512xf32, #tpu.memory_space<vmem>>, vector<64x256xf32>
    %c4 = arith.constant 4 : index
    %c0_60 = arith.constant 0 : index
    %100 = vector.load %arg9[%c4, %c0_60] : memref<9x512xf32, #tpu.memory_space<vmem>>, vector<1x64xf32>
    %c5 = arith.constant 5 : index
    %c0_61 = arith.constant 0 : index
    %101 = vector.load %arg9[%c5, %c0_61] : memref<9x512xf32, #tpu.memory_space<vmem>>, vector<1x64xf32>
    %102 = vector.broadcast %0 : vector<32x1xf32> to vector<32x256xf32>
    %103 = arith.mulf %97, %102 : vector<32x256xf32>
    %cst_62 = arith.constant dense<0.000000e+00> : vector<256xf32>
    %104 = vector.multi_reduction <add>, %103, %cst_62 [0] : vector<32x256xf32> to vector<256xf32>
    %105 = vector.shape_cast %104 : vector<256xf32> to vector<1x256xf32>
    %106 = arith.mulf %103, %103 : vector<32x256xf32>
    %cst_63 = arith.constant dense<0.000000e+00> : vector<256xf32>
    %107 = vector.multi_reduction <add>, %106, %cst_63 [0] : vector<32x256xf32> to vector<256xf32>
    %108 = vector.shape_cast %107 : vector<256xf32> to vector<1x256xf32>
    %cst_64 = arith.constant dense<0.000000e+00> : vector<1x64xf32>
    %109 = tpu.matmul %105, %98, %cst_64 {dimension_numbers = #tpu.dot_dimension_numbers<[1], [0], [0], [1], [0, 0, 1, 1], [], []>} : vector<1x256xf32>, vector<256x64xf32>, vector<1x64xf32> -> vector<1x64xf32>
    %cst_65 = arith.constant dense<0.000000e+00> : vector<1x64xf32>
    %110 = tpu.matmul %108, %98, %cst_65 {dimension_numbers = #tpu.dot_dimension_numbers<[1], [0], [0], [1], [0, 0, 1, 1], [], []>} : vector<1x256xf32>, vector<256x64xf32>, vector<1x64xf32> -> vector<1x64xf32>
    %cst_66 = arith.constant 3.125000e-02 : f32
    %111 = vector.broadcast %cst_66 : f32 to vector<1x64xf32>
    %112 = arith.mulf %109, %111 : vector<1x64xf32>
    %cst_67 = arith.constant 3.125000e-02 : f32
    %113 = vector.broadcast %cst_67 : f32 to vector<1x64xf32>
    %114 = arith.mulf %110, %113 : vector<1x64xf32>
    %115 = arith.mulf %112, %112 : vector<1x64xf32>
    %116 = arith.subf %114, %115 : vector<1x64xf32>
    %cst_68 = arith.constant 9.99999974E-6 : f32
    %117 = vector.broadcast %cst_68 : f32 to vector<1x64xf32>
    %118 = arith.addf %116, %117 : vector<1x64xf32>
    %119 = math.rsqrt %118 : vector<1x64xf32>
    %120 = arith.mulf %100, %119 : vector<1x64xf32>
    %121 = arith.mulf %112, %120 : vector<1x64xf32>
    %122 = arith.subf %101, %121 : vector<1x64xf32>
    %cst_69 = arith.constant dense<0.000000e+00> : vector<1x256xf32>
    %123 = tpu.matmul %120, %99, %cst_69 {dimension_numbers = #tpu.dot_dimension_numbers<[1], [0], [0], [1], [0, 0, 1, 1], [], []>} : vector<1x64xf32>, vector<64x256xf32>, vector<1x256xf32> -> vector<1x256xf32>
    %cst_70 = arith.constant dense<0.000000e+00> : vector<1x256xf32>
    %124 = tpu.matmul %122, %99, %cst_70 {dimension_numbers = #tpu.dot_dimension_numbers<[1], [0], [0], [1], [0, 0, 1, 1], [], []>} : vector<1x64xf32>, vector<64x256xf32>, vector<1x256xf32> -> vector<1x256xf32>
    %125 = vector.broadcast %123 : vector<1x256xf32> to vector<32x256xf32>
    %126 = arith.mulf %97, %125 : vector<32x256xf32>
    %127 = vector.broadcast %124 : vector<1x256xf32> to vector<32x256xf32>
    %128 = arith.addf %126, %127 : vector<32x256xf32>
    %129 = arith.truncf %128 : vector<32x256xf32> to vector<32x256xbf16>
    %c6 = arith.constant 6 : index
    %c0_71 = arith.constant 0 : index
    %130 = vector.load %arg9[%c6, %c0_71] : memref<9x512xf32, #tpu.memory_space<vmem>>, vector<1x256xf32>
    %131 = vector.extract_strided_slice %129 {offsets = [0, 0], sizes = [8, 256], strides = [1, 1]} : vector<32x256xbf16> to vector<8x256xbf16>
    %c0_72 = arith.constant 0 : index
    %c0_73 = arith.constant 0 : index
    %132 = vector.load %arg4[%c0_72, %c0_73] : memref<1024x256xbf16, #tpu.memory_space<vmem>>, vector<256x256xbf16>
    %cst_74 = arith.constant dense<0.000000e+00> : vector<8x256xf32>
    %133 = tpu.matmul %131, %132, %cst_74 {dimension_numbers = #tpu.dot_dimension_numbers<[1], [0], [0], [1], [0, 0, 1, 1], [], []>} : vector<8x256xbf16>, vector<256x256xbf16>, vector<8x256xf32> -> vector<8x256xf32>
    %134 = vector.broadcast %130 : vector<1x256xf32> to vector<8x256xf32>
    %135 = arith.addf %134, %133 : vector<8x256xf32>
    %136 = vector.extract_strided_slice %129 {offsets = [8, 0], sizes = [8, 256], strides = [1, 1]} : vector<32x256xbf16> to vector<8x256xbf16>
    %c256 = arith.constant 256 : index
    %c0_75 = arith.constant 0 : index
    %137 = vector.load %arg4[%c256, %c0_75] : memref<1024x256xbf16, #tpu.memory_space<vmem>>, vector<256x256xbf16>
    %cst_76 = arith.constant dense<0.000000e+00> : vector<8x256xf32>
    %138 = tpu.matmul %136, %137, %cst_76 {dimension_numbers = #tpu.dot_dimension_numbers<[1], [0], [0], [1], [0, 0, 1, 1], [], []>} : vector<8x256xbf16>, vector<256x256xbf16>, vector<8x256xf32> -> vector<8x256xf32>
    %139 = arith.addf %135, %138 : vector<8x256xf32>
    %140 = vector.extract_strided_slice %129 {offsets = [16, 0], sizes = [8, 256], strides = [1, 1]} : vector<32x256xbf16> to vector<8x256xbf16>
    %c512_77 = arith.constant 512 : index
    %c0_78 = arith.constant 0 : index
    %141 = vector.load %arg4[%c512_77, %c0_78] : memref<1024x256xbf16, #tpu.memory_space<vmem>>, vector<256x256xbf16>
    %cst_79 = arith.constant dense<0.000000e+00> : vector<8x256xf32>
    %142 = tpu.matmul %140, %141, %cst_79 {dimension_numbers = #tpu.dot_dimension_numbers<[1], [0], [0], [1], [0, 0, 1, 1], [], []>} : vector<8x256xbf16>, vector<256x256xbf16>, vector<8x256xf32> -> vector<8x256xf32>
    %143 = arith.addf %139, %142 : vector<8x256xf32>
    %144 = vector.extract_strided_slice %129 {offsets = [24, 0], sizes = [8, 256], strides = [1, 1]} : vector<32x256xbf16> to vector<8x256xbf16>
    %c768 = arith.constant 768 : index
    %c0_80 = arith.constant 0 : index
    %145 = vector.load %arg4[%c768, %c0_80] : memref<1024x256xbf16, #tpu.memory_space<vmem>>, vector<256x256xbf16>
    %cst_81 = arith.constant dense<0.000000e+00> : vector<8x256xf32>
    %146 = tpu.matmul %144, %145, %cst_81 {dimension_numbers = #tpu.dot_dimension_numbers<[1], [0], [0], [1], [0, 0, 1, 1], [], []>} : vector<8x256xbf16>, vector<256x256xbf16>, vector<8x256xf32> -> vector<8x256xf32>
    %147 = arith.addf %143, %146 : vector<8x256xf32>
    %cst_82 = arith.constant 0.000000e+00 : f32
    %148 = vector.broadcast %cst_82 : f32 to vector<8x256xf32>
    %149 = arith.maximumf %147, %148 : vector<8x256xf32>
    %c0_83 = arith.constant 0 : index
    %c0_84 = arith.constant 0 : index
    %150 = vector.load %arg5[%c0_83, %c0_84] : memref<256x128xf32, #tpu.memory_space<vmem>>, vector<256x128xf32>
    %cst_85 = arith.constant dense<0.000000e+00> : vector<8x128xf32>
    %151 = tpu.matmul %149, %150, %cst_85 {dimension_numbers = #tpu.dot_dimension_numbers<[1], [0], [0], [1], [0, 0, 1, 1], [], []>} : vector<8x256xf32>, vector<256x128xf32>, vector<8x128xf32> -> vector<8x128xf32>
    %c7 = arith.constant 7 : index
    %c0_86 = arith.constant 0 : index
    %152 = vector.load %arg9[%c7, %c0_86] : memref<9x512xf32, #tpu.memory_space<vmem>>, vector<1x128xf32>
    %153 = vector.broadcast %152 : vector<1x128xf32> to vector<8x128xf32>
    %154 = arith.addf %151, %153 : vector<8x128xf32>
    %cst_87 = arith.constant 0.000000e+00 : f32
    %155 = vector.broadcast %cst_87 : f32 to vector<8x128xf32>
    %156 = arith.maximumf %154, %155 : vector<8x128xf32>
    %c0_88 = arith.constant 0 : index
    %c0_89 = arith.constant 0 : index
    %157 = vector.load %arg6[%c0_88, %c0_89] : memref<128x64xf32, #tpu.memory_space<vmem>>, vector<128x64xf32>
    %cst_90 = arith.constant dense<0.000000e+00> : vector<8x64xf32>
    %158 = tpu.matmul %156, %157, %cst_90 {dimension_numbers = #tpu.dot_dimension_numbers<[1], [0], [0], [1], [0, 0, 1, 1], [], []>} : vector<8x128xf32>, vector<128x64xf32>, vector<8x64xf32> -> vector<8x64xf32>
    %c8 = arith.constant 8 : index
    %c0_91 = arith.constant 0 : index
    %159 = vector.load %arg9[%c8, %c0_91] : memref<9x512xf32, #tpu.memory_space<vmem>>, vector<1x64xf32>
    %160 = vector.broadcast %159 : vector<1x64xf32> to vector<8x64xf32>
    %161 = arith.addf %158, %160 : vector<8x64xf32>
    %cst_92 = arith.constant 0.000000e+00 : f32
    %162 = vector.broadcast %cst_92 : f32 to vector<8x64xf32>
    %163 = arith.maximumf %161, %162 : vector<8x64xf32>
    %c0_93 = arith.constant 0 : index
    %c0_94 = arith.constant 0 : index
    %164 = vector.load %arg10[%c0_93, %c0_94] : memref<8x64xf32, #tpu.memory_space<vmem>>, vector<8x64xf32>
    tpu.vector_store %arg10[%c0_93, %c0_94], %163 {strides = array<i32>} : memref<8x64xf32, #tpu.memory_space<vmem>>, vector<8x64xf32>,
    return
  }
}

</mosaic_0001>

<llo_original>
// kernel: global_features.1
$region0: #{global_features.1}
  #allocation0 [shape = 'u32[]', space=smem, size = 0x4, offset = 0x4, fixed_abs, tag = 'smem constant byte address 0x4 - core index']
  #allocation1 [shape = 'u32[72,128]{1,0:T(1,128)}', space=vmem, size = 0x9000, scoped, tag = 'internal scratch']
  %s0 = inlined_call_operand.vmem [shape: bf16[128,1024], index: 0, kind: input, shape index: {}]
  %s1 = inlined_call_operand.hbm [shape: f32[32,1], index: 1, kind: input, shape index: {}]
  %s2 = inlined_call_operand.hbm [shape: bf16[3,1024,512], index: 2, kind: input, shape index: {}]
  %s3 = inlined_call_operand.hbm [shape: bf16[3,512,256], index: 3, kind: input, shape index: {}]
  %s4 = inlined_call_operand.hbm [shape: bf16[1024,256], index: 4, kind: input, shape index: {}]
  %s5 = inlined_call_operand.hbm [shape: f32[256,128], index: 5, kind: input, shape index: {}]
  %s6 = inlined_call_operand.vmem [shape: f32[128,64], index: 6, kind: input, shape index: {}]
  %s7 = inlined_call_operand.vmem [shape: f32[768,64], index: 7, kind: input, shape index: {}]
  %s8 = inlined_call_operand.hbm [shape: f32[128,512], index: 8, kind: input, shape index: {}]
  %s9 = inlined_call_operand.hbm [shape: f32[9,512], index: 9, kind: input, shape index: {}]
  %s10 = inlined_call_operand.vmem [shape: f32[8,64], index: 10, kind: output, shape index: {}]
  %s11 = sld [smem:[#allocation0]]
  $region78: #{global_features.1} parent=0
    _
  %s13 = ssub.s32 1, %s11
  %s14 = scalar_select 0, %s13, %s11
  $region1: #{global_features.1} parent=0
    #allocation2 [shape = 'u8[16384]{0}', space=vmem, size = 0x4000, scoped, tag = 'input window, operand 1, single buffered']
    #allocation3 [shape = 's32[1]{0}', space=sflag, size = 0x4, scoped, tag = 'scoped memory for global_features.1']
    #allocation4 [shape = 'u8[3145728]{0}', space=vmem, size = 0x300000, scoped, tag = 'input window, operand 2, single buffered']
    #allocation5 [shape = 's32[1]{0}', space=sflag, size = 0x4, scoped, tag = 'scoped memory for global_features.1']
    #allocation6 [shape = 'u8[786432]{0}', space=vmem, size = 0xc0000, scoped, tag = 'input window, operand 3, single buffered']
    #allocation7 [shape = 'u8[524288]{0}', space=vmem, size = 0x80000, scoped, tag = 'input window, operand 4, single buffered']
    #allocation8 [shape = 's32[1]{0}', space=sflag, size = 0x4, scoped, tag = 'scoped memory for global_features.1']
    #allocation9 [shape = 'u8[131072]{0}', space=vmem, size = 0x20000, scoped, tag = 'input window, operand 5, single buffered']
    #allocation10 [shape = 'u8[262144]{0}', space=vmem, size = 0x40000, scoped, tag = 'input window, operand 8, single buffered']
    #allocation11 [shape = 's32[1]{0}', space=sflag, size = 0x4, scoped, tag = 'scoped memory for global_features.1']
    #allocation12 [shape = 'u8[32768]{0}', space=vmem, size = 0x8000, scoped, tag = 'input window, operand 9, single buffered']
    %15 = vsyncpa [#allocation3], 0
    %16 = vsyncpa [#allocation5], 0
    %17 = vsyncpa [#allocation8], 0
    %18 = vsyncpa [#allocation11], 0
    // Predicated region
    $region2: #{global_features.1} parent=1 // pred_check
      _
    $region3: #{global_features.1} parent=1 // pred_check_branch
      %20 = sbr.rel (0) target = $region5
    $region4: #{global_features.1} parent=1 // pred_region
      _
    $region5: #{global_features.1} parent=1 // pred_fallthru
      _
    // Predicated region
    $region6: #{global_features.1} parent=1 // pred_check
      _
    $region7: #{global_features.1} parent=1 // pred_check_branch
      %22 = sbr.rel (0) target = $region9
    $region8: #{global_features.1} parent=1 // pred_region
      %24 = vsyncadd [#allocation3], 0
      %s25 = sshll.u32 %s1, 4
      %s26 = int_to_ptr.hbm [resolvable:$true] %s25
      %s27 = sshll.u32 [#allocation2], 4
      %s28 = int_to_ptr.vmem [resolvable:$true] %s27
      %33 = dma.hbm_to_vmem [thread:$0]  %s26, 512, %s28, [#allocation3], 128, 128, 8
    $region9: #{global_features.1} parent=1 // pred_fallthru
      _
    // Predicated region
    $region10: #{global_features.1} parent=1 // pred_check
      _
    $region11: #{global_features.1} parent=1 // pred_check_branch
      %35 = sbr.rel (0) target = $region13
    $region12: #{global_features.1} parent=1 // pred_region
      %37 = vsyncadd [#allocation5], 0
      %s38 = sshll.u32 %s2, 4
      %s39 = int_to_ptr.hbm [resolvable:$true] %s38
      %s40 = sshll.u32 [#allocation4], 4
      %s41 = int_to_ptr.vmem [resolvable:$true] %s40
      %46 = dma.hbm_to_vmem [thread:$0]  %s39, 98304, %s41, [#allocation5], 256, 256, 16
    $region13: #{global_features.1} parent=1 // pred_fallthru
      _
    // Predicated region
    $region14: #{global_features.1} parent=1 // pred_check
      _
    $region15: #{global_features.1} parent=1 // pred_check_branch
      %48 = sbr.rel (0) target = $region17
    $region16: #{global_features.1} parent=1 // pred_region
      %50 = vsyncadd [#allocation5], 0
      %s51 = sshll.u32 %s3, 4
      %s52 = int_to_ptr.hbm [resolvable:$true] %s51
      %s53 = sshll.u32 [#allocation6], 4
      %s54 = int_to_ptr.vmem [resolvable:$true] %s53
      %59 = dma.hbm_to_vmem [thread:$0]  %s52, 24576, %s54, [#allocation5], 128, 128, 8
    $region17: #{global_features.1} parent=1 // pred_fallthru
      _
    // Predicated region
    $region18: #{global_features.1} parent=1 // pred_check
      _
    $region19: #{global_features.1} parent=1 // pred_check_branch
      %61 = sbr.rel (0) target = $region21
    $region20: #{global_features.1} parent=1 // pred_region
      %63 = vsyncadd [#allocation8], 0
      %s64 = sshll.u32 %s4, 4
      %s65 = int_to_ptr.hbm [resolvable:$true] %s64
      %s66 = sshll.u32 [#allocation7], 4
      %s67 = int_to_ptr.vmem [resolvable:$true] %s66
      %72 = dma.hbm_to_vmem [thread:$0]  %s65, 16384, %s67, [#allocation8], 128, 128, 8
    $region21: #{global_features.1} parent=1 // pred_fallthru
      _
    // Predicated region
    $region22: #{global_features.1} parent=1 // pred_check
      _
    $region23: #{global_features.1} parent=1 // pred_check_branch
      %74 = sbr.rel (0) target = $region25
    $region24: #{global_features.1} parent=1 // pred_region
      %76 = vsyncadd [#allocation8], 0
      %s77 = sshll.u32 %s5, 4
      %s78 = int_to_ptr.hbm [resolvable:$true] %s77
      %s79 = sshll.u32 [#allocation9], 4
      %s80 = int_to_ptr.vmem [resolvable:$true] %s79
      %85 = dma.hbm_to_vmem [thread:$0]  %s78, 4096, %s80, [#allocation8], 128, 128, 8
    $region25: #{global_features.1} parent=1 // pred_fallthru
      _
    // Predicated region
    $region26: #{global_features.1} parent=1 // pred_check
      _
    $region27: #{global_features.1} parent=1 // pred_check_branch
      %87 = sbr.rel (0) target = $region29
    $region28: #{global_features.1} parent=1 // pred_region
      _
    $region29: #{global_features.1} parent=1 // pred_fallthru
      _
    // Predicated region
    $region30: #{global_features.1} parent=1 // pred_check
      _
    $region31: #{global_features.1} parent=1 // pred_check_branch
      %89 = sbr.rel (0) target = $region33
    $region32: #{global_features.1} parent=1 // pred_region
      _
    $region33: #{global_features.1} parent=1 // pred_fallthru
      _
    // Predicated region
    $region34: #{global_features.1} parent=1 // pred_check
      _
    $region35: #{global_features.1} parent=1 // pred_check_branch
      %91 = sbr.rel (0) target = $region37
    $region36: #{global_features.1} parent=1 // pred_region
      %93 = vsyncadd [#allocation11], 0
      %s94 = sshll.u32 %s8, 4
      %s95 = int_to_ptr.hbm [resolvable:$true] %s94
      %s96 = sshll.u32 [#allocation10], 4
      %s97 = int_to_ptr.vmem [resolvable:$true] %s96
      %102 = dma.hbm_to_vmem [thread:$0]  %s95, 8192, %s97, [#allocation11], 512, 512, 32
    $region37: #{global_features.1} parent=1 // pred_fallthru
      _
    // Predicated region
    $region38: #{global_features.1} parent=1 // pred_check
      _
    $region39: #{global_features.1} parent=1 // pred_check_branch
      %104 = sbr.rel (0) target = $region41
    $region40: #{global_features.1} parent=1 // pred_region
      %106 = vsyncadd [#allocation11], 0
      %s107 = sshll.u32 %s9, 4
      %s108 = int_to_ptr.hbm [resolvable:$true] %s107
      %s109 = sshll.u32 [#allocation12], 4
      %s110 = int_to_ptr.vmem [resolvable:$true] %s109
      %115 = dma.hbm_to_vmem [thread:$0]  %s108, 1024, %s110, [#allocation11], 512, 512, 32
    $region41: #{global_features.1} parent=1 // pred_fallthru
      _
    // Predicated region
    $region42: #{global_features.1} parent=1 // pred_check
      _
    $region43: #{global_features.1} parent=1 // pred_check_branch
      %117 = sbr.rel (0) target = $region45
    $region44: #{global_features.1} parent=1 // pred_region
      %119 = dma.done [#allocation3], 512
    $region45: #{global_features.1} parent=1 // pred_fallthru
      _
    // Predicated region
    $region46: #{global_features.1} parent=1 // pred_check
      _
    $region47: #{global_features.1} parent=1 // pred_check_branch
      %121 = sbr.rel (0) target = $region49
    $region48: #{global_features.1} parent=1 // pred_region
      %123 = dma.done [#allocation5], 98304
    $region49: #{global_features.1} parent=1 // pred_fallthru
      _
    // Predicated region
    $region50: #{global_features.1} parent=1 // pred_check
      _
    $region51: #{global_features.1} parent=1 // pred_check_branch
      %125 = sbr.rel (0) target = $region53
    $region52: #{global_features.1} parent=1 // pred_region
      %127 = dma.done [#allocation5], 24576
    $region53: #{global_features.1} parent=1 // pred_fallthru
      _
    // Predicated region
    $region54: #{global_features.1} parent=1 // pred_check
      _
    $region55: #{global_features.1} parent=1 // pred_check_branch
      %129 = sbr.rel (0) target = $region57
    $region56: #{global_features.1} parent=1 // pred_region
      %131 = dma.done [#allocation8], 16384
    $region57: #{global_features.1} parent=1 // pred_fallthru
      _
    // Predicated region
    $region58: #{global_features.1} parent=1 // pred_check
      _
    $region59: #{global_features.1} parent=1 // pred_check_branch
      %133 = sbr.rel (0) target = $region61
    $region60: #{global_features.1} parent=1 // pred_region
      %135 = dma.done [#allocation8], 4096
    $region61: #{global_features.1} parent=1 // pred_fallthru
      _
    // Predicated region
    $region62: #{global_features.1} parent=1 // pred_check
      _
    $region63: #{global_features.1} parent=1 // pred_check_branch
      %137 = sbr.rel (0) target = $region65
    $region64: #{global_features.1} parent=1 // pred_region
      %139 = dma.done [#allocation11], 8192
    $region65: #{global_features.1} parent=1 // pred_fallthru
      _
    // Predicated region
    $region66: #{global_features.1} parent=1 // pred_check
      _
    $region67: #{global_features.1} parent=1 // pred_check_branch
      %141 = sbr.rel (0) target = $region69
    $region68: #{global_features.1} parent=1 // pred_region
      %143 = dma.done [#allocation11], 1024
    $region69: #{global_features.1} parent=1 // pred_fallthru
      _
    %v144 = vld [vmem:[#allocation2] sm:$0xff]
    %v145 = vld [vmem:[#allocation2 + $0x8] sm:$0xff]
    %v146 = vld [vmem:[#allocation2 + $0x10] sm:$0xff]
    %v147 = vld [vmem:[#allocation2 + $0x18] sm:$0xff]
    %v148 = vld [vmem:[%s0] sm:$0xff]
    %v149 = vld [vmem:[%s0 + $0x8] sm:$0xff]
    %v150 = vld [vmem:[%s0 + $0x10] sm:$0xff]
    %v151 = vld [vmem:[%s0 + $0x18] sm:$0xff]
    %v152 = vld [vmem:[%s0 + $0x20] sm:$0xff]
    %v153 = vld [vmem:[%s0 + $0x28] sm:$0xff]
    %v154 = vld [vmem:[%s0 + $0x30] sm:$0xff]
    %v155 = vld [vmem:[%s0 + $0x38] sm:$0xff]
    %v156 = vld [vmem:[%s0 + $0x40] sm:$0xff]
    %v157 = vld [vmem:[%s0 + $0x48] sm:$0xff]
    %v158 = vld [vmem:[%s0 + $0x50] sm:$0xff]
    %v159 = vld [vmem:[%s0 + $0x58] sm:$0xff]
    %v160 = vld [vmem:[%s0 + $0x60] sm:$0xff]
    %v161 = vld [vmem:[%s0 + $0x68] sm:$0xff]
    %v162 = vld [vmem:[%s0 + $0x70] sm:$0xff]
    %v163 = vld [vmem:[%s0 + $0x78] sm:$0xff]
    %v164 = vld [vmem:[%s0 + $0x80] sm:$0xff]
    %v165 = vld [vmem:[%s0 + $0x88] sm:$0xff]
    %v166 = vld [vmem:[%s0 + $0x90] sm:$0xff]
    %v167 = vld [vmem:[%s0 + $0x98] sm:$0xff]
    %v168 = vld [vmem:[%s0 + $0xa0] sm:$0xff]
    %v169 = vld [vmem:[%s0 + $0xa8] sm:$0xff]
    %v170 = vld [vmem:[%s0 + $0xb0] sm:$0xff]
    %v171 = vld [vmem:[%s0 + $0xb8] sm:$0xff]
    %v172 = vld [vmem:[%s0 + $0xc0] sm:$0xff]
    %v173 = vld [vmem:[%s0 + $0xc8] sm:$0xff]
    %v174 = vld [vmem:[%s0 + $0xd0] sm:$0xff]
    %v175 = vld [vmem:[%s0 + $0xd8] sm:$0xff]
    %v176 = vld [vmem:[%s0 + $0xe0] sm:$0xff]
    %v177 = vld [vmem:[%s0 + $0xe8] sm:$0xff]
    %v178 = vld [vmem:[%s0 + $0xf0] sm:$0xff]
    %v179 = vld [vmem:[%s0 + $0xf8] sm:$0xff]
    %v180 = vld [vmem:[%s0 + $0x100] sm:$0xff]
    %v181 = vld [vmem:[%s0 + $0x108] sm:$0xff]
    %v182 = vld [vmem:[%s0 + $0x110] sm:$0xff]
    %v183 = vld [vmem:[%s0 + $0x118] sm:$0xff]
    %v184 = vld [vmem:[%s0 + $0x120] sm:$0xff]
    %v185 = vld [vmem:[%s0 + $0x128] sm:$0xff]
    %v186 = vld [vmem:[%s0 + $0x130] sm:$0xff]
    %v187 = vld [vmem:[%s0 + $0x138] sm:$0xff]
    %v188 = vld [vmem:[%s0 + $0x140] sm:$0xff]
    %v189 = vld [vmem:[%s0 + $0x148] sm:$0xff]
    %v190 = vld [vmem:[%s0 + $0x150] sm:$0xff]
    %v191 = vld [vmem:[%s0 + $0x158] sm:$0xff]
    %v192 = vld [vmem:[%s0 + $0x160] sm:$0xff]
    %v193 = vld [vmem:[%s0 + $0x168] sm:$0xff]
    %v194 = vld [vmem:[%s0 + $0x170] sm:$0xff]
    %v195 = vld [vmem:[%s0 + $0x178] sm:$0xff]
    %v196 = vld [vmem:[%s0 + $0x180] sm:$0xff]
    %v197 = vld [vmem:[%s0 + $0x188] sm:$0xff]
    %v198 = vld [vmem:[%s0 + $0x190] sm:$0xff]
    %v199 = vld [vmem:[%s0 + $0x198] sm:$0xff]
    %v200 = vld [vmem:[%s0 + $0x1a0] sm:$0xff]
    %v201 = vld [vmem:[%s0 + $0x1a8] sm:$0xff]
    %v202 = vld [vmem:[%s0 + $0x1b0] sm:$0xff]
    %v203 = vld [vmem:[%s0 + $0x1b8] sm:$0xff]
    %v204 = vld [vmem:[%s0 + $0x1c0] sm:$0xff]
    %v205 = vld [vmem:[%s0 + $0x1c8] sm:$0xff]
    %v206 = vld [vmem:[%s0 + $0x1d0] sm:$0xff]
    %v207 = vld [vmem:[%s0 + $0x1d8] sm:$0xff]
    %v208 = vld [vmem:[%s0 + $0x1e0] sm:$0xff]
    %v209 = vld [vmem:[%s0 + $0x1e8] sm:$0xff]
    %v210 = vld [vmem:[%s0 + $0x1f0] sm:$0xff]
    %v211 = vld [vmem:[%s0 + $0x1f8] sm:$0xff]
    %v212 = vld [vmem:[#allocation4] sm:$0xff]
    %v213 = vld [vmem:[#allocation4 + $0x8] sm:$0xff]
    %v214 = vld [vmem:[#allocation4 + $0x10] sm:$0xff]
    %v215 = vld [vmem:[#allocation4 + $0x18] sm:$0xff]
    %v216 = vld [vmem:[#allocation4 + $0x20] sm:$0xff]
    %v217 = vld [vmem:[#allocation4 + $0x28] sm:$0xff]
    %v218 = vld [vmem:[#allocation4 + $0x30] sm:$0xff]
    %v219 = vld [vmem:[#allocation4 + $0x38] sm:$0xff]
    %v220 = vld [vmem:[#allocation4 + $0x40] sm:$0xff]
    %v221 = vld [vmem:[#allocation4 + $0x48] sm:$0xff]
    %v222 = vld [vmem:[#allocation4 + $0x50] sm:$0xff]
    %v223 = vld [vmem:[#allocation4 + $0x58] sm:$0xff]
    %v224 = vld [vmem:[#allocation4 + $0x60] sm:$0xff]
    %v225 = vld [vmem:[#allocation4 + $0x68] sm:$0xff]
    %v226 = vld [vmem:[#allocation4 + $0x70] sm:$0xff]
    %v227 = vld [vmem:[#allocation4 + $0x78] sm:$0xff]
    %v228 = vld [vmem:[#allocation4 + $0x80] sm:$0xff]
    %v229 = vld [vmem:[#allocation4 + $0x88] sm:$0xff]
    %v230 = vld [vmem:[#allocation4 + $0x90] sm:$0xff]
    %v231 = vld [vmem:[#allocation4 + $0x98] sm:$0xff]
    %v232 = vld [vmem:[#allocation4 + $0xa0] sm:$0xff]
    %v233 = vld [vmem:[#allocation4 + $0xa8] sm:$0xff]
    %v234 = vld [vmem:[#allocation4 + $0xb0] sm:$0xff]
    %v235 = vld [vmem:[#allocation4 + $0xb8] sm:$0xff]
    %v236 = vld [vmem:[#allocation4 + $0xc0] sm:$0xff]
    %v237 = vld [vmem:[#allocation4 + $0xc8] sm:$0xff]
    %v238 = vld [vmem:[#allocation4 + $0xd0] sm:$0xff]
    %v239 = vld [vmem:[#allocation4 + $0xd8] sm:$0xff]
    %v240 = vld [vmem:[#allocation4 + $0xe0] sm:$0xff]
    %v241 = vld [vmem:[#allocation4 + $0xe8] sm:$0xff]
    %v242 = vld [vmem:[#allocation4 + $0xf0] sm:$0xff]
    %v243 = vld [vmem:[#allocation4 + $0xf8] sm:$0xff]
    %v244 = vld [vmem:[#allocation4 + $0x100] sm:$0xff]
    %v245 = vld [vmem:[#allocation4 + $0x108] sm:$0xff]
    %v246 = vld [vmem:[#allocation4 + $0x110] sm:$0xff]
    %v247 = vld [vmem:[#allocation4 + $0x118] sm:$0xff]
    %v248 = vld [vmem:[#allocation4 + $0x120] sm:$0xff]
    %v249 = vld [vmem:[#allocation4 + $0x128] sm:$0xff]
    %v250 = vld [vmem:[#allocation4 + $0x130] sm:$0xff]
    %v251 = vld [vmem:[#allocation4 + $0x138] sm:$0xff]
    %v252 = vld [vmem:[#allocation4 + $0x140] sm:$0xff]
    %v253 = vld [vmem:[#allocation4 + $0x148] sm:$0xff]
    %v254 = vld [vmem:[#allocation4 + $0x150] sm:$0xff]
    %v255 = vld [vmem:[#allocation4 + $0x158] sm:$0xff]
    %v256 = vld [vmem:[#allocation4 + $0x160] sm:$0xff]
    %v257 = vld [vmem:[#allocation4 + $0x168] sm:$0xff]
    %v258 = vld [vmem:[#allocation4 + $0x170] sm:$0xff]
    %v259 = vld [vmem:[#allocation4 + $0x178] sm:$0xff]
    %v260 = vld [vmem:[#allocation4 + $0x180] sm:$0xff]
    %v261 = vld [vmem:[#allocation4 + $0x188] sm:$0xff]
    %v262 = vld [vmem:[#allocation4 + $0x190] sm:$0xff]
    %v263 = vld [vmem:[#allocation4 + $0x198] sm:$0xff]
    %v264 = vld [vmem:[#allocation4 + $0x1a0] sm:$0xff]
    %v265 = vld [vmem:[#allocation4 + $0x1a8] sm:$0xff]
    %v266 = vld [vmem:[#allocation4 + $0x1b0] sm:$0xff]
    %v267 = vld [vmem:[#allocation4 + $0x1b8] sm:$0xff]
    %v268 = vld [vmem:[#allocation4 + $0x1c0] sm:$0xff]
    %v269 = vld [vmem:[#allocation4 + $0x1c8] sm:$0xff]
    %v270 = vld [vmem:[#allocation4 + $0x1d0] sm:$0xff]
    %v271 = vld [vmem:[#allocation4 + $0x1d8] sm:$0xff]
    %v272 = vld [vmem:[#allocation4 + $0x1e0] sm:$0xff]
    %v273 = vld [vmem:[#allocation4 + $0x1e8] sm:$0xff]
    %v274 = vld [vmem:[#allocation4 + $0x1f0] sm:$0xff]
    %v275 = vld [vmem:[#allocation4 + $0x1f8] sm:$0xff]
    %v276 = vld [vmem:[#allocation4 + $0x200] sm:$0xff]
    %v277 = vld [vmem:[#allocation4 + $0x208] sm:$0xff]
    %v278 = vld [vmem:[#allocation4 + $0x210] sm:$0xff]
    %v279 = vld [vmem:[#allocation4 + $0x218] sm:$0xff]
    %v280 = vld [vmem:[#allocation4 + $0x220] sm:$0xff]
    %v281 = vld [vmem:[#allocation4 + $0x228] sm:$0xff]
    %v282 = vld [vmem:[#allocation4 + $0x230] sm:$0xff]
    %v283 = vld [vmem:[#allocation4 + $0x238] sm:$0xff]
    %v284 = vld [vmem:[#allocation4 + $0x240] sm:$0xff]
    %v285 = vld [vmem:[#allocation4 + $0x248] sm:$0xff]
    %v286 = vld [vmem:[#allocation4 + $0x250] sm:$0xff]
    %v287 = vld [vmem:[#allocation4 + $0x258] sm:$0xff]
    %v288 = vld [vmem:[#allocation4 + $0x260] sm:$0xff]
    %v289 = vld [vmem:[#allocation4 + $0x268] sm:$0xff]
    %v290 = vld [vmem:[#allocation4 + $0x270] sm:$0xff]
    %v291 = vld [vmem:[#allocation4 + $0x278] sm:$0xff]
    %v292 = vld [vmem:[#allocation4 + $0x280] sm:$0xff]
    %v293 = vld [vmem:[#allocation4 + $0x288] sm:$0xff]
    %v294 = vld [vmem:[#allocation4 + $0x290] sm:$0xff]
    %v295 = vld [vmem:[#allocation4 + $0x298] sm:$0xff]
    %v296 = vld [vmem:[#allocation4 + $0x2a0] sm:$0xff]
    %v297 = vld [vmem:[#allocation4 + $0x2a8] sm:$0xff]
    %v298 = vld [vmem:[#allocation4 + $0x2b0] sm:$0xff]
    %v299 = vld [vmem:[#allocation4 + $0x2b8] sm:$0xff]
    %v300 = vld [vmem:[#allocation4 + $0x2c0] sm:$0xff]
    %v301 = vld [vmem:[#allocation4 + $0x2c8] sm:$0xff]
    %v302 = vld [vmem:[#allocation4 + $0x2d0] sm:$0xff]
    %v303 = vld [vmem:[#allocation4 + $0x2d8] sm:$0xff]
    %v304 = vld [vmem:[#allocation4 + $0x2e0] sm:$0xff]
    %v305 = vld [vmem:[#allocation4 + $0x2e8] sm:$0xff]
    %v306 = vld [vmem:[#allocation4 + $0x2f0] sm:$0xff]
    %v307 = vld [vmem:[#allocation4 + $0x2f8] sm:$0xff]
    %v308 = vld [vmem:[#allocation4 + $0x300] sm:$0xff]
    %v309 = vld [vmem:[#allocation4 + $0x308] sm:$0xff]
    %v310 = vld [vmem:[#allocation4 + $0x310] sm:$0xff]
    %v311 = vld [vmem:[#allocation4 + $0x318] sm:$0xff]
    %v312 = vld [vmem:[#allocation4 + $0x320] sm:$0xff]
    %v313 = vld [vmem:[#allocation4 + $0x328] sm:$0xff]
    %v314 = vld [vmem:[#allocation4 + $0x330] sm:$0xff]
    %v315 = vld [vmem:[#allocation4 + $0x338] sm:$0xff]
    %v316 = vld [vmem:[#allocation4 + $0x340] sm:$0xff]
    %v317 = vld [vmem:[#allocation4 + $0x348] sm:$0xff]
    %v318 = vld [vmem:[#allocation4 + $0x350] sm:$0xff]
    %v319 = vld [vmem:[#allocation4 + $0x358] sm:$0xff]
    %v320 = vld [vmem:[#allocation4 + $0x360] sm:$0xff]
    %v321 = vld [vmem:[#allocation4 + $0x368] sm:$0xff]
    %v322 = vld [vmem:[#allocation4 + $0x370] sm:$0xff]
    %v323 = vld [vmem:[#allocation4 + $0x378] sm:$0xff]
    %v324 = vld [vmem:[#allocation4 + $0x380] sm:$0xff]
    %v325 = vld [vmem:[#allocation4 + $0x388] sm:$0xff]
    %v326 = vld [vmem:[#allocation4 + $0x390] sm:$0xff]
    %v327 = vld [vmem:[#allocation4 + $0x398] sm:$0xff]
    %v328 = vld [vmem:[#allocation4 + $0x3a0] sm:$0xff]
    %v329 = vld [vmem:[#allocation4 + $0x3a8] sm:$0xff]
    %v330 = vld [vmem:[#allocation4 + $0x3b0] sm:$0xff]
    %v331 = vld [vmem:[#allocation4 + $0x3b8] sm:$0xff]
    %v332 = vld [vmem:[#allocation4 + $0x3c0] sm:$0xff]
    %v333 = vld [vmem:[#allocation4 + $0x3c8] sm:$0xff]
    %v334 = vld [vmem:[#allocation4 + $0x3d0] sm:$0xff]
    %v335 = vld [vmem:[#allocation4 + $0x3d8] sm:$0xff]
    %v336 = vld [vmem:[#allocation4 + $0x3e0] sm:$0xff]
    %v337 = vld [vmem:[#allocation4 + $0x3e8] sm:$0xff]
    %v338 = vld [vmem:[#allocation4 + $0x3f0] sm:$0xff]
    %v339 = vld [vmem:[#allocation4 + $0x3f8] sm:$0xff]
    %v340 = vld [vmem:[#allocation4 + $0x400] sm:$0xff]
    %v341 = vld [vmem:[#allocation4 + $0x408] sm:$0xff]
    %v342 = vld [vmem:[#allocation4 + $0x410] sm:$0xff]
    %v343 = vld [vmem:[#allocation4 + $0x418] sm:$0xff]
    %v344 = vld [vmem:[#allocation4 + $0x420] sm:$0xff]
    %v345 = vld [vmem:[#allocation4 + $0x428] sm:$0xff]
    %v346 = vld [vmem:[#allocation4 + $0x430] sm:$0xff]
    %v347 = vld [vmem:[#allocation4 + $0x438] sm:$0xff]
    %v348 = vld [vmem:[#allocation4 + $0x440] sm:$0xff]
    %v349 = vld [vmem:[#allocation4 + $0x448] sm:$0xff]
    %v350 = vld [vmem:[#allocation4 + $0x450] sm:$0xff]
    %v351 = vld [vmem:[#allocation4 + $0x458] sm:$0xff]
    %v352 = vld [vmem:[#allocation4 + $0x460] sm:$0xff]
    %v353 = vld [vmem:[#allocation4 + $0x468] sm:$0xff]
    %v354 = vld [vmem:[#allocation4 + $0x470] sm:$0xff]
    %v355 = vld [vmem:[#allocation4 + $0x478] sm:$0xff]
    %v356 = vld [vmem:[#allocation4 + $0x480] sm:$0xff]
    %v357 = vld [vmem:[#allocation4 + $0x488] sm:$0xff]
    %v358 = vld [vmem:[#allocation4 + $0x490] sm:$0xff]
    %v359 = vld [vmem:[#allocation4 + $0x498] sm:$0xff]
    %v360 = vld [vmem:[#allocation4 + $0x4a0] sm:$0xff]
    %v361 = vld [vmem:[#allocation4 + $0x4a8] sm:$0xff]
    %v362 = vld [vmem:[#allocation4 + $0x4b0] sm:$0xff]
    %v363 = vld [vmem:[#allocation4 + $0x4b8] sm:$0xff]
    %v364 = vld [vmem:[#allocation4 + $0x4c0] sm:$0xff]
    %v365 = vld [vmem:[#allocation4 + $0x4c8] sm:$0xff]
    %v366 = vld [vmem:[#allocation4 + $0x4d0] sm:$0xff]
    %v367 = vld [vmem:[#allocation4 + $0x4d8] sm:$0xff]
    %v368 = vld [vmem:[#allocation4 + $0x4e0] sm:$0xff]
    %v369 = vld [vmem:[#allocation4 + $0x4e8] sm:$0xff]
    %v370 = vld [vmem:[#allocation4 + $0x4f0] sm:$0xff]
    %v371 = vld [vmem:[#allocation4 + $0x4f8] sm:$0xff]
    %v372 = vld [vmem:[#allocation4 + $0x500] sm:$0xff]
    %v373 = vld [vmem:[#allocation4 + $0x508] sm:$0xff]
    %v374 = vld [vmem:[#allocation4 + $0x510] sm:$0xff]
    %v375 = vld [vmem:[#allocation4 + $0x518] sm:$0xff]
    %v376 = vld [vmem:[#allocation4 + $0x520] sm:$0xff]
    %v377 = vld [vmem:[#allocation4 + $0x528] sm:$0xff]
    %v378 = vld [vmem:[#allocation4 + $0x530] sm:$0xff]
    %v379 = vld [vmem:[#allocation4 + $0x538] sm:$0xff]
    %v380 = vld [vmem:[#allocation4 + $0x540] sm:$0xff]
    %v381 = vld [vmem:[#allocation4 + $0x548] sm:$0xff]
    %v382 = vld [vmem:[#allocation4 + $0x550] sm:$0xff]
    %v383 = vld [vmem:[#allocation4 + $0x558] sm:$0xff]
    %v384 = vld [vmem:[#allocation4 + $0x560] sm:$0xff]
    %v385 = vld [vmem:[#allocation4 + $0x568] sm:$0xff]
    %v386 = vld [vmem:[#allocation4 + $0x570] sm:$0xff]
    %v387 = vld [vmem:[#allocation4 + $0x578] sm:$0xff]
    %v388 = vld [vmem:[#allocation4 + $0x580] sm:$0xff]
    %v389 = vld [vmem:[#allocation4 + $0x588] sm:$0xff]
    %v390 = vld [vmem:[#allocation4 + $0x590] sm:$0xff]
    %v391 = vld [vmem:[#allocation4 + $0x598] sm:$0xff]
    %v392 = vld [vmem:[#allocation4 + $0x5a0] sm:$0xff]
    %v393 = vld [vmem:[#allocation4 + $0x5a8] sm:$0xff]
    %v394 = vld [vmem:[#allocation4 + $0x5b0] sm:$0xff]
    %v395 = vld [vmem:[#allocation4 + $0x5b8] sm:$0xff]
    %v396 = vld [vmem:[#allocation4 + $0x5c0] sm:$0xff]
    %v397 = vld [vmem:[#allocation4 + $0x5c8] sm:$0xff]
    %v398 = vld [vmem:[#allocation4 + $0x5d0] sm:$0xff]
    %v399 = vld [vmem:[#allocation4 + $0x5d8] sm:$0xff]
    %v400 = vld [vmem:[#allocation4 + $0x5e0] sm:$0xff]
    %v401 = vld [vmem:[#allocation4 + $0x5e8] sm:$0xff]
    %v402 = vld [vmem:[#allocation4 + $0x5f0] sm:$0xff]
    %v403 = vld [vmem:[#allocation4 + $0x5f8] sm:$0xff]
    %v404 = vld [vmem:[#allocation4 + $0x600] sm:$0xff]
    %v405 = vld [vmem:[#allocation4 + $0x608] sm:$0xff]
    %v406 = vld [vmem:[#allocation4 + $0x610] sm:$0xff]
    %v407 = vld [vmem:[#allocation4 + $0x618] sm:$0xff]
    %v408 = vld [vmem:[#allocation4 + $0x620] sm:$0xff]
    %v409 = vld [vmem:[#allocation4 + $0x628] sm:$0xff]
    %v410 = vld [vmem:[#allocation4 + $0x630] sm:$0xff]
    %v411 = vld [vmem:[#allocation4 + $0x638] sm:$0xff]
    %v412 = vld [vmem:[#allocation4 + $0x640] sm:$0xff]
    %v413 = vld [vmem:[#allocation4 + $0x648] sm:$0xff]
    %v414 = vld [vmem:[#allocation4 + $0x650] sm:$0xff]
    %v415 = vld [vmem:[#allocation4 + $0x658] sm:$0xff]
    %v416 = vld [vmem:[#allocation4 + $0x660] sm:$0xff]
    %v417 = vld [vmem:[#allocation4 + $0x668] sm:$0xff]
    %v418 = vld [vmem:[#allocation4 + $0x670] sm:$0xff]
    %v419 = vld [vmem:[#allocation4 + $0x678] sm:$0xff]
    %v420 = vld [vmem:[#allocation4 + $0x680] sm:$0xff]
    %v421 = vld [vmem:[#allocation4 + $0x688] sm:$0xff]
    %v422 = vld [vmem:[#allocation4 + $0x690] sm:$0xff]
    %v423 = vld [vmem:[#allocation4 + $0x698] sm:$0xff]
    %v424 = vld [vmem:[#allocation4 + $0x6a0] sm:$0xff]
    %v425 = vld [vmem:[#allocation4 + $0x6a8] sm:$0xff]
    %v426 = vld [vmem:[#allocation4 + $0x6b0] sm:$0xff]
    %v427 = vld [vmem:[#allocation4 + $0x6b8] sm:$0xff]
    %v428 = vld [vmem:[#allocation4 + $0x6c0] sm:$0xff]
    %v429 = vld [vmem:[#allocation4 + $0x6c8] sm:$0xff]
    %v430 = vld [vmem:[#allocation4 + $0x6d0] sm:$0xff]
    %v431 = vld [vmem:[#allocation4 + $0x6d8] sm:$0xff]
    %v432 = vld [vmem:[#allocation4 + $0x6e0] sm:$0xff]
    %v433 = vld [vmem:[#allocation4 + $0x6e8] sm:$0xff]
    %v434 = vld [vmem:[#allocation4 + $0x6f0] sm:$0xff]
    %v435 = vld [vmem:[#allocation4 + $0x6f8] sm:$0xff]
    %v436 = vld [vmem:[#allocation4 + $0x700] sm:$0xff]
    %v437 = vld [vmem:[#allocation4 + $0x708] sm:$0xff]
    %v438 = vld [vmem:[#allocation4 + $0x710] sm:$0xff]
    %v439 = vld [vmem:[#allocation4 + $0x718] sm:$0xff]
    %v440 = vld [vmem:[#allocation4 + $0x720] sm:$0xff]
    %v441 = vld [vmem:[#allocation4 + $0x728] sm:$0xff]
    %v442 = vld [vmem:[#allocation4 + $0x730] sm:$0xff]
    %v443 = vld [vmem:[#allocation4 + $0x738] sm:$0xff]
    %v444 = vld [vmem:[#allocation4 + $0x740] sm:$0xff]
    %v445 = vld [vmem:[#allocation4 + $0x748] sm:$0xff]
    %v446 = vld [vmem:[#allocation4 + $0x750] sm:$0xff]
    %v447 = vld [vmem:[#allocation4 + $0x758] sm:$0xff]
    %v448 = vld [vmem:[#allocation4 + $0x760] sm:$0xff]
    %v449 = vld [vmem:[#allocation4 + $0x768] sm:$0xff]
    %v450 = vld [vmem:[#allocation4 + $0x770] sm:$0xff]
    %v451 = vld [vmem:[#allocation4 + $0x778] sm:$0xff]
    %v452 = vld [vmem:[#allocation4 + $0x780] sm:$0xff]
    %v453 = vld [vmem:[#allocation4 + $0x788] sm:$0xff]
    %v454 = vld [vmem:[#allocation4 + $0x790] sm:$0xff]
    %v455 = vld [vmem:[#allocation4 + $0x798] sm:$0xff]
    %v456 = vld [vmem:[#allocation4 + $0x7a0] sm:$0xff]
    %v457 = vld [vmem:[#allocation4 + $0x7a8] sm:$0xff]
    %v458 = vld [vmem:[#allocation4 + $0x7b0] sm:$0xff]
    %v459 = vld [vmem:[#allocation4 + $0x7b8] sm:$0xff]
    %v460 = vld [vmem:[#allocation4 + $0x7c0] sm:$0xff]
    %v461 = vld [vmem:[#allocation4 + $0x7c8] sm:$0xff]
    %v462 = vld [vmem:[#allocation4 + $0x7d0] sm:$0xff]
    %v463 = vld [vmem:[#allocation4 + $0x7d8] sm:$0xff]
    %v464 = vld [vmem:[#allocation4 + $0x7e0] sm:$0xff]
    %v465 = vld [vmem:[#allocation4 + $0x7e8] sm:$0xff]
    %v466 = vld [vmem:[#allocation4 + $0x7f0] sm:$0xff]
    %v467 = vld [vmem:[#allocation4 + $0x7f8] sm:$0xff]
    %s468 = scalar_lea.vmem [#allocation4], 2048
    %v469 = vld [vmem:[%s468] sm:$0xff]
    %v470 = vld [vmem:[%s468 + $0x8] sm:$0xff]
    %v471 = vld [vmem:[%s468 + $0x10] sm:$0xff]
    %v472 = vld [vmem:[%s468 + $0x18] sm:$0xff]
    %v473 = vld [vmem:[%s468 + $0x20] sm:$0xff]
    %v474 = vld [vmem:[%s468 + $0x28] sm:$0xff]
    %v475 = vld [vmem:[%s468 + $0x30] sm:$0xff]
    %v476 = vld [vmem:[%s468 + $0x38] sm:$0xff]
    %v477 = vld [vmem:[%s468 + $0x40] sm:$0xff]
    %v478 = vld [vmem:[%s468 + $0x48] sm:$0xff]
    %v479 = vld [vmem:[%s468 + $0x50] sm:$0xff]
    %v480 = vld [vmem:[%s468 + $0x58] sm:$0xff]
    %v481 = vld [vmem:[%s468 + $0x60] sm:$0xff]
    %v482 = vld [vmem:[%s468 + $0x68] sm:$0xff]
    %v483 = vld [vmem:[%s468 + $0x70] sm:$0xff]
    %v484 = vld [vmem:[%s468 + $0x78] sm:$0xff]
    %v485 = vld [vmem:[%s468 + $0x80] sm:$0xff]
    %v486 = vld [vmem:[%s468 + $0x88] sm:$0xff]
    %v487 = vld [vmem:[%s468 + $0x90] sm:$0xff]
    %v488 = vld [vmem:[%s468 + $0x98] sm:$0xff]
    %v489 = vld [vmem:[%s468 + $0xa0] sm:$0xff]
    %v490 = vld [vmem:[%s468 + $0xa8] sm:$0xff]
    %v491 = vld [vmem:[%s468 + $0xb0] sm:$0xff]
    %v492 = vld [vmem:[%s468 + $0xb8] sm:$0xff]
    %v493 = vld [vmem:[%s468 + $0xc0] sm:$0xff]
    %v494 = vld [vmem:[%s468 + $0xc8] sm:$0xff]
    %v495 = vld [vmem:[%s468 + $0xd0] sm:$0xff]
    %v496 = vld [vmem:[%s468 + $0xd8] sm:$0xff]
    %v497 = vld [vmem:[%s468 + $0xe0] sm:$0xff]
    %v498 = vld [vmem:[%s468 + $0xe8] sm:$0xff]
    %v499 = vld [vmem:[%s468 + $0xf0] sm:$0xff]
    %v500 = vld [vmem:[%s468 + $0xf8] sm:$0xff]
    %v501 = vld [vmem:[%s468 + $0x100] sm:$0xff]
    %v502 = vld [vmem:[%s468 + $0x108] sm:$0xff]
    %v503 = vld [vmem:[%s468 + $0x110] sm:$0xff]
    %v504 = vld [vmem:[%s468 + $0x118] sm:$0xff]
    %v505 = vld [vmem:[%s468 + $0x120] sm:$0xff]
    %v506 = vld [vmem:[%s468 + $0x128] sm:$0xff]
    %v507 = vld [vmem:[%s468 + $0x130] sm:$0xff]
    %v508 = vld [vmem:[%s468 + $0x138] sm:$0xff]
    %v509 = vld [vmem:[%s468 + $0x140] sm:$0xff]
    %v510 = vld [vmem:[%s468 + $0x148] sm:$0xff]
    %v511 = vld [vmem:[%s468 + $0x150] sm:$0xff]
    %v512 = vld [vmem:[%s468 + $0x158] sm:$0xff]
    %v513 = vld [vmem:[%s468 + $0x160] sm:$0xff]
    %v514 = vld [vmem:[%s468 + $0x168] sm:$0xff]
    %v515 = vld [vmem:[%s468 + $0x170] sm:$0xff]
    %v516 = vld [vmem:[%s468 + $0x178] sm:$0xff]
    %v517 = vld [vmem:[%s468 + $0x180] sm:$0xff]
    %v518 = vld [vmem:[%s468 + $0x188] sm:$0xff]
    %v519 = vld [vmem:[%s468 + $0x190] sm:$0xff]
    %v520 = vld [vmem:[%s468 + $0x198] sm:$0xff]
    %v521 = vld [vmem:[%s468 + $0x1a0] sm:$0xff]
    %v522 = vld [vmem:[%s468 + $0x1a8] sm:$0xff]
    %v523 = vld [vmem:[%s468 + $0x1b0] sm:$0xff]
    %v524 = vld [vmem:[%s468 + $0x1b8] sm:$0xff]
    %v525 = vld [vmem:[%s468 + $0x1c0] sm:$0xff]
    %v526 = vld [vmem:[%s468 + $0x1c8] sm:$0xff]
    %v527 = vld [vmem:[%s468 + $0x1d0] sm:$0xff]
    %v528 = vld [vmem:[%s468 + $0x1d8] sm:$0xff]
    %v529 = vld [vmem:[%s468 + $0x1e0] sm:$0xff]
    %v530 = vld [vmem:[%s468 + $0x1e8] sm:$0xff]
    %v531 = vld [vmem:[%s468 + $0x1f0] sm:$0xff]
    %v532 = vld [vmem:[%s468 + $0x1f8] sm:$0xff]
    %v533 = vld [vmem:[%s468 + $0x200] sm:$0xff]
    %v534 = vld [vmem:[%s468 + $0x208] sm:$0xff]
    %v535 = vld [vmem:[%s468 + $0x210] sm:$0xff]
    %v536 = vld [vmem:[%s468 + $0x218] sm:$0xff]
    %v537 = vld [vmem:[%s468 + $0x220] sm:$0xff]
    %v538 = vld [vmem:[%s468 + $0x228] sm:$0xff]
    %v539 = vld [vmem:[%s468 + $0x230] sm:$0xff]
    %v540 = vld [vmem:[%s468 + $0x238] sm:$0xff]
    %v541 = vld [vmem:[%s468 + $0x240] sm:$0xff]
    %v542 = vld [vmem:[%s468 + $0x248] sm:$0xff]
    %v543 = vld [vmem:[%s468 + $0x250] sm:$0xff]
    %v544 = vld [vmem:[%s468 + $0x258] sm:$0xff]
    %v545 = vld [vmem:[%s468 + $0x260] sm:$0xff]
    %v546 = vld [vmem:[%s468 + $0x268] sm:$0xff]
    %v547 = vld [vmem:[%s468 + $0x270] sm:$0xff]
    %v548 = vld [vmem:[%s468 + $0x278] sm:$0xff]
    %v549 = vld [vmem:[%s468 + $0x280] sm:$0xff]
    %v550 = vld [vmem:[%s468 + $0x288] sm:$0xff]
    %v551 = vld [vmem:[%s468 + $0x290] sm:$0xff]
    %v552 = vld [vmem:[%s468 + $0x298] sm:$0xff]
    %v553 = vld [vmem:[%s468 + $0x2a0] sm:$0xff]
    %v554 = vld [vmem:[%s468 + $0x2a8] sm:$0xff]
    %v555 = vld [vmem:[%s468 + $0x2b0] sm:$0xff]
    %v556 = vld [vmem:[%s468 + $0x2b8] sm:$0xff]
    %v557 = vld [vmem:[%s468 + $0x2c0] sm:$0xff]
    %v558 = vld [vmem:[%s468 + $0x2c8] sm:$0xff]
    %v559 = vld [vmem:[%s468 + $0x2d0] sm:$0xff]
    %v560 = vld [vmem:[%s468 + $0x2d8] sm:$0xff]
    %v561 = vld [vmem:[%s468 + $0x2e0] sm:$0xff]
    %v562 = vld [vmem:[%s468 + $0x2e8] sm:$0xff]
    %v563 = vld [vmem:[%s468 + $0x2f0] sm:$0xff]
    %v564 = vld [vmem:[%s468 + $0x2f8] sm:$0xff]
    %v565 = vld [vmem:[%s468 + $0x300] sm:$0xff]
    %v566 = vld [vmem:[%s468 + $0x308] sm:$0xff]
    %v567 = vld [vmem:[%s468 + $0x310] sm:$0xff]
    %v568 = vld [vmem:[%s468 + $0x318] sm:$0xff]
    %v569 = vld [vmem:[%s468 + $0x320] sm:$0xff]
    %v570 = vld [vmem:[%s468 + $0x328] sm:$0xff]
    %v571 = vld [vmem:[%s468 + $0x330] sm:$0xff]
    %v572 = vld [vmem:[%s468 + $0x338] sm:$0xff]
    %v573 = vld [vmem:[%s468 + $0x340] sm:$0xff]
    %v574 = vld [vmem:[%s468 + $0x348] sm:$0xff]
    %v575 = vld [vmem:[%s468 + $0x350] sm:$0xff]
    %v576 = vld [vmem:[%s468 + $0x358] sm:$0xff]
    %v577 = vld [vmem:[%s468 + $0x360] sm:$0xff]
    %v578 = vld [vmem:[%s468 + $0x368] sm:$0xff]
    %v579 = vld [vmem:[%s468 + $0x370] sm:$0xff]
    %v580 = vld [vmem:[%s468 + $0x378] sm:$0xff]
    %v581 = vld [vmem:[%s468 + $0x380] sm:$0xff]
    %v582 = vld [vmem:[%s468 + $0x388] sm:$0xff]
    %v583 = vld [vmem:[%s468 + $0x390] sm:$0xff]
    %v584 = vld [vmem:[%s468 + $0x398] sm:$0xff]
    %v585 = vld [vmem:[%s468 + $0x3a0] sm:$0xff]
    %v586 = vld [vmem:[%s468 + $0x3a8] sm:$0xff]
    %v587 = vld [vmem:[%s468 + $0x3b0] sm:$0xff]
    %v588 = vld [vmem:[%s468 + $0x3b8] sm:$0xff]
    %v589 = vld [vmem:[%s468 + $0x3c0] sm:$0xff]
    %v590 = vld [vmem:[%s468 + $0x3c8] sm:$0xff]
    %v591 = vld [vmem:[%s468 + $0x3d0] sm:$0xff]
    %v592 = vld [vmem:[%s468 + $0x3d8] sm:$0xff]
    %v593 = vld [vmem:[%s468 + $0x3e0] sm:$0xff]
    %v594 = vld [vmem:[%s468 + $0x3e8] sm:$0xff]
    %v595 = vld [vmem:[%s468 + $0x3f0] sm:$0xff]
    %v596 = vld [vmem:[%s468 + $0x3f8] sm:$0xff]
    %v597 = vld [vmem:[%s468 + $0x400] sm:$0xff]
    %v598 = vld [vmem:[%s468 + $0x408] sm:$0xff]
    %v599 = vld [vmem:[%s468 + $0x410] sm:$0xff]
    %v600 = vld [vmem:[%s468 + $0x418] sm:$0xff]
    %v601 = vld [vmem:[%s468 + $0x420] sm:$0xff]
    %v602 = vld [vmem:[%s468 + $0x428] sm:$0xff]
    %v603 = vld [vmem:[%s468 + $0x430] sm:$0xff]
    %v604 = vld [vmem:[%s468 + $0x438] sm:$0xff]
    %v605 = vld [vmem:[%s468 + $0x440] sm:$0xff]
    %v606 = vld [vmem:[%s468 + $0x448] sm:$0xff]
    %v607 = vld [vmem:[%s468 + $0x450] sm:$0xff]
    %v608 = vld [vmem:[%s468 + $0x458] sm:$0xff]
    %v609 = vld [vmem:[%s468 + $0x460] sm:$0xff]
    %v610 = vld [vmem:[%s468 + $0x468] sm:$0xff]
    %v611 = vld [vmem:[%s468 + $0x470] sm:$0xff]
    %v612 = vld [vmem:[%s468 + $0x478] sm:$0xff]
    %v613 = vld [vmem:[%s468 + $0x480] sm:$0xff]
    %v614 = vld [vmem:[%s468 + $0x488] sm:$0xff]
    %v615 = vld [vmem:[%s468 + $0x490] sm:$0xff]
    %v616 = vld [vmem:[%s468 + $0x498] sm:$0xff]
    %v617 = vld [vmem:[%s468 + $0x4a0] sm:$0xff]
    %v618 = vld [vmem:[%s468 + $0x4a8] sm:$0xff]
    %v619 = vld [vmem:[%s468 + $0x4b0] sm:$0xff]
    %v620 = vld [vmem:[%s468 + $0x4b8] sm:$0xff]
    %v621 = vld [vmem:[%s468 + $0x4c0] sm:$0xff]
    %v622 = vld [vmem:[%s468 + $0x4c8] sm:$0xff]
    %v623 = vld [vmem:[%s468 + $0x4d0] sm:$0xff]
    %v624 = vld [vmem:[%s468 + $0x4d8] sm:$0xff]
    %v625 = vld [vmem:[%s468 + $0x4e0] sm:$0xff]
    %v626 = vld [vmem:[%s468 + $0x4e8] sm:$0xff]
    %v627 = vld [vmem:[%s468 + $0x4f0] sm:$0xff]
    %v628 = vld [vmem:[%s468 + $0x4f8] sm:$0xff]
    %v629 = vld [vmem:[%s468 + $0x500] sm:$0xff]
    %v630 = vld [vmem:[%s468 + $0x508] sm:$0xff]
    %v631 = vld [vmem:[%s468 + $0x510] sm:$0xff]
    %v632 = vld [vmem:[%s468 + $0x518] sm:$0xff]
    %v633 = vld [vmem:[%s468 + $0x520] sm:$0xff]
    %v634 = vld [vmem:[%s468 + $0x528] sm:$0xff]
    %v635 = vld [vmem:[%s468 + $0x530] sm:$0xff]
    %v636 = vld [vmem:[%s468 + $0x538] sm:$0xff]
    %v637 = vld [vmem:[%s468 + $0x540] sm:$0xff]
    %v638 = vld [vmem:[%s468 + $0x548] sm:$0xff]
    %v639 = vld [vmem:[%s468 + $0x550] sm:$0xff]
    %v640 = vld [vmem:[%s468 + $0x558] sm:$0xff]
    %v641 = vld [vmem:[%s468 + $0x560] sm:$0xff]
    %v642 = vld [vmem:[%s468 + $0x568] sm:$0xff]
    %v643 = vld [vmem:[%s468 + $0x570] sm:$0xff]
    %v644 = vld [vmem:[%s468 + $0x578] sm:$0xff]
    %v645 = vld [vmem:[%s468 + $0x580] sm:$0xff]
    %v646 = vld [vmem:[%s468 + $0x588] sm:$0xff]
    %v647 = vld [vmem:[%s468 + $0x590] sm:$0xff]
    %v648 = vld [vmem:[%s468 + $0x598] sm:$0xff]
    %v649 = vld [vmem:[%s468 + $0x5a0] sm:$0xff]
    %v650 = vld [vmem:[%s468 + $0x5a8] sm:$0xff]
    %v651 = vld [vmem:[%s468 + $0x5b0] sm:$0xff]
    %v652 = vld [vmem:[%s468 + $0x5b8] sm:$0xff]
    %v653 = vld [vmem:[%s468 + $0x5c0] sm:$0xff]
    %v654 = vld [vmem:[%s468 + $0x5c8] sm:$0xff]
    %v655 = vld [vmem:[%s468 + $0x5d0] sm:$0xff]
    %v656 = vld [vmem:[%s468 + $0x5d8] sm:$0xff]
    %v657 = vld [vmem:[%s468 + $0x5e0] sm:$0xff]
    %v658 = vld [vmem:[%s468 + $0x5e8] sm:$0xff]
    %v659 = vld [vmem:[%s468 + $0x5f0] sm:$0xff]
    %v660 = vld [vmem:[%s468 + $0x5f8] sm:$0xff]
    %v661 = vld [vmem:[%s468 + $0x600] sm:$0xff]
    %v662 = vld [vmem:[%s468 + $0x608] sm:$0xff]
    %v663 = vld [vmem:[%s468 + $0x610] sm:$0xff]
    %v664 = vld [vmem:[%s468 + $0x618] sm:$0xff]
    %v665 = vld [vmem:[%s468 + $0x620] sm:$0xff]
    %v666 = vld [vmem:[%s468 + $0x628] sm:$0xff]
    %v667 = vld [vmem:[%s468 + $0x630] sm:$0xff]
    %v668 = vld [vmem:[%s468 + $0x638] sm:$0xff]
    %v669 = vld [vmem:[%s468 + $0x640] sm:$0xff]
    %v670 = vld [vmem:[%s468 + $0x648] sm:$0xff]
    %v671 = vld [vmem:[%s468 + $0x650] sm:$0xff]
    %v672 = vld [vmem:[%s468 + $0x658] sm:$0xff]
    %v673 = vld [vmem:[%s468 + $0x660] sm:$0xff]
    %v674 = vld [vmem:[%s468 + $0x668] sm:$0xff]
    %v675 = vld [vmem:[%s468 + $0x670] sm:$0xff]
    %v676 = vld [vmem:[%s468 + $0x678] sm:$0xff]
    %v677 = vld [vmem:[%s468 + $0x680] sm:$0xff]
    %v678 = vld [vmem:[%s468 + $0x688] sm:$0xff]
    %v679 = vld [vmem:[%s468 + $0x690] sm:$0xff]
    %v680 = vld [vmem:[%s468 + $0x698] sm:$0xff]
    %v681 = vld [vmem:[%s468 + $0x6a0] sm:$0xff]
    %v682 = vld [vmem:[%s468 + $0x6a8] sm:$0xff]
    %v683 = vld [vmem:[%s468 + $0x6b0] sm:$0xff]
    %v684 = vld [vmem:[%s468 + $0x6b8] sm:$0xff]
    %v685 = vld [vmem:[%s468 + $0x6c0] sm:$0xff]
    %v686 = vld [vmem:[%s468 + $0x6c8] sm:$0xff]
    %v687 = vld [vmem:[%s468 + $0x6d0] sm:$0xff]
    %v688 = vld [vmem:[%s468 + $0x6d8] sm:$0xff]
    %v689 = vld [vmem:[%s468 + $0x6e0] sm:$0xff]
    %v690 = vld [vmem:[%s468 + $0x6e8] sm:$0xff]
    %v691 = vld [vmem:[%s468 + $0x6f0] sm:$0xff]
    %v692 = vld [vmem:[%s468 + $0x6f8] sm:$0xff]
    %v693 = vld [vmem:[%s468 + $0x700] sm:$0xff]
    %v694 = vld [vmem:[%s468 + $0x708] sm:$0xff]
    %v695 = vld [vmem:[%s468 + $0x710] sm:$0xff]
    %v696 = vld [vmem:[%s468 + $0x718] sm:$0xff]
    %v697 = vld [vmem:[%s468 + $0x720] sm:$0xff]
    %v698 = vld [vmem:[%s468 + $0x728] sm:$0xff]
    %v699 = vld [vmem:[%s468 + $0x730] sm:$0xff]
    %v700 = vld [vmem:[%s468 + $0x738] sm:$0xff]
    %v701 = vld [vmem:[%s468 + $0x740] sm:$0xff]
    %v702 = vld [vmem:[%s468 + $0x748] sm:$0xff]
    %v703 = vld [vmem:[%s468 + $0x750] sm:$0xff]
    %v704 = vld [vmem:[%s468 + $0x758] sm:$0xff]
    %v705 = vld [vmem:[%s468 + $0x760] sm:$0xff]
    %v706 = vld [vmem:[%s468 + $0x768] sm:$0xff]
    %v707 = vld [vmem:[%s468 + $0x770] sm:$0xff]
    %v708 = vld [vmem:[%s468 + $0x778] sm:$0xff]
    %v709 = vld [vmem:[%s468 + $0x780] sm:$0xff]
    %v710 = vld [vmem:[%s468 + $0x788] sm:$0xff]
    %v711 = vld [vmem:[%s468 + $0x790] sm:$0xff]
    %v712 = vld [vmem:[%s468 + $0x798] sm:$0xff]
    %v713 = vld [vmem:[%s468 + $0x7a0] sm:$0xff]
    %v714 = vld [vmem:[%s468 + $0x7a8] sm:$0xff]
    %v715 = vld [vmem:[%s468 + $0x7b0] sm:$0xff]
    %v716 = vld [vmem:[%s468 + $0x7b8] sm:$0xff]
    %v717 = vld [vmem:[%s468 + $0x7c0] sm:$0xff]
    %v718 = vld [vmem:[%s468 + $0x7c8] sm:$0xff]
    %v719 = vld [vmem:[%s468 + $0x7d0] sm:$0xff]
    %v720 = vld [vmem:[%s468 + $0x7d8] sm:$0xff]
    %v721 = vld [vmem:[%s468 + $0x7e0] sm:$0xff]
    %v722 = vld [vmem:[%s468 + $0x7e8] sm:$0xff]
    %v723 = vld [vmem:[%s468 + $0x7f0] sm:$0xff]
    %v724 = vld [vmem:[%s468 + $0x7f8] sm:$0xff]
    %s725 = scalar_lea.vmem [#allocation4], 4096
    %v726 = vld [vmem:[%s725] sm:$0xff]
    %v727 = vld [vmem:[%s725 + $0x8] sm:$0xff]
    %v728 = vld [vmem:[%s725 + $0x10] sm:$0xff]
    %v729 = vld [vmem:[%s725 + $0x18] sm:$0xff]
    %v730 = vld [vmem:[%s725 + $0x20] sm:$0xff]
    %v731 = vld [vmem:[%s725 + $0x28] sm:$0xff]
    %v732 = vld [vmem:[%s725 + $0x30] sm:$0xff]
    %v733 = vld [vmem:[%s725 + $0x38] sm:$0xff]
    %v734 = vld [vmem:[%s725 + $0x40] sm:$0xff]
    %v735 = vld [vmem:[%s725 + $0x48] sm:$0xff]
    %v736 = vld [vmem:[%s725 + $0x50] sm:$0xff]
    %v737 = vld [vmem:[%s725 + $0x58] sm:$0xff]
    %v738 = vld [vmem:[%s725 + $0x60] sm:$0xff]
    %v739 = vld [vmem:[%s725 + $0x68] sm:$0xff]
    %v740 = vld [vmem:[%s725 + $0x70] sm:$0xff]
    %v741 = vld [vmem:[%s725 + $0x78] sm:$0xff]
    %v742 = vld [vmem:[%s725 + $0x80] sm:$0xff]
    %v743 = vld [vmem:[%s725 + $0x88] sm:$0xff]
    %v744 = vld [vmem:[%s725 + $0x90] sm:$0xff]
    %v745 = vld [vmem:[%s725 + $0x98] sm:$0xff]
    %v746 = vld [vmem:[%s725 + $0xa0] sm:$0xff]
    %v747 = vld [vmem:[%s725 + $0xa8] sm:$0xff]
    %v748 = vld [vmem:[%s725 + $0xb0] sm:$0xff]
    %v749 = vld [vmem:[%s725 + $0xb8] sm:$0xff]
    %v750 = vld [vmem:[%s725 + $0xc0] sm:$0xff]
    %v751 = vld [vmem:[%s725 + $0xc8] sm:$0xff]
    %v752 = vld [vmem:[%s725 + $0xd0] sm:$0xff]
    %v753 = vld [vmem:[%s725 + $0xd8] sm:$0xff]
    %v754 = vld [vmem:[%s725 + $0xe0] sm:$0xff]
    %v755 = vld [vmem:[%s725 + $0xe8] sm:$0xff]
    %v756 = vld [vmem:[%s725 + $0xf0] sm:$0xff]
    %v757 = vld [vmem:[%s725 + $0xf8] sm:$0xff]
    %v758 = vld [vmem:[%s725 + $0x100] sm:$0xff]
    %v759 = vld [vmem:[%s725 + $0x108] sm:$0xff]
    %v760 = vld [vmem:[%s725 + $0x110] sm:$0xff]
    %v761 = vld [vmem:[%s725 + $0x118] sm:$0xff]
    %v762 = vld [vmem:[%s725 + $0x120] sm:$0xff]
    %v763 = vld [vmem:[%s725 + $0x128] sm:$0xff]
    %v764 = vld [vmem:[%s725 + $0x130] sm:$0xff]
    %v765 = vld [vmem:[%s725 + $0x138] sm:$0xff]
    %v766 = vld [vmem:[%s725 + $0x140] sm:$0xff]
    %v767 = vld [vmem:[%s725 + $0x148] sm:$0xff]
    %v768 = vld [vmem:[%s725 + $0x150] sm:$0xff]
    %v769 = vld [vmem:[%s725 + $0x158] sm:$0xff]
    %v770 = vld [vmem:[%s725 + $0x160] sm:$0xff]
    %v771 = vld [vmem:[%s725 + $0x168] sm:$0xff]
    %v772 = vld [vmem:[%s725 + $0x170] sm:$0xff]
    %v773 = vld [vmem:[%s725 + $0x178] sm:$0xff]
    %v774 = vld [vmem:[%s725 + $0x180] sm:$0xff]
    %v775 = vld [vmem:[%s725 + $0x188] sm:$0xff]
    %v776 = vld [vmem:[%s725 + $0x190] sm:$0xff]
    %v777 = vld [vmem:[%s725 + $0x198] sm:$0xff]
    %v778 = vld [vmem:[%s725 + $0x1a0] sm:$0xff]
    %v779 = vld [vmem:[%s725 + $0x1a8] sm:$0xff]
    %v780 = vld [vmem:[%s725 + $0x1b0] sm:$0xff]
    %v781 = vld [vmem:[%s725 + $0x1b8] sm:$0xff]
    %v782 = vld [vmem:[%s725 + $0x1c0] sm:$0xff]
    %v783 = vld [vmem:[%s725 + $0x1c8] sm:$0xff]
    %v784 = vld [vmem:[%s725 + $0x1d0] sm:$0xff]
    %v785 = vld [vmem:[%s725 + $0x1d8] sm:$0xff]
    %v786 = vld [vmem:[%s725 + $0x1e0] sm:$0xff]
    %v787 = vld [vmem:[%s725 + $0x1e8] sm:$0xff]
    %v788 = vld [vmem:[%s725 + $0x1f0] sm:$0xff]
    %v789 = vld [vmem:[%s725 + $0x1f8] sm:$0xff]
    %v790 = vld [vmem:[%s725 + $0x200] sm:$0xff]
    %v791 = vld [vmem:[%s725 + $0x208] sm:$0xff]
    %v792 = vld [vmem:[%s725 + $0x210] sm:$0xff]
    %v793 = vld [vmem:[%s725 + $0x218] sm:$0xff]
    %v794 = vld [vmem:[%s725 + $0x220] sm:$0xff]
    %v795 = vld [vmem:[%s725 + $0x228] sm:$0xff]
    %v796 = vld [vmem:[%s725 + $0x230] sm:$0xff]
    %v797 = vld [vmem:[%s725 + $0x238] sm:$0xff]
    %v798 = vld [vmem:[%s725 + $0x240] sm:$0xff]
    %v799 = vld [vmem:[%s725 + $0x248] sm:$0xff]
    %v800 = vld [vmem:[%s725 + $0x250] sm:$0xff]
    %v801 = vld [vmem:[%s725 + $0x258] sm:$0xff]
    %v802 = vld [vmem:[%s725 + $0x260] sm:$0xff]
    %v803 = vld [vmem:[%s725 + $0x268] sm:$0xff]
    %v804 = vld [vmem:[%s725 + $0x270] sm:$0xff]
    %v805 = vld [vmem:[%s725 + $0x278] sm:$0xff]
    %v806 = vld [vmem:[%s725 + $0x280] sm:$0xff]
    %v807 = vld [vmem:[%s725 + $0x288] sm:$0xff]
    %v808 = vld [vmem:[%s725 + $0x290] sm:$0xff]
    %v809 = vld [vmem:[%s725 + $0x298] sm:$0xff]
    %v810 = vld [vmem:[%s725 + $0x2a0] sm:$0xff]
    %v811 = vld [vmem:[%s725 + $0x2a8] sm:$0xff]
    %v812 = vld [vmem:[%s725 + $0x2b0] sm:$0xff]
    %v813 = vld [vmem:[%s725 + $0x2b8] sm:$0xff]
    %v814 = vld [vmem:[%s725 + $0x2c0] sm:$0xff]
    %v815 = vld [vmem:[%s725 + $0x2c8] sm:$0xff]
    %v816 = vld [vmem:[%s725 + $0x2d0] sm:$0xff]
    %v817 = vld [vmem:[%s725 + $0x2d8] sm:$0xff]
    %v818 = vld [vmem:[%s725 + $0x2e0] sm:$0xff]
    %v819 = vld [vmem:[%s725 + $0x2e8] sm:$0xff]
    %v820 = vld [vmem:[%s725 + $0x2f0] sm:$0xff]
    %v821 = vld [vmem:[%s725 + $0x2f8] sm:$0xff]
    %v822 = vld [vmem:[%s725 + $0x300] sm:$0xff]
    %v823 = vld [vmem:[%s725 + $0x308] sm:$0xff]
    %v824 = vld [vmem:[%s725 + $0x310] sm:$0xff]
    %v825 = vld [vmem:[%s725 + $0x318] sm:$0xff]
    %v826 = vld [vmem:[%s725 + $0x320] sm:$0xff]
    %v827 = vld [vmem:[%s725 + $0x328] sm:$0xff]
    %v828 = vld [vmem:[%s725 + $0x330] sm:$0xff]
    %v829 = vld [vmem:[%s725 + $0x338] sm:$0xff]
    %v830 = vld [vmem:[%s725 + $0x340] sm:$0xff]
    %v831 = vld [vmem:[%s725 + $0x348] sm:$0xff]
    %v832 = vld [vmem:[%s725 + $0x350] sm:$0xff]
    %v833 = vld [vmem:[%s725 + $0x358] sm:$0xff]
    %v834 = vld [vmem:[%s725 + $0x360] sm:$0xff]
    %v835 = vld [vmem:[%s725 + $0x368] sm:$0xff]
    %v836 = vld [vmem:[%s725 + $0x370] sm:$0xff]
    %v837 = vld [vmem:[%s725 + $0x378] sm:$0xff]
    %v838 = vld [vmem:[%s725 + $0x380] sm:$0xff]
    %v839 = vld [vmem:[%s725 + $0x388] sm:$0xff]
    %v840 = vld [vmem:[%s725 + $0x390] sm:$0xff]
    %v841 = vld [vmem:[%s725 + $0x398] sm:$0xff]
    %v842 = vld [vmem:[%s725 + $0x3a0] sm:$0xff]
    %v843 = vld [vmem:[%s725 + $0x3a8] sm:$0xff]
    %v844 = vld [vmem:[%s725 + $0x3b0] sm:$0xff]
    %v845 = vld [vmem:[%s725 + $0x3b8] sm:$0xff]
    %v846 = vld [vmem:[%s725 + $0x3c0] sm:$0xff]
    %v847 = vld [vmem:[%s725 + $0x3c8] sm:$0xff]
    %v848 = vld [vmem:[%s725 + $0x3d0] sm:$0xff]
    %v849 = vld [vmem:[%s725 + $0x3d8] sm:$0xff]
    %v850 = vld [vmem:[%s725 + $0x3e0] sm:$0xff]
    %v851 = vld [vmem:[%s725 + $0x3e8] sm:$0xff]
    %v852 = vld [vmem:[%s725 + $0x3f0] sm:$0xff]
    %v853 = vld [vmem:[%s725 + $0x3f8] sm:$0xff]
    %v854 = vld [vmem:[%s725 + $0x400] sm:$0xff]
    %v855 = vld [vmem:[%s725 + $0x408] sm:$0xff]
    %v856 = vld [vmem:[%s725 + $0x410] sm:$0xff]
    %v857 = vld [vmem:[%s725 + $0x418] sm:$0xff]
    %v858 = vld [vmem:[%s725 + $0x420] sm:$0xff]
    %v859 = vld [vmem:[%s725 + $0x428] sm:$0xff]
    %v860 = vld [vmem:[%s725 + $0x430] sm:$0xff]
    %v861 = vld [vmem:[%s725 + $0x438] sm:$0xff]
    %v862 = vld [vmem:[%s725 + $0x440] sm:$0xff]
    %v863 = vld [vmem:[%s725 + $0x448] sm:$0xff]
    %v864 = vld [vmem:[%s725 + $0x450] sm:$0xff]
    %v865 = vld [vmem:[%s725 + $0x458] sm:$0xff]
    %v866 = vld [vmem:[%s725 + $0x460] sm:$0xff]
    %v867 = vld [vmem:[%s725 + $0x468] sm:$0xff]
    %v868 = vld [vmem:[%s725 + $0x470] sm:$0xff]
    %v869 = vld [vmem:[%s725 + $0x478] sm:$0xff]
    %v870 = vld [vmem:[%s725 + $0x480] sm:$0xff]
    %v871 = vld [vmem:[%s725 + $0x488] sm:$0xff]
    %v872 = vld [vmem:[%s725 + $0x490] sm:$0xff]
    %v873 = vld [vmem:[%s725 + $0x498] sm:$0xff]
    %v874 = vld [vmem:[%s725 + $0x4a0] sm:$0xff]
    %v875 = vld [vmem:[%s725 + $0x4a8] sm:$0xff]
    %v876 = vld [vmem:[%s725 + $0x4b0] sm:$0xff]
    %v877 = vld [vmem:[%s725 + $0x4b8] sm:$0xff]
    %v878 = vld [vmem:[%s725 + $0x4c0] sm:$0xff]
    %v879 = vld [vmem:[%s725 + $0x4c8] sm:$0xff]
    %v880 = vld [vmem:[%s725 + $0x4d0] sm:$0xff]
    %v881 = vld [vmem:[%s725 + $0x4d8] sm:$0xff]
    %v882 = vld [vmem:[%s725 + $0x4e0] sm:$0xff]
    %v883 = vld [vmem:[%s725 + $0x4e8] sm:$0xff]
    %v884 = vld [vmem:[%s725 + $0x4f0] sm:$0xff]
    %v885 = vld [vmem:[%s725 + $0x4f8] sm:$0xff]
    %v886 = vld [vmem:[%s725 + $0x500] sm:$0xff]
    %v887 = vld [vmem:[%s725 + $0x508] sm:$0xff]
    %v888 = vld [vmem:[%s725 + $0x510] sm:$0xff]
    %v889 = vld [vmem:[%s725 + $0x518] sm:$0xff]
    %v890 = vld [vmem:[%s725 + $0x520] sm:$0xff]
    %v891 = vld [vmem:[%s725 + $0x528] sm:$0xff]
    %v892 = vld [vmem:[%s725 + $0x530] sm:$0xff]
    %v893 = vld [vmem:[%s725 + $0x538] sm:$0xff]
    %v894 = vld [vmem:[%s725 + $0x540] sm:$0xff]
    %v895 = vld [vmem:[%s725 + $0x548] sm:$0xff]
    %v896 = vld [vmem:[%s725 + $0x550] sm:$0xff]
    %v897 = vld [vmem:[%s725 + $0x558] sm:$0xff]
    %v898 = vld [vmem:[%s725 + $0x560] sm:$0xff]
    %v899 = vld [vmem:[%s725 + $0x568] sm:$0xff]
    %v900 = vld [vmem:[%s725 + $0x570] sm:$0xff]
    %v901 = vld [vmem:[%s725 + $0x578] sm:$0xff]
    %v902 = vld [vmem:[%s725 + $0x580] sm:$0xff]
    %v903 = vld [vmem:[%s725 + $0x588] sm:$0xff]
    %v904 = vld [vmem:[%s725 + $0x590] sm:$0xff]
    %v905 = vld [vmem:[%s725 + $0x598] sm:$0xff]
    %v906 = vld [vmem:[%s725 + $0x5a0] sm:$0xff]
    %v907 = vld [vmem:[%s725 + $0x5a8] sm:$0xff]
    %v908 = vld [vmem:[%s725 + $0x5b0] sm:$0xff]
    %v909 = vld [vmem:[%s725 + $0x5b8] sm:$0xff]
    %v910 = vld [vmem:[%s725 + $0x5c0] sm:$0xff]
    %v911 = vld [vmem:[%s725 + $0x5c8] sm:$0xff]
    %v912 = vld [vmem:[%s725 + $0x5d0] sm:$0xff]
    %v913 = vld [vmem:[%s725 + $0x5d8] sm:$0xff]
    %v914 = vld [vmem:[%s725 + $0x5e0] sm:$0xff]
    %v915 = vld [vmem:[%s725 + $0x5e8] sm:$0xff]
    %v916 = vld [vmem:[%s725 + $0x5f0] sm:$0xff]
    %v917 = vld [vmem:[%s725 + $0x5f8] sm:$0xff]
    %v918 = vld [vmem:[%s725 + $0x600] sm:$0xff]
    %v919 = vld [vmem:[%s725 + $0x608] sm:$0xff]
    %v920 = vld [vmem:[%s725 + $0x610] sm:$0xff]
    %v921 = vld [vmem:[%s725 + $0x618] sm:$0xff]
    %v922 = vld [vmem:[%s725 + $0x620] sm:$0xff]
    %v923 = vld [vmem:[%s725 + $0x628] sm:$0xff]
    %v924 = vld [vmem:[%s725 + $0x630] sm:$0xff]
    %v925 = vld [vmem:[%s725 + $0x638] sm:$0xff]
    %v926 = vld [vmem:[%s725 + $0x640] sm:$0xff]
    %v927 = vld [vmem:[%s725 + $0x648] sm:$0xff]
    %v928 = vld [vmem:[%s725 + $0x650] sm:$0xff]
    %v929 = vld [vmem:[%s725 + $0x658] sm:$0xff]
    %v930 = vld [vmem:[%s725 + $0x660] sm:$0xff]
    %v931 = vld [vmem:[%s725 + $0x668] sm:$0xff]
    %v932 = vld [vmem:[%s725 + $0x670] sm:$0xff]
    %v933 = vld [vmem:[%s725 + $0x678] sm:$0xff]
    %v934 = vld [vmem:[%s725 + $0x680] sm:$0xff]
    %v935 = vld [vmem:[%s725 + $0x688] sm:$0xff]
    %v936 = vld [vmem:[%s725 + $0x690] sm:$0xff]
    %v937 = vld [vmem:[%s725 + $0x698] sm:$0xff]
    %v938 = vld [vmem:[%s725 + $0x6a0] sm:$0xff]
    %v939 = vld [vmem:[%s725 + $0x6a8] sm:$0xff]
    %v940 = vld [vmem:[%s725 + $0x6b0] sm:$0xff]
    %v941 = vld [vmem:[%s725 + $0x6b8] sm:$0xff]
    %v942 = vld [vmem:[%s725 + $0x6c0] sm:$0xff]
    %v943 = vld [vmem:[%s725 + $0x6c8] sm:$0xff]
    %v944 = vld [vmem:[%s725 + $0x6d0] sm:$0xff]
    %v945 = vld [vmem:[%s725 + $0x6d8] sm:$0xff]
    %v946 = vld [vmem:[%s725 + $0x6e0] sm:$0xff]
    %v947 = vld [vmem:[%s725 + $0x6e8] sm:$0xff]
    %v948 = vld [vmem:[%s725 + $0x6f0] sm:$0xff]
    %v949 = vld [vmem:[%s725 + $0x6f8] sm:$0xff]
    %v950 = vld [vmem:[%s725 + $0x700] sm:$0xff]
    %v951 = vld [vmem:[%s725 + $0x708] sm:$0xff]
    %v952 = vld [vmem:[%s725 + $0x710] sm:$0xff]
    %v953 = vld [vmem:[%s725 + $0x718] sm:$0xff]
    %v954 = vld [vmem:[%s725 + $0x720] sm:$0xff]
    %v955 = vld [vmem:[%s725 + $0x728] sm:$0xff]
    %v956 = vld [vmem:[%s725 + $0x730] sm:$0xff]
    %v957 = vld [vmem:[%s725 + $0x738] sm:$0xff]
    %v958 = vld [vmem:[%s725 + $0x740] sm:$0xff]
    %v959 = vld [vmem:[%s725 + $0x748] sm:$0xff]
    %v960 = vld [vmem:[%s725 + $0x750] sm:$0xff]
    %v961 = vld [vmem:[%s725 + $0x758] sm:$0xff]
    %v962 = vld [vmem:[%s725 + $0x760] sm:$0xff]
    %v963 = vld [vmem:[%s725 + $0x768] sm:$0xff]
    %v964 = vld [vmem:[%s725 + $0x770] sm:$0xff]
    %v965 = vld [vmem:[%s725 + $0x778] sm:$0xff]
    %v966 = vld [vmem:[%s725 + $0x780] sm:$0xff]
    %v967 = vld [vmem:[%s725 + $0x788] sm:$0xff]
    %v968 = vld [vmem:[%s725 + $0x790] sm:$0xff]
    %v969 = vld [vmem:[%s725 + $0x798] sm:$0xff]
    %v970 = vld [vmem:[%s725 + $0x7a0] sm:$0xff]
    %v971 = vld [vmem:[%s725 + $0x7a8] sm:$0xff]
    %v972 = vld [vmem:[%s725 + $0x7b0] sm:$0xff]
    %v973 = vld [vmem:[%s725 + $0x7b8] sm:$0xff]
    %v974 = vld [vmem:[%s725 + $0x7c0] sm:$0xff]
    %v975 = vld [vmem:[%s725 + $0x7c8] sm:$0xff]
    %v976 = vld [vmem:[%s725 + $0x7d0] sm:$0xff]
    %v977 = vld [vmem:[%s725 + $0x7d8] sm:$0xff]
    %v978 = vld [vmem:[%s725 + $0x7e0] sm:$0xff]
    %v979 = vld [vmem:[%s725 + $0x7e8] sm:$0xff]
    %v980 = vld [vmem:[%s725 + $0x7f0] sm:$0xff]
    %v981 = vld [vmem:[%s725 + $0x7f8] sm:$0xff]
    %v982 = vld [vmem:[#allocation6] sm:$0xff]
    %v983 = vld [vmem:[#allocation6 + $0x8] sm:$0xff]
    %v984 = vld [vmem:[#allocation6 + $0x10] sm:$0xff]
    %v985 = vld [vmem:[#allocation6 + $0x18] sm:$0xff]
    %v986 = vld [vmem:[#allocation6 + $0x20] sm:$0xff]
    %v987 = vld [vmem:[#allocation6 + $0x28] sm:$0xff]
    %v988 = vld [vmem:[#allocation6 + $0x30] sm:$0xff]
    %v989 = vld [vmem:[#allocation6 + $0x38] sm:$0xff]
    %v990 = vld [vmem:[#allocation6 + $0x40] sm:$0xff]
    %v991 = vld [vmem:[#allocation6 + $0x48] sm:$0xff]
    %v992 = vld [vmem:[#allocation6 + $0x50] sm:$0xff]
    %v993 = vld [vmem:[#allocation6 + $0x58] sm:$0xff]
    %v994 = vld [vmem:[#allocation6 + $0x60] sm:$0xff]
    %v995 = vld [vmem:[#allocation6 + $0x68] sm:$0xff]
    %v996 = vld [vmem:[#allocation6 + $0x70] sm:$0xff]
    %v997 = vld [vmem:[#allocation6 + $0x78] sm:$0xff]
    %v998 = vld [vmem:[#allocation6 + $0x80] sm:$0xff]
    %v999 = vld [vmem:[#allocation6 + $0x88] sm:$0xff]
    %v1000 = vld [vmem:[#allocation6 + $0x90] sm:$0xff]
    %v1001 = vld [vmem:[#allocation6 + $0x98] sm:$0xff]
    %v1002 = vld [vmem:[#allocation6 + $0xa0] sm:$0xff]
    %v1003 = vld [vmem:[#allocation6 + $0xa8] sm:$0xff]
    %v1004 = vld [vmem:[#allocation6 + $0xb0] sm:$0xff]
    %v1005 = vld [vmem:[#allocation6 + $0xb8] sm:$0xff]
    %v1006 = vld [vmem:[#allocation6 + $0xc0] sm:$0xff]
    %v1007 = vld [vmem:[#allocation6 + $0xc8] sm:$0xff]
    %v1008 = vld [vmem:[#allocation6 + $0xd0] sm:$0xff]
    %v1009 = vld [vmem:[#allocation6 + $0xd8] sm:$0xff]
    %v1010 = vld [vmem:[#allocation6 + $0xe0] sm:$0xff]
    %v1011 = vld [vmem:[#allocation6 + $0xe8] sm:$0xff]
    %v1012 = vld [vmem:[#allocation6 + $0xf0] sm:$0xff]
    %v1013 = vld [vmem:[#allocation6 + $0xf8] sm:$0xff]
    %v1014 = vld [vmem:[#allocation6 + $0x100] sm:$0xff]
    %v1015 = vld [vmem:[#allocation6 + $0x108] sm:$0xff]
    %v1016 = vld [vmem:[#allocation6 + $0x110] sm:$0xff]
    %v1017 = vld [vmem:[#allocation6 + $0x118] sm:$0xff]
    %v1018 = vld [vmem:[#allocation6 + $0x120] sm:$0xff]
    %v1019 = vld [vmem:[#allocation6 + $0x128] sm:$0xff]
    %v1020 = vld [vmem:[#allocation6 + $0x130] sm:$0xff]
    %v1021 = vld [vmem:[#allocation6 + $0x138] sm:$0xff]
    %v1022 = vld [vmem:[#allocation6 + $0x140] sm:$0xff]
    %v1023 = vld [vmem:[#allocation6 + $0x148] sm:$0xff]
    %v1024 = vld [vmem:[#allocation6 + $0x150] sm:$0xff]
    %v1025 = vld [vmem:[#allocation6 + $0x158] sm:$0xff]
    %v1026 = vld [vmem:[#allocation6 + $0x160] sm:$0xff]
    %v1027 = vld [vmem:[#allocation6 + $0x168] sm:$0xff]
    %v1028 = vld [vmem:[#allocation6 + $0x170] sm:$0xff]
    %v1029 = vld [vmem:[#allocation6 + $0x178] sm:$0xff]
    %v1030 = vld [vmem:[#allocation6 + $0x180] sm:$0xff]
    %v1031 = vld [vmem:[#allocation6 + $0x188] sm:$0xff]
    %v1032 = vld [vmem:[#allocation6 + $0x190] sm:$0xff]
    %v1033 = vld [vmem:[#allocation6 + $0x198] sm:$0xff]
    %v1034 = vld [vmem:[#allocation6 + $0x1a0] sm:$0xff]
    %v1035 = vld [vmem:[#allocation6 + $0x1a8] sm:$0xff]
    %v1036 = vld [vmem:[#allocation6 + $0x1b0] sm:$0xff]
    %v1037 = vld [vmem:[#allocation6 + $0x1b8] sm:$0xff]
    %v1038 = vld [vmem:[#allocation6 + $0x1c0] sm:$0xff]
    %v1039 = vld [vmem:[#allocation6 + $0x1c8] sm:$0xff]
    %v1040 = vld [vmem:[#allocation6 + $0x1d0] sm:$0xff]
    %v1041 = vld [vmem:[#allocation6 + $0x1d8] sm:$0xff]
    %v1042 = vld [vmem:[#allocation6 + $0x1e0] sm:$0xff]
    %v1043 = vld [vmem:[#allocation6 + $0x1e8] sm:$0xff]
    %v1044 = vld [vmem:[#allocation6 + $0x1f0] sm:$0xff]
    %v1045 = vld [vmem:[#allocation6 + $0x1f8] sm:$0xff]
    %s1046 = scalar_lea.vmem [#allocation6], 512
    %v1047 = vld [vmem:[%s1046] sm:$0xff]
    %v1048 = vld [vmem:[%s1046 + $0x8] sm:$0xff]
    %v1049 = vld [vmem:[%s1046 + $0x10] sm:$0xff]
    %v1050 = vld [vmem:[%s1046 + $0x18] sm:$0xff]
    %v1051 = vld [vmem:[%s1046 + $0x20] sm:$0xff]
    %v1052 = vld [vmem:[%s1046 + $0x28] sm:$0xff]
    %v1053 = vld [vmem:[%s1046 + $0x30] sm:$0xff]
    %v1054 = vld [vmem:[%s1046 + $0x38] sm:$0xff]
    %v1055 = vld [vmem:[%s1046 + $0x40] sm:$0xff]
    %v1056 = vld [vmem:[%s1046 + $0x48] sm:$0xff]
    %v1057 = vld [vmem:[%s1046 + $0x50] sm:$0xff]
    %v1058 = vld [vmem:[%s1046 + $0x58] sm:$0xff]
    %v1059 = vld [vmem:[%s1046 + $0x60] sm:$0xff]
    %v1060 = vld [vmem:[%s1046 + $0x68] sm:$0xff]
    %v1061 = vld [vmem:[%s1046 + $0x70] sm:$0xff]
    %v1062 = vld [vmem:[%s1046 + $0x78] sm:$0xff]
    %v1063 = vld [vmem:[%s1046 + $0x80] sm:$0xff]
    %v1064 = vld [vmem:[%s1046 + $0x88] sm:$0xff]
    %v1065 = vld [vmem:[%s1046 + $0x90] sm:$0xff]
    %v1066 = vld [vmem:[%s1046 + $0x98] sm:$0xff]
    %v1067 = vld [vmem:[%s1046 + $0xa0] sm:$0xff]
    %v1068 = vld [vmem:[%s1046 + $0xa8] sm:$0xff]
    %v1069 = vld [vmem:[%s1046 + $0xb0] sm:$0xff]
    %v1070 = vld [vmem:[%s1046 + $0xb8] sm:$0xff]
    %v1071 = vld [vmem:[%s1046 + $0xc0] sm:$0xff]
    %v1072 = vld [vmem:[%s1046 + $0xc8] sm:$0xff]
    %v1073 = vld [vmem:[%s1046 + $0xd0] sm:$0xff]
    %v1074 = vld [vmem:[%s1046 + $0xd8] sm:$0xff]
    %v1075 = vld [vmem:[%s1046 + $0xe0] sm:$0xff]
    %v1076 = vld [vmem:[%s1046 + $0xe8] sm:$0xff]
    %v1077 = vld [vmem:[%s1046 + $0xf0] sm:$0xff]
    %v1078 = vld [vmem:[%s1046 + $0xf8] sm:$0xff]
    %v1079 = vld [vmem:[%s1046 + $0x100] sm:$0xff]
    %v1080 = vld [vmem:[%s1046 + $0x108] sm:$0xff]
    %v1081 = vld [vmem:[%s1046 + $0x110] sm:$0xff]
    %v1082 = vld [vmem:[%s1046 + $0x118] sm:$0xff]
    %v1083 = vld [vmem:[%s1046 + $0x120] sm:$0xff]
    %v1084 = vld [vmem:[%s1046 + $0x128] sm:$0xff]
    %v1085 = vld [vmem:[%s1046 + $0x130] sm:$0xff]
    %v1086 = vld [vmem:[%s1046 + $0x138] sm:$0xff]
    %v1087 = vld [vmem:[%s1046 + $0x140] sm:$0xff]
    %v1088 = vld [vmem:[%s1046 + $0x148] sm:$0xff]
    %v1089 = vld [vmem:[%s1046 + $0x150] sm:$0xff]
    %v1090 = vld [vmem:[%s1046 + $0x158] sm:$0xff]
    %v1091 = vld [vmem:[%s1046 + $0x160] sm:$0xff]
    %v1092 = vld [vmem:[%s1046 + $0x168] sm:$0xff]
    %v1093 = vld [vmem:[%s1046 + $0x170] sm:$0xff]
    %v1094 = vld [vmem:[%s1046 + $0x178] sm:$0xff]
    %v1095 = vld [vmem:[%s1046 + $0x180] sm:$0xff]
    %v1096 = vld [vmem:[%s1046 + $0x188] sm:$0xff]
    %v1097 = vld [vmem:[%s1046 + $0x190] sm:$0xff]
    %v1098 = vld [vmem:[%s1046 + $0x198] sm:$0xff]
    %v1099 = vld [vmem:[%s1046 + $0x1a0] sm:$0xff]
    %v1100 = vld [vmem:[%s1046 + $0x1a8] sm:$0xff]
    %v1101 = vld [vmem:[%s1046 + $0x1b0] sm:$0xff]
    %v1102 = vld [vmem:[%s1046 + $0x1b8] sm:$0xff]
    %v1103 = vld [vmem:[%s1046 + $0x1c0] sm:$0xff]
    %v1104 = vld [vmem:[%s1046 + $0x1c8] sm:$0xff]
    %v1105 = vld [vmem:[%s1046 + $0x1d0] sm:$0xff]
    %v1106 = vld [vmem:[%s1046 + $0x1d8] sm:$0xff]
    %v1107 = vld [vmem:[%s1046 + $0x1e0] sm:$0xff]
    %v1108 = vld [vmem:[%s1046 + $0x1e8] sm:$0xff]
    %v1109 = vld [vmem:[%s1046 + $0x1f0] sm:$0xff]
    %v1110 = vld [vmem:[%s1046 + $0x1f8] sm:$0xff]
    %s1111 = scalar_lea.vmem [#allocation6], 1024
    %v1112 = vld [vmem:[%s1111] sm:$0xff]
    %v1113 = vld [vmem:[%s1111 + $0x8] sm:$0xff]
    %v1114 = vld [vmem:[%s1111 + $0x10] sm:$0xff]
    %v1115 = vld [vmem:[%s1111 + $0x18] sm:$0xff]
    %v1116 = vld [vmem:[%s1111 + $0x20] sm:$0xff]
    %v1117 = vld [vmem:[%s1111 + $0x28] sm:$0xff]
    %v1118 = vld [vmem:[%s1111 + $0x30] sm:$0xff]
    %v1119 = vld [vmem:[%s1111 + $0x38] sm:$0xff]
    %v1120 = vld [vmem:[%s1111 + $0x40] sm:$0xff]
    %v1121 = vld [vmem:[%s1111 + $0x48] sm:$0xff]
    %v1122 = vld [vmem:[%s1111 + $0x50] sm:$0xff]
    %v1123 = vld [vmem:[%s1111 + $0x58] sm:$0xff]
    %v1124 = vld [vmem:[%s1111 + $0x60] sm:$0xff]
    %v1125 = vld [vmem:[%s1111 + $0x68] sm:$0xff]
    %v1126 = vld [vmem:[%s1111 + $0x70] sm:$0xff]
    %v1127 = vld [vmem:[%s1111 + $0x78] sm:$0xff]
    %v1128 = vld [vmem:[%s1111 + $0x80] sm:$0xff]
    %v1129 = vld [vmem:[%s1111 + $0x88] sm:$0xff]
    %v1130 = vld [vmem:[%s1111 + $0x90] sm:$0xff]
    %v1131 = vld [vmem:[%s1111 + $0x98] sm:$0xff]
    %v1132 = vld [vmem:[%s1111 + $0xa0] sm:$0xff]
    %v1133 = vld [vmem:[%s1111 + $0xa8] sm:$0xff]
    %v1134 = vld [vmem:[%s1111 + $0xb0] sm:$0xff]
    %v1135 = vld [vmem:[%s1111 + $0xb8] sm:$0xff]
    %v1136 = vld [vmem:[%s1111 + $0xc0] sm:$0xff]
    %v1137 = vld [vmem:[%s1111 + $0xc8] sm:$0xff]
    %v1138 = vld [vmem:[%s1111 + $0xd0] sm:$0xff]
    %v1139 = vld [vmem:[%s1111 + $0xd8] sm:$0xff]
    %v1140 = vld [vmem:[%s1111 + $0xe0] sm:$0xff]
    %v1141 = vld [vmem:[%s1111 + $0xe8] sm:$0xff]
    %v1142 = vld [vmem:[%s1111 + $0xf0] sm:$0xff]
    %v1143 = vld [vmem:[%s1111 + $0xf8] sm:$0xff]
    %v1144 = vld [vmem:[%s1111 + $0x100] sm:$0xff]
    %v1145 = vld [vmem:[%s1111 + $0x108] sm:$0xff]
    %v1146 = vld [vmem:[%s1111 + $0x110] sm:$0xff]
    %v1147 = vld [vmem:[%s1111 + $0x118] sm:$0xff]
    %v1148 = vld [vmem:[%s1111 + $0x120] sm:$0xff]
    %v1149 = vld [vmem:[%s1111 + $0x128] sm:$0xff]
    %v1150 = vld [vmem:[%s1111 + $0x130] sm:$0xff]
    %v1151 = vld [vmem:[%s1111 + $0x138] sm:$0xff]
    %v1152 = vld [vmem:[%s1111 + $0x140] sm:$0xff]
    %v1153 = vld [vmem:[%s1111 + $0x148] sm:$0xff]
    %v1154 = vld [vmem:[%s1111 + $0x150] sm:$0xff]
    %v1155 = vld [vmem:[%s1111 + $0x158] sm:$0xff]
    %v1156 = vld [vmem:[%s1111 + $0x160] sm:$0xff]
    %v1157 = vld [vmem:[%s1111 + $0x168] sm:$0xff]
    %v1158 = vld [vmem:[%s1111 + $0x170] sm:$0xff]
    %v1159 = vld [vmem:[%s1111 + $0x178] sm:$0xff]
    %v1160 = vld [vmem:[%s1111 + $0x180] sm:$0xff]
    %v1161 = vld [vmem:[%s1111 + $0x188] sm:$0xff]
    %v1162 = vld [vmem:[%s1111 + $0x190] sm:$0xff]
    %v1163 = vld [vmem:[%s1111 + $0x198] sm:$0xff]
    %v1164 = vld [vmem:[%s1111 + $0x1a0] sm:$0xff]
    %v1165 = vld [vmem:[%s1111 + $0x1a8] sm:$0xff]
    %v1166 = vld [vmem:[%s1111 + $0x1b0] sm:$0xff]
    %v1167 = vld [vmem:[%s1111 + $0x1b8] sm:$0xff]
    %v1168 = vld [vmem:[%s1111 + $0x1c0] sm:$0xff]
    %v1169 = vld [vmem:[%s1111 + $0x1c8] sm:$0xff]
    %v1170 = vld [vmem:[%s1111 + $0x1d0] sm:$0xff]
    %v1171 = vld [vmem:[%s1111 + $0x1d8] sm:$0xff]
    %v1172 = vld [vmem:[%s1111 + $0x1e0] sm:$0xff]
    %v1173 = vld [vmem:[%s1111 + $0x1e8] sm:$0xff]
    %v1174 = vld [vmem:[%s1111 + $0x1f0] sm:$0xff]
    %v1175 = vld [vmem:[%s1111 + $0x1f8] sm:$0xff]
    %v1176 = vld [vmem:[#allocation12] ss:$8 sm:$0xf]
    %v1193 = vunpack.c.l.b16 %v164
    %v1194 = vunpack.c.h.b16 %v164
    %v1195 = vunpack.c.l.b16 %v165
    %v1196 = vunpack.c.h.b16 %v165
    %v1197 = vunpack.c.l.b16 %v166
    %v1198 = vunpack.c.h.b16 %v166
    %v1199 = vunpack.c.l.b16 %v167
    %v1200 = vunpack.c.h.b16 %v167
    %v1201 = vunpack.c.l.b16 %v168
    %v1202 = vunpack.c.h.b16 %v168
    %v1203 = vunpack.c.l.b16 %v169
    %v1204 = vunpack.c.h.b16 %v169
    %v1205 = vunpack.c.l.b16 %v170
    %v1206 = vunpack.c.h.b16 %v170
    %v1207 = vunpack.c.l.b16 %v171
    %v1208 = vunpack.c.h.b16 %v171
    %v1209 = vunpack.c.l.b16 %v172
    %v1210 = vunpack.c.h.b16 %v172
    %v1211 = vunpack.c.l.b16 %v173
    %v1212 = vunpack.c.h.b16 %v173
    %v1213 = vunpack.c.l.b16 %v174
    %v1214 = vunpack.c.h.b16 %v174
    %v1215 = vunpack.c.l.b16 %v175
    %v1216 = vunpack.c.h.b16 %v175
    %v1217 = vunpack.c.l.b16 %v176
    %v1218 = vunpack.c.h.b16 %v176
    %v1219 = vunpack.c.l.b16 %v177
    %v1220 = vunpack.c.h.b16 %v177
    %v1221 = vunpack.c.l.b16 %v178
    %v1222 = vunpack.c.h.b16 %v178
    %v1223 = vunpack.c.l.b16 %v179
    %v1224 = vunpack.c.h.b16 %v179
    %v1225 = vpack.c.b16 %v1201, %v1193
    %v1226 = vpack.c.b16 %v1202, %v1194
    %v1227 = vpack.c.b16 %v1203, %v1195
    %v1228 = vpack.c.b16 %v1204, %v1196
    %v1229 = vpack.c.b16 %v1205, %v1197
    %v1230 = vpack.c.b16 %v1206, %v1198
    %v1231 = vpack.c.b16 %v1207, %v1199
    %v1232 = vpack.c.b16 %v1208, %v1200
    %v1233 = vpack.c.b16 %v1217, %v1209
    %v1234 = vpack.c.b16 %v1218, %v1210
    %v1235 = vpack.c.b16 %v1219, %v1211
    %v1236 = vpack.c.b16 %v1220, %v1212
    %v1237 = vpack.c.b16 %v1221, %v1213
    %v1238 = vpack.c.b16 %v1222, %v1214
    %v1239 = vpack.c.b16 %v1223, %v1215
    %v1240 = vpack.c.b16 %v1224, %v1216
    %v1513 = vunpack.c.l.b16 %v726
    %v1514 = vunpack.c.h.b16 %v726
    %v1515 = vunpack.c.l.b16 %v727
    %v1516 = vunpack.c.h.b16 %v727
    %v1517 = vunpack.c.l.b16 %v728
    %v1518 = vunpack.c.h.b16 %v728
    %v1519 = vunpack.c.l.b16 %v729
    %v1520 = vunpack.c.h.b16 %v729
    %v1521 = vunpack.c.l.b16 %v730
    %v1522 = vunpack.c.h.b16 %v730
    %v1523 = vunpack.c.l.b16 %v731
    %v1524 = vunpack.c.h.b16 %v731
    %v1525 = vunpack.c.l.b16 %v732
    %v1526 = vunpack.c.h.b16 %v732
    %v1527 = vunpack.c.l.b16 %v733
    %v1528 = vunpack.c.h.b16 %v733
    %v1529 = vunpack.c.l.b16 %v734
    %v1530 = vunpack.c.h.b16 %v734
    %v1531 = vunpack.c.l.b16 %v735
    %v1532 = vunpack.c.h.b16 %v735
    %v1533 = vunpack.c.l.b16 %v736
    %v1534 = vunpack.c.h.b16 %v736
    %v1535 = vunpack.c.l.b16 %v737
    %v1536 = vunpack.c.h.b16 %v737
    %v1537 = vunpack.c.l.b16 %v738
    %v1538 = vunpack.c.h.b16 %v738
    %v1539 = vunpack.c.l.b16 %v739
    %v1540 = vunpack.c.h.b16 %v739
    %v1541 = vunpack.c.l.b16 %v740
    %v1542 = vunpack.c.h.b16 %v740
    %v1543 = vunpack.c.l.b16 %v741
    %v1544 = vunpack.c.h.b16 %v741
    %v1545 = vunpack.c.l.b16 %v742
    %v1546 = vunpack.c.h.b16 %v742
    %v1547 = vunpack.c.l.b16 %v743
    %v1548 = vunpack.c.h.b16 %v743
    %v1549 = vunpack.c.l.b16 %v744
    %v1550 = vunpack.c.h.b16 %v744
    %v1551 = vunpack.c.l.b16 %v745
    %v1552 = vunpack.c.h.b16 %v745
    %v1553 = vunpack.c.l.b16 %v746
    %v1554 = vunpack.c.h.b16 %v746
    %v1555 = vunpack.c.l.b16 %v747
    %v1556 = vunpack.c.h.b16 %v747
    %v1557 = vunpack.c.l.b16 %v748
    %v1558 = vunpack.c.h.b16 %v748
    %v1559 = vunpack.c.l.b16 %v749
    %v1560 = vunpack.c.h.b16 %v749
    %v1561 = vunpack.c.l.b16 %v750
    %v1562 = vunpack.c.h.b16 %v750
    %v1563 = vunpack.c.l.b16 %v751
    %v1564 = vunpack.c.h.b16 %v751
    %v1565 = vunpack.c.l.b16 %v752
    %v1566 = vunpack.c.h.b16 %v752
    %v1567 = vunpack.c.l.b16 %v753
    %v1568 = vunpack.c.h.b16 %v753
    %v1569 = vunpack.c.l.b16 %v754
    %v1570 = vunpack.c.h.b16 %v754
    %v1571 = vunpack.c.l.b16 %v755
    %v1572 = vunpack.c.h.b16 %v755
    %v1573 = vunpack.c.l.b16 %v756
    %v1574 = vunpack.c.h.b16 %v756
    %v1575 = vunpack.c.l.b16 %v757
    %v1576 = vunpack.c.h.b16 %v757
    %v1577 = vunpack.c.l.b16 %v758
    %v1578 = vunpack.c.h.b16 %v758
    %v1579 = vunpack.c.l.b16 %v759
    %v1580 = vunpack.c.h.b16 %v759
    %v1581 = vunpack.c.l.b16 %v760
    %v1582 = vunpack.c.h.b16 %v760
    %v1583 = vunpack.c.l.b16 %v761
    %v1584 = vunpack.c.h.b16 %v761
    %v1585 = vunpack.c.l.b16 %v762
    %v1586 = vunpack.c.h.b16 %v762
    %v1587 = vunpack.c.l.b16 %v763
    %v1588 = vunpack.c.h.b16 %v763
    %v1589 = vunpack.c.l.b16 %v764
    %v1590 = vunpack.c.h.b16 %v764
    %v1591 = vunpack.c.l.b16 %v765
    %v1592 = vunpack.c.h.b16 %v765
    %v1593 = vunpack.c.l.b16 %v766
    %v1594 = vunpack.c.h.b16 %v766
    %v1595 = vunpack.c.l.b16 %v767
    %v1596 = vunpack.c.h.b16 %v767
    %v1597 = vunpack.c.l.b16 %v768
    %v1598 = vunpack.c.h.b16 %v768
    %v1599 = vunpack.c.l.b16 %v769
    %v1600 = vunpack.c.h.b16 %v769
    %v1601 = vunpack.c.l.b16 %v770
    %v1602 = vunpack.c.h.b16 %v770
    %v1603 = vunpack.c.l.b16 %v771
    %v1604 = vunpack.c.h.b16 %v771
    %v1605 = vunpack.c.l.b16 %v772
    %v1606 = vunpack.c.h.b16 %v772
    %v1607 = vunpack.c.l.b16 %v773
    %v1608 = vunpack.c.h.b16 %v773
    %v1609 = vunpack.c.l.b16 %v774
    %v1610 = vunpack.c.h.b16 %v774
    %v1611 = vunpack.c.l.b16 %v775
    %v1612 = vunpack.c.h.b16 %v775
    %v1613 = vunpack.c.l.b16 %v776
    %v1614 = vunpack.c.h.b16 %v776
    %v1615 = vunpack.c.l.b16 %v777
    %v1616 = vunpack.c.h.b16 %v777
    %v1617 = vunpack.c.l.b16 %v778
    %v1618 = vunpack.c.h.b16 %v778
    %v1619 = vunpack.c.l.b16 %v779
    %v1620 = vunpack.c.h.b16 %v779
    %v1621 = vunpack.c.l.b16 %v780
    %v1622 = vunpack.c.h.b16 %v780
    %v1623 = vunpack.c.l.b16 %v781
    %v1624 = vunpack.c.h.b16 %v781
    %v1625 = vunpack.c.l.b16 %v782
    %v1626 = vunpack.c.h.b16 %v782
    %v1627 = vunpack.c.l.b16 %v783
    %v1628 = vunpack.c.h.b16 %v783
    %v1629 = vunpack.c.l.b16 %v784
    %v1630 = vunpack.c.h.b16 %v784
    %v1631 = vunpack.c.l.b16 %v785
    %v1632 = vunpack.c.h.b16 %v785
    %v1633 = vunpack.c.l.b16 %v786
    %v1634 = vunpack.c.h.b16 %v786
    %v1635 = vunpack.c.l.b16 %v787
    %v1636 = vunpack.c.h.b16 %v787
    %v1637 = vunpack.c.l.b16 %v788
    %v1638 = vunpack.c.h.b16 %v788
    %v1639 = vunpack.c.l.b16 %v789
    %v1640 = vunpack.c.h.b16 %v789
    %v1641 = vunpack.c.l.b16 %v790
    %v1642 = vunpack.c.h.b16 %v790
    %v1643 = vunpack.c.l.b16 %v791
    %v1644 = vunpack.c.h.b16 %v791
    %v1645 = vunpack.c.l.b16 %v792
    %v1646 = vunpack.c.h.b16 %v792
    %v1647 = vunpack.c.l.b16 %v793
    %v1648 = vunpack.c.h.b16 %v793
    %v1649 = vunpack.c.l.b16 %v794
    %v1650 = vunpack.c.h.b16 %v794
    %v1651 = vunpack.c.l.b16 %v795
    %v1652 = vunpack.c.h.b16 %v795
    %v1653 = vunpack.c.l.b16 %v796
    %v1654 = vunpack.c.h.b16 %v796
    %v1655 = vunpack.c.l.b16 %v797
    %v1656 = vunpack.c.h.b16 %v797
    %v1657 = vunpack.c.l.b16 %v798
    %v1658 = vunpack.c.h.b16 %v798
    %v1659 = vunpack.c.l.b16 %v799
    %v1660 = vunpack.c.h.b16 %v799
    %v1661 = vunpack.c.l.b16 %v800
    %v1662 = vunpack.c.h.b16 %v800
    %v1663 = vunpack.c.l.b16 %v801
    %v1664 = vunpack.c.h.b16 %v801
    %v1665 = vunpack.c.l.b16 %v802
    %v1666 = vunpack.c.h.b16 %v802
    %v1667 = vunpack.c.l.b16 %v803
    %v1668 = vunpack.c.h.b16 %v803
    %v1669 = vunpack.c.l.b16 %v804
    %v1670 = vunpack.c.h.b16 %v804
    %v1671 = vunpack.c.l.b16 %v805
    %v1672 = vunpack.c.h.b16 %v805
    %v1673 = vunpack.c.l.b16 %v806
    %v1674 = vunpack.c.h.b16 %v806
    %v1675 = vunpack.c.l.b16 %v807
    %v1676 = vunpack.c.h.b16 %v807
    %v1677 = vunpack.c.l.b16 %v808
    %v1678 = vunpack.c.h.b16 %v808
    %v1679 = vunpack.c.l.b16 %v809
    %v1680 = vunpack.c.h.b16 %v809
    %v1681 = vunpack.c.l.b16 %v810
    %v1682 = vunpack.c.h.b16 %v810
    %v1683 = vunpack.c.l.b16 %v811
    %v1684 = vunpack.c.h.b16 %v811
    %v1685 = vunpack.c.l.b16 %v812
    %v1686 = vunpack.c.h.b16 %v812
    %v1687 = vunpack.c.l.b16 %v813
    %v1688 = vunpack.c.h.b16 %v813
    %v1689 = vunpack.c.l.b16 %v814
    %v1690 = vunpack.c.h.b16 %v814
    %v1691 = vunpack.c.l.b16 %v815
    %v1692 = vunpack.c.h.b16 %v815
    %v1693 = vunpack.c.l.b16 %v816
    %v1694 = vunpack.c.h.b16 %v816
    %v1695 = vunpack.c.l.b16 %v817
    %v1696 = vunpack.c.h.b16 %v817
    %v1697 = vunpack.c.l.b16 %v818
    %v1698 = vunpack.c.h.b16 %v818
    %v1699 = vunpack.c.l.b16 %v819
    %v1700 = vunpack.c.h.b16 %v819
    %v1701 = vunpack.c.l.b16 %v820
    %v1702 = vunpack.c.h.b16 %v820
    %v1703 = vunpack.c.l.b16 %v821
    %v1704 = vunpack.c.h.b16 %v821
    %v1705 = vunpack.c.l.b16 %v822
    %v1706 = vunpack.c.h.b16 %v822
    %v1707 = vunpack.c.l.b16 %v823
    %v1708 = vunpack.c.h.b16 %v823
    %v1709 = vunpack.c.l.b16 %v824
    %v1710 = vunpack.c.h.b16 %v824
    %v1711 = vunpack.c.l.b16 %v825
    %v1712 = vunpack.c.h.b16 %v825
    %v1713 = vunpack.c.l.b16 %v826
    %v1714 = vunpack.c.h.b16 %v826
    %v1715 = vunpack.c.l.b16 %v827
    %v1716 = vunpack.c.h.b16 %v827
    %v1717 = vunpack.c.l.b16 %v828
    %v1718 = vunpack.c.h.b16 %v828
    %v1719 = vunpack.c.l.b16 %v829
    %v1720 = vunpack.c.h.b16 %v829
    %v1721 = vunpack.c.l.b16 %v830
    %v1722 = vunpack.c.h.b16 %v830
    %v1723 = vunpack.c.l.b16 %v831
    %v1724 = vunpack.c.h.b16 %v831
    %v1725 = vunpack.c.l.b16 %v832
    %v1726 = vunpack.c.h.b16 %v832
    %v1727 = vunpack.c.l.b16 %v833
    %v1728 = vunpack.c.h.b16 %v833
    %v1729 = vunpack.c.l.b16 %v834
    %v1730 = vunpack.c.h.b16 %v834
    %v1731 = vunpack.c.l.b16 %v835
    %v1732 = vunpack.c.h.b16 %v835
    %v1733 = vunpack.c.l.b16 %v836
    %v1734 = vunpack.c.h.b16 %v836
    %v1735 = vunpack.c.l.b16 %v837
    %v1736 = vunpack.c.h.b16 %v837
    %v1737 = vunpack.c.l.b16 %v838
    %v1738 = vunpack.c.h.b16 %v838
    %v1739 = vunpack.c.l.b16 %v839
    %v1740 = vunpack.c.h.b16 %v839
    %v1741 = vunpack.c.l.b16 %v840
    %v1742 = vunpack.c.h.b16 %v840
    %v1743 = vunpack.c.l.b16 %v841
    %v1744 = vunpack.c.h.b16 %v841
    %v1745 = vunpack.c.l.b16 %v842
    %v1746 = vunpack.c.h.b16 %v842
    %v1747 = vunpack.c.l.b16 %v843
    %v1748 = vunpack.c.h.b16 %v843
    %v1749 = vunpack.c.l.b16 %v844
    %v1750 = vunpack.c.h.b16 %v844
    %v1751 = vunpack.c.l.b16 %v845
    %v1752 = vunpack.c.h.b16 %v845
    %v1753 = vunpack.c.l.b16 %v846
    %v1754 = vunpack.c.h.b16 %v846
    %v1755 = vunpack.c.l.b16 %v847
    %v1756 = vunpack.c.h.b16 %v847
    %v1757 = vunpack.c.l.b16 %v848
    %v1758 = vunpack.c.h.b16 %v848
    %v1759 = vunpack.c.l.b16 %v849
    %v1760 = vunpack.c.h.b16 %v849
    %v1761 = vunpack.c.l.b16 %v850
    %v1762 = vunpack.c.h.b16 %v850
    %v1763 = vunpack.c.l.b16 %v851
    %v1764 = vunpack.c.h.b16 %v851
    %v1765 = vunpack.c.l.b16 %v852
    %v1766 = vunpack.c.h.b16 %v852
    %v1767 = vunpack.c.l.b16 %v853
    %v1768 = vunpack.c.h.b16 %v853
    %v1769 = vunpack.c.l.b16 %v854
    %v1770 = vunpack.c.h.b16 %v854
    %v1771 = vunpack.c.l.b16 %v855
    %v1772 = vunpack.c.h.b16 %v855
    %v1773 = vunpack.c.l.b16 %v856
    %v1774 = vunpack.c.h.b16 %v856
    %v1775 = vunpack.c.l.b16 %v857
    %v1776 = vunpack.c.h.b16 %v857
    %v1777 = vunpack.c.l.b16 %v858
    %v1778 = vunpack.c.h.b16 %v858
    %v1779 = vunpack.c.l.b16 %v859
    %v1780 = vunpack.c.h.b16 %v859
    %v1781 = vunpack.c.l.b16 %v860
    %v1782 = vunpack.c.h.b16 %v860
    %v1783 = vunpack.c.l.b16 %v861
    %v1784 = vunpack.c.h.b16 %v861
    %v1785 = vunpack.c.l.b16 %v862
    %v1786 = vunpack.c.h.b16 %v862
    %v1787 = vunpack.c.l.b16 %v863
    %v1788 = vunpack.c.h.b16 %v863
    %v1789 = vunpack.c.l.b16 %v864
    %v1790 = vunpack.c.h.b16 %v864
    %v1791 = vunpack.c.l.b16 %v865
    %v1792 = vunpack.c.h.b16 %v865
    %v1793 = vunpack.c.l.b16 %v866
    %v1794 = vunpack.c.h.b16 %v866
    %v1795 = vunpack.c.l.b16 %v867
    %v1796 = vunpack.c.h.b16 %v867
    %v1797 = vunpack.c.l.b16 %v868
    %v1798 = vunpack.c.h.b16 %v868
    %v1799 = vunpack.c.l.b16 %v869
    %v1800 = vunpack.c.h.b16 %v869
    %v1801 = vunpack.c.l.b16 %v870
    %v1802 = vunpack.c.h.b16 %v870
    %v1803 = vunpack.c.l.b16 %v871
    %v1804 = vunpack.c.h.b16 %v871
    %v1805 = vunpack.c.l.b16 %v872
    %v1806 = vunpack.c.h.b16 %v872
    %v1807 = vunpack.c.l.b16 %v873
    %v1808 = vunpack.c.h.b16 %v873
    %v1809 = vunpack.c.l.b16 %v874
    %v1810 = vunpack.c.h.b16 %v874
    %v1811 = vunpack.c.l.b16 %v875
    %v1812 = vunpack.c.h.b16 %v875
    %v1813 = vunpack.c.l.b16 %v876
    %v1814 = vunpack.c.h.b16 %v876
    %v1815 = vunpack.c.l.b16 %v877
    %v1816 = vunpack.c.h.b16 %v877
    %v1817 = vunpack.c.l.b16 %v878
    %v1818 = vunpack.c.h.b16 %v878
    %v1819 = vunpack.c.l.b16 %v879
    %v1820 = vunpack.c.h.b16 %v879
    %v1821 = vunpack.c.l.b16 %v880
    %v1822 = vunpack.c.h.b16 %v880
    %v1823 = vunpack.c.l.b16 %v881
    %v1824 = vunpack.c.h.b16 %v881
    %v1825 = vunpack.c.l.b16 %v882
    %v1826 = vunpack.c.h.b16 %v882
    %v1827 = vunpack.c.l.b16 %v883
    %v1828 = vunpack.c.h.b16 %v883
    %v1829 = vunpack.c.l.b16 %v884
    %v1830 = vunpack.c.h.b16 %v884
    %v1831 = vunpack.c.l.b16 %v885
    %v1832 = vunpack.c.h.b16 %v885
    %v1833 = vunpack.c.l.b16 %v886
    %v1834 = vunpack.c.h.b16 %v886
    %v1835 = vunpack.c.l.b16 %v887
    %v1836 = vunpack.c.h.b16 %v887
    %v1837 = vunpack.c.l.b16 %v888
    %v1838 = vunpack.c.h.b16 %v888
    %v1839 = vunpack.c.l.b16 %v889
    %v1840 = vunpack.c.h.b16 %v889
    %v1841 = vunpack.c.l.b16 %v890
    %v1842 = vunpack.c.h.b16 %v890
    %v1843 = vunpack.c.l.b16 %v891
    %v1844 = vunpack.c.h.b16 %v891
    %v1845 = vunpack.c.l.b16 %v892
    %v1846 = vunpack.c.h.b16 %v892
    %v1847 = vunpack.c.l.b16 %v893
    %v1848 = vunpack.c.h.b16 %v893
    %v1849 = vunpack.c.l.b16 %v894
    %v1850 = vunpack.c.h.b16 %v894
    %v1851 = vunpack.c.l.b16 %v895
    %v1852 = vunpack.c.h.b16 %v895
    %v1853 = vunpack.c.l.b16 %v896
    %v1854 = vunpack.c.h.b16 %v896
    %v1855 = vunpack.c.l.b16 %v897
    %v1856 = vunpack.c.h.b16 %v897
    %v1857 = vunpack.c.l.b16 %v898
    %v1858 = vunpack.c.h.b16 %v898
    %v1859 = vunpack.c.l.b16 %v899
    %v1860 = vunpack.c.h.b16 %v899
    %v1861 = vunpack.c.l.b16 %v900
    %v1862 = vunpack.c.h.b16 %v900
    %v1863 = vunpack.c.l.b16 %v901
    %v1864 = vunpack.c.h.b16 %v901
    %v1865 = vunpack.c.l.b16 %v902
    %v1866 = vunpack.c.h.b16 %v902
    %v1867 = vunpack.c.l.b16 %v903
    %v1868 = vunpack.c.h.b16 %v903
    %v1869 = vunpack.c.l.b16 %v904
    %v1870 = vunpack.c.h.b16 %v904
    %v1871 = vunpack.c.l.b16 %v905
    %v1872 = vunpack.c.h.b16 %v905
    %v1873 = vunpack.c.l.b16 %v906
    %v1874 = vunpack.c.h.b16 %v906
    %v1875 = vunpack.c.l.b16 %v907
    %v1876 = vunpack.c.h.b16 %v907
    %v1877 = vunpack.c.l.b16 %v908
    %v1878 = vunpack.c.h.b16 %v908
    %v1879 = vunpack.c.l.b16 %v909
    %v1880 = vunpack.c.h.b16 %v909
    %v1881 = vunpack.c.l.b16 %v910
    %v1882 = vunpack.c.h.b16 %v910
    %v1883 = vunpack.c.l.b16 %v911
    %v1884 = vunpack.c.h.b16 %v911
    %v1885 = vunpack.c.l.b16 %v912
    %v1886 = vunpack.c.h.b16 %v912
    %v1887 = vunpack.c.l.b16 %v913
    %v1888 = vunpack.c.h.b16 %v913
    %v1889 = vunpack.c.l.b16 %v914
    %v1890 = vunpack.c.h.b16 %v914
    %v1891 = vunpack.c.l.b16 %v915
    %v1892 = vunpack.c.h.b16 %v915
    %v1893 = vunpack.c.l.b16 %v916
    %v1894 = vunpack.c.h.b16 %v916
    %v1895 = vunpack.c.l.b16 %v917
    %v1896 = vunpack.c.h.b16 %v917
    %v1897 = vunpack.c.l.b16 %v918
    %v1898 = vunpack.c.h.b16 %v918
    %v1899 = vunpack.c.l.b16 %v919
    %v1900 = vunpack.c.h.b16 %v919
    %v1901 = vunpack.c.l.b16 %v920
    %v1902 = vunpack.c.h.b16 %v920
    %v1903 = vunpack.c.l.b16 %v921
    %v1904 = vunpack.c.h.b16 %v921
    %v1905 = vunpack.c.l.b16 %v922
    %v1906 = vunpack.c.h.b16 %v922
    %v1907 = vunpack.c.l.b16 %v923
    %v1908 = vunpack.c.h.b16 %v923
    %v1909 = vunpack.c.l.b16 %v924
    %v1910 = vunpack.c.h.b16 %v924
    %v1911 = vunpack.c.l.b16 %v925
    %v1912 = vunpack.c.h.b16 %v925
    %v1913 = vunpack.c.l.b16 %v926
    %v1914 = vunpack.c.h.b16 %v926
    %v1915 = vunpack.c.l.b16 %v927
    %v1916 = vunpack.c.h.b16 %v927
    %v1917 = vunpack.c.l.b16 %v928
    %v1918 = vunpack.c.h.b16 %v928
    %v1919 = vunpack.c.l.b16 %v929
    %v1920 = vunpack.c.h.b16 %v929
    %v1921 = vunpack.c.l.b16 %v930
    %v1922 = vunpack.c.h.b16 %v930
    %v1923 = vunpack.c.l.b16 %v931
    %v1924 = vunpack.c.h.b16 %v931
    %v1925 = vunpack.c.l.b16 %v932
    %v1926 = vunpack.c.h.b16 %v932
    %v1927 = vunpack.c.l.b16 %v933
    %v1928 = vunpack.c.h.b16 %v933
    %v1929 = vunpack.c.l.b16 %v934
    %v1930 = vunpack.c.h.b16 %v934
    %v1931 = vunpack.c.l.b16 %v935
    %v1932 = vunpack.c.h.b16 %v935
    %v1933 = vunpack.c.l.b16 %v936
    %v1934 = vunpack.c.h.b16 %v936
    %v1935 = vunpack.c.l.b16 %v937
    %v1936 = vunpack.c.h.b16 %v937
    %v1937 = vunpack.c.l.b16 %v938
    %v1938 = vunpack.c.h.b16 %v938
    %v1939 = vunpack.c.l.b16 %v939
    %v1940 = vunpack.c.h.b16 %v939
    %v1941 = vunpack.c.l.b16 %v940
    %v1942 = vunpack.c.h.b16 %v940
    %v1943 = vunpack.c.l.b16 %v941
    %v1944 = vunpack.c.h.b16 %v941
    %v1945 = vunpack.c.l.b16 %v942
    %v1946 = vunpack.c.h.b16 %v942
    %v1947 = vunpack.c.l.b16 %v943
    %v1948 = vunpack.c.h.b16 %v943
    %v1949 = vunpack.c.l.b16 %v944
    %v1950 = vunpack.c.h.b16 %v944
    %v1951 = vunpack.c.l.b16 %v945
    %v1952 = vunpack.c.h.b16 %v945
    %v1953 = vunpack.c.l.b16 %v946
    %v1954 = vunpack.c.h.b16 %v946
    %v1955 = vunpack.c.l.b16 %v947
    %v1956 = vunpack.c.h.b16 %v947
    %v1957 = vunpack.c.l.b16 %v948
    %v1958 = vunpack.c.h.b16 %v948
    %v1959 = vunpack.c.l.b16 %v949
    %v1960 = vunpack.c.h.b16 %v949
    %v1961 = vunpack.c.l.b16 %v950
    %v1962 = vunpack.c.h.b16 %v950
    %v1963 = vunpack.c.l.b16 %v951
    %v1964 = vunpack.c.h.b16 %v951
    %v1965 = vunpack.c.l.b16 %v952
    %v1966 = vunpack.c.h.b16 %v952
    %v1967 = vunpack.c.l.b16 %v953
    %v1968 = vunpack.c.h.b16 %v953
    %v1969 = vunpack.c.l.b16 %v954
    %v1970 = vunpack.c.h.b16 %v954
    %v1971 = vunpack.c.l.b16 %v955
    %v1972 = vunpack.c.h.b16 %v955
    %v1973 = vunpack.c.l.b16 %v956
    %v1974 = vunpack.c.h.b16 %v956
    %v1975 = vunpack.c.l.b16 %v957
    %v1976 = vunpack.c.h.b16 %v957
    %v1977 = vunpack.c.l.b16 %v958
    %v1978 = vunpack.c.h.b16 %v958
    %v1979 = vunpack.c.l.b16 %v959
    %v1980 = vunpack.c.h.b16 %v959
    %v1981 = vunpack.c.l.b16 %v960
    %v1982 = vunpack.c.h.b16 %v960
    %v1983 = vunpack.c.l.b16 %v961
    %v1984 = vunpack.c.h.b16 %v961
    %v1985 = vunpack.c.l.b16 %v962
    %v1986 = vunpack.c.h.b16 %v962
    %v1987 = vunpack.c.l.b16 %v963
    %v1988 = vunpack.c.h.b16 %v963
    %v1989 = vunpack.c.l.b16 %v964
    %v1990 = vunpack.c.h.b16 %v964
    %v1991 = vunpack.c.l.b16 %v965
    %v1992 = vunpack.c.h.b16 %v965
    %v1993 = vunpack.c.l.b16 %v966
    %v1994 = vunpack.c.h.b16 %v966
    %v1995 = vunpack.c.l.b16 %v967
    %v1996 = vunpack.c.h.b16 %v967
    %v1997 = vunpack.c.l.b16 %v968
    %v1998 = vunpack.c.h.b16 %v968
    %v1999 = vunpack.c.l.b16 %v969
    %v2000 = vunpack.c.h.b16 %v969
    %v2001 = vunpack.c.l.b16 %v970
    %v2002 = vunpack.c.h.b16 %v970
    %v2003 = vunpack.c.l.b16 %v971
    %v2004 = vunpack.c.h.b16 %v971
    %v2005 = vunpack.c.l.b16 %v972
    %v2006 = vunpack.c.h.b16 %v972
    %v2007 = vunpack.c.l.b16 %v973
    %v2008 = vunpack.c.h.b16 %v973
    %v2009 = vunpack.c.l.b16 %v974
    %v2010 = vunpack.c.h.b16 %v974
    %v2011 = vunpack.c.l.b16 %v975
    %v2012 = vunpack.c.h.b16 %v975
    %v2013 = vunpack.c.l.b16 %v976
    %v2014 = vunpack.c.h.b16 %v976
    %v2015 = vunpack.c.l.b16 %v977
    %v2016 = vunpack.c.h.b16 %v977
    %v2017 = vunpack.c.l.b16 %v978
    %v2018 = vunpack.c.h.b16 %v978
    %v2019 = vunpack.c.l.b16 %v979
    %v2020 = vunpack.c.h.b16 %v979
    %v2021 = vunpack.c.l.b16 %v980
    %v2022 = vunpack.c.h.b16 %v980
    %v2023 = vunpack.c.l.b16 %v981
    %v2024 = vunpack.c.h.b16 %v981
    %v2025 = vpack.c.b16 %v1517, %v1513
    %v2026 = vpack.c.b16 %v1518, %v1514
    %v2027 = vpack.c.b16 %v1519, %v1515
    %v2028 = vpack.c.b16 %v1520, %v1516
    %v2029 = vpack.c.b16 %v1525, %v1521
    %v2030 = vpack.c.b16 %v1526, %v1522
    %v2031 = vpack.c.b16 %v1527, %v1523
    %v2032 = vpack.c.b16 %v1528, %v1524
    %v2033 = vpack.c.b16 %v1533, %v1529
    %v2034 = vpack.c.b16 %v1534, %v1530
    %v2035 = vpack.c.b16 %v1535, %v1531
    %v2036 = vpack.c.b16 %v1536, %v1532
    %v2037 = vpack.c.b16 %v1541, %v1537
    %v2038 = vpack.c.b16 %v1542, %v1538
    %v2039 = vpack.c.b16 %v1543, %v1539
    %v2040 = vpack.c.b16 %v1544, %v1540
    %v2041 = vpack.c.b16 %v1549, %v1545
    %v2042 = vpack.c.b16 %v1550, %v1546
    %v2043 = vpack.c.b16 %v1551, %v1547
    %v2044 = vpack.c.b16 %v1552, %v1548
    %v2045 = vpack.c.b16 %v1557, %v1553
    %v2046 = vpack.c.b16 %v1558, %v1554
    %v2047 = vpack.c.b16 %v1559, %v1555
    %v2048 = vpack.c.b16 %v1560, %v1556
    %v2049 = vpack.c.b16 %v1565, %v1561
    %v2050 = vpack.c.b16 %v1566, %v1562
    %v2051 = vpack.c.b16 %v1567, %v1563
    %v2052 = vpack.c.b16 %v1568, %v1564
    %v2053 = vpack.c.b16 %v1573, %v1569
    %v2054 = vpack.c.b16 %v1574, %v1570
    %v2055 = vpack.c.b16 %v1575, %v1571
    %v2056 = vpack.c.b16 %v1576, %v1572
    %v2057 = vpack.c.b16 %v1581, %v1577
    %v2058 = vpack.c.b16 %v1582, %v1578
    %v2059 = vpack.c.b16 %v1583, %v1579
    %v2060 = vpack.c.b16 %v1584, %v1580
    %v2061 = vpack.c.b16 %v1589, %v1585
    %v2062 = vpack.c.b16 %v1590, %v1586
    %v2063 = vpack.c.b16 %v1591, %v1587
    %v2064 = vpack.c.b16 %v1592, %v1588
    %v2065 = vpack.c.b16 %v1597, %v1593
    %v2066 = vpack.c.b16 %v1598, %v1594
    %v2067 = vpack.c.b16 %v1599, %v1595
    %v2068 = vpack.c.b16 %v1600, %v1596
    %v2069 = vpack.c.b16 %v1605, %v1601
    %v2070 = vpack.c.b16 %v1606, %v1602
    %v2071 = vpack.c.b16 %v1607, %v1603
    %v2072 = vpack.c.b16 %v1608, %v1604
    %v2073 = vpack.c.b16 %v1613, %v1609
    %v2074 = vpack.c.b16 %v1614, %v1610
    %v2075 = vpack.c.b16 %v1615, %v1611
    %v2076 = vpack.c.b16 %v1616, %v1612
    %v2077 = vpack.c.b16 %v1621, %v1617
    %v2078 = vpack.c.b16 %v1622, %v1618
    %v2079 = vpack.c.b16 %v1623, %v1619
    %v2080 = vpack.c.b16 %v1624, %v1620
    %v2081 = vpack.c.b16 %v1629, %v1625
    %v2082 = vpack.c.b16 %v1630, %v1626
    %v2083 = vpack.c.b16 %v1631, %v1627
    %v2084 = vpack.c.b16 %v1632, %v1628
    %v2085 = vpack.c.b16 %v1637, %v1633
    %v2086 = vpack.c.b16 %v1638, %v1634
    %v2087 = vpack.c.b16 %v1639, %v1635
    %v2088 = vpack.c.b16 %v1640, %v1636
    %v2089 = vpack.c.b16 %v1645, %v1641
    %v2090 = vpack.c.b16 %v1646, %v1642
    %v2091 = vpack.c.b16 %v1647, %v1643
    %v2092 = vpack.c.b16 %v1648, %v1644
    %v2093 = vpack.c.b16 %v1653, %v1649
    %v2094 = vpack.c.b16 %v1654, %v1650
    %v2095 = vpack.c.b16 %v1655, %v1651
    %v2096 = vpack.c.b16 %v1656, %v1652
    %v2097 = vpack.c.b16 %v1661, %v1657
    %v2098 = vpack.c.b16 %v1662, %v1658
    %v2099 = vpack.c.b16 %v1663, %v1659
    %v2100 = vpack.c.b16 %v1664, %v1660
    %v2101 = vpack.c.b16 %v1669, %v1665
    %v2102 = vpack.c.b16 %v1670, %v1666
    %v2103 = vpack.c.b16 %v1671, %v1667
    %v2104 = vpack.c.b16 %v1672, %v1668
    %v2105 = vpack.c.b16 %v1677, %v1673
    %v2106 = vpack.c.b16 %v1678, %v1674
    %v2107 = vpack.c.b16 %v1679, %v1675
    %v2108 = vpack.c.b16 %v1680, %v1676
    %v2109 = vpack.c.b16 %v1685, %v1681
    %v2110 = vpack.c.b16 %v1686, %v1682
    %v2111 = vpack.c.b16 %v1687, %v1683
    %v2112 = vpack.c.b16 %v1688, %v1684
    %v2113 = vpack.c.b16 %v1693, %v1689
    %v2114 = vpack.c.b16 %v1694, %v1690
    %v2115 = vpack.c.b16 %v1695, %v1691
    %v2116 = vpack.c.b16 %v1696, %v1692
    %v2117 = vpack.c.b16 %v1701, %v1697
    %v2118 = vpack.c.b16 %v1702, %v1698
    %v2119 = vpack.c.b16 %v1703, %v1699
    %v2120 = vpack.c.b16 %v1704, %v1700
    %v2121 = vpack.c.b16 %v1709, %v1705
    %v2122 = vpack.c.b16 %v1710, %v1706
    %v2123 = vpack.c.b16 %v1711, %v1707
    %v2124 = vpack.c.b16 %v1712, %v1708
    %v2125 = vpack.c.b16 %v1717, %v1713
    %v2126 = vpack.c.b16 %v1718, %v1714
    %v2127 = vpack.c.b16 %v1719, %v1715
    %v2128 = vpack.c.b16 %v1720, %v1716
    %v2129 = vpack.c.b16 %v1725, %v1721
    %v2130 = vpack.c.b16 %v1726, %v1722
    %v2131 = vpack.c.b16 %v1727, %v1723
    %v2132 = vpack.c.b16 %v1728, %v1724
    %v2133 = vpack.c.b16 %v1733, %v1729
    %v2134 = vpack.c.b16 %v1734, %v1730
    %v2135 = vpack.c.b16 %v1735, %v1731
    %v2136 = vpack.c.b16 %v1736, %v1732
    %v2137 = vpack.c.b16 %v1741, %v1737
    %v2138 = vpack.c.b16 %v1742, %v1738
    %v2139 = vpack.c.b16 %v1743, %v1739
    %v2140 = vpack.c.b16 %v1744, %v1740
    %v2141 = vpack.c.b16 %v1749, %v1745
    %v2142 = vpack.c.b16 %v1750, %v1746
    %v2143 = vpack.c.b16 %v1751, %v1747
    %v2144 = vpack.c.b16 %v1752, %v1748
    %v2145 = vpack.c.b16 %v1757, %v1753
    %v2146 = vpack.c.b16 %v1758, %v1754
    %v2147 = vpack.c.b16 %v1759, %v1755
    %v2148 = vpack.c.b16 %v1760, %v1756
    %v2149 = vpack.c.b16 %v1765, %v1761
    %v2150 = vpack.c.b16 %v1766, %v1762
    %v2151 = vpack.c.b16 %v1767, %v1763
    %v2152 = vpack.c.b16 %v1768, %v1764
    %v2153 = vpack.c.b16 %v1773, %v1769
    %v2154 = vpack.c.b16 %v1774, %v1770
    %v2155 = vpack.c.b16 %v1775, %v1771
    %v2156 = vpack.c.b16 %v1776, %v1772
    %v2157 = vpack.c.b16 %v1781, %v1777
    %v2158 = vpack.c.b16 %v1782, %v1778
    %v2159 = vpack.c.b16 %v1783, %v1779
    %v2160 = vpack.c.b16 %v1784, %v1780
    %v2161 = vpack.c.b16 %v1789, %v1785
    %v2162 = vpack.c.b16 %v1790, %v1786
    %v2163 = vpack.c.b16 %v1791, %v1787
    %v2164 = vpack.c.b16 %v1792, %v1788
    %v2165 = vpack.c.b16 %v1797, %v1793
    %v2166 = vpack.c.b16 %v1798, %v1794
    %v2167 = vpack.c.b16 %v1799, %v1795
    %v2168 = vpack.c.b16 %v1800, %v1796
    %v2169 = vpack.c.b16 %v1805, %v1801
    %v2170 = vpack.c.b16 %v1806, %v1802
    %v2171 = vpack.c.b16 %v1807, %v1803
    %v2172 = vpack.c.b16 %v1808, %v1804
    %v2173 = vpack.c.b16 %v1813, %v1809
    %v2174 = vpack.c.b16 %v1814, %v1810
    %v2175 = vpack.c.b16 %v1815, %v1811
    %v2176 = vpack.c.b16 %v1816, %v1812
    %v2177 = vpack.c.b16 %v1821, %v1817
    %v2178 = vpack.c.b16 %v1822, %v1818
    %v2179 = vpack.c.b16 %v1823, %v1819
    %v2180 = vpack.c.b16 %v1824, %v1820
    %v2181 = vpack.c.b16 %v1829, %v1825
    %v2182 = vpack.c.b16 %v1830, %v1826
    %v2183 = vpack.c.b16 %v1831, %v1827
    %v2184 = vpack.c.b16 %v1832, %v1828
    %v2185 = vpack.c.b16 %v1837, %v1833
    %v2186 = vpack.c.b16 %v1838, %v1834
    %v2187 = vpack.c.b16 %v1839, %v1835
    %v2188 = vpack.c.b16 %v1840, %v1836
    %v2189 = vpack.c.b16 %v1845, %v1841
    %v2190 = vpack.c.b16 %v1846, %v1842
    %v2191 = vpack.c.b16 %v1847, %v1843
    %v2192 = vpack.c.b16 %v1848, %v1844
    %v2193 = vpack.c.b16 %v1853, %v1849
    %v2194 = vpack.c.b16 %v1854, %v1850
    %v2195 = vpack.c.b16 %v1855, %v1851
    %v2196 = vpack.c.b16 %v1856, %v1852
    %v2197 = vpack.c.b16 %v1861, %v1857
    %v2198 = vpack.c.b16 %v1862, %v1858
    %v2199 = vpack.c.b16 %v1863, %v1859
    %v2200 = vpack.c.b16 %v1864, %v1860
    %v2201 = vpack.c.b16 %v1869, %v1865
    %v2202 = vpack.c.b16 %v1870, %v1866
    %v2203 = vpack.c.b16 %v1871, %v1867
    %v2204 = vpack.c.b16 %v1872, %v1868
    %v2205 = vpack.c.b16 %v1877, %v1873
    %v2206 = vpack.c.b16 %v1878, %v1874
    %v2207 = vpack.c.b16 %v1879, %v1875
    %v2208 = vpack.c.b16 %v1880, %v1876
    %v2209 = vpack.c.b16 %v1885, %v1881
    %v2210 = vpack.c.b16 %v1886, %v1882
    %v2211 = vpack.c.b16 %v1887, %v1883
    %v2212 = vpack.c.b16 %v1888, %v1884
    %v2213 = vpack.c.b16 %v1893, %v1889
    %v2214 = vpack.c.b16 %v1894, %v1890
    %v2215 = vpack.c.b16 %v1895, %v1891
    %v2216 = vpack.c.b16 %v1896, %v1892
    %v2217 = vpack.c.b16 %v1901, %v1897
    %v2218 = vpack.c.b16 %v1902, %v1898
    %v2219 = vpack.c.b16 %v1903, %v1899
    %v2220 = vpack.c.b16 %v1904, %v1900
    %v2221 = vpack.c.b16 %v1909, %v1905
    %v2222 = vpack.c.b16 %v1910, %v1906
    %v2223 = vpack.c.b16 %v1911, %v1907
    %v2224 = vpack.c.b16 %v1912, %v1908
    %v2225 = vpack.c.b16 %v1917, %v1913
    %v2226 = vpack.c.b16 %v1918, %v1914
    %v2227 = vpack.c.b16 %v1919, %v1915
    %v2228 = vpack.c.b16 %v1920, %v1916
    %v2229 = vpack.c.b16 %v1925, %v1921
    %v2230 = vpack.c.b16 %v1926, %v1922
    %v2231 = vpack.c.b16 %v1927, %v1923
    %v2232 = vpack.c.b16 %v1928, %v1924
    %v2233 = vpack.c.b16 %v1933, %v1929
    %v2234 = vpack.c.b16 %v1934, %v1930
    %v2235 = vpack.c.b16 %v1935, %v1931
    %v2236 = vpack.c.b16 %v1936, %v1932
    %v2237 = vpack.c.b16 %v1941, %v1937
    %v2238 = vpack.c.b16 %v1942, %v1938
    %v2239 = vpack.c.b16 %v1943, %v1939
    %v2240 = vpack.c.b16 %v1944, %v1940
    %v2241 = vpack.c.b16 %v1949, %v1945
    %v2242 = vpack.c.b16 %v1950, %v1946
    %v2243 = vpack.c.b16 %v1951, %v1947
    %v2244 = vpack.c.b16 %v1952, %v1948
    %v2245 = vpack.c.b16 %v1957, %v1953
    %v2246 = vpack.c.b16 %v1958, %v1954
    %v2247 = vpack.c.b16 %v1959, %v1955
    %v2248 = vpack.c.b16 %v1960, %v1956
    %v2249 = vpack.c.b16 %v1965, %v1961
    %v2250 = vpack.c.b16 %v1966, %v1962
    %v2251 = vpack.c.b16 %v1967, %v1963
    %v2252 = vpack.c.b16 %v1968, %v1964
    %v2253 = vpack.c.b16 %v1973, %v1969
    %v2254 = vpack.c.b16 %v1974, %v1970
    %v2255 = vpack.c.b16 %v1975, %v1971
    %v2256 = vpack.c.b16 %v1976, %v1972
    %v2257 = vpack.c.b16 %v1981, %v1977
    %v2258 = vpack.c.b16 %v1982, %v1978
    %v2259 = vpack.c.b16 %v1983, %v1979
    %v2260 = vpack.c.b16 %v1984, %v1980
    %v2261 = vpack.c.b16 %v1989, %v1985
    %v2262 = vpack.c.b16 %v1990, %v1986
    %v2263 = vpack.c.b16 %v1991, %v1987
    %v2264 = vpack.c.b16 %v1992, %v1988
    %v2265 = vpack.c.b16 %v1997, %v1993
    %v2266 = vpack.c.b16 %v1998, %v1994
    %v2267 = vpack.c.b16 %v1999, %v1995
    %v2268 = vpack.c.b16 %v2000, %v1996
    %v2269 = vpack.c.b16 %v2005, %v2001
    %v2270 = vpack.c.b16 %v2006, %v2002
    %v2271 = vpack.c.b16 %v2007, %v2003
    %v2272 = vpack.c.b16 %v2008, %v2004
    %v2273 = vpack.c.b16 %v2013, %v2009
    %v2274 = vpack.c.b16 %v2014, %v2010
    %v2275 = vpack.c.b16 %v2015, %v2011
    %v2276 = vpack.c.b16 %v2016, %v2012
    %v2277 = vpack.c.b16 %v2021, %v2017
    %v2278 = vpack.c.b16 %v2022, %v2018
    %v2279 = vpack.c.b16 %v2023, %v2019
    %v2280 = vpack.c.b16 %v2024, %v2020
    %2537 = vmatpush.bf16.msra.mxu0 %v2053
    %2538 = vmatpush.bf16.msra.mxu0 %v2049
    %2539 = vmatpush.bf16.msra.mxu0 %v2045
    %2540 = vmatpush.bf16.msra.mxu0 %v2041
    %2541 = vmatpush.bf16.msra.mxu0 %v2037
    %2542 = vmatpush.bf16.msra.mxu0 %v2033
    %2543 = vmatpush.bf16.msra.mxu0 %v2029
    %2544 = vmatpush.bf16.msra.mxu0 %v2025
    %2545 = vmatmul.bf16.gmra.mxu0 %v1225
    %v2546 = vpop.f32.mrf.mxu0
    %v2547 = vadd.f32 0.0, %v2546
    %v2548 = vpop.f32.mrf.mxu0
    %v2549 = vadd.f32 0.0, %v2548
    %2550 = vmatmul.bf16.gmra.mxu0 %v1233
    %v2551 = vpop.f32.mrf.mxu0
    %v2552 = vadd.f32 0.0, %v2551
    %v2553 = vpop.f32.mrf.mxu0
    %v2554 = vadd.f32 0.0, %v2553
    %2555 = vdwg.mxu0
    %2556 = vmatpush.bf16.msra.mxu0 %v2085
    %2557 = vmatpush.bf16.msra.mxu0 %v2081
    %2558 = vmatpush.bf16.msra.mxu0 %v2077
    %2559 = vmatpush.bf16.msra.mxu0 %v2073
    %2560 = vmatpush.bf16.msra.mxu0 %v2069
    %2561 = vmatpush.bf16.msra.mxu0 %v2065
    %2562 = vmatpush.bf16.msra.mxu0 %v2061
    %2563 = vmatpush.bf16.msra.mxu0 %v2057
    %2564 = vmatmul.bf16.gmra.mxu0 %v1226
    %v2565 = vpop.f32.mrf.mxu0
    %v2566 = vadd.f32 %v2547, %v2565
    %v2567 = vpop.f32.mrf.mxu0
    %v2568 = vadd.f32 %v2549, %v2567
    %2569 = vmatmul.bf16.gmra.mxu0 %v1234
    %v2570 = vpop.f32.mrf.mxu0
    %v2571 = vadd.f32 %v2552, %v2570
    %v2572 = vpop.f32.mrf.mxu0
    %v2573 = vadd.f32 %v2554, %v2572
    %2574 = vdwg.mxu0
    %2575 = vmatpush.bf16.msra.mxu0 %v2117
    %2576 = vmatpush.bf16.msra.mxu0 %v2113
    %2577 = vmatpush.bf16.msra.mxu0 %v2109
    %2578 = vmatpush.bf16.msra.mxu0 %v2105
    %2579 = vmatpush.bf16.msra.mxu0 %v2101
    %2580 = vmatpush.bf16.msra.mxu0 %v2097
    %2581 = vmatpush.bf16.msra.mxu0 %v2093
    %2582 = vmatpush.bf16.msra.mxu0 %v2089
    %2583 = vmatmul.bf16.gmra.mxu0 %v1227
    %v2584 = vpop.f32.mrf.mxu0
    %v2585 = vadd.f32 %v2566, %v2584
    %v2586 = vpop.f32.mrf.mxu0
    %v2587 = vadd.f32 %v2568, %v2586
    %2588 = vmatmul.bf16.gmra.mxu0 %v1235
    %v2589 = vpop.f32.mrf.mxu0
    %v2590 = vadd.f32 %v2571, %v2589
    %v2591 = vpop.f32.mrf.mxu0
    %v2592 = vadd.f32 %v2573, %v2591
    %2593 = vdwg.mxu0
    %2594 = vmatpush.bf16.msra.mxu0 %v2149
    %2595 = vmatpush.bf16.msra.mxu0 %v2145
    %2596 = vmatpush.bf16.msra.mxu0 %v2141
    %2597 = vmatpush.bf16.msra.mxu0 %v2137
    %2598 = vmatpush.bf16.msra.mxu0 %v2133
    %2599 = vmatpush.bf16.msra.mxu0 %v2129
    %2600 = vmatpush.bf16.msra.mxu0 %v2125
    %2601 = vmatpush.bf16.msra.mxu0 %v2121
    %2602 = vmatmul.bf16.gmra.mxu0 %v1228
    %v2603 = vpop.f32.mrf.mxu0
    %v2604 = vadd.f32 %v2585, %v2603
    %v2605 = vpop.f32.mrf.mxu0
    %v2606 = vadd.f32 %v2587, %v2605
    %2607 = vmatmul.bf16.gmra.mxu0 %v1236
    %v2608 = vpop.f32.mrf.mxu0
    %v2609 = vadd.f32 %v2590, %v2608
    %v2610 = vpop.f32.mrf.mxu0
    %v2611 = vadd.f32 %v2592, %v2610
    %2612 = vdwg.mxu0
    %2613 = vmatpush.bf16.msra.mxu0 %v2181
    %2614 = vmatpush.bf16.msra.mxu0 %v2177
    %2615 = vmatpush.bf16.msra.mxu0 %v2173
    %2616 = vmatpush.bf16.msra.mxu0 %v2169
    %2617 = vmatpush.bf16.msra.mxu0 %v2165
    %2618 = vmatpush.bf16.msra.mxu0 %v2161
    %2619 = vmatpush.bf16.msra.mxu0 %v2157
    %2620 = vmatpush.bf16.msra.mxu0 %v2153
    %2621 = vmatmul.bf16.gmra.mxu0 %v1229
    %v2622 = vpop.f32.mrf.mxu0
    %v2623 = vadd.f32 %v2604, %v2622
    %v2624 = vpop.f32.mrf.mxu0
    %v2625 = vadd.f32 %v2606, %v2624
    %2626 = vmatmul.bf16.gmra.mxu0 %v1237
    %v2627 = vpop.f32.mrf.mxu0
    %v2628 = vadd.f32 %v2609, %v2627
    %v2629 = vpop.f32.mrf.mxu0
    %v2630 = vadd.f32 %v2611, %v2629
    %2631 = vdwg.mxu0
    %2632 = vmatpush.bf16.msra.mxu0 %v2213
    %2633 = vmatpush.bf16.msra.mxu0 %v2209
    %2634 = vmatpush.bf16.msra.mxu0 %v2205
    %2635 = vmatpush.bf16.msra.mxu0 %v2201
    %2636 = vmatpush.bf16.msra.mxu0 %v2197
    %2637 = vmatpush.bf16.msra.mxu0 %v2193
    %2638 = vmatpush.bf16.msra.mxu0 %v2189
    %2639 = vmatpush.bf16.msra.mxu0 %v2185
    %2640 = vmatmul.bf16.gmra.mxu0 %v1230
    %v2641 = vpop.f32.mrf.mxu0
    %v2642 = vadd.f32 %v2623, %v2641
    %v2643 = vpop.f32.mrf.mxu0
    %v2644 = vadd.f32 %v2625, %v2643
    %2645 = vmatmul.bf16.gmra.mxu0 %v1238
    %v2646 = vpop.f32.mrf.mxu0
    %v2647 = vadd.f32 %v2628, %v2646
    %v2648 = vpop.f32.mrf.mxu0
    %v2649 = vadd.f32 %v2630, %v2648
    %2650 = vdwg.mxu0
    %2651 = vmatpush.bf16.msra.mxu0 %v2245
    %2652 = vmatpush.bf16.msra.mxu0 %v2241
    %2653 = vmatpush.bf16.msra.mxu0 %v2237
    %2654 = vmatpush.bf16.msra.mxu0 %v2233
    %2655 = vmatpush.bf16.msra.mxu0 %v2229
    %2656 = vmatpush.bf16.msra.mxu0 %v2225
    %2657 = vmatpush.bf16.msra.mxu0 %v2221
    %2658 = vmatpush.bf16.msra.mxu0 %v2217
    %2659 = vmatmul.bf16.gmra.mxu0 %v1231
    %v2660 = vpop.f32.mrf.mxu0
    %v2661 = vadd.f32 %v2642, %v2660
    %v2662 = vpop.f32.mrf.mxu0
    %v2663 = vadd.f32 %v2644, %v2662
    %2664 = vmatmul.bf16.gmra.mxu0 %v1239
    %v2665 = vpop.f32.mrf.mxu0
    %v2666 = vadd.f32 %v2647, %v2665
    %v2667 = vpop.f32.mrf.mxu0
    %v2668 = vadd.f32 %v2649, %v2667
    %2669 = vdwg.mxu0
    %2670 = vmatpush.bf16.msra.mxu0 %v2277
    %2671 = vmatpush.bf16.msra.mxu0 %v2273
    %2672 = vmatpush.bf16.msra.mxu0 %v2269
    %2673 = vmatpush.bf16.msra.mxu0 %v2265
    %2674 = vmatpush.bf16.msra.mxu0 %v2261
    %2675 = vmatpush.bf16.msra.mxu0 %v2257
    %2676 = vmatpush.bf16.msra.mxu0 %v2253
    %2677 = vmatpush.bf16.msra.mxu0 %v2249
    %2678 = vmatmul.bf16.gmra.mxu0 %v1232
    %v2679 = vpop.f32.mrf.mxu0
    %v2680 = vadd.f32 %v2661, %v2679
    %v2681 = vpop.f32.mrf.mxu0
    %v2682 = vadd.f32 %v2663, %v2681
    %2683 = vmatmul.bf16.gmra.mxu0 %v1240
    %v2684 = vpop.f32.mrf.mxu0
    %v2685 = vadd.f32 %v2666, %v2684
    %v2686 = vpop.f32.mrf.mxu0
    %v2687 = vadd.f32 %v2668, %v2686
    %2688 = vdwg.mxu0
    %2689 = vmatpush.bf16.msra.mxu0 %v2054
    %2690 = vmatpush.bf16.msra.mxu0 %v2050
    %2691 = vmatpush.bf16.msra.mxu0 %v2046
    %2692 = vmatpush.bf16.msra.mxu0 %v2042
    %2693 = vmatpush.bf16.msra.mxu0 %v2038
    %2694 = vmatpush.bf16.msra.mxu0 %v2034
    %2695 = vmatpush.bf16.msra.mxu0 %v2030
    %2696 = vmatpush.bf16.msra.mxu0 %v2026
    %2697 = vmatmul.bf16.gmra.mxu0 %v1225
    %v2698 = vpop.f32.mrf.mxu0
    %v2699 = vadd.f32 0.0, %v2698
    %v2700 = vpop.f32.mrf.mxu0
    %v2701 = vadd.f32 0.0, %v2700
    %2702 = vmatmul.bf16.gmra.mxu0 %v1233
    %v2703 = vpop.f32.mrf.mxu0
    %v2704 = vadd.f32 0.0, %v2703
    %v2705 = vpop.f32.mrf.mxu0
    %v2706 = vadd.f32 0.0, %v2705
    %2707 = vdwg.mxu0
    %2708 = vmatpush.bf16.msra.mxu0 %v2086
    %2709 = vmatpush.bf16.msra.mxu0 %v2082
    %2710 = vmatpush.bf16.msra.mxu0 %v2078
    %2711 = vmatpush.bf16.msra.mxu0 %v2074
    %2712 = vmatpush.bf16.msra.mxu0 %v2070
    %2713 = vmatpush.bf16.msra.mxu0 %v2066
    %2714 = vmatpush.bf16.msra.mxu0 %v2062
    %2715 = vmatpush.bf16.msra.mxu0 %v2058
    %2716 = vmatmul.bf16.gmra.mxu0 %v1226
    %v2717 = vpop.f32.mrf.mxu0
    %v2718 = vadd.f32 %v2699, %v2717
    %v2719 = vpop.f32.mrf.mxu0
    %v2720 = vadd.f32 %v2701, %v2719
    %2721 = vmatmul.bf16.gmra.mxu0 %v1234
    %v2722 = vpop.f32.mrf.mxu0
    %v2723 = vadd.f32 %v2704, %v2722
    %v2724 = vpop.f32.mrf.mxu0
    %v2725 = vadd.f32 %v2706, %v2724
    %2726 = vdwg.mxu0
    %2727 = vmatpush.bf16.msra.mxu0 %v2118
    %2728 = vmatpush.bf16.msra.mxu0 %v2114
    %2729 = vmatpush.bf16.msra.mxu0 %v2110
    %2730 = vmatpush.bf16.msra.mxu0 %v2106
    %2731 = vmatpush.bf16.msra.mxu0 %v2102
    %2732 = vmatpush.bf16.msra.mxu0 %v2098
    %2733 = vmatpush.bf16.msra.mxu0 %v2094
    %2734 = vmatpush.bf16.msra.mxu0 %v2090
    %2735 = vmatmul.bf16.gmra.mxu0 %v1227
    %v2736 = vpop.f32.mrf.mxu0
    %v2737 = vadd.f32 %v2718, %v2736
    %v2738 = vpop.f32.mrf.mxu0
    %v2739 = vadd.f32 %v2720, %v2738
    %2740 = vmatmul.bf16.gmra.mxu0 %v1235
    %v2741 = vpop.f32.mrf.mxu0
    %v2742 = vadd.f32 %v2723, %v2741
    %v2743 = vpop.f32.mrf.mxu0
    %v2744 = vadd.f32 %v2725, %v2743
    %2745 = vdwg.mxu0
    %2746 = vmatpush.bf16.msra.mxu0 %v2150
    %2747 = vmatpush.bf16.msra.mxu0 %v2146
    %2748 = vmatpush.bf16.msra.mxu0 %v2142
    %2749 = vmatpush.bf16.msra.mxu0 %v2138
    %2750 = vmatpush.bf16.msra.mxu0 %v2134
    %2751 = vmatpush.bf16.msra.mxu0 %v2130
    %2752 = vmatpush.bf16.msra.mxu0 %v2126
    %2753 = vmatpush.bf16.msra.mxu0 %v2122
    %2754 = vmatmul.bf16.gmra.mxu0 %v1228
    %v2755 = vpop.f32.mrf.mxu0
    %v2756 = vadd.f32 %v2737, %v2755
    %v2757 = vpop.f32.mrf.mxu0
    %v2758 = vadd.f32 %v2739, %v2757
    %2759 = vmatmul.bf16.gmra.mxu0 %v1236
    %v2760 = vpop.f32.mrf.mxu0
    %v2761 = vadd.f32 %v2742, %v2760
    %v2762 = vpop.f32.mrf.mxu0
    %v2763 = vadd.f32 %v2744, %v2762
    %2764 = vdwg.mxu0
    %2765 = vmatpush.bf16.msra.mxu0 %v2182
    %2766 = vmatpush.bf16.msra.mxu0 %v2178
    %2767 = vmatpush.bf16.msra.mxu0 %v2174
    %2768 = vmatpush.bf16.msra.mxu0 %v2170
    %2769 = vmatpush.bf16.msra.mxu0 %v2166
    %2770 = vmatpush.bf16.msra.mxu0 %v2162
    %2771 = vmatpush.bf16.msra.mxu0 %v2158
    %2772 = vmatpush.bf16.msra.mxu0 %v2154
    %2773 = vmatmul.bf16.gmra.mxu0 %v1229
    %v2774 = vpop.f32.mrf.mxu0
    %v2775 = vadd.f32 %v2756, %v2774
    %v2776 = vpop.f32.mrf.mxu0
    %v2777 = vadd.f32 %v2758, %v2776
    %2778 = vmatmul.bf16.gmra.mxu0 %v1237
    %v2779 = vpop.f32.mrf.mxu0
    %v2780 = vadd.f32 %v2761, %v2779
    %v2781 = vpop.f32.mrf.mxu0
    %v2782 = vadd.f32 %v2763, %v2781
    %2783 = vdwg.mxu0
    %2784 = vmatpush.bf16.msra.mxu0 %v2214
    %2785 = vmatpush.bf16.msra.mxu0 %v2210
    %2786 = vmatpush.bf16.msra.mxu0 %v2206
    %2787 = vmatpush.bf16.msra.mxu0 %v2202
    %2788 = vmatpush.bf16.msra.mxu0 %v2198
    %2789 = vmatpush.bf16.msra.mxu0 %v2194
    %2790 = vmatpush.bf16.msra.mxu0 %v2190
    %2791 = vmatpush.bf16.msra.mxu0 %v2186
    %2792 = vmatmul.bf16.gmra.mxu0 %v1230
    %v2793 = vpop.f32.mrf.mxu0
    %v2794 = vadd.f32 %v2775, %v2793
    %v2795 = vpop.f32.mrf.mxu0
    %v2796 = vadd.f32 %v2777, %v2795
    %2797 = vmatmul.bf16.gmra.mxu0 %v1238
    %v2798 = vpop.f32.mrf.mxu0
    %v2799 = vadd.f32 %v2780, %v2798
    %v2800 = vpop.f32.mrf.mxu0
    %v2801 = vadd.f32 %v2782, %v2800
    %2802 = vdwg.mxu0
    %2803 = vmatpush.bf16.msra.mxu0 %v2246
    %2804 = vmatpush.bf16.msra.mxu0 %v2242
    %2805 = vmatpush.bf16.msra.mxu0 %v2238
    %2806 = vmatpush.bf16.msra.mxu0 %v2234
    %2807 = vmatpush.bf16.msra.mxu0 %v2230
    %2808 = vmatpush.bf16.msra.mxu0 %v2226
    %2809 = vmatpush.bf16.msra.mxu0 %v2222
    %2810 = vmatpush.bf16.msra.mxu0 %v2218
    %2811 = vmatmul.bf16.gmra.mxu0 %v1231
    %v2812 = vpop.f32.mrf.mxu0
    %v2813 = vadd.f32 %v2794, %v2812
    %v2814 = vpop.f32.mrf.mxu0
    %v2815 = vadd.f32 %v2796, %v2814
    %2816 = vmatmul.bf16.gmra.mxu0 %v1239
    %v2817 = vpop.f32.mrf.mxu0
    %v2818 = vadd.f32 %v2799, %v2817
    %v2819 = vpop.f32.mrf.mxu0
    %v2820 = vadd.f32 %v2801, %v2819
    %2821 = vdwg.mxu0
    %2822 = vmatpush.bf16.msra.mxu0 %v2278
    %2823 = vmatpush.bf16.msra.mxu0 %v2274
    %2824 = vmatpush.bf16.msra.mxu0 %v2270
    %2825 = vmatpush.bf16.msra.mxu0 %v2266
    %2826 = vmatpush.bf16.msra.mxu0 %v2262
    %2827 = vmatpush.bf16.msra.mxu0 %v2258
    %2828 = vmatpush.bf16.msra.mxu0 %v2254
    %2829 = vmatpush.bf16.msra.mxu0 %v2250
    %2830 = vmatmul.bf16.gmra.mxu0 %v1232
    %v2831 = vpop.f32.mrf.mxu0
    %v2832 = vadd.f32 %v2813, %v2831
    %v2833 = vpop.f32.mrf.mxu0
    %v2834 = vadd.f32 %v2815, %v2833
    %2835 = vmatmul.bf16.gmra.mxu0 %v1240
    %v2836 = vpop.f32.mrf.mxu0
    %v2837 = vadd.f32 %v2818, %v2836
    %v2838 = vpop.f32.mrf.mxu0
    %v2839 = vadd.f32 %v2820, %v2838
    %2840 = vdwg.mxu0
    %2841 = vmatpush.bf16.msra.mxu0 %v2055
    %2842 = vmatpush.bf16.msra.mxu0 %v2051
    %2843 = vmatpush.bf16.msra.mxu0 %v2047
    %2844 = vmatpush.bf16.msra.mxu0 %v2043
    %2845 = vmatpush.bf16.msra.mxu0 %v2039
    %2846 = vmatpush.bf16.msra.mxu0 %v2035
    %2847 = vmatpush.bf16.msra.mxu0 %v2031
    %2848 = vmatpush.bf16.msra.mxu0 %v2027
    %2849 = vmatmul.bf16.gmra.mxu0 %v1225
    %v2850 = vpop.f32.mrf.mxu0
    %v2851 = vadd.f32 0.0, %v2850
    %v2852 = vpop.f32.mrf.mxu0
    %v2853 = vadd.f32 0.0, %v2852
    %2854 = vmatmul.bf16.gmra.mxu0 %v1233
    %v2855 = vpop.f32.mrf.mxu0
    %v2856 = vadd.f32 0.0, %v2855
    %v2857 = vpop.f32.mrf.mxu0
    %v2858 = vadd.f32 0.0, %v2857
    %2859 = vdwg.mxu0
    %2860 = vmatpush.bf16.msra.mxu0 %v2087
    %2861 = vmatpush.bf16.msra.mxu0 %v2083
    %2862 = vmatpush.bf16.msra.mxu0 %v2079
    %2863 = vmatpush.bf16.msra.mxu0 %v2075
    %2864 = vmatpush.bf16.msra.mxu0 %v2071
    %2865 = vmatpush.bf16.msra.mxu0 %v2067
    %2866 = vmatpush.bf16.msra.mxu0 %v2063
    %2867 = vmatpush.bf16.msra.mxu0 %v2059
    %2868 = vmatmul.bf16.gmra.mxu0 %v1226
    %v2869 = vpop.f32.mrf.mxu0
    %v2870 = vadd.f32 %v2851, %v2869
    %v2871 = vpop.f32.mrf.mxu0
    %v2872 = vadd.f32 %v2853, %v2871
    %2873 = vmatmul.bf16.gmra.mxu0 %v1234
    %v2874 = vpop.f32.mrf.mxu0
    %v2875 = vadd.f32 %v2856, %v2874
    %v2876 = vpop.f32.mrf.mxu0
    %v2877 = vadd.f32 %v2858, %v2876
    %2878 = vdwg.mxu0
    %2879 = vmatpush.bf16.msra.mxu0 %v2119
    %2880 = vmatpush.bf16.msra.mxu0 %v2115
    %2881 = vmatpush.bf16.msra.mxu0 %v2111
    %2882 = vmatpush.bf16.msra.mxu0 %v2107
    %2883 = vmatpush.bf16.msra.mxu0 %v2103
    %2884 = vmatpush.bf16.msra.mxu0 %v2099
    %2885 = vmatpush.bf16.msra.mxu0 %v2095
    %2886 = vmatpush.bf16.msra.mxu0 %v2091
    %2887 = vmatmul.bf16.gmra.mxu0 %v1227
    %v2888 = vpop.f32.mrf.mxu0
    %v2889 = vadd.f32 %v2870, %v2888
    %v2890 = vpop.f32.mrf.mxu0
    %v2891 = vadd.f32 %v2872, %v2890
    %2892 = vmatmul.bf16.gmra.mxu0 %v1235
    %v2893 = vpop.f32.mrf.mxu0
    %v2894 = vadd.f32 %v2875, %v2893
    %v2895 = vpop.f32.mrf.mxu0
    %v2896 = vadd.f32 %v2877, %v2895
    %2897 = vdwg.mxu0
    %2898 = vmatpush.bf16.msra.mxu0 %v2151
    %2899 = vmatpush.bf16.msra.mxu0 %v2147
    %2900 = vmatpush.bf16.msra.mxu0 %v2143
    %2901 = vmatpush.bf16.msra.mxu0 %v2139
    %2902 = vmatpush.bf16.msra.mxu0 %v2135
    %2903 = vmatpush.bf16.msra.mxu0 %v2131
    %2904 = vmatpush.bf16.msra.mxu0 %v2127
    %2905 = vmatpush.bf16.msra.mxu0 %v2123
    %2906 = vmatmul.bf16.gmra.mxu0 %v1228
    %v2907 = vpop.f32.mrf.mxu0
    %v2908 = vadd.f32 %v2889, %v2907
    %v2909 = vpop.f32.mrf.mxu0
    %v2910 = vadd.f32 %v2891, %v2909
    %2911 = vmatmul.bf16.gmra.mxu0 %v1236
    %v2912 = vpop.f32.mrf.mxu0
    %v2913 = vadd.f32 %v2894, %v2912
    %v2914 = vpop.f32.mrf.mxu0
    %v2915 = vadd.f32 %v2896, %v2914
    %2916 = vdwg.mxu0
    %2917 = vmatpush.bf16.msra.mxu0 %v2183
    %2918 = vmatpush.bf16.msra.mxu0 %v2179
    %2919 = vmatpush.bf16.msra.mxu0 %v2175
    %2920 = vmatpush.bf16.msra.mxu0 %v2171
    %2921 = vmatpush.bf16.msra.mxu0 %v2167
    %2922 = vmatpush.bf16.msra.mxu0 %v2163
    %2923 = vmatpush.bf16.msra.mxu0 %v2159
    %2924 = vmatpush.bf16.msra.mxu0 %v2155
    %2925 = vmatmul.bf16.gmra.mxu0 %v1229
    %v2926 = vpop.f32.mrf.mxu0
    %v2927 = vadd.f32 %v2908, %v2926
    %v2928 = vpop.f32.mrf.mxu0
    %v2929 = vadd.f32 %v2910, %v2928
    %2930 = vmatmul.bf16.gmra.mxu0 %v1237
    %v2931 = vpop.f32.mrf.mxu0
    %v2932 = vadd.f32 %v2913, %v2931
    %v2933 = vpop.f32.mrf.mxu0
    %v2934 = vadd.f32 %v2915, %v2933
    %2935 = vdwg.mxu0
    %2936 = vmatpush.bf16.msra.mxu0 %v2215
    %2937 = vmatpush.bf16.msra.mxu0 %v2211
    %2938 = vmatpush.bf16.msra.mxu0 %v2207
    %2939 = vmatpush.bf16.msra.mxu0 %v2203
    %2940 = vmatpush.bf16.msra.mxu0 %v2199
    %2941 = vmatpush.bf16.msra.mxu0 %v2195
    %2942 = vmatpush.bf16.msra.mxu0 %v2191
    %2943 = vmatpush.bf16.msra.mxu0 %v2187
    %2944 = vmatmul.bf16.gmra.mxu0 %v1230
    %v2945 = vpop.f32.mrf.mxu0
    %v2946 = vadd.f32 %v2927, %v2945
    %v2947 = vpop.f32.mrf.mxu0
    %v2948 = vadd.f32 %v2929, %v2947
    %2949 = vmatmul.bf16.gmra.mxu0 %v1238
    %v2950 = vpop.f32.mrf.mxu0
    %v2951 = vadd.f32 %v2932, %v2950
    %v2952 = vpop.f32.mrf.mxu0
    %v2953 = vadd.f32 %v2934, %v2952
    %2954 = vdwg.mxu0
    %2955 = vmatpush.bf16.msra.mxu0 %v2247
    %2956 = vmatpush.bf16.msra.mxu0 %v2243
    %2957 = vmatpush.bf16.msra.mxu0 %v2239
    %2958 = vmatpush.bf16.msra.mxu0 %v2235
    %2959 = vmatpush.bf16.msra.mxu0 %v2231
    %2960 = vmatpush.bf16.msra.mxu0 %v2227
    %2961 = vmatpush.bf16.msra.mxu0 %v2223
    %2962 = vmatpush.bf16.msra.mxu0 %v2219
    %2963 = vmatmul.bf16.gmra.mxu0 %v1231
    %v2964 = vpop.f32.mrf.mxu0
    %v2965 = vadd.f32 %v2946, %v2964
    %v2966 = vpop.f32.mrf.mxu0
    %v2967 = vadd.f32 %v2948, %v2966
    %2968 = vmatmul.bf16.gmra.mxu0 %v1239
    %v2969 = vpop.f32.mrf.mxu0
    %v2970 = vadd.f32 %v2951, %v2969
    %v2971 = vpop.f32.mrf.mxu0
    %v2972 = vadd.f32 %v2953, %v2971
    %2973 = vdwg.mxu0
    %2974 = vmatpush.bf16.msra.mxu0 %v2279
    %2975 = vmatpush.bf16.msra.mxu0 %v2275
    %2976 = vmatpush.bf16.msra.mxu0 %v2271
    %2977 = vmatpush.bf16.msra.mxu0 %v2267
    %2978 = vmatpush.bf16.msra.mxu0 %v2263
    %2979 = vmatpush.bf16.msra.mxu0 %v2259
    %2980 = vmatpush.bf16.msra.mxu0 %v2255
    %2981 = vmatpush.bf16.msra.mxu0 %v2251
    %2982 = vmatmul.bf16.gmra.mxu0 %v1232
    %v2983 = vpop.f32.mrf.mxu0
    %v2984 = vadd.f32 %v2965, %v2983
    %v2985 = vpop.f32.mrf.mxu0
    %v2986 = vadd.f32 %v2967, %v2985
    %2987 = vmatmul.bf16.gmra.mxu0 %v1240
    %v2988 = vpop.f32.mrf.mxu0
    %v2989 = vadd.f32 %v2970, %v2988
    %v2990 = vpop.f32.mrf.mxu0
    %v2991 = vadd.f32 %v2972, %v2990
    %2992 = vdwg.mxu0
    %2993 = vmatpush.bf16.msra.mxu0 %v2056
    %2994 = vmatpush.bf16.msra.mxu0 %v2052
    %2995 = vmatpush.bf16.msra.mxu0 %v2048
    %2996 = vmatpush.bf16.msra.mxu0 %v2044
    %2997 = vmatpush.bf16.msra.mxu0 %v2040
    %2998 = vmatpush.bf16.msra.mxu0 %v2036
    %2999 = vmatpush.bf16.msra.mxu0 %v2032
    %3000 = vmatpush.bf16.msra.mxu0 %v2028
    %3001 = vmatmul.bf16.gmra.mxu0 %v1225
    %v3002 = vpop.f32.mrf.mxu0
    %v3003 = vadd.f32 0.0, %v3002
    %v3004 = vpop.f32.mrf.mxu0
    %v3005 = vadd.f32 0.0, %v3004
    %3006 = vmatmul.bf16.gmra.mxu0 %v1233
    %v3007 = vpop.f32.mrf.mxu0
    %v3008 = vadd.f32 0.0, %v3007
    %v3009 = vpop.f32.mrf.mxu0
    %v3010 = vadd.f32 0.0, %v3009
    %3011 = vdwg.mxu0
    %3012 = vmatpush.bf16.msra.mxu0 %v2088
    %3013 = vmatpush.bf16.msra.mxu0 %v2084
    %3014 = vmatpush.bf16.msra.mxu0 %v2080
    %3015 = vmatpush.bf16.msra.mxu0 %v2076
    %3016 = vmatpush.bf16.msra.mxu0 %v2072
    %3017 = vmatpush.bf16.msra.mxu0 %v2068
    %3018 = vmatpush.bf16.msra.mxu0 %v2064
    %3019 = vmatpush.bf16.msra.mxu0 %v2060
    %3020 = vmatmul.bf16.gmra.mxu0 %v1226
    %v3021 = vpop.f32.mrf.mxu0
    %v3022 = vadd.f32 %v3003, %v3021
    %v3023 = vpop.f32.mrf.mxu0
    %v3024 = vadd.f32 %v3005, %v3023
    %3025 = vmatmul.bf16.gmra.mxu0 %v1234
    %v3026 = vpop.f32.mrf.mxu0
    %v3027 = vadd.f32 %v3008, %v3026
    %v3028 = vpop.f32.mrf.mxu0
    %v3029 = vadd.f32 %v3010, %v3028
    %3030 = vdwg.mxu0
    %3031 = vmatpush.bf16.msra.mxu0 %v2120
    %3032 = vmatpush.bf16.msra.mxu0 %v2116
    %3033 = vmatpush.bf16.msra.mxu0 %v2112
    %3034 = vmatpush.bf16.msra.mxu0 %v2108
    %3035 = vmatpush.bf16.msra.mxu0 %v2104
    %3036 = vmatpush.bf16.msra.mxu0 %v2100
    %3037 = vmatpush.bf16.msra.mxu0 %v2096
    %3038 = vmatpush.bf16.msra.mxu0 %v2092
    %3039 = vmatmul.bf16.gmra.mxu0 %v1227
    %v3040 = vpop.f32.mrf.mxu0
    %v3041 = vadd.f32 %v3022, %v3040
    %v3042 = vpop.f32.mrf.mxu0
    %v3043 = vadd.f32 %v3024, %v3042
    %3044 = vmatmul.bf16.gmra.mxu0 %v1235
    %v3045 = vpop.f32.mrf.mxu0
    %v3046 = vadd.f32 %v3027, %v3045
    %v3047 = vpop.f32.mrf.mxu0
    %v3048 = vadd.f32 %v3029, %v3047
    %3049 = vdwg.mxu0
    %3050 = vmatpush.bf16.msra.mxu0 %v2152
    %3051 = vmatpush.bf16.msra.mxu0 %v2148
    %3052 = vmatpush.bf16.msra.mxu0 %v2144
    %3053 = vmatpush.bf16.msra.mxu0 %v2140
    %3054 = vmatpush.bf16.msra.mxu0 %v2136
    %3055 = vmatpush.bf16.msra.mxu0 %v2132
    %3056 = vmatpush.bf16.msra.mxu0 %v2128
    %3057 = vmatpush.bf16.msra.mxu0 %v2124
    %3058 = vmatmul.bf16.gmra.mxu0 %v1228
    %v3059 = vpop.f32.mrf.mxu0
    %v3060 = vadd.f32 %v3041, %v3059
    %v3061 = vpop.f32.mrf.mxu0
    %v3062 = vadd.f32 %v3043, %v3061
    %3063 = vmatmul.bf16.gmra.mxu0 %v1236
    %v3064 = vpop.f32.mrf.mxu0
    %v3065 = vadd.f32 %v3046, %v3064
    %v3066 = vpop.f32.mrf.mxu0
    %v3067 = vadd.f32 %v3048, %v3066
    %3068 = vdwg.mxu0
    %3069 = vmatpush.bf16.msra.mxu0 %v2184
    %3070 = vmatpush.bf16.msra.mxu0 %v2180
    %3071 = vmatpush.bf16.msra.mxu0 %v2176
    %3072 = vmatpush.bf16.msra.mxu0 %v2172
    %3073 = vmatpush.bf16.msra.mxu0 %v2168
    %3074 = vmatpush.bf16.msra.mxu0 %v2164
    %3075 = vmatpush.bf16.msra.mxu0 %v2160
    %3076 = vmatpush.bf16.msra.mxu0 %v2156
    %3077 = vmatmul.bf16.gmra.mxu0 %v1229
    %v3078 = vpop.f32.mrf.mxu0
    %v3079 = vadd.f32 %v3060, %v3078
    %v3080 = vpop.f32.mrf.mxu0
    %v3081 = vadd.f32 %v3062, %v3080
    %3082 = vmatmul.bf16.gmra.mxu0 %v1237
    %v3083 = vpop.f32.mrf.mxu0
    %v3084 = vadd.f32 %v3065, %v3083
    %v3085 = vpop.f32.mrf.mxu0
    %v3086 = vadd.f32 %v3067, %v3085
    %3087 = vdwg.mxu0
    %3088 = vmatpush.bf16.msra.mxu0 %v2216
    %3089 = vmatpush.bf16.msra.mxu0 %v2212
    %3090 = vmatpush.bf16.msra.mxu0 %v2208
    %3091 = vmatpush.bf16.msra.mxu0 %v2204
    %3092 = vmatpush.bf16.msra.mxu0 %v2200
    %3093 = vmatpush.bf16.msra.mxu0 %v2196
    %3094 = vmatpush.bf16.msra.mxu0 %v2192
    %3095 = vmatpush.bf16.msra.mxu0 %v2188
    %3096 = vmatmul.bf16.gmra.mxu0 %v1230
    %v3097 = vpop.f32.mrf.mxu0
    %v3098 = vadd.f32 %v3079, %v3097
    %v3099 = vpop.f32.mrf.mxu0
    %v3100 = vadd.f32 %v3081, %v3099
    %3101 = vmatmul.bf16.gmra.mxu0 %v1238
    %v3102 = vpop.f32.mrf.mxu0
    %v3103 = vadd.f32 %v3084, %v3102
    %v3104 = vpop.f32.mrf.mxu0
    %v3105 = vadd.f32 %v3086, %v3104
    %3106 = vdwg.mxu0
    %3107 = vmatpush.bf16.msra.mxu0 %v2248
    %3108 = vmatpush.bf16.msra.mxu0 %v2244
    %3109 = vmatpush.bf16.msra.mxu0 %v2240
    %3110 = vmatpush.bf16.msra.mxu0 %v2236
    %3111 = vmatpush.bf16.msra.mxu0 %v2232
    %3112 = vmatpush.bf16.msra.mxu0 %v2228
    %3113 = vmatpush.bf16.msra.mxu0 %v2224
    %3114 = vmatpush.bf16.msra.mxu0 %v2220
    %3115 = vmatmul.bf16.gmra.mxu0 %v1231
    %v3116 = vpop.f32.mrf.mxu0
    %v3117 = vadd.f32 %v3098, %v3116
    %v3118 = vpop.f32.mrf.mxu0
    %v3119 = vadd.f32 %v3100, %v3118
    %3120 = vmatmul.bf16.gmra.mxu0 %v1239
    %v3121 = vpop.f32.mrf.mxu0
    %v3122 = vadd.f32 %v3103, %v3121
    %v3123 = vpop.f32.mrf.mxu0
    %v3124 = vadd.f32 %v3105, %v3123
    %3125 = vdwg.mxu0
    %3126 = vmatpush.bf16.msra.mxu0 %v2280
    %3127 = vmatpush.bf16.msra.mxu0 %v2276
    %3128 = vmatpush.bf16.msra.mxu0 %v2272
    %3129 = vmatpush.bf16.msra.mxu0 %v2268
    %3130 = vmatpush.bf16.msra.mxu0 %v2264
    %3131 = vmatpush.bf16.msra.mxu0 %v2260
    %3132 = vmatpush.bf16.msra.mxu0 %v2256
    %3133 = vmatpush.bf16.msra.mxu0 %v2252
    %3134 = vmatmul.bf16.gmra.mxu0 %v1232
    %v3135 = vpop.f32.mrf.mxu0
    %v3136 = vadd.f32 %v3117, %v3135
    %v3137 = vpop.f32.mrf.mxu0
    %v3138 = vadd.f32 %v3119, %v3137
    %3139 = vmatmul.bf16.gmra.mxu0 %v1240
    %v3140 = vpop.f32.mrf.mxu0
    %v3141 = vadd.f32 %v3122, %v3140
    %v3142 = vpop.f32.mrf.mxu0
    %v3143 = vadd.f32 %v3124, %v3142
    %3144 = vdwg.mxu0
    %v3161 = vunpack.c.l.b16 %v148
    %v3162 = vunpack.c.h.b16 %v148
    %v3163 = vunpack.c.l.b16 %v149
    %v3164 = vunpack.c.h.b16 %v149
    %v3165 = vunpack.c.l.b16 %v150
    %v3166 = vunpack.c.h.b16 %v150
    %v3167 = vunpack.c.l.b16 %v151
    %v3168 = vunpack.c.h.b16 %v151
    %v3169 = vunpack.c.l.b16 %v152
    %v3170 = vunpack.c.h.b16 %v152
    %v3171 = vunpack.c.l.b16 %v153
    %v3172 = vunpack.c.h.b16 %v153
    %v3173 = vunpack.c.l.b16 %v154
    %v3174 = vunpack.c.h.b16 %v154
    %v3175 = vunpack.c.l.b16 %v155
    %v3176 = vunpack.c.h.b16 %v155
    %v3177 = vunpack.c.l.b16 %v156
    %v3178 = vunpack.c.h.b16 %v156
    %v3179 = vunpack.c.l.b16 %v157
    %v3180 = vunpack.c.h.b16 %v157
    %v3181 = vunpack.c.l.b16 %v158
    %v3182 = vunpack.c.h.b16 %v158
    %v3183 = vunpack.c.l.b16 %v159
    %v3184 = vunpack.c.h.b16 %v159
    %v3185 = vunpack.c.l.b16 %v160
    %v3186 = vunpack.c.h.b16 %v160
    %v3187 = vunpack.c.l.b16 %v161
    %v3188 = vunpack.c.h.b16 %v161
    %v3189 = vunpack.c.l.b16 %v162
    %v3190 = vunpack.c.h.b16 %v162
    %v3191 = vunpack.c.l.b16 %v163
    %v3192 = vunpack.c.h.b16 %v163
    %v3193 = vpack.c.b16 %v3169, %v3161
    %v3194 = vpack.c.b16 %v3170, %v3162
    %v3195 = vpack.c.b16 %v3171, %v3163
    %v3196 = vpack.c.b16 %v3172, %v3164
    %v3197 = vpack.c.b16 %v3173, %v3165
    %v3198 = vpack.c.b16 %v3174, %v3166
    %v3199 = vpack.c.b16 %v3175, %v3167
    %v3200 = vpack.c.b16 %v3176, %v3168
    %v3201 = vpack.c.b16 %v3185, %v3177
    %v3202 = vpack.c.b16 %v3186, %v3178
    %v3203 = vpack.c.b16 %v3187, %v3179
    %v3204 = vpack.c.b16 %v3188, %v3180
    %v3205 = vpack.c.b16 %v3189, %v3181
    %v3206 = vpack.c.b16 %v3190, %v3182
    %v3207 = vpack.c.b16 %v3191, %v3183
    %v3208 = vpack.c.b16 %v3192, %v3184
    %v3481 = vunpack.c.l.b16 %v469
    %v3482 = vunpack.c.h.b16 %v469
    %v3483 = vunpack.c.l.b16 %v470
    %v3484 = vunpack.c.h.b16 %v470
    %v3485 = vunpack.c.l.b16 %v471
    %v3486 = vunpack.c.h.b16 %v471
    %v3487 = vunpack.c.l.b16 %v472
    %v3488 = vunpack.c.h.b16 %v472
    %v3489 = vunpack.c.l.b16 %v473
    %v3490 = vunpack.c.h.b16 %v473
    %v3491 = vunpack.c.l.b16 %v474
    %v3492 = vunpack.c.h.b16 %v474
    %v3493 = vunpack.c.l.b16 %v475
    %v3494 = vunpack.c.h.b16 %v475
    %v3495 = vunpack.c.l.b16 %v476
    %v3496 = vunpack.c.h.b16 %v476
    %v3497 = vunpack.c.l.b16 %v477
    %v3498 = vunpack.c.h.b16 %v477
    %v3499 = vunpack.c.l.b16 %v478
    %v3500 = vunpack.c.h.b16 %v478
    %v3501 = vunpack.c.l.b16 %v479
    %v3502 = vunpack.c.h.b16 %v479
    %v3503 = vunpack.c.l.b16 %v480
    %v3504 = vunpack.c.h.b16 %v480
    %v3505 = vunpack.c.l.b16 %v481
    %v3506 = vunpack.c.h.b16 %v481
    %v3507 = vunpack.c.l.b16 %v482
    %v3508 = vunpack.c.h.b16 %v482
    %v3509 = vunpack.c.l.b16 %v483
    %v3510 = vunpack.c.h.b16 %v483
    %v3511 = vunpack.c.l.b16 %v484
    %v3512 = vunpack.c.h.b16 %v484
    %v3513 = vunpack.c.l.b16 %v485
    %v3514 = vunpack.c.h.b16 %v485
    %v3515 = vunpack.c.l.b16 %v486
    %v3516 = vunpack.c.h.b16 %v486
    %v3517 = vunpack.c.l.b16 %v487
    %v3518 = vunpack.c.h.b16 %v487
    %v3519 = vunpack.c.l.b16 %v488
    %v3520 = vunpack.c.h.b16 %v488
    %v3521 = vunpack.c.l.b16 %v489
    %v3522 = vunpack.c.h.b16 %v489
    %v3523 = vunpack.c.l.b16 %v490
    %v3524 = vunpack.c.h.b16 %v490
    %v3525 = vunpack.c.l.b16 %v491
    %v3526 = vunpack.c.h.b16 %v491
    %v3527 = vunpack.c.l.b16 %v492
    %v3528 = vunpack.c.h.b16 %v492
    %v3529 = vunpack.c.l.b16 %v493
    %v3530 = vunpack.c.h.b16 %v493
    %v3531 = vunpack.c.l.b16 %v494
    %v3532 = vunpack.c.h.b16 %v494
    %v3533 = vunpack.c.l.b16 %v495
    %v3534 = vunpack.c.h.b16 %v495
    %v3535 = vunpack.c.l.b16 %v496
    %v3536 = vunpack.c.h.b16 %v496
    %v3537 = vunpack.c.l.b16 %v497
    %v3538 = vunpack.c.h.b16 %v497
    %v3539 = vunpack.c.l.b16 %v498
    %v3540 = vunpack.c.h.b16 %v498
    %v3541 = vunpack.c.l.b16 %v499
    %v3542 = vunpack.c.h.b16 %v499
    %v3543 = vunpack.c.l.b16 %v500
    %v3544 = vunpack.c.h.b16 %v500
    %v3545 = vunpack.c.l.b16 %v501
    %v3546 = vunpack.c.h.b16 %v501
    %v3547 = vunpack.c.l.b16 %v502
    %v3548 = vunpack.c.h.b16 %v502
    %v3549 = vunpack.c.l.b16 %v503
    %v3550 = vunpack.c.h.b16 %v503
    %v3551 = vunpack.c.l.b16 %v504
    %v3552 = vunpack.c.h.b16 %v504
    %v3553 = vunpack.c.l.b16 %v505
    %v3554 = vunpack.c.h.b16 %v505
    %v3555 = vunpack.c.l.b16 %v506
    %v3556 = vunpack.c.h.b16 %v506
    %v3557 = vunpack.c.l.b16 %v507
    %v3558 = vunpack.c.h.b16 %v507
    %v3559 = vunpack.c.l.b16 %v508
    %v3560 = vunpack.c.h.b16 %v508
    %v3561 = vunpack.c.l.b16 %v509
    %v3562 = vunpack.c.h.b16 %v509
    %v3563 = vunpack.c.l.b16 %v510
    %v3564 = vunpack.c.h.b16 %v510
    %v3565 = vunpack.c.l.b16 %v511
    %v3566 = vunpack.c.h.b16 %v511
    %v3567 = vunpack.c.l.b16 %v512
    %v3568 = vunpack.c.h.b16 %v512
    %v3569 = vunpack.c.l.b16 %v513
    %v3570 = vunpack.c.h.b16 %v513
    %v3571 = vunpack.c.l.b16 %v514
    %v3572 = vunpack.c.h.b16 %v514
    %v3573 = vunpack.c.l.b16 %v515
    %v3574 = vunpack.c.h.b16 %v515
    %v3575 = vunpack.c.l.b16 %v516
    %v3576 = vunpack.c.h.b16 %v516
    %v3577 = vunpack.c.l.b16 %v517
    %v3578 = vunpack.c.h.b16 %v517
    %v3579 = vunpack.c.l.b16 %v518
    %v3580 = vunpack.c.h.b16 %v518
    %v3581 = vunpack.c.l.b16 %v519
    %v3582 = vunpack.c.h.b16 %v519
    %v3583 = vunpack.c.l.b16 %v520
    %v3584 = vunpack.c.h.b16 %v520
    %v3585 = vunpack.c.l.b16 %v521
    %v3586 = vunpack.c.h.b16 %v521
    %v3587 = vunpack.c.l.b16 %v522
    %v3588 = vunpack.c.h.b16 %v522
    %v3589 = vunpack.c.l.b16 %v523
    %v3590 = vunpack.c.h.b16 %v523
    %v3591 = vunpack.c.l.b16 %v524
    %v3592 = vunpack.c.h.b16 %v524
    %v3593 = vunpack.c.l.b16 %v525
    %v3594 = vunpack.c.h.b16 %v525
    %v3595 = vunpack.c.l.b16 %v526
    %v3596 = vunpack.c.h.b16 %v526
    %v3597 = vunpack.c.l.b16 %v527
    %v3598 = vunpack.c.h.b16 %v527
    %v3599 = vunpack.c.l.b16 %v528
    %v3600 = vunpack.c.h.b16 %v528
    %v3601 = vunpack.c.l.b16 %v529
    %v3602 = vunpack.c.h.b16 %v529
    %v3603 = vunpack.c.l.b16 %v530
    %v3604 = vunpack.c.h.b16 %v530
    %v3605 = vunpack.c.l.b16 %v531
    %v3606 = vunpack.c.h.b16 %v531
    %v3607 = vunpack.c.l.b16 %v532
    %v3608 = vunpack.c.h.b16 %v532
    %v3609 = vunpack.c.l.b16 %v533
    %v3610 = vunpack.c.h.b16 %v533
    %v3611 = vunpack.c.l.b16 %v534
    %v3612 = vunpack.c.h.b16 %v534
    %v3613 = vunpack.c.l.b16 %v535
    %v3614 = vunpack.c.h.b16 %v535
    %v3615 = vunpack.c.l.b16 %v536
    %v3616 = vunpack.c.h.b16 %v536
    %v3617 = vunpack.c.l.b16 %v537
    %v3618 = vunpack.c.h.b16 %v537
    %v3619 = vunpack.c.l.b16 %v538
    %v3620 = vunpack.c.h.b16 %v538
    %v3621 = vunpack.c.l.b16 %v539
    %v3622 = vunpack.c.h.b16 %v539
    %v3623 = vunpack.c.l.b16 %v540
    %v3624 = vunpack.c.h.b16 %v540
    %v3625 = vunpack.c.l.b16 %v541
    %v3626 = vunpack.c.h.b16 %v541
    %v3627 = vunpack.c.l.b16 %v542
    %v3628 = vunpack.c.h.b16 %v542
    %v3629 = vunpack.c.l.b16 %v543
    %v3630 = vunpack.c.h.b16 %v543
    %v3631 = vunpack.c.l.b16 %v544
    %v3632 = vunpack.c.h.b16 %v544
    %v3633 = vunpack.c.l.b16 %v545
    %v3634 = vunpack.c.h.b16 %v545
    %v3635 = vunpack.c.l.b16 %v546
    %v3636 = vunpack.c.h.b16 %v546
    %v3637 = vunpack.c.l.b16 %v547
    %v3638 = vunpack.c.h.b16 %v547
    %v3639 = vunpack.c.l.b16 %v548
    %v3640 = vunpack.c.h.b16 %v548
    %v3641 = vunpack.c.l.b16 %v549
    %v3642 = vunpack.c.h.b16 %v549
    %v3643 = vunpack.c.l.b16 %v550
    %v3644 = vunpack.c.h.b16 %v550
    %v3645 = vunpack.c.l.b16 %v551
    %v3646 = vunpack.c.h.b16 %v551
    %v3647 = vunpack.c.l.b16 %v552
    %v3648 = vunpack.c.h.b16 %v552
    %v3649 = vunpack.c.l.b16 %v553
    %v3650 = vunpack.c.h.b16 %v553
    %v3651 = vunpack.c.l.b16 %v554
    %v3652 = vunpack.c.h.b16 %v554
    %v3653 = vunpack.c.l.b16 %v555
    %v3654 = vunpack.c.h.b16 %v555
    %v3655 = vunpack.c.l.b16 %v556
    %v3656 = vunpack.c.h.b16 %v556
    %v3657 = vunpack.c.l.b16 %v557
    %v3658 = vunpack.c.h.b16 %v557
    %v3659 = vunpack.c.l.b16 %v558
    %v3660 = vunpack.c.h.b16 %v558
    %v3661 = vunpack.c.l.b16 %v559
    %v3662 = vunpack.c.h.b16 %v559
    %v3663 = vunpack.c.l.b16 %v560
    %v3664 = vunpack.c.h.b16 %v560
    %v3665 = vunpack.c.l.b16 %v561
    %v3666 = vunpack.c.h.b16 %v561
    %v3667 = vunpack.c.l.b16 %v562
    %v3668 = vunpack.c.h.b16 %v562
    %v3669 = vunpack.c.l.b16 %v563
    %v3670 = vunpack.c.h.b16 %v563
    %v3671 = vunpack.c.l.b16 %v564
    %v3672 = vunpack.c.h.b16 %v564
    %v3673 = vunpack.c.l.b16 %v565
    %v3674 = vunpack.c.h.b16 %v565
    %v3675 = vunpack.c.l.b16 %v566
    %v3676 = vunpack.c.h.b16 %v566
    %v3677 = vunpack.c.l.b16 %v567
    %v3678 = vunpack.c.h.b16 %v567
    %v3679 = vunpack.c.l.b16 %v568
    %v3680 = vunpack.c.h.b16 %v568
    %v3681 = vunpack.c.l.b16 %v569
    %v3682 = vunpack.c.h.b16 %v569
    %v3683 = vunpack.c.l.b16 %v570
    %v3684 = vunpack.c.h.b16 %v570
    %v3685 = vunpack.c.l.b16 %v571
    %v3686 = vunpack.c.h.b16 %v571
    %v3687 = vunpack.c.l.b16 %v572
    %v3688 = vunpack.c.h.b16 %v572
    %v3689 = vunpack.c.l.b16 %v573
    %v3690 = vunpack.c.h.b16 %v573
    %v3691 = vunpack.c.l.b16 %v574
    %v3692 = vunpack.c.h.b16 %v574
    %v3693 = vunpack.c.l.b16 %v575
    %v3694 = vunpack.c.h.b16 %v575
    %v3695 = vunpack.c.l.b16 %v576
    %v3696 = vunpack.c.h.b16 %v576
    %v3697 = vunpack.c.l.b16 %v577
    %v3698 = vunpack.c.h.b16 %v577
    %v3699 = vunpack.c.l.b16 %v578
    %v3700 = vunpack.c.h.b16 %v578
    %v3701 = vunpack.c.l.b16 %v579
    %v3702 = vunpack.c.h.b16 %v579
    %v3703 = vunpack.c.l.b16 %v580
    %v3704 = vunpack.c.h.b16 %v580
    %v3705 = vunpack.c.l.b16 %v581
    %v3706 = vunpack.c.h.b16 %v581
    %v3707 = vunpack.c.l.b16 %v582
    %v3708 = vunpack.c.h.b16 %v582
    %v3709 = vunpack.c.l.b16 %v583
    %v3710 = vunpack.c.h.b16 %v583
    %v3711 = vunpack.c.l.b16 %v584
    %v3712 = vunpack.c.h.b16 %v584
    %v3713 = vunpack.c.l.b16 %v585
    %v3714 = vunpack.c.h.b16 %v585
    %v3715 = vunpack.c.l.b16 %v586
    %v3716 = vunpack.c.h.b16 %v586
    %v3717 = vunpack.c.l.b16 %v587
    %v3718 = vunpack.c.h.b16 %v587
    %v3719 = vunpack.c.l.b16 %v588
    %v3720 = vunpack.c.h.b16 %v588
    %v3721 = vunpack.c.l.b16 %v589
    %v3722 = vunpack.c.h.b16 %v589
    %v3723 = vunpack.c.l.b16 %v590
    %v3724 = vunpack.c.h.b16 %v590
    %v3725 = vunpack.c.l.b16 %v591
    %v3726 = vunpack.c.h.b16 %v591
    %v3727 = vunpack.c.l.b16 %v592
    %v3728 = vunpack.c.h.b16 %v592
    %v3729 = vunpack.c.l.b16 %v593
    %v3730 = vunpack.c.h.b16 %v593
    %v3731 = vunpack.c.l.b16 %v594
    %v3732 = vunpack.c.h.b16 %v594
    %v3733 = vunpack.c.l.b16 %v595
    %v3734 = vunpack.c.h.b16 %v595
    %v3735 = vunpack.c.l.b16 %v596
    %v3736 = vunpack.c.h.b16 %v596
    %v3737 = vunpack.c.l.b16 %v597
    %v3738 = vunpack.c.h.b16 %v597
    %v3739 = vunpack.c.l.b16 %v598
    %v3740 = vunpack.c.h.b16 %v598
    %v3741 = vunpack.c.l.b16 %v599
    %v3742 = vunpack.c.h.b16 %v599
    %v3743 = vunpack.c.l.b16 %v600
    %v3744 = vunpack.c.h.b16 %v600
    %v3745 = vunpack.c.l.b16 %v601
    %v3746 = vunpack.c.h.b16 %v601
    %v3747 = vunpack.c.l.b16 %v602
    %v3748 = vunpack.c.h.b16 %v602
    %v3749 = vunpack.c.l.b16 %v603
    %v3750 = vunpack.c.h.b16 %v603
    %v3751 = vunpack.c.l.b16 %v604
    %v3752 = vunpack.c.h.b16 %v604
    %v3753 = vunpack.c.l.b16 %v605
    %v3754 = vunpack.c.h.b16 %v605
    %v3755 = vunpack.c.l.b16 %v606
    %v3756 = vunpack.c.h.b16 %v606
    %v3757 = vunpack.c.l.b16 %v607
    %v3758 = vunpack.c.h.b16 %v607
    %v3759 = vunpack.c.l.b16 %v608
    %v3760 = vunpack.c.h.b16 %v608
    %v3761 = vunpack.c.l.b16 %v609
    %v3762 = vunpack.c.h.b16 %v609
    %v3763 = vunpack.c.l.b16 %v610
    %v3764 = vunpack.c.h.b16 %v610
    %v3765 = vunpack.c.l.b16 %v611
    %v3766 = vunpack.c.h.b16 %v611
    %v3767 = vunpack.c.l.b16 %v612
    %v3768 = vunpack.c.h.b16 %v612
    %v3769 = vunpack.c.l.b16 %v613
    %v3770 = vunpack.c.h.b16 %v613
    %v3771 = vunpack.c.l.b16 %v614
    %v3772 = vunpack.c.h.b16 %v614
    %v3773 = vunpack.c.l.b16 %v615
    %v3774 = vunpack.c.h.b16 %v615
    %v3775 = vunpack.c.l.b16 %v616
    %v3776 = vunpack.c.h.b16 %v616
    %v3777 = vunpack.c.l.b16 %v617
    %v3778 = vunpack.c.h.b16 %v617
    %v3779 = vunpack.c.l.b16 %v618
    %v3780 = vunpack.c.h.b16 %v618
    %v3781 = vunpack.c.l.b16 %v619
    %v3782 = vunpack.c.h.b16 %v619
    %v3783 = vunpack.c.l.b16 %v620
    %v3784 = vunpack.c.h.b16 %v620
    %v3785 = vunpack.c.l.b16 %v621
    %v3786 = vunpack.c.h.b16 %v621
    %v3787 = vunpack.c.l.b16 %v622
    %v3788 = vunpack.c.h.b16 %v622
    %v3789 = vunpack.c.l.b16 %v623
    %v3790 = vunpack.c.h.b16 %v623
    %v3791 = vunpack.c.l.b16 %v624
    %v3792 = vunpack.c.h.b16 %v624
    %v3793 = vunpack.c.l.b16 %v625
    %v3794 = vunpack.c.h.b16 %v625
    %v3795 = vunpack.c.l.b16 %v626
    %v3796 = vunpack.c.h.b16 %v626
    %v3797 = vunpack.c.l.b16 %v627
    %v3798 = vunpack.c.h.b16 %v627
    %v3799 = vunpack.c.l.b16 %v628
    %v3800 = vunpack.c.h.b16 %v628
    %v3801 = vunpack.c.l.b16 %v629
    %v3802 = vunpack.c.h.b16 %v629
    %v3803 = vunpack.c.l.b16 %v630
    %v3804 = vunpack.c.h.b16 %v630
    %v3805 = vunpack.c.l.b16 %v631
    %v3806 = vunpack.c.h.b16 %v631
    %v3807 = vunpack.c.l.b16 %v632
    %v3808 = vunpack.c.h.b16 %v632
    %v3809 = vunpack.c.l.b16 %v633
    %v3810 = vunpack.c.h.b16 %v633
    %v3811 = vunpack.c.l.b16 %v634
    %v3812 = vunpack.c.h.b16 %v634
    %v3813 = vunpack.c.l.b16 %v635
    %v3814 = vunpack.c.h.b16 %v635
    %v3815 = vunpack.c.l.b16 %v636
    %v3816 = vunpack.c.h.b16 %v636
    %v3817 = vunpack.c.l.b16 %v637
    %v3818 = vunpack.c.h.b16 %v637
    %v3819 = vunpack.c.l.b16 %v638
    %v3820 = vunpack.c.h.b16 %v638
    %v3821 = vunpack.c.l.b16 %v639
    %v3822 = vunpack.c.h.b16 %v639
    %v3823 = vunpack.c.l.b16 %v640
    %v3824 = vunpack.c.h.b16 %v640
    %v3825 = vunpack.c.l.b16 %v641
    %v3826 = vunpack.c.h.b16 %v641
    %v3827 = vunpack.c.l.b16 %v642
    %v3828 = vunpack.c.h.b16 %v642
    %v3829 = vunpack.c.l.b16 %v643
    %v3830 = vunpack.c.h.b16 %v643
    %v3831 = vunpack.c.l.b16 %v644
    %v3832 = vunpack.c.h.b16 %v644
    %v3833 = vunpack.c.l.b16 %v645
    %v3834 = vunpack.c.h.b16 %v645
    %v3835 = vunpack.c.l.b16 %v646
    %v3836 = vunpack.c.h.b16 %v646
    %v3837 = vunpack.c.l.b16 %v647
    %v3838 = vunpack.c.h.b16 %v647
    %v3839 = vunpack.c.l.b16 %v648
    %v3840 = vunpack.c.h.b16 %v648
    %v3841 = vunpack.c.l.b16 %v649
    %v3842 = vunpack.c.h.b16 %v649
    %v3843 = vunpack.c.l.b16 %v650
    %v3844 = vunpack.c.h.b16 %v650
    %v3845 = vunpack.c.l.b16 %v651
    %v3846 = vunpack.c.h.b16 %v651
    %v3847 = vunpack.c.l.b16 %v652
    %v3848 = vunpack.c.h.b16 %v652
    %v3849 = vunpack.c.l.b16 %v653
    %v3850 = vunpack.c.h.b16 %v653
    %v3851 = vunpack.c.l.b16 %v654
    %v3852 = vunpack.c.h.b16 %v654
    %v3853 = vunpack.c.l.b16 %v655
    %v3854 = vunpack.c.h.b16 %v655
    %v3855 = vunpack.c.l.b16 %v656
    %v3856 = vunpack.c.h.b16 %v656
    %v3857 = vunpack.c.l.b16 %v657
    %v3858 = vunpack.c.h.b16 %v657
    %v3859 = vunpack.c.l.b16 %v658
    %v3860 = vunpack.c.h.b16 %v658
    %v3861 = vunpack.c.l.b16 %v659
    %v3862 = vunpack.c.h.b16 %v659
    %v3863 = vunpack.c.l.b16 %v660
    %v3864 = vunpack.c.h.b16 %v660
    %v3865 = vunpack.c.l.b16 %v661
    %v3866 = vunpack.c.h.b16 %v661
    %v3867 = vunpack.c.l.b16 %v662
    %v3868 = vunpack.c.h.b16 %v662
    %v3869 = vunpack.c.l.b16 %v663
    %v3870 = vunpack.c.h.b16 %v663
    %v3871 = vunpack.c.l.b16 %v664
    %v3872 = vunpack.c.h.b16 %v664
    %v3873 = vunpack.c.l.b16 %v665
    %v3874 = vunpack.c.h.b16 %v665
    %v3875 = vunpack.c.l.b16 %v666
    %v3876 = vunpack.c.h.b16 %v666
    %v3877 = vunpack.c.l.b16 %v667
    %v3878 = vunpack.c.h.b16 %v667
    %v3879 = vunpack.c.l.b16 %v668
    %v3880 = vunpack.c.h.b16 %v668
    %v3881 = vunpack.c.l.b16 %v669
    %v3882 = vunpack.c.h.b16 %v669
    %v3883 = vunpack.c.l.b16 %v670
    %v3884 = vunpack.c.h.b16 %v670
    %v3885 = vunpack.c.l.b16 %v671
    %v3886 = vunpack.c.h.b16 %v671
    %v3887 = vunpack.c.l.b16 %v672
    %v3888 = vunpack.c.h.b16 %v672
    %v3889 = vunpack.c.l.b16 %v673
    %v3890 = vunpack.c.h.b16 %v673
    %v3891 = vunpack.c.l.b16 %v674
    %v3892 = vunpack.c.h.b16 %v674
    %v3893 = vunpack.c.l.b16 %v675
    %v3894 = vunpack.c.h.b16 %v675
    %v3895 = vunpack.c.l.b16 %v676
    %v3896 = vunpack.c.h.b16 %v676
    %v3897 = vunpack.c.l.b16 %v677
    %v3898 = vunpack.c.h.b16 %v677
    %v3899 = vunpack.c.l.b16 %v678
    %v3900 = vunpack.c.h.b16 %v678
    %v3901 = vunpack.c.l.b16 %v679
    %v3902 = vunpack.c.h.b16 %v679
    %v3903 = vunpack.c.l.b16 %v680
    %v3904 = vunpack.c.h.b16 %v680
    %v3905 = vunpack.c.l.b16 %v681
    %v3906 = vunpack.c.h.b16 %v681
    %v3907 = vunpack.c.l.b16 %v682
    %v3908 = vunpack.c.h.b16 %v682
    %v3909 = vunpack.c.l.b16 %v683
    %v3910 = vunpack.c.h.b16 %v683
    %v3911 = vunpack.c.l.b16 %v684
    %v3912 = vunpack.c.h.b16 %v684
    %v3913 = vunpack.c.l.b16 %v685
    %v3914 = vunpack.c.h.b16 %v685
    %v3915 = vunpack.c.l.b16 %v686
    %v3916 = vunpack.c.h.b16 %v686
    %v3917 = vunpack.c.l.b16 %v687
    %v3918 = vunpack.c.h.b16 %v687
    %v3919 = vunpack.c.l.b16 %v688
    %v3920 = vunpack.c.h.b16 %v688
    %v3921 = vunpack.c.l.b16 %v689
    %v3922 = vunpack.c.h.b16 %v689
    %v3923 = vunpack.c.l.b16 %v690
    %v3924 = vunpack.c.h.b16 %v690
    %v3925 = vunpack.c.l.b16 %v691
    %v3926 = vunpack.c.h.b16 %v691
    %v3927 = vunpack.c.l.b16 %v692
    %v3928 = vunpack.c.h.b16 %v692
    %v3929 = vunpack.c.l.b16 %v693
    %v3930 = vunpack.c.h.b16 %v693
    %v3931 = vunpack.c.l.b16 %v694
    %v3932 = vunpack.c.h.b16 %v694
    %v3933 = vunpack.c.l.b16 %v695
    %v3934 = vunpack.c.h.b16 %v695
    %v3935 = vunpack.c.l.b16 %v696
    %v3936 = vunpack.c.h.b16 %v696
    %v3937 = vunpack.c.l.b16 %v697
    %v3938 = vunpack.c.h.b16 %v697
    %v3939 = vunpack.c.l.b16 %v698
    %v3940 = vunpack.c.h.b16 %v698
    %v3941 = vunpack.c.l.b16 %v699
    %v3942 = vunpack.c.h.b16 %v699
    %v3943 = vunpack.c.l.b16 %v700
    %v3944 = vunpack.c.h.b16 %v700
    %v3945 = vunpack.c.l.b16 %v701
    %v3946 = vunpack.c.h.b16 %v701
    %v3947 = vunpack.c.l.b16 %v702
    %v3948 = vunpack.c.h.b16 %v702
    %v3949 = vunpack.c.l.b16 %v703
    %v3950 = vunpack.c.h.b16 %v703
    %v3951 = vunpack.c.l.b16 %v704
    %v3952 = vunpack.c.h.b16 %v704
    %v3953 = vunpack.c.l.b16 %v705
    %v3954 = vunpack.c.h.b16 %v705
    %v3955 = vunpack.c.l.b16 %v706
    %v3956 = vunpack.c.h.b16 %v706
    %v3957 = vunpack.c.l.b16 %v707
    %v3958 = vunpack.c.h.b16 %v707
    %v3959 = vunpack.c.l.b16 %v708
    %v3960 = vunpack.c.h.b16 %v708
    %v3961 = vunpack.c.l.b16 %v709
    %v3962 = vunpack.c.h.b16 %v709
    %v3963 = vunpack.c.l.b16 %v710
    %v3964 = vunpack.c.h.b16 %v710
    %v3965 = vunpack.c.l.b16 %v711
    %v3966 = vunpack.c.h.b16 %v711
    %v3967 = vunpack.c.l.b16 %v712
    %v3968 = vunpack.c.h.b16 %v712
    %v3969 = vunpack.c.l.b16 %v713
    %v3970 = vunpack.c.h.b16 %v713
    %v3971 = vunpack.c.l.b16 %v714
    %v3972 = vunpack.c.h.b16 %v714
    %v3973 = vunpack.c.l.b16 %v715
    %v3974 = vunpack.c.h.b16 %v715
    %v3975 = vunpack.c.l.b16 %v716
    %v3976 = vunpack.c.h.b16 %v716
    %v3977 = vunpack.c.l.b16 %v717
    %v3978 = vunpack.c.h.b16 %v717
    %v3979 = vunpack.c.l.b16 %v718
    %v3980 = vunpack.c.h.b16 %v718
    %v3981 = vunpack.c.l.b16 %v719
    %v3982 = vunpack.c.h.b16 %v719
    %v3983 = vunpack.c.l.b16 %v720
    %v3984 = vunpack.c.h.b16 %v720
    %v3985 = vunpack.c.l.b16 %v721
    %v3986 = vunpack.c.h.b16 %v721
    %v3987 = vunpack.c.l.b16 %v722
    %v3988 = vunpack.c.h.b16 %v722
    %v3989 = vunpack.c.l.b16 %v723
    %v3990 = vunpack.c.h.b16 %v723
    %v3991 = vunpack.c.l.b16 %v724
    %v3992 = vunpack.c.h.b16 %v724
    %v3993 = vpack.c.b16 %v3485, %v3481
    %v3994 = vpack.c.b16 %v3486, %v3482
    %v3995 = vpack.c.b16 %v3487, %v3483
    %v3996 = vpack.c.b16 %v3488, %v3484
    %v3997 = vpack.c.b16 %v3493, %v3489
    %v3998 = vpack.c.b16 %v3494, %v3490
    %v3999 = vpack.c.b16 %v3495, %v3491
    %v4000 = vpack.c.b16 %v3496, %v3492
    %v4001 = vpack.c.b16 %v3501, %v3497
    %v4002 = vpack.c.b16 %v3502, %v3498
    %v4003 = vpack.c.b16 %v3503, %v3499
    %v4004 = vpack.c.b16 %v3504, %v3500
    %v4005 = vpack.c.b16 %v3509, %v3505
    %v4006 = vpack.c.b16 %v3510, %v3506
    %v4007 = vpack.c.b16 %v3511, %v3507
    %v4008 = vpack.c.b16 %v3512, %v3508
    %v4009 = vpack.c.b16 %v3517, %v3513
    %v4010 = vpack.c.b16 %v3518, %v3514
    %v4011 = vpack.c.b16 %v3519, %v3515
    %v4012 = vpack.c.b16 %v3520, %v3516
    %v4013 = vpack.c.b16 %v3525, %v3521
    %v4014 = vpack.c.b16 %v3526, %v3522
    %v4015 = vpack.c.b16 %v3527, %v3523
    %v4016 = vpack.c.b16 %v3528, %v3524
    %v4017 = vpack.c.b16 %v3533, %v3529
    %v4018 = vpack.c.b16 %v3534, %v3530
    %v4019 = vpack.c.b16 %v3535, %v3531
    %v4020 = vpack.c.b16 %v3536, %v3532
    %v4021 = vpack.c.b16 %v3541, %v3537
    %v4022 = vpack.c.b16 %v3542, %v3538
    %v4023 = vpack.c.b16 %v3543, %v3539
    %v4024 = vpack.c.b16 %v3544, %v3540
    %v4025 = vpack.c.b16 %v3549, %v3545
    %v4026 = vpack.c.b16 %v3550, %v3546
    %v4027 = vpack.c.b16 %v3551, %v3547
    %v4028 = vpack.c.b16 %v3552, %v3548
    %v4029 = vpack.c.b16 %v3557, %v3553
    %v4030 = vpack.c.b16 %v3558, %v3554
    %v4031 = vpack.c.b16 %v3559, %v3555
    %v4032 = vpack.c.b16 %v3560, %v3556
    %v4033 = vpack.c.b16 %v3565, %v3561
    %v4034 = vpack.c.b16 %v3566, %v3562
    %v4035 = vpack.c.b16 %v3567, %v3563
    %v4036 = vpack.c.b16 %v3568, %v3564
    %v4037 = vpack.c.b16 %v3573, %v3569
    %v4038 = vpack.c.b16 %v3574, %v3570
    %v4039 = vpack.c.b16 %v3575, %v3571
    %v4040 = vpack.c.b16 %v3576, %v3572
    %v4041 = vpack.c.b16 %v3581, %v3577
    %v4042 = vpack.c.b16 %v3582, %v3578
    %v4043 = vpack.c.b16 %v3583, %v3579
    %v4044 = vpack.c.b16 %v3584, %v3580
    %v4045 = vpack.c.b16 %v3589, %v3585
    %v4046 = vpack.c.b16 %v3590, %v3586
    %v4047 = vpack.c.b16 %v3591, %v3587
    %v4048 = vpack.c.b16 %v3592, %v3588
    %v4049 = vpack.c.b16 %v3597, %v3593
    %v4050 = vpack.c.b16 %v3598, %v3594
    %v4051 = vpack.c.b16 %v3599, %v3595
    %v4052 = vpack.c.b16 %v3600, %v3596
    %v4053 = vpack.c.b16 %v3605, %v3601
    %v4054 = vpack.c.b16 %v3606, %v3602
    %v4055 = vpack.c.b16 %v3607, %v3603
    %v4056 = vpack.c.b16 %v3608, %v3604
    %v4057 = vpack.c.b16 %v3613, %v3609
    %v4058 = vpack.c.b16 %v3614, %v3610
    %v4059 = vpack.c.b16 %v3615, %v3611
    %v4060 = vpack.c.b16 %v3616, %v3612
    %v4061 = vpack.c.b16 %v3621, %v3617
    %v4062 = vpack.c.b16 %v3622, %v3618
    %v4063 = vpack.c.b16 %v3623, %v3619
    %v4064 = vpack.c.b16 %v3624, %v3620
    %v4065 = vpack.c.b16 %v3629, %v3625
    %v4066 = vpack.c.b16 %v3630, %v3626
    %v4067 = vpack.c.b16 %v3631, %v3627
    %v4068 = vpack.c.b16 %v3632, %v3628
    %v4069 = vpack.c.b16 %v3637, %v3633
    %v4070 = vpack.c.b16 %v3638, %v3634
    %v4071 = vpack.c.b16 %v3639, %v3635
    %v4072 = vpack.c.b16 %v3640, %v3636
    %v4073 = vpack.c.b16 %v3645, %v3641
    %v4074 = vpack.c.b16 %v3646, %v3642
    %v4075 = vpack.c.b16 %v3647, %v3643
    %v4076 = vpack.c.b16 %v3648, %v3644
    %v4077 = vpack.c.b16 %v3653, %v3649
    %v4078 = vpack.c.b16 %v3654, %v3650
    %v4079 = vpack.c.b16 %v3655, %v3651
    %v4080 = vpack.c.b16 %v3656, %v3652
    %v4081 = vpack.c.b16 %v3661, %v3657
    %v4082 = vpack.c.b16 %v3662, %v3658
    %v4083 = vpack.c.b16 %v3663, %v3659
    %v4084 = vpack.c.b16 %v3664, %v3660
    %v4085 = vpack.c.b16 %v3669, %v3665
    %v4086 = vpack.c.b16 %v3670, %v3666
    %v4087 = vpack.c.b16 %v3671, %v3667
    %v4088 = vpack.c.b16 %v3672, %v3668
    %v4089 = vpack.c.b16 %v3677, %v3673
    %v4090 = vpack.c.b16 %v3678, %v3674
    %v4091 = vpack.c.b16 %v3679, %v3675
    %v4092 = vpack.c.b16 %v3680, %v3676
    %v4093 = vpack.c.b16 %v3685, %v3681
    %v4094 = vpack.c.b16 %v3686, %v3682
    %v4095 = vpack.c.b16 %v3687, %v3683
    %v4096 = vpack.c.b16 %v3688, %v3684
    %v4097 = vpack.c.b16 %v3693, %v3689
    %v4098 = vpack.c.b16 %v3694, %v3690
    %v4099 = vpack.c.b16 %v3695, %v3691
    %v4100 = vpack.c.b16 %v3696, %v3692
    %v4101 = vpack.c.b16 %v3701, %v3697
    %v4102 = vpack.c.b16 %v3702, %v3698
    %v4103 = vpack.c.b16 %v3703, %v3699
    %v4104 = vpack.c.b16 %v3704, %v3700
    %v4105 = vpack.c.b16 %v3709, %v3705
    %v4106 = vpack.c.b16 %v3710, %v3706
    %v4107 = vpack.c.b16 %v3711, %v3707
    %v4108 = vpack.c.b16 %v3712, %v3708
    %v4109 = vpack.c.b16 %v3717, %v3713
    %v4110 = vpack.c.b16 %v3718, %v3714
    %v4111 = vpack.c.b16 %v3719, %v3715
    %v4112 = vpack.c.b16 %v3720, %v3716
    %v4113 = vpack.c.b16 %v3725, %v3721
    %v4114 = vpack.c.b16 %v3726, %v3722
    %v4115 = vpack.c.b16 %v3727, %v3723
    %v4116 = vpack.c.b16 %v3728, %v3724
    %v4117 = vpack.c.b16 %v3733, %v3729
    %v4118 = vpack.c.b16 %v3734, %v3730
    %v4119 = vpack.c.b16 %v3735, %v3731
    %v4120 = vpack.c.b16 %v3736, %v3732
    %v4121 = vpack.c.b16 %v3741, %v3737
    %v4122 = vpack.c.b16 %v3742, %v3738
    %v4123 = vpack.c.b16 %v3743, %v3739
    %v4124 = vpack.c.b16 %v3744, %v3740
    %v4125 = vpack.c.b16 %v3749, %v3745
    %v4126 = vpack.c.b16 %v3750, %v3746
    %v4127 = vpack.c.b16 %v3751, %v3747
    %v4128 = vpack.c.b16 %v3752, %v3748
    %v4129 = vpack.c.b16 %v3757, %v3753
    %v4130 = vpack.c.b16 %v3758, %v3754
    %v4131 = vpack.c.b16 %v3759, %v3755
    %v4132 = vpack.c.b16 %v3760, %v3756
    %v4133 = vpack.c.b16 %v3765, %v3761
    %v4134 = vpack.c.b16 %v3766, %v3762
    %v4135 = vpack.c.b16 %v3767, %v3763
    %v4136 = vpack.c.b16 %v3768, %v3764
    %v4137 = vpack.c.b16 %v3773, %v3769
    %v4138 = vpack.c.b16 %v3774, %v3770
    %v4139 = vpack.c.b16 %v3775, %v3771
    %v4140 = vpack.c.b16 %v3776, %v3772
    %v4141 = vpack.c.b16 %v3781, %v3777
    %v4142 = vpack.c.b16 %v3782, %v3778
    %v4143 = vpack.c.b16 %v3783, %v3779
    %v4144 = vpack.c.b16 %v3784, %v3780
    %v4145 = vpack.c.b16 %v3789, %v3785
    %v4146 = vpack.c.b16 %v3790, %v3786
    %v4147 = vpack.c.b16 %v3791, %v3787
    %v4148 = vpack.c.b16 %v3792, %v3788
    %v4149 = vpack.c.b16 %v3797, %v3793
    %v4150 = vpack.c.b16 %v3798, %v3794
    %v4151 = vpack.c.b16 %v3799, %v3795
    %v4152 = vpack.c.b16 %v3800, %v3796
    %v4153 = vpack.c.b16 %v3805, %v3801
    %v4154 = vpack.c.b16 %v3806, %v3802
    %v4155 = vpack.c.b16 %v3807, %v3803
    %v4156 = vpack.c.b16 %v3808, %v3804
    %v4157 = vpack.c.b16 %v3813, %v3809
    %v4158 = vpack.c.b16 %v3814, %v3810
    %v4159 = vpack.c.b16 %v3815, %v3811
    %v4160 = vpack.c.b16 %v3816, %v3812
    %v4161 = vpack.c.b16 %v3821, %v3817
    %v4162 = vpack.c.b16 %v3822, %v3818
    %v4163 = vpack.c.b16 %v3823, %v3819
    %v4164 = vpack.c.b16 %v3824, %v3820
    %v4165 = vpack.c.b16 %v3829, %v3825
    %v4166 = vpack.c.b16 %v3830, %v3826
    %v4167 = vpack.c.b16 %v3831, %v3827
    %v4168 = vpack.c.b16 %v3832, %v3828
    %v4169 = vpack.c.b16 %v3837, %v3833
    %v4170 = vpack.c.b16 %v3838, %v3834
    %v4171 = vpack.c.b16 %v3839, %v3835
    %v4172 = vpack.c.b16 %v3840, %v3836
    %v4173 = vpack.c.b16 %v3845, %v3841
    %v4174 = vpack.c.b16 %v3846, %v3842
    %v4175 = vpack.c.b16 %v3847, %v3843
    %v4176 = vpack.c.b16 %v3848, %v3844
    %v4177 = vpack.c.b16 %v3853, %v3849
    %v4178 = vpack.c.b16 %v3854, %v3850
    %v4179 = vpack.c.b16 %v3855, %v3851
    %v4180 = vpack.c.b16 %v3856, %v3852
    %v4181 = vpack.c.b16 %v3861, %v3857
    %v4182 = vpack.c.b16 %v3862, %v3858
    %v4183 = vpack.c.b16 %v3863, %v3859
    %v4184 = vpack.c.b16 %v3864, %v3860
    %v4185 = vpack.c.b16 %v3869, %v3865
    %v4186 = vpack.c.b16 %v3870, %v3866
    %v4187 = vpack.c.b16 %v3871, %v3867
    %v4188 = vpack.c.b16 %v3872, %v3868
    %v4189 = vpack.c.b16 %v3877, %v3873
    %v4190 = vpack.c.b16 %v3878, %v3874
    %v4191 = vpack.c.b16 %v3879, %v3875
    %v4192 = vpack.c.b16 %v3880, %v3876
    %v4193 = vpack.c.b16 %v3885, %v3881
    %v4194 = vpack.c.b16 %v3886, %v3882
    %v4195 = vpack.c.b16 %v3887, %v3883
    %v4196 = vpack.c.b16 %v3888, %v3884
    %v4197 = vpack.c.b16 %v3893, %v3889
    %v4198 = vpack.c.b16 %v3894, %v3890
    %v4199 = vpack.c.b16 %v3895, %v3891
    %v4200 = vpack.c.b16 %v3896, %v3892
    %v4201 = vpack.c.b16 %v3901, %v3897
    %v4202 = vpack.c.b16 %v3902, %v3898
    %v4203 = vpack.c.b16 %v3903, %v3899
    %v4204 = vpack.c.b16 %v3904, %v3900
    %v4205 = vpack.c.b16 %v3909, %v3905
    %v4206 = vpack.c.b16 %v3910, %v3906
    %v4207 = vpack.c.b16 %v3911, %v3907
    %v4208 = vpack.c.b16 %v3912, %v3908
    %v4209 = vpack.c.b16 %v3917, %v3913
    %v4210 = vpack.c.b16 %v3918, %v3914
    %v4211 = vpack.c.b16 %v3919, %v3915
    %v4212 = vpack.c.b16 %v3920, %v3916
    %v4213 = vpack.c.b16 %v3925, %v3921
    %v4214 = vpack.c.b16 %v3926, %v3922
    %v4215 = vpack.c.b16 %v3927, %v3923
    %v4216 = vpack.c.b16 %v3928, %v3924
    %v4217 = vpack.c.b16 %v3933, %v3929
    %v4218 = vpack.c.b16 %v3934, %v3930
    %v4219 = vpack.c.b16 %v3935, %v3931
    %v4220 = vpack.c.b16 %v3936, %v3932
    %v4221 = vpack.c.b16 %v3941, %v3937
    %v4222 = vpack.c.b16 %v3942, %v3938
    %v4223 = vpack.c.b16 %v3943, %v3939
    %v4224 = vpack.c.b16 %v3944, %v3940
    %v4225 = vpack.c.b16 %v3949, %v3945
    %v4226 = vpack.c.b16 %v3950, %v3946
    %v4227 = vpack.c.b16 %v3951, %v3947
    %v4228 = vpack.c.b16 %v3952, %v3948
    %v4229 = vpack.c.b16 %v3957, %v3953
    %v4230 = vpack.c.b16 %v3958, %v3954
    %v4231 = vpack.c.b16 %v3959, %v3955
    %v4232 = vpack.c.b16 %v3960, %v3956
    %v4233 = vpack.c.b16 %v3965, %v3961
    %v4234 = vpack.c.b16 %v3966, %v3962
    %v4235 = vpack.c.b16 %v3967, %v3963
    %v4236 = vpack.c.b16 %v3968, %v3964
    %v4237 = vpack.c.b16 %v3973, %v3969
    %v4238 = vpack.c.b16 %v3974, %v3970
    %v4239 = vpack.c.b16 %v3975, %v3971
    %v4240 = vpack.c.b16 %v3976, %v3972
    %v4241 = vpack.c.b16 %v3981, %v3977
    %v4242 = vpack.c.b16 %v3982, %v3978
    %v4243 = vpack.c.b16 %v3983, %v3979
    %v4244 = vpack.c.b16 %v3984, %v3980
    %v4245 = vpack.c.b16 %v3989, %v3985
    %v4246 = vpack.c.b16 %v3990, %v3986
    %v4247 = vpack.c.b16 %v3991, %v3987
    %v4248 = vpack.c.b16 %v3992, %v3988
    %4505 = vmatpush.bf16.msra.mxu0 %v4021
    %4506 = vmatpush.bf16.msra.mxu0 %v4017
    %4507 = vmatpush.bf16.msra.mxu0 %v4013
    %4508 = vmatpush.bf16.msra.mxu0 %v4009
    %4509 = vmatpush.bf16.msra.mxu0 %v4005
    %4510 = vmatpush.bf16.msra.mxu0 %v4001
    %4511 = vmatpush.bf16.msra.mxu0 %v3997
    %4512 = vmatpush.bf16.msra.mxu0 %v3993
    %4513 = vmatmul.bf16.gmra.mxu0 %v3193
    %v4514 = vpop.f32.mrf.mxu0
    %v4515 = vadd.f32 %v2680, %v4514
    %v4516 = vpop.f32.mrf.mxu0
    %v4517 = vadd.f32 %v2682, %v4516
    %4518 = vmatmul.bf16.gmra.mxu0 %v3201
    %v4519 = vpop.f32.mrf.mxu0
    %v4520 = vadd.f32 %v2685, %v4519
    %v4521 = vpop.f32.mrf.mxu0
    %v4522 = vadd.f32 %v2687, %v4521
    %4523 = vdwg.mxu0
    %4524 = vmatpush.bf16.msra.mxu0 %v4053
    %4525 = vmatpush.bf16.msra.mxu0 %v4049
    %4526 = vmatpush.bf16.msra.mxu0 %v4045
    %4527 = vmatpush.bf16.msra.mxu0 %v4041
    %4528 = vmatpush.bf16.msra.mxu0 %v4037
    %4529 = vmatpush.bf16.msra.mxu0 %v4033
    %4530 = vmatpush.bf16.msra.mxu0 %v4029
    %4531 = vmatpush.bf16.msra.mxu0 %v4025
    %4532 = vmatmul.bf16.gmra.mxu0 %v3194
    %v4533 = vpop.f32.mrf.mxu0
    %v4534 = vadd.f32 %v4515, %v4533
    %v4535 = vpop.f32.mrf.mxu0
    %v4536 = vadd.f32 %v4517, %v4535
    %4537 = vmatmul.bf16.gmra.mxu0 %v3202
    %v4538 = vpop.f32.mrf.mxu0
    %v4539 = vadd.f32 %v4520, %v4538
    %v4540 = vpop.f32.mrf.mxu0
    %v4541 = vadd.f32 %v4522, %v4540
    %4542 = vdwg.mxu0
    %4543 = vmatpush.bf16.msra.mxu0 %v4085
    %4544 = vmatpush.bf16.msra.mxu0 %v4081
    %4545 = vmatpush.bf16.msra.mxu0 %v4077
    %4546 = vmatpush.bf16.msra.mxu0 %v4073
    %4547 = vmatpush.bf16.msra.mxu0 %v4069
    %4548 = vmatpush.bf16.msra.mxu0 %v4065
    %4549 = vmatpush.bf16.msra.mxu0 %v4061
    %4550 = vmatpush.bf16.msra.mxu0 %v4057
    %4551 = vmatmul.bf16.gmra.mxu0 %v3195
    %v4552 = vpop.f32.mrf.mxu0
    %v4553 = vadd.f32 %v4534, %v4552
    %v4554 = vpop.f32.mrf.mxu0
    %v4555 = vadd.f32 %v4536, %v4554
    %4556 = vmatmul.bf16.gmra.mxu0 %v3203
    %v4557 = vpop.f32.mrf.mxu0
    %v4558 = vadd.f32 %v4539, %v4557
    %v4559 = vpop.f32.mrf.mxu0
    %v4560 = vadd.f32 %v4541, %v4559
    %4561 = vdwg.mxu0
    %4562 = vmatpush.bf16.msra.mxu0 %v4117
    %4563 = vmatpush.bf16.msra.mxu0 %v4113
    %4564 = vmatpush.bf16.msra.mxu0 %v4109
    %4565 = vmatpush.bf16.msra.mxu0 %v4105
    %4566 = vmatpush.bf16.msra.mxu0 %v4101
    %4567 = vmatpush.bf16.msra.mxu0 %v4097
    %4568 = vmatpush.bf16.msra.mxu0 %v4093
    %4569 = vmatpush.bf16.msra.mxu0 %v4089
    %4570 = vmatmul.bf16.gmra.mxu0 %v3196
    %v4571 = vpop.f32.mrf.mxu0
    %v4572 = vadd.f32 %v4553, %v4571
    %v4573 = vpop.f32.mrf.mxu0
    %v4574 = vadd.f32 %v4555, %v4573
    %4575 = vmatmul.bf16.gmra.mxu0 %v3204
    %v4576 = vpop.f32.mrf.mxu0
    %v4577 = vadd.f32 %v4558, %v4576
    %v4578 = vpop.f32.mrf.mxu0
    %v4579 = vadd.f32 %v4560, %v4578
    %4580 = vdwg.mxu0
    %4581 = vmatpush.bf16.msra.mxu0 %v4149
    %4582 = vmatpush.bf16.msra.mxu0 %v4145
    %4583 = vmatpush.bf16.msra.mxu0 %v4141
    %4584 = vmatpush.bf16.msra.mxu0 %v4137
    %4585 = vmatpush.bf16.msra.mxu0 %v4133
    %4586 = vmatpush.bf16.msra.mxu0 %v4129
    %4587 = vmatpush.bf16.msra.mxu0 %v4125
    %4588 = vmatpush.bf16.msra.mxu0 %v4121
    %4589 = vmatmul.bf16.gmra.mxu0 %v3197
    %v4590 = vpop.f32.mrf.mxu0
    %v4591 = vadd.f32 %v4572, %v4590
    %v4592 = vpop.f32.mrf.mxu0
    %v4593 = vadd.f32 %v4574, %v4592
    %4594 = vmatmul.bf16.gmra.mxu0 %v3205
    %v4595 = vpop.f32.mrf.mxu0
    %v4596 = vadd.f32 %v4577, %v4595
    %v4597 = vpop.f32.mrf.mxu0
    %v4598 = vadd.f32 %v4579, %v4597
    %4599 = vdwg.mxu0
    %4600 = vmatpush.bf16.msra.mxu0 %v4181
    %4601 = vmatpush.bf16.msra.mxu0 %v4177
    %4602 = vmatpush.bf16.msra.mxu0 %v4173
    %4603 = vmatpush.bf16.msra.mxu0 %v4169
    %4604 = vmatpush.bf16.msra.mxu0 %v4165
    %4605 = vmatpush.bf16.msra.mxu0 %v4161
    %4606 = vmatpush.bf16.msra.mxu0 %v4157
    %4607 = vmatpush.bf16.msra.mxu0 %v4153
    %4608 = vmatmul.bf16.gmra.mxu0 %v3198
    %v4609 = vpop.f32.mrf.mxu0
    %v4610 = vadd.f32 %v4591, %v4609
    %v4611 = vpop.f32.mrf.mxu0
    %v4612 = vadd.f32 %v4593, %v4611
    %4613 = vmatmul.bf16.gmra.mxu0 %v3206
    %v4614 = vpop.f32.mrf.mxu0
    %v4615 = vadd.f32 %v4596, %v4614
    %v4616 = vpop.f32.mrf.mxu0
    %v4617 = vadd.f32 %v4598, %v4616
    %4618 = vdwg.mxu0
    %4619 = vmatpush.bf16.msra.mxu0 %v4213
    %4620 = vmatpush.bf16.msra.mxu0 %v4209
    %4621 = vmatpush.bf16.msra.mxu0 %v4205
    %4622 = vmatpush.bf16.msra.mxu0 %v4201
    %4623 = vmatpush.bf16.msra.mxu0 %v4197
    %4624 = vmatpush.bf16.msra.mxu0 %v4193
    %4625 = vmatpush.bf16.msra.mxu0 %v4189
    %4626 = vmatpush.bf16.msra.mxu0 %v4185
    %4627 = vmatmul.bf16.gmra.mxu0 %v3199
    %v4628 = vpop.f32.mrf.mxu0
    %v4629 = vadd.f32 %v4610, %v4628
    %v4630 = vpop.f32.mrf.mxu0
    %v4631 = vadd.f32 %v4612, %v4630
    %4632 = vmatmul.bf16.gmra.mxu0 %v3207
    %v4633 = vpop.f32.mrf.mxu0
    %v4634 = vadd.f32 %v4615, %v4633
    %v4635 = vpop.f32.mrf.mxu0
    %v4636 = vadd.f32 %v4617, %v4635
    %4637 = vdwg.mxu0
    %4638 = vmatpush.bf16.msra.mxu0 %v4245
    %4639 = vmatpush.bf16.msra.mxu0 %v4241
    %4640 = vmatpush.bf16.msra.mxu0 %v4237
    %4641 = vmatpush.bf16.msra.mxu0 %v4233
    %4642 = vmatpush.bf16.msra.mxu0 %v4229
    %4643 = vmatpush.bf16.msra.mxu0 %v4225
    %4644 = vmatpush.bf16.msra.mxu0 %v4221
    %4645 = vmatpush.bf16.msra.mxu0 %v4217
    %4646 = vmatmul.bf16.gmra.mxu0 %v3200
    %v4647 = vpop.f32.mrf.mxu0
    %v4648 = vadd.f32 %v4629, %v4647
    %v4649 = vpop.f32.mrf.mxu0
    %v4650 = vadd.f32 %v4631, %v4649
    %4651 = vmatmul.bf16.gmra.mxu0 %v3208
    %v4652 = vpop.f32.mrf.mxu0
    %v4653 = vadd.f32 %v4634, %v4652
    %v4654 = vpop.f32.mrf.mxu0
    %v4655 = vadd.f32 %v4636, %v4654
    %4656 = vdwg.mxu0
    %4657 = vmatpush.bf16.msra.mxu0 %v4022
    %4658 = vmatpush.bf16.msra.mxu0 %v4018
    %4659 = vmatpush.bf16.msra.mxu0 %v4014
    %4660 = vmatpush.bf16.msra.mxu0 %v4010
    %4661 = vmatpush.bf16.msra.mxu0 %v4006
    %4662 = vmatpush.bf16.msra.mxu0 %v4002
    %4663 = vmatpush.bf16.msra.mxu0 %v3998
    %4664 = vmatpush.bf16.msra.mxu0 %v3994
    %4665 = vmatmul.bf16.gmra.mxu0 %v3193
    %v4666 = vpop.f32.mrf.mxu0
    %v4667 = vadd.f32 %v2832, %v4666
    %v4668 = vpop.f32.mrf.mxu0
    %v4669 = vadd.f32 %v2834, %v4668
    %4670 = vmatmul.bf16.gmra.mxu0 %v3201
    %v4671 = vpop.f32.mrf.mxu0
    %v4672 = vadd.f32 %v2837, %v4671
    %v4673 = vpop.f32.mrf.mxu0
    %v4674 = vadd.f32 %v2839, %v4673
    %4675 = vdwg.mxu0
    %4676 = vmatpush.bf16.msra.mxu0 %v4054
    %4677 = vmatpush.bf16.msra.mxu0 %v4050
    %4678 = vmatpush.bf16.msra.mxu0 %v4046
    %4679 = vmatpush.bf16.msra.mxu0 %v4042
    %4680 = vmatpush.bf16.msra.mxu0 %v4038
    %4681 = vmatpush.bf16.msra.mxu0 %v4034
    %4682 = vmatpush.bf16.msra.mxu0 %v4030
    %4683 = vmatpush.bf16.msra.mxu0 %v4026
    %4684 = vmatmul.bf16.gmra.mxu0 %v3194
    %v4685 = vpop.f32.mrf.mxu0
    %v4686 = vadd.f32 %v4667, %v4685
    %v4687 = vpop.f32.mrf.mxu0
    %v4688 = vadd.f32 %v4669, %v4687
    %4689 = vmatmul.bf16.gmra.mxu0 %v3202
    %v4690 = vpop.f32.mrf.mxu0
    %v4691 = vadd.f32 %v4672, %v4690
    %v4692 = vpop.f32.mrf.mxu0
    %v4693 = vadd.f32 %v4674, %v4692
    %4694 = vdwg.mxu0
    %4695 = vmatpush.bf16.msra.mxu0 %v4086
    %4696 = vmatpush.bf16.msra.mxu0 %v4082
    %4697 = vmatpush.bf16.msra.mxu0 %v4078
    %4698 = vmatpush.bf16.msra.mxu0 %v4074
    %4699 = vmatpush.bf16.msra.mxu0 %v4070
    %4700 = vmatpush.bf16.msra.mxu0 %v4066
    %4701 = vmatpush.bf16.msra.mxu0 %v4062
    %4702 = vmatpush.bf16.msra.mxu0 %v4058
    %4703 = vmatmul.bf16.gmra.mxu0 %v3195
    %v4704 = vpop.f32.mrf.mxu0
    %v4705 = vadd.f32 %v4686, %v4704
    %v4706 = vpop.f32.mrf.mxu0
    %v4707 = vadd.f32 %v4688, %v4706
    %4708 = vmatmul.bf16.gmra.mxu0 %v3203
    %v4709 = vpop.f32.mrf.mxu0
    %v4710 = vadd.f32 %v4691, %v4709
    %v4711 = vpop.f32.mrf.mxu0
    %v4712 = vadd.f32 %v4693, %v4711
    %4713 = vdwg.mxu0
    %4714 = vmatpush.bf16.msra.mxu0 %v4118
    %4715 = vmatpush.bf16.msra.mxu0 %v4114
    %4716 = vmatpush.bf16.msra.mxu0 %v4110
    %4717 = vmatpush.bf16.msra.mxu0 %v4106
    %4718 = vmatpush.bf16.msra.mxu0 %v4102
    %4719 = vmatpush.bf16.msra.mxu0 %v4098
    %4720 = vmatpush.bf16.msra.mxu0 %v4094
    %4721 = vmatpush.bf16.msra.mxu0 %v4090
    %4722 = vmatmul.bf16.gmra.mxu0 %v3196
    %v4723 = vpop.f32.mrf.mxu0
    %v4724 = vadd.f32 %v4705, %v4723
    %v4725 = vpop.f32.mrf.mxu0
    %v4726 = vadd.f32 %v4707, %v4725
    %4727 = vmatmul.bf16.gmra.mxu0 %v3204
    %v4728 = vpop.f32.mrf.mxu0
    %v4729 = vadd.f32 %v4710, %v4728
    %v4730 = vpop.f32.mrf.mxu0
    %v4731 = vadd.f32 %v4712, %v4730
    %4732 = vdwg.mxu0
    %4733 = vmatpush.bf16.msra.mxu0 %v4150
    %4734 = vmatpush.bf16.msra.mxu0 %v4146
    %4735 = vmatpush.bf16.msra.mxu0 %v4142
    %4736 = vmatpush.bf16.msra.mxu0 %v4138
    %4737 = vmatpush.bf16.msra.mxu0 %v4134
    %4738 = vmatpush.bf16.msra.mxu0 %v4130
    %4739 = vmatpush.bf16.msra.mxu0 %v4126
    %4740 = vmatpush.bf16.msra.mxu0 %v4122
    %4741 = vmatmul.bf16.gmra.mxu0 %v3197
    %v4742 = vpop.f32.mrf.mxu0
    %v4743 = vadd.f32 %v4724, %v4742
    %v4744 = vpop.f32.mrf.mxu0
    %v4745 = vadd.f32 %v4726, %v4744
    %4746 = vmatmul.bf16.gmra.mxu0 %v3205
    %v4747 = vpop.f32.mrf.mxu0
    %v4748 = vadd.f32 %v4729, %v4747
    %v4749 = vpop.f32.mrf.mxu0
    %v4750 = vadd.f32 %v4731, %v4749
    %4751 = vdwg.mxu0
    %4752 = vmatpush.bf16.msra.mxu0 %v4182
    %4753 = vmatpush.bf16.msra.mxu0 %v4178
    %4754 = vmatpush.bf16.msra.mxu0 %v4174
    %4755 = vmatpush.bf16.msra.mxu0 %v4170
    %4756 = vmatpush.bf16.msra.mxu0 %v4166
    %4757 = vmatpush.bf16.msra.mxu0 %v4162
    %4758 = vmatpush.bf16.msra.mxu0 %v4158
    %4759 = vmatpush.bf16.msra.mxu0 %v4154
    %4760 = vmatmul.bf16.gmra.mxu0 %v3198
    %v4761 = vpop.f32.mrf.mxu0
    %v4762 = vadd.f32 %v4743, %v4761
    %v4763 = vpop.f32.mrf.mxu0
    %v4764 = vadd.f32 %v4745, %v4763
    %4765 = vmatmul.bf16.gmra.mxu0 %v3206
    %v4766 = vpop.f32.mrf.mxu0
    %v4767 = vadd.f32 %v4748, %v4766
    %v4768 = vpop.f32.mrf.mxu0
    %v4769 = vadd.f32 %v4750, %v4768
    %4770 = vdwg.mxu0
    %4771 = vmatpush.bf16.msra.mxu0 %v4214
    %4772 = vmatpush.bf16.msra.mxu0 %v4210
    %4773 = vmatpush.bf16.msra.mxu0 %v4206
    %4774 = vmatpush.bf16.msra.mxu0 %v4202
    %4775 = vmatpush.bf16.msra.mxu0 %v4198
    %4776 = vmatpush.bf16.msra.mxu0 %v4194
    %4777 = vmatpush.bf16.msra.mxu0 %v4190
    %4778 = vmatpush.bf16.msra.mxu0 %v4186
    %4779 = vmatmul.bf16.gmra.mxu0 %v3199
    %v4780 = vpop.f32.mrf.mxu0
    %v4781 = vadd.f32 %v4762, %v4780
    %v4782 = vpop.f32.mrf.mxu0
    %v4783 = vadd.f32 %v4764, %v4782
    %4784 = vmatmul.bf16.gmra.mxu0 %v3207
    %v4785 = vpop.f32.mrf.mxu0
    %v4786 = vadd.f32 %v4767, %v4785
    %v4787 = vpop.f32.mrf.mxu0
    %v4788 = vadd.f32 %v4769, %v4787
    %4789 = vdwg.mxu0
    %4790 = vmatpush.bf16.msra.mxu0 %v4246
    %4791 = vmatpush.bf16.msra.mxu0 %v4242
    %4792 = vmatpush.bf16.msra.mxu0 %v4238
    %4793 = vmatpush.bf16.msra.mxu0 %v4234
    %4794 = vmatpush.bf16.msra.mxu0 %v4230
    %4795 = vmatpush.bf16.msra.mxu0 %v4226
    %4796 = vmatpush.bf16.msra.mxu0 %v4222
    %4797 = vmatpush.bf16.msra.mxu0 %v4218
    %4798 = vmatmul.bf16.gmra.mxu0 %v3200
    %v4799 = vpop.f32.mrf.mxu0
    %v4800 = vadd.f32 %v4781, %v4799
    %v4801 = vpop.f32.mrf.mxu0
    %v4802 = vadd.f32 %v4783, %v4801
    %4803 = vmatmul.bf16.gmra.mxu0 %v3208
    %v4804 = vpop.f32.mrf.mxu0
    %v4805 = vadd.f32 %v4786, %v4804
    %v4806 = vpop.f32.mrf.mxu0
    %v4807 = vadd.f32 %v4788, %v4806
    %4808 = vdwg.mxu0
    %4809 = vmatpush.bf16.msra.mxu0 %v4023
    %4810 = vmatpush.bf16.msra.mxu0 %v4019
    %4811 = vmatpush.bf16.msra.mxu0 %v4015
    %4812 = vmatpush.bf16.msra.mxu0 %v4011
    %4813 = vmatpush.bf16.msra.mxu0 %v4007
    %4814 = vmatpush.bf16.msra.mxu0 %v4003
    %4815 = vmatpush.bf16.msra.mxu0 %v3999
    %4816 = vmatpush.bf16.msra.mxu0 %v3995
    %4817 = vmatmul.bf16.gmra.mxu0 %v3193
    %v4818 = vpop.f32.mrf.mxu0
    %v4819 = vadd.f32 %v2984, %v4818
    %v4820 = vpop.f32.mrf.mxu0
    %v4821 = vadd.f32 %v2986, %v4820
    %4822 = vmatmul.bf16.gmra.mxu0 %v3201
    %v4823 = vpop.f32.mrf.mxu0
    %v4824 = vadd.f32 %v2989, %v4823
    %v4825 = vpop.f32.mrf.mxu0
    %v4826 = vadd.f32 %v2991, %v4825
    %4827 = vdwg.mxu0
    %4828 = vmatpush.bf16.msra.mxu0 %v4055
    %4829 = vmatpush.bf16.msra.mxu0 %v4051
    %4830 = vmatpush.bf16.msra.mxu0 %v4047
    %4831 = vmatpush.bf16.msra.mxu0 %v4043
    %4832 = vmatpush.bf16.msra.mxu0 %v4039
    %4833 = vmatpush.bf16.msra.mxu0 %v4035
    %4834 = vmatpush.bf16.msra.mxu0 %v4031
    %4835 = vmatpush.bf16.msra.mxu0 %v4027
    %4836 = vmatmul.bf16.gmra.mxu0 %v3194
    %v4837 = vpop.f32.mrf.mxu0
    %v4838 = vadd.f32 %v4819, %v4837
    %v4839 = vpop.f32.mrf.mxu0
    %v4840 = vadd.f32 %v4821, %v4839
    %4841 = vmatmul.bf16.gmra.mxu0 %v3202
    %v4842 = vpop.f32.mrf.mxu0
    %v4843 = vadd.f32 %v4824, %v4842
    %v4844 = vpop.f32.mrf.mxu0
    %v4845 = vadd.f32 %v4826, %v4844
    %4846 = vdwg.mxu0
    %4847 = vmatpush.bf16.msra.mxu0 %v4087
    %4848 = vmatpush.bf16.msra.mxu0 %v4083
    %4849 = vmatpush.bf16.msra.mxu0 %v4079
    %4850 = vmatpush.bf16.msra.mxu0 %v4075
    %4851 = vmatpush.bf16.msra.mxu0 %v4071
    %4852 = vmatpush.bf16.msra.mxu0 %v4067
    %4853 = vmatpush.bf16.msra.mxu0 %v4063
    %4854 = vmatpush.bf16.msra.mxu0 %v4059
    %4855 = vmatmul.bf16.gmra.mxu0 %v3195
    %v4856 = vpop.f32.mrf.mxu0
    %v4857 = vadd.f32 %v4838, %v4856
    %v4858 = vpop.f32.mrf.mxu0
    %v4859 = vadd.f32 %v4840, %v4858
    %4860 = vmatmul.bf16.gmra.mxu0 %v3203
    %v4861 = vpop.f32.mrf.mxu0
    %v4862 = vadd.f32 %v4843, %v4861
    %v4863 = vpop.f32.mrf.mxu0
    %v4864 = vadd.f32 %v4845, %v4863
    %4865 = vdwg.mxu0
    %4866 = vmatpush.bf16.msra.mxu0 %v4119
    %4867 = vmatpush.bf16.msra.mxu0 %v4115
    %4868 = vmatpush.bf16.msra.mxu0 %v4111
    %4869 = vmatpush.bf16.msra.mxu0 %v4107
    %4870 = vmatpush.bf16.msra.mxu0 %v4103
    %4871 = vmatpush.bf16.msra.mxu0 %v4099
    %4872 = vmatpush.bf16.msra.mxu0 %v4095
    %4873 = vmatpush.bf16.msra.mxu0 %v4091
    %4874 = vmatmul.bf16.gmra.mxu0 %v3196
    %v4875 = vpop.f32.mrf.mxu0
    %v4876 = vadd.f32 %v4857, %v4875
    %v4877 = vpop.f32.mrf.mxu0
    %v4878 = vadd.f32 %v4859, %v4877
    %4879 = vmatmul.bf16.gmra.mxu0 %v3204
    %v4880 = vpop.f32.mrf.mxu0
    %v4881 = vadd.f32 %v4862, %v4880
    %v4882 = vpop.f32.mrf.mxu0
    %v4883 = vadd.f32 %v4864, %v4882
    %4884 = vdwg.mxu0
    %4885 = vmatpush.bf16.msra.mxu0 %v4151
    %4886 = vmatpush.bf16.msra.mxu0 %v4147
    %4887 = vmatpush.bf16.msra.mxu0 %v4143
    %4888 = vmatpush.bf16.msra.mxu0 %v4139
    %4889 = vmatpush.bf16.msra.mxu0 %v4135
    %4890 = vmatpush.bf16.msra.mxu0 %v4131
    %4891 = vmatpush.bf16.msra.mxu0 %v4127
    %4892 = vmatpush.bf16.msra.mxu0 %v4123
    %4893 = vmatmul.bf16.gmra.mxu0 %v3197
    %v4894 = vpop.f32.mrf.mxu0
    %v4895 = vadd.f32 %v4876, %v4894
    %v4896 = vpop.f32.mrf.mxu0
    %v4897 = vadd.f32 %v4878, %v4896
    %4898 = vmatmul.bf16.gmra.mxu0 %v3205
    %v4899 = vpop.f32.mrf.mxu0
    %v4900 = vadd.f32 %v4881, %v4899
    %v4901 = vpop.f32.mrf.mxu0
    %v4902 = vadd.f32 %v4883, %v4901
    %4903 = vdwg.mxu0
    %4904 = vmatpush.bf16.msra.mxu0 %v4183
    %4905 = vmatpush.bf16.msra.mxu0 %v4179
    %4906 = vmatpush.bf16.msra.mxu0 %v4175
    %4907 = vmatpush.bf16.msra.mxu0 %v4171
    %4908 = vmatpush.bf16.msra.mxu0 %v4167
    %4909 = vmatpush.bf16.msra.mxu0 %v4163
    %4910 = vmatpush.bf16.msra.mxu0 %v4159
    %4911 = vmatpush.bf16.msra.mxu0 %v4155
    %4912 = vmatmul.bf16.gmra.mxu0 %v3198
    %v4913 = vpop.f32.mrf.mxu0
    %v4914 = vadd.f32 %v4895, %v4913
    %v4915 = vpop.f32.mrf.mxu0
    %v4916 = vadd.f32 %v4897, %v4915
    %4917 = vmatmul.bf16.gmra.mxu0 %v3206
    %v4918 = vpop.f32.mrf.mxu0
    %v4919 = vadd.f32 %v4900, %v4918
    %v4920 = vpop.f32.mrf.mxu0
    %v4921 = vadd.f32 %v4902, %v4920
    %4922 = vdwg.mxu0
    %4923 = vmatpush.bf16.msra.mxu0 %v4215
    %4924 = vmatpush.bf16.msra.mxu0 %v4211
    %4925 = vmatpush.bf16.msra.mxu0 %v4207
    %4926 = vmatpush.bf16.msra.mxu0 %v4203
    %4927 = vmatpush.bf16.msra.mxu0 %v4199
    %4928 = vmatpush.bf16.msra.mxu0 %v4195
    %4929 = vmatpush.bf16.msra.mxu0 %v4191
    %4930 = vmatpush.bf16.msra.mxu0 %v4187
    %4931 = vmatmul.bf16.gmra.mxu0 %v3199
    %v4932 = vpop.f32.mrf.mxu0
    %v4933 = vadd.f32 %v4914, %v4932
    %v4934 = vpop.f32.mrf.mxu0
    %v4935 = vadd.f32 %v4916, %v4934
    %4936 = vmatmul.bf16.gmra.mxu0 %v3207
    %v4937 = vpop.f32.mrf.mxu0
    %v4938 = vadd.f32 %v4919, %v4937
    %v4939 = vpop.f32.mrf.mxu0
    %v4940 = vadd.f32 %v4921, %v4939
    %4941 = vdwg.mxu0
    %4942 = vmatpush.bf16.msra.mxu0 %v4247
    %4943 = vmatpush.bf16.msra.mxu0 %v4243
    %4944 = vmatpush.bf16.msra.mxu0 %v4239
    %4945 = vmatpush.bf16.msra.mxu0 %v4235
    %4946 = vmatpush.bf16.msra.mxu0 %v4231
    %4947 = vmatpush.bf16.msra.mxu0 %v4227
    %4948 = vmatpush.bf16.msra.mxu0 %v4223
    %4949 = vmatpush.bf16.msra.mxu0 %v4219
    %4950 = vmatmul.bf16.gmra.mxu0 %v3200
    %v4951 = vpop.f32.mrf.mxu0
    %v4952 = vadd.f32 %v4933, %v4951
    %v4953 = vpop.f32.mrf.mxu0
    %v4954 = vadd.f32 %v4935, %v4953
    %4955 = vmatmul.bf16.gmra.mxu0 %v3208
    %v4956 = vpop.f32.mrf.mxu0
    %v4957 = vadd.f32 %v4938, %v4956
    %v4958 = vpop.f32.mrf.mxu0
    %v4959 = vadd.f32 %v4940, %v4958
    %4960 = vdwg.mxu0
    %4961 = vmatpush.bf16.msra.mxu0 %v4024
    %4962 = vmatpush.bf16.msra.mxu0 %v4020
    %4963 = vmatpush.bf16.msra.mxu0 %v4016
    %4964 = vmatpush.bf16.msra.mxu0 %v4012
    %4965 = vmatpush.bf16.msra.mxu0 %v4008
    %4966 = vmatpush.bf16.msra.mxu0 %v4004
    %4967 = vmatpush.bf16.msra.mxu0 %v4000
    %4968 = vmatpush.bf16.msra.mxu0 %v3996
    %4969 = vmatmul.bf16.gmra.mxu0 %v3193
    %v4970 = vpop.f32.mrf.mxu0
    %v4971 = vadd.f32 %v3136, %v4970
    %v4972 = vpop.f32.mrf.mxu0
    %v4973 = vadd.f32 %v3138, %v4972
    %4974 = vmatmul.bf16.gmra.mxu0 %v3201
    %v4975 = vpop.f32.mrf.mxu0
    %v4976 = vadd.f32 %v3141, %v4975
    %v4977 = vpop.f32.mrf.mxu0
    %v4978 = vadd.f32 %v3143, %v4977
    %4979 = vdwg.mxu0
    %4980 = vmatpush.bf16.msra.mxu0 %v4056
    %4981 = vmatpush.bf16.msra.mxu0 %v4052
    %4982 = vmatpush.bf16.msra.mxu0 %v4048
    %4983 = vmatpush.bf16.msra.mxu0 %v4044
    %4984 = vmatpush.bf16.msra.mxu0 %v4040
    %4985 = vmatpush.bf16.msra.mxu0 %v4036
    %4986 = vmatpush.bf16.msra.mxu0 %v4032
    %4987 = vmatpush.bf16.msra.mxu0 %v4028
    %4988 = vmatmul.bf16.gmra.mxu0 %v3194
    %v4989 = vpop.f32.mrf.mxu0
    %v4990 = vadd.f32 %v4971, %v4989
    %v4991 = vpop.f32.mrf.mxu0
    %v4992 = vadd.f32 %v4973, %v4991
    %4993 = vmatmul.bf16.gmra.mxu0 %v3202
    %v4994 = vpop.f32.mrf.mxu0
    %v4995 = vadd.f32 %v4976, %v4994
    %v4996 = vpop.f32.mrf.mxu0
    %v4997 = vadd.f32 %v4978, %v4996
    %4998 = vdwg.mxu0
    %4999 = vmatpush.bf16.msra.mxu0 %v4088
    %5000 = vmatpush.bf16.msra.mxu0 %v4084
    %5001 = vmatpush.bf16.msra.mxu0 %v4080
    %5002 = vmatpush.bf16.msra.mxu0 %v4076
    %5003 = vmatpush.bf16.msra.mxu0 %v4072
    %5004 = vmatpush.bf16.msra.mxu0 %v4068
    %5005 = vmatpush.bf16.msra.mxu0 %v4064
    %5006 = vmatpush.bf16.msra.mxu0 %v4060
    %5007 = vmatmul.bf16.gmra.mxu0 %v3195
    %v5008 = vpop.f32.mrf.mxu0
    %v5009 = vadd.f32 %v4990, %v5008
    %v5010 = vpop.f32.mrf.mxu0
    %v5011 = vadd.f32 %v4992, %v5010
    %5012 = vmatmul.bf16.gmra.mxu0 %v3203
    %v5013 = vpop.f32.mrf.mxu0
    %v5014 = vadd.f32 %v4995, %v5013
    %v5015 = vpop.f32.mrf.mxu0
    %v5016 = vadd.f32 %v4997, %v5015
    %5017 = vdwg.mxu0
    %5018 = vmatpush.bf16.msra.mxu0 %v4120
    %5019 = vmatpush.bf16.msra.mxu0 %v4116
    %5020 = vmatpush.bf16.msra.mxu0 %v4112
    %5021 = vmatpush.bf16.msra.mxu0 %v4108
    %5022 = vmatpush.bf16.msra.mxu0 %v4104
    %5023 = vmatpush.bf16.msra.mxu0 %v4100
    %5024 = vmatpush.bf16.msra.mxu0 %v4096
    %5025 = vmatpush.bf16.msra.mxu0 %v4092
    %5026 = vmatmul.bf16.gmra.mxu0 %v3196
    %v5027 = vpop.f32.mrf.mxu0
    %v5028 = vadd.f32 %v5009, %v5027
    %v5029 = vpop.f32.mrf.mxu0
    %v5030 = vadd.f32 %v5011, %v5029
    %5031 = vmatmul.bf16.gmra.mxu0 %v3204
    %v5032 = vpop.f32.mrf.mxu0
    %v5033 = vadd.f32 %v5014, %v5032
    %v5034 = vpop.f32.mrf.mxu0
    %v5035 = vadd.f32 %v5016, %v5034
    %5036 = vdwg.mxu0
    %5037 = vmatpush.bf16.msra.mxu0 %v4152
    %5038 = vmatpush.bf16.msra.mxu0 %v4148
    %5039 = vmatpush.bf16.msra.mxu0 %v4144
    %5040 = vmatpush.bf16.msra.mxu0 %v4140
    %5041 = vmatpush.bf16.msra.mxu0 %v4136
    %5042 = vmatpush.bf16.msra.mxu0 %v4132
    %5043 = vmatpush.bf16.msra.mxu0 %v4128
    %5044 = vmatpush.bf16.msra.mxu0 %v4124
    %5045 = vmatmul.bf16.gmra.mxu0 %v3197
    %v5046 = vpop.f32.mrf.mxu0
    %v5047 = vadd.f32 %v5028, %v5046
    %v5048 = vpop.f32.mrf.mxu0
    %v5049 = vadd.f32 %v5030, %v5048
    %5050 = vmatmul.bf16.gmra.mxu0 %v3205
    %v5051 = vpop.f32.mrf.mxu0
    %v5052 = vadd.f32 %v5033, %v5051
    %v5053 = vpop.f32.mrf.mxu0
    %v5054 = vadd.f32 %v5035, %v5053
    %5055 = vdwg.mxu0
    %5056 = vmatpush.bf16.msra.mxu0 %v4184
    %5057 = vmatpush.bf16.msra.mxu0 %v4180
    %5058 = vmatpush.bf16.msra.mxu0 %v4176
    %5059 = vmatpush.bf16.msra.mxu0 %v4172
    %5060 = vmatpush.bf16.msra.mxu0 %v4168
    %5061 = vmatpush.bf16.msra.mxu0 %v4164
    %5062 = vmatpush.bf16.msra.mxu0 %v4160
    %5063 = vmatpush.bf16.msra.mxu0 %v4156
    %5064 = vmatmul.bf16.gmra.mxu0 %v3198
    %v5065 = vpop.f32.mrf.mxu0
    %v5066 = vadd.f32 %v5047, %v5065
    %v5067 = vpop.f32.mrf.mxu0
    %v5068 = vadd.f32 %v5049, %v5067
    %5069 = vmatmul.bf16.gmra.mxu0 %v3206
    %v5070 = vpop.f32.mrf.mxu0
    %v5071 = vadd.f32 %v5052, %v5070
    %v5072 = vpop.f32.mrf.mxu0
    %v5073 = vadd.f32 %v5054, %v5072
    %5074 = vdwg.mxu0
    %5075 = vmatpush.bf16.msra.mxu0 %v4216
    %5076 = vmatpush.bf16.msra.mxu0 %v4212
    %5077 = vmatpush.bf16.msra.mxu0 %v4208
    %5078 = vmatpush.bf16.msra.mxu0 %v4204
    %5079 = vmatpush.bf16.msra.mxu0 %v4200
    %5080 = vmatpush.bf16.msra.mxu0 %v4196
    %5081 = vmatpush.bf16.msra.mxu0 %v4192
    %5082 = vmatpush.bf16.msra.mxu0 %v4188
    %5083 = vmatmul.bf16.gmra.mxu0 %v3199
    %v5084 = vpop.f32.mrf.mxu0
    %v5085 = vadd.f32 %v5066, %v5084
    %v5086 = vpop.f32.mrf.mxu0
    %v5087 = vadd.f32 %v5068, %v5086
    %5088 = vmatmul.bf16.gmra.mxu0 %v3207
    %v5089 = vpop.f32.mrf.mxu0
    %v5090 = vadd.f32 %v5071, %v5089
    %v5091 = vpop.f32.mrf.mxu0
    %v5092 = vadd.f32 %v5073, %v5091
    %5093 = vdwg.mxu0
    %5094 = vmatpush.bf16.msra.mxu0 %v4248
    %5095 = vmatpush.bf16.msra.mxu0 %v4244
    %5096 = vmatpush.bf16.msra.mxu0 %v4240
    %5097 = vmatpush.bf16.msra.mxu0 %v4236
    %5098 = vmatpush.bf16.msra.mxu0 %v4232
    %5099 = vmatpush.bf16.msra.mxu0 %v4228
    %5100 = vmatpush.bf16.msra.mxu0 %v4224
    %5101 = vmatpush.bf16.msra.mxu0 %v4220
    %5102 = vmatmul.bf16.gmra.mxu0 %v3200
    %v5103 = vpop.f32.mrf.mxu0
    %v5104 = vadd.f32 %v5085, %v5103
    %v5105 = vpop.f32.mrf.mxu0
    %v5106 = vadd.f32 %v5087, %v5105
    %5107 = vmatmul.bf16.gmra.mxu0 %v3208
    %v5108 = vpop.f32.mrf.mxu0
    %v5109 = vadd.f32 %v5090, %v5108
    %v5110 = vpop.f32.mrf.mxu0
    %v5111 = vadd.f32 %v5092, %v5110
    %5112 = vdwg.mxu0
    %v5129 = vunpack.c.l.b16 %v196
    %v5130 = vunpack.c.h.b16 %v196
    %v5131 = vunpack.c.l.b16 %v197
    %v5132 = vunpack.c.h.b16 %v197
    %v5133 = vunpack.c.l.b16 %v198
    %v5134 = vunpack.c.h.b16 %v198
    %v5135 = vunpack.c.l.b16 %v199
    %v5136 = vunpack.c.h.b16 %v199
    %v5137 = vunpack.c.l.b16 %v200
    %v5138 = vunpack.c.h.b16 %v200
    %v5139 = vunpack.c.l.b16 %v201
    %v5140 = vunpack.c.h.b16 %v201
    %v5141 = vunpack.c.l.b16 %v202
    %v5142 = vunpack.c.h.b16 %v202
    %v5143 = vunpack.c.l.b16 %v203
    %v5144 = vunpack.c.h.b16 %v203
    %v5145 = vunpack.c.l.b16 %v204
    %v5146 = vunpack.c.h.b16 %v204
    %v5147 = vunpack.c.l.b16 %v205
    %v5148 = vunpack.c.h.b16 %v205
    %v5149 = vunpack.c.l.b16 %v206
    %v5150 = vunpack.c.h.b16 %v206
    %v5151 = vunpack.c.l.b16 %v207
    %v5152 = vunpack.c.h.b16 %v207
    %v5153 = vunpack.c.l.b16 %v208
    %v5154 = vunpack.c.h.b16 %v208
    %v5155 = vunpack.c.l.b16 %v209
    %v5156 = vunpack.c.h.b16 %v209
    %v5157 = vunpack.c.l.b16 %v210
    %v5158 = vunpack.c.h.b16 %v210
    %v5159 = vunpack.c.l.b16 %v211
    %v5160 = vunpack.c.h.b16 %v211
    %v5161 = vpack.c.b16 %v5137, %v5129
    %v5162 = vpack.c.b16 %v5138, %v5130
    %v5163 = vpack.c.b16 %v5139, %v5131
    %v5164 = vpack.c.b16 %v5140, %v5132
    %v5165 = vpack.c.b16 %v5141, %v5133
    %v5166 = vpack.c.b16 %v5142, %v5134
    %v5167 = vpack.c.b16 %v5143, %v5135
    %v5168 = vpack.c.b16 %v5144, %v5136
    %v5169 = vpack.c.b16 %v5153, %v5145
    %v5170 = vpack.c.b16 %v5154, %v5146
    %v5171 = vpack.c.b16 %v5155, %v5147
    %v5172 = vpack.c.b16 %v5156, %v5148
    %v5173 = vpack.c.b16 %v5157, %v5149
    %v5174 = vpack.c.b16 %v5158, %v5150
    %v5175 = vpack.c.b16 %v5159, %v5151
    %v5176 = vpack.c.b16 %v5160, %v5152
    %v5449 = vunpack.c.l.b16 %v212
    %v5450 = vunpack.c.h.b16 %v212
    %v5451 = vunpack.c.l.b16 %v213
    %v5452 = vunpack.c.h.b16 %v213
    %v5453 = vunpack.c.l.b16 %v214
    %v5454 = vunpack.c.h.b16 %v214
    %v5455 = vunpack.c.l.b16 %v215
    %v5456 = vunpack.c.h.b16 %v215
    %v5457 = vunpack.c.l.b16 %v216
    %v5458 = vunpack.c.h.b16 %v216
    %v5459 = vunpack.c.l.b16 %v217
    %v5460 = vunpack.c.h.b16 %v217
    %v5461 = vunpack.c.l.b16 %v218
    %v5462 = vunpack.c.h.b16 %v218
    %v5463 = vunpack.c.l.b16 %v219
    %v5464 = vunpack.c.h.b16 %v219
    %v5465 = vunpack.c.l.b16 %v220
    %v5466 = vunpack.c.h.b16 %v220
    %v5467 = vunpack.c.l.b16 %v221
    %v5468 = vunpack.c.h.b16 %v221
    %v5469 = vunpack.c.l.b16 %v222
    %v5470 = vunpack.c.h.b16 %v222
    %v5471 = vunpack.c.l.b16 %v223
    %v5472 = vunpack.c.h.b16 %v223
    %v5473 = vunpack.c.l.b16 %v224
    %v5474 = vunpack.c.h.b16 %v224
    %v5475 = vunpack.c.l.b16 %v225
    %v5476 = vunpack.c.h.b16 %v225
    %v5477 = vunpack.c.l.b16 %v226
    %v5478 = vunpack.c.h.b16 %v226
    %v5479 = vunpack.c.l.b16 %v227
    %v5480 = vunpack.c.h.b16 %v227
    %v5481 = vunpack.c.l.b16 %v228
    %v5482 = vunpack.c.h.b16 %v228
    %v5483 = vunpack.c.l.b16 %v229
    %v5484 = vunpack.c.h.b16 %v229
    %v5485 = vunpack.c.l.b16 %v230
    %v5486 = vunpack.c.h.b16 %v230
    %v5487 = vunpack.c.l.b16 %v231
    %v5488 = vunpack.c.h.b16 %v231
    %v5489 = vunpack.c.l.b16 %v232
    %v5490 = vunpack.c.h.b16 %v232
    %v5491 = vunpack.c.l.b16 %v233
    %v5492 = vunpack.c.h.b16 %v233
    %v5493 = vunpack.c.l.b16 %v234
    %v5494 = vunpack.c.h.b16 %v234
    %v5495 = vunpack.c.l.b16 %v235
    %v5496 = vunpack.c.h.b16 %v235
    %v5497 = vunpack.c.l.b16 %v236
    %v5498 = vunpack.c.h.b16 %v236
    %v5499 = vunpack.c.l.b16 %v237
    %v5500 = vunpack.c.h.b16 %v237
    %v5501 = vunpack.c.l.b16 %v238
    %v5502 = vunpack.c.h.b16 %v238
    %v5503 = vunpack.c.l.b16 %v239
    %v5504 = vunpack.c.h.b16 %v239
    %v5505 = vunpack.c.l.b16 %v240
    %v5506 = vunpack.c.h.b16 %v240
    %v5507 = vunpack.c.l.b16 %v241
    %v5508 = vunpack.c.h.b16 %v241
    %v5509 = vunpack.c.l.b16 %v242
    %v5510 = vunpack.c.h.b16 %v242
    %v5511 = vunpack.c.l.b16 %v243
    %v5512 = vunpack.c.h.b16 %v243
    %v5513 = vunpack.c.l.b16 %v244
    %v5514 = vunpack.c.h.b16 %v244
    %v5515 = vunpack.c.l.b16 %v245
    %v5516 = vunpack.c.h.b16 %v245
    %v5517 = vunpack.c.l.b16 %v246
    %v5518 = vunpack.c.h.b16 %v246
    %v5519 = vunpack.c.l.b16 %v247
    %v5520 = vunpack.c.h.b16 %v247
    %v5521 = vunpack.c.l.b16 %v248
    %v5522 = vunpack.c.h.b16 %v248
    %v5523 = vunpack.c.l.b16 %v249
    %v5524 = vunpack.c.h.b16 %v249
    %v5525 = vunpack.c.l.b16 %v250
    %v5526 = vunpack.c.h.b16 %v250
    %v5527 = vunpack.c.l.b16 %v251
    %v5528 = vunpack.c.h.b16 %v251
    %v5529 = vunpack.c.l.b16 %v252
    %v5530 = vunpack.c.h.b16 %v252
    %v5531 = vunpack.c.l.b16 %v253
    %v5532 = vunpack.c.h.b16 %v253
    %v5533 = vunpack.c.l.b16 %v254
    %v5534 = vunpack.c.h.b16 %v254
    %v5535 = vunpack.c.l.b16 %v255
    %v5536 = vunpack.c.h.b16 %v255
    %v5537 = vunpack.c.l.b16 %v256
    %v5538 = vunpack.c.h.b16 %v256
    %v5539 = vunpack.c.l.b16 %v257
    %v5540 = vunpack.c.h.b16 %v257
    %v5541 = vunpack.c.l.b16 %v258
    %v5542 = vunpack.c.h.b16 %v258
    %v5543 = vunpack.c.l.b16 %v259
    %v5544 = vunpack.c.h.b16 %v259
    %v5545 = vunpack.c.l.b16 %v260
    %v5546 = vunpack.c.h.b16 %v260
    %v5547 = vunpack.c.l.b16 %v261
    %v5548 = vunpack.c.h.b16 %v261
    %v5549 = vunpack.c.l.b16 %v262
    %v5550 = vunpack.c.h.b16 %v262
    %v5551 = vunpack.c.l.b16 %v263
    %v5552 = vunpack.c.h.b16 %v263
    %v5553 = vunpack.c.l.b16 %v264
    %v5554 = vunpack.c.h.b16 %v264
    %v5555 = vunpack.c.l.b16 %v265
    %v5556 = vunpack.c.h.b16 %v265
    %v5557 = vunpack.c.l.b16 %v266
    %v5558 = vunpack.c.h.b16 %v266
    %v5559 = vunpack.c.l.b16 %v267
    %v5560 = vunpack.c.h.b16 %v267
    %v5561 = vunpack.c.l.b16 %v268
    %v5562 = vunpack.c.h.b16 %v268
    %v5563 = vunpack.c.l.b16 %v269
    %v5564 = vunpack.c.h.b16 %v269
    %v5565 = vunpack.c.l.b16 %v270
    %v5566 = vunpack.c.h.b16 %v270
    %v5567 = vunpack.c.l.b16 %v271
    %v5568 = vunpack.c.h.b16 %v271
    %v5569 = vunpack.c.l.b16 %v272
    %v5570 = vunpack.c.h.b16 %v272
    %v5571 = vunpack.c.l.b16 %v273
    %v5572 = vunpack.c.h.b16 %v273
    %v5573 = vunpack.c.l.b16 %v274
    %v5574 = vunpack.c.h.b16 %v274
    %v5575 = vunpack.c.l.b16 %v275
    %v5576 = vunpack.c.h.b16 %v275
    %v5577 = vunpack.c.l.b16 %v276
    %v5578 = vunpack.c.h.b16 %v276
    %v5579 = vunpack.c.l.b16 %v277
    %v5580 = vunpack.c.h.b16 %v277
    %v5581 = vunpack.c.l.b16 %v278
    %v5582 = vunpack.c.h.b16 %v278
    %v5583 = vunpack.c.l.b16 %v279
    %v5584 = vunpack.c.h.b16 %v279
    %v5585 = vunpack.c.l.b16 %v280
    %v5586 = vunpack.c.h.b16 %v280
    %v5587 = vunpack.c.l.b16 %v281
    %v5588 = vunpack.c.h.b16 %v281
    %v5589 = vunpack.c.l.b16 %v282
    %v5590 = vunpack.c.h.b16 %v282
    %v5591 = vunpack.c.l.b16 %v283
    %v5592 = vunpack.c.h.b16 %v283
    %v5593 = vunpack.c.l.b16 %v284
    %v5594 = vunpack.c.h.b16 %v284
    %v5595 = vunpack.c.l.b16 %v285
    %v5596 = vunpack.c.h.b16 %v285
    %v5597 = vunpack.c.l.b16 %v286
    %v5598 = vunpack.c.h.b16 %v286
    %v5599 = vunpack.c.l.b16 %v287
    %v5600 = vunpack.c.h.b16 %v287
    %v5601 = vunpack.c.l.b16 %v288
    %v5602 = vunpack.c.h.b16 %v288
    %v5603 = vunpack.c.l.b16 %v289
    %v5604 = vunpack.c.h.b16 %v289
    %v5605 = vunpack.c.l.b16 %v290
    %v5606 = vunpack.c.h.b16 %v290
    %v5607 = vunpack.c.l.b16 %v291
    %v5608 = vunpack.c.h.b16 %v291
    %v5609 = vunpack.c.l.b16 %v292
    %v5610 = vunpack.c.h.b16 %v292
    %v5611 = vunpack.c.l.b16 %v293
    %v5612 = vunpack.c.h.b16 %v293
    %v5613 = vunpack.c.l.b16 %v294
    %v5614 = vunpack.c.h.b16 %v294
    %v5615 = vunpack.c.l.b16 %v295
    %v5616 = vunpack.c.h.b16 %v295
    %v5617 = vunpack.c.l.b16 %v296
    %v5618 = vunpack.c.h.b16 %v296
    %v5619 = vunpack.c.l.b16 %v297
    %v5620 = vunpack.c.h.b16 %v297
    %v5621 = vunpack.c.l.b16 %v298
    %v5622 = vunpack.c.h.b16 %v298
    %v5623 = vunpack.c.l.b16 %v299
    %v5624 = vunpack.c.h.b16 %v299
    %v5625 = vunpack.c.l.b16 %v300
    %v5626 = vunpack.c.h.b16 %v300
    %v5627 = vunpack.c.l.b16 %v301
    %v5628 = vunpack.c.h.b16 %v301
    %v5629 = vunpack.c.l.b16 %v302
    %v5630 = vunpack.c.h.b16 %v302
    %v5631 = vunpack.c.l.b16 %v303
    %v5632 = vunpack.c.h.b16 %v303
    %v5633 = vunpack.c.l.b16 %v304
    %v5634 = vunpack.c.h.b16 %v304
    %v5635 = vunpack.c.l.b16 %v305
    %v5636 = vunpack.c.h.b16 %v305
    %v5637 = vunpack.c.l.b16 %v306
    %v5638 = vunpack.c.h.b16 %v306
    %v5639 = vunpack.c.l.b16 %v307
    %v5640 = vunpack.c.h.b16 %v307
    %v5641 = vunpack.c.l.b16 %v308
    %v5642 = vunpack.c.h.b16 %v308
    %v5643 = vunpack.c.l.b16 %v309
    %v5644 = vunpack.c.h.b16 %v309
    %v5645 = vunpack.c.l.b16 %v310
    %v5646 = vunpack.c.h.b16 %v310
    %v5647 = vunpack.c.l.b16 %v311
    %v5648 = vunpack.c.h.b16 %v311
    %v5649 = vunpack.c.l.b16 %v312
    %v5650 = vunpack.c.h.b16 %v312
    %v5651 = vunpack.c.l.b16 %v313
    %v5652 = vunpack.c.h.b16 %v313
    %v5653 = vunpack.c.l.b16 %v314
    %v5654 = vunpack.c.h.b16 %v314
    %v5655 = vunpack.c.l.b16 %v315
    %v5656 = vunpack.c.h.b16 %v315
    %v5657 = vunpack.c.l.b16 %v316
    %v5658 = vunpack.c.h.b16 %v316
    %v5659 = vunpack.c.l.b16 %v317
    %v5660 = vunpack.c.h.b16 %v317
    %v5661 = vunpack.c.l.b16 %v318
    %v5662 = vunpack.c.h.b16 %v318
    %v5663 = vunpack.c.l.b16 %v319
    %v5664 = vunpack.c.h.b16 %v319
    %v5665 = vunpack.c.l.b16 %v320
    %v5666 = vunpack.c.h.b16 %v320
    %v5667 = vunpack.c.l.b16 %v321
    %v5668 = vunpack.c.h.b16 %v321
    %v5669 = vunpack.c.l.b16 %v322
    %v5670 = vunpack.c.h.b16 %v322
    %v5671 = vunpack.c.l.b16 %v323
    %v5672 = vunpack.c.h.b16 %v323
    %v5673 = vunpack.c.l.b16 %v324
    %v5674 = vunpack.c.h.b16 %v324
    %v5675 = vunpack.c.l.b16 %v325
    %v5676 = vunpack.c.h.b16 %v325
    %v5677 = vunpack.c.l.b16 %v326
    %v5678 = vunpack.c.h.b16 %v326
    %v5679 = vunpack.c.l.b16 %v327
    %v5680 = vunpack.c.h.b16 %v327
    %v5681 = vunpack.c.l.b16 %v328
    %v5682 = vunpack.c.h.b16 %v328
    %v5683 = vunpack.c.l.b16 %v329
    %v5684 = vunpack.c.h.b16 %v329
    %v5685 = vunpack.c.l.b16 %v330
    %v5686 = vunpack.c.h.b16 %v330
    %v5687 = vunpack.c.l.b16 %v331
    %v5688 = vunpack.c.h.b16 %v331
    %v5689 = vunpack.c.l.b16 %v332
    %v5690 = vunpack.c.h.b16 %v332
    %v5691 = vunpack.c.l.b16 %v333
    %v5692 = vunpack.c.h.b16 %v333
    %v5693 = vunpack.c.l.b16 %v334
    %v5694 = vunpack.c.h.b16 %v334
    %v5695 = vunpack.c.l.b16 %v335
    %v5696 = vunpack.c.h.b16 %v335
    %v5697 = vunpack.c.l.b16 %v336
    %v5698 = vunpack.c.h.b16 %v336
    %v5699 = vunpack.c.l.b16 %v337
    %v5700 = vunpack.c.h.b16 %v337
    %v5701 = vunpack.c.l.b16 %v338
    %v5702 = vunpack.c.h.b16 %v338
    %v5703 = vunpack.c.l.b16 %v339
    %v5704 = vunpack.c.h.b16 %v339
    %v5705 = vunpack.c.l.b16 %v340
    %v5706 = vunpack.c.h.b16 %v340
    %v5707 = vunpack.c.l.b16 %v341
    %v5708 = vunpack.c.h.b16 %v341
    %v5709 = vunpack.c.l.b16 %v342
    %v5710 = vunpack.c.h.b16 %v342
    %v5711 = vunpack.c.l.b16 %v343
    %v5712 = vunpack.c.h.b16 %v343
    %v5713 = vunpack.c.l.b16 %v344
    %v5714 = vunpack.c.h.b16 %v344
    %v5715 = vunpack.c.l.b16 %v345
    %v5716 = vunpack.c.h.b16 %v345
    %v5717 = vunpack.c.l.b16 %v346
    %v5718 = vunpack.c.h.b16 %v346
    %v5719 = vunpack.c.l.b16 %v347
    %v5720 = vunpack.c.h.b16 %v347
    %v5721 = vunpack.c.l.b16 %v348
    %v5722 = vunpack.c.h.b16 %v348
    %v5723 = vunpack.c.l.b16 %v349
    %v5724 = vunpack.c.h.b16 %v349
    %v5725 = vunpack.c.l.b16 %v350
    %v5726 = vunpack.c.h.b16 %v350
    %v5727 = vunpack.c.l.b16 %v351
    %v5728 = vunpack.c.h.b16 %v351
    %v5729 = vunpack.c.l.b16 %v352
    %v5730 = vunpack.c.h.b16 %v352
    %v5731 = vunpack.c.l.b16 %v353
    %v5732 = vunpack.c.h.b16 %v353
    %v5733 = vunpack.c.l.b16 %v354
    %v5734 = vunpack.c.h.b16 %v354
    %v5735 = vunpack.c.l.b16 %v355
    %v5736 = vunpack.c.h.b16 %v355
    %v5737 = vunpack.c.l.b16 %v356
    %v5738 = vunpack.c.h.b16 %v356
    %v5739 = vunpack.c.l.b16 %v357
    %v5740 = vunpack.c.h.b16 %v357
    %v5741 = vunpack.c.l.b16 %v358
    %v5742 = vunpack.c.h.b16 %v358
    %v5743 = vunpack.c.l.b16 %v359
    %v5744 = vunpack.c.h.b16 %v359
    %v5745 = vunpack.c.l.b16 %v360
    %v5746 = vunpack.c.h.b16 %v360
    %v5747 = vunpack.c.l.b16 %v361
    %v5748 = vunpack.c.h.b16 %v361
    %v5749 = vunpack.c.l.b16 %v362
    %v5750 = vunpack.c.h.b16 %v362
    %v5751 = vunpack.c.l.b16 %v363
    %v5752 = vunpack.c.h.b16 %v363
    %v5753 = vunpack.c.l.b16 %v364
    %v5754 = vunpack.c.h.b16 %v364
    %v5755 = vunpack.c.l.b16 %v365
    %v5756 = vunpack.c.h.b16 %v365
    %v5757 = vunpack.c.l.b16 %v366
    %v5758 = vunpack.c.h.b16 %v366
    %v5759 = vunpack.c.l.b16 %v367
    %v5760 = vunpack.c.h.b16 %v367
    %v5761 = vunpack.c.l.b16 %v368
    %v5762 = vunpack.c.h.b16 %v368
    %v5763 = vunpack.c.l.b16 %v369
    %v5764 = vunpack.c.h.b16 %v369
    %v5765 = vunpack.c.l.b16 %v370
    %v5766 = vunpack.c.h.b16 %v370
    %v5767 = vunpack.c.l.b16 %v371
    %v5768 = vunpack.c.h.b16 %v371
    %v5769 = vunpack.c.l.b16 %v372
    %v5770 = vunpack.c.h.b16 %v372
    %v5771 = vunpack.c.l.b16 %v373
    %v5772 = vunpack.c.h.b16 %v373
    %v5773 = vunpack.c.l.b16 %v374
    %v5774 = vunpack.c.h.b16 %v374
    %v5775 = vunpack.c.l.b16 %v375
    %v5776 = vunpack.c.h.b16 %v375
    %v5777 = vunpack.c.l.b16 %v376
    %v5778 = vunpack.c.h.b16 %v376
    %v5779 = vunpack.c.l.b16 %v377
    %v5780 = vunpack.c.h.b16 %v377
    %v5781 = vunpack.c.l.b16 %v378
    %v5782 = vunpack.c.h.b16 %v378
    %v5783 = vunpack.c.l.b16 %v379
    %v5784 = vunpack.c.h.b16 %v379
    %v5785 = vunpack.c.l.b16 %v380
    %v5786 = vunpack.c.h.b16 %v380
    %v5787 = vunpack.c.l.b16 %v381
    %v5788 = vunpack.c.h.b16 %v381
    %v5789 = vunpack.c.l.b16 %v382
    %v5790 = vunpack.c.h.b16 %v382
    %v5791 = vunpack.c.l.b16 %v383
    %v5792 = vunpack.c.h.b16 %v383
    %v5793 = vunpack.c.l.b16 %v384
    %v5794 = vunpack.c.h.b16 %v384
    %v5795 = vunpack.c.l.b16 %v385
    %v5796 = vunpack.c.h.b16 %v385
    %v5797 = vunpack.c.l.b16 %v386
    %v5798 = vunpack.c.h.b16 %v386
    %v5799 = vunpack.c.l.b16 %v387
    %v5800 = vunpack.c.h.b16 %v387
    %v5801 = vunpack.c.l.b16 %v388
    %v5802 = vunpack.c.h.b16 %v388
    %v5803 = vunpack.c.l.b16 %v389
    %v5804 = vunpack.c.h.b16 %v389
    %v5805 = vunpack.c.l.b16 %v390
    %v5806 = vunpack.c.h.b16 %v390
    %v5807 = vunpack.c.l.b16 %v391
    %v5808 = vunpack.c.h.b16 %v391
    %v5809 = vunpack.c.l.b16 %v392
    %v5810 = vunpack.c.h.b16 %v392
    %v5811 = vunpack.c.l.b16 %v393
    %v5812 = vunpack.c.h.b16 %v393
    %v5813 = vunpack.c.l.b16 %v394
    %v5814 = vunpack.c.h.b16 %v394
    %v5815 = vunpack.c.l.b16 %v395
    %v5816 = vunpack.c.h.b16 %v395
    %v5817 = vunpack.c.l.b16 %v396
    %v5818 = vunpack.c.h.b16 %v396
    %v5819 = vunpack.c.l.b16 %v397
    %v5820 = vunpack.c.h.b16 %v397
    %v5821 = vunpack.c.l.b16 %v398
    %v5822 = vunpack.c.h.b16 %v398
    %v5823 = vunpack.c.l.b16 %v399
    %v5824 = vunpack.c.h.b16 %v399
    %v5825 = vunpack.c.l.b16 %v400
    %v5826 = vunpack.c.h.b16 %v400
    %v5827 = vunpack.c.l.b16 %v401
    %v5828 = vunpack.c.h.b16 %v401
    %v5829 = vunpack.c.l.b16 %v402
    %v5830 = vunpack.c.h.b16 %v402
    %v5831 = vunpack.c.l.b16 %v403
    %v5832 = vunpack.c.h.b16 %v403
    %v5833 = vunpack.c.l.b16 %v404
    %v5834 = vunpack.c.h.b16 %v404
    %v5835 = vunpack.c.l.b16 %v405
    %v5836 = vunpack.c.h.b16 %v405
    %v5837 = vunpack.c.l.b16 %v406
    %v5838 = vunpack.c.h.b16 %v406
    %v5839 = vunpack.c.l.b16 %v407
    %v5840 = vunpack.c.h.b16 %v407
    %v5841 = vunpack.c.l.b16 %v408
    %v5842 = vunpack.c.h.b16 %v408
    %v5843 = vunpack.c.l.b16 %v409
    %v5844 = vunpack.c.h.b16 %v409
    %v5845 = vunpack.c.l.b16 %v410
    %v5846 = vunpack.c.h.b16 %v410
    %v5847 = vunpack.c.l.b16 %v411
    %v5848 = vunpack.c.h.b16 %v411
    %v5849 = vunpack.c.l.b16 %v412
    %v5850 = vunpack.c.h.b16 %v412
    %v5851 = vunpack.c.l.b16 %v413
    %v5852 = vunpack.c.h.b16 %v413
    %v5853 = vunpack.c.l.b16 %v414
    %v5854 = vunpack.c.h.b16 %v414
    %v5855 = vunpack.c.l.b16 %v415
    %v5856 = vunpack.c.h.b16 %v415
    %v5857 = vunpack.c.l.b16 %v416
    %v5858 = vunpack.c.h.b16 %v416
    %v5859 = vunpack.c.l.b16 %v417
    %v5860 = vunpack.c.h.b16 %v417
    %v5861 = vunpack.c.l.b16 %v418
    %v5862 = vunpack.c.h.b16 %v418
    %v5863 = vunpack.c.l.b16 %v419
    %v5864 = vunpack.c.h.b16 %v419
    %v5865 = vunpack.c.l.b16 %v420
    %v5866 = vunpack.c.h.b16 %v420
    %v5867 = vunpack.c.l.b16 %v421
    %v5868 = vunpack.c.h.b16 %v421
    %v5869 = vunpack.c.l.b16 %v422
    %v5870 = vunpack.c.h.b16 %v422
    %v5871 = vunpack.c.l.b16 %v423
    %v5872 = vunpack.c.h.b16 %v423
    %v5873 = vunpack.c.l.b16 %v424
    %v5874 = vunpack.c.h.b16 %v424
    %v5875 = vunpack.c.l.b16 %v425
    %v5876 = vunpack.c.h.b16 %v425
    %v5877 = vunpack.c.l.b16 %v426
    %v5878 = vunpack.c.h.b16 %v426
    %v5879 = vunpack.c.l.b16 %v427
    %v5880 = vunpack.c.h.b16 %v427
    %v5881 = vunpack.c.l.b16 %v428
    %v5882 = vunpack.c.h.b16 %v428
    %v5883 = vunpack.c.l.b16 %v429
    %v5884 = vunpack.c.h.b16 %v429
    %v5885 = vunpack.c.l.b16 %v430
    %v5886 = vunpack.c.h.b16 %v430
    %v5887 = vunpack.c.l.b16 %v431
    %v5888 = vunpack.c.h.b16 %v431
    %v5889 = vunpack.c.l.b16 %v432
    %v5890 = vunpack.c.h.b16 %v432
    %v5891 = vunpack.c.l.b16 %v433
    %v5892 = vunpack.c.h.b16 %v433
    %v5893 = vunpack.c.l.b16 %v434
    %v5894 = vunpack.c.h.b16 %v434
    %v5895 = vunpack.c.l.b16 %v435
    %v5896 = vunpack.c.h.b16 %v435
    %v5897 = vunpack.c.l.b16 %v436
    %v5898 = vunpack.c.h.b16 %v436
    %v5899 = vunpack.c.l.b16 %v437
    %v5900 = vunpack.c.h.b16 %v437
    %v5901 = vunpack.c.l.b16 %v438
    %v5902 = vunpack.c.h.b16 %v438
    %v5903 = vunpack.c.l.b16 %v439
    %v5904 = vunpack.c.h.b16 %v439
    %v5905 = vunpack.c.l.b16 %v440
    %v5906 = vunpack.c.h.b16 %v440
    %v5907 = vunpack.c.l.b16 %v441
    %v5908 = vunpack.c.h.b16 %v441
    %v5909 = vunpack.c.l.b16 %v442
    %v5910 = vunpack.c.h.b16 %v442
    %v5911 = vunpack.c.l.b16 %v443
    %v5912 = vunpack.c.h.b16 %v443
    %v5913 = vunpack.c.l.b16 %v444
    %v5914 = vunpack.c.h.b16 %v444
    %v5915 = vunpack.c.l.b16 %v445
    %v5916 = vunpack.c.h.b16 %v445
    %v5917 = vunpack.c.l.b16 %v446
    %v5918 = vunpack.c.h.b16 %v446
    %v5919 = vunpack.c.l.b16 %v447
    %v5920 = vunpack.c.h.b16 %v447
    %v5921 = vunpack.c.l.b16 %v448
    %v5922 = vunpack.c.h.b16 %v448
    %v5923 = vunpack.c.l.b16 %v449
    %v5924 = vunpack.c.h.b16 %v449
    %v5925 = vunpack.c.l.b16 %v450
    %v5926 = vunpack.c.h.b16 %v450
    %v5927 = vunpack.c.l.b16 %v451
    %v5928 = vunpack.c.h.b16 %v451
    %v5929 = vunpack.c.l.b16 %v452
    %v5930 = vunpack.c.h.b16 %v452
    %v5931 = vunpack.c.l.b16 %v453
    %v5932 = vunpack.c.h.b16 %v453
    %v5933 = vunpack.c.l.b16 %v454
    %v5934 = vunpack.c.h.b16 %v454
    %v5935 = vunpack.c.l.b16 %v455
    %v5936 = vunpack.c.h.b16 %v455
    %v5937 = vunpack.c.l.b16 %v456
    %v5938 = vunpack.c.h.b16 %v456
    %v5939 = vunpack.c.l.b16 %v457
    %v5940 = vunpack.c.h.b16 %v457
    %v5941 = vunpack.c.l.b16 %v458
    %v5942 = vunpack.c.h.b16 %v458
    %v5943 = vunpack.c.l.b16 %v459
    %v5944 = vunpack.c.h.b16 %v459
    %v5945 = vunpack.c.l.b16 %v460
    %v5946 = vunpack.c.h.b16 %v460
    %v5947 = vunpack.c.l.b16 %v461
    %v5948 = vunpack.c.h.b16 %v461
    %v5949 = vunpack.c.l.b16 %v462
    %v5950 = vunpack.c.h.b16 %v462
    %v5951 = vunpack.c.l.b16 %v463
    %v5952 = vunpack.c.h.b16 %v463
    %v5953 = vunpack.c.l.b16 %v464
    %v5954 = vunpack.c.h.b16 %v464
    %v5955 = vunpack.c.l.b16 %v465
    %v5956 = vunpack.c.h.b16 %v465
    %v5957 = vunpack.c.l.b16 %v466
    %v5958 = vunpack.c.h.b16 %v466
    %v5959 = vunpack.c.l.b16 %v467
    %v5960 = vunpack.c.h.b16 %v467
    %v5961 = vpack.c.b16 %v5453, %v5449
    %v5962 = vpack.c.b16 %v5454, %v5450
    %v5963 = vpack.c.b16 %v5455, %v5451
    %v5964 = vpack.c.b16 %v5456, %v5452
    %v5965 = vpack.c.b16 %v5461, %v5457
    %v5966 = vpack.c.b16 %v5462, %v5458
    %v5967 = vpack.c.b16 %v5463, %v5459
    %v5968 = vpack.c.b16 %v5464, %v5460
    %v5969 = vpack.c.b16 %v5469, %v5465
    %v5970 = vpack.c.b16 %v5470, %v5466
    %v5971 = vpack.c.b16 %v5471, %v5467
    %v5972 = vpack.c.b16 %v5472, %v5468
    %v5973 = vpack.c.b16 %v5477, %v5473
    %v5974 = vpack.c.b16 %v5478, %v5474
    %v5975 = vpack.c.b16 %v5479, %v5475
    %v5976 = vpack.c.b16 %v5480, %v5476
    %v5977 = vpack.c.b16 %v5485, %v5481
    %v5978 = vpack.c.b16 %v5486, %v5482
    %v5979 = vpack.c.b16 %v5487, %v5483
    %v5980 = vpack.c.b16 %v5488, %v5484
    %v5981 = vpack.c.b16 %v5493, %v5489
    %v5982 = vpack.c.b16 %v5494, %v5490
    %v5983 = vpack.c.b16 %v5495, %v5491
    %v5984 = vpack.c.b16 %v5496, %v5492
    %v5985 = vpack.c.b16 %v5501, %v5497
    %v5986 = vpack.c.b16 %v5502, %v5498
    %v5987 = vpack.c.b16 %v5503, %v5499
    %v5988 = vpack.c.b16 %v5504, %v5500
    %v5989 = vpack.c.b16 %v5509, %v5505
    %v5990 = vpack.c.b16 %v5510, %v5506
    %v5991 = vpack.c.b16 %v5511, %v5507
    %v5992 = vpack.c.b16 %v5512, %v5508
    %v5993 = vpack.c.b16 %v5517, %v5513
    %v5994 = vpack.c.b16 %v5518, %v5514
    %v5995 = vpack.c.b16 %v5519, %v5515
    %v5996 = vpack.c.b16 %v5520, %v5516
    %v5997 = vpack.c.b16 %v5525, %v5521
    %v5998 = vpack.c.b16 %v5526, %v5522
    %v5999 = vpack.c.b16 %v5527, %v5523
    %v6000 = vpack.c.b16 %v5528, %v5524
    %v6001 = vpack.c.b16 %v5533, %v5529
    %v6002 = vpack.c.b16 %v5534, %v5530
    %v6003 = vpack.c.b16 %v5535, %v5531
    %v6004 = vpack.c.b16 %v5536, %v5532
    %v6005 = vpack.c.b16 %v5541, %v5537
    %v6006 = vpack.c.b16 %v5542, %v5538
    %v6007 = vpack.c.b16 %v5543, %v5539
    %v6008 = vpack.c.b16 %v5544, %v5540
    %v6009 = vpack.c.b16 %v5549, %v5545
    %v6010 = vpack.c.b16 %v5550, %v5546
    %v6011 = vpack.c.b16 %v5551, %v5547
    %v6012 = vpack.c.b16 %v5552, %v5548
    %v6013 = vpack.c.b16 %v5557, %v5553
    %v6014 = vpack.c.b16 %v5558, %v5554
    %v6015 = vpack.c.b16 %v5559, %v5555
    %v6016 = vpack.c.b16 %v5560, %v5556
    %v6017 = vpack.c.b16 %v5565, %v5561
    %v6018 = vpack.c.b16 %v5566, %v5562
    %v6019 = vpack.c.b16 %v5567, %v5563
    %v6020 = vpack.c.b16 %v5568, %v5564
    %v6021 = vpack.c.b16 %v5573, %v5569
    %v6022 = vpack.c.b16 %v5574, %v5570
    %v6023 = vpack.c.b16 %v5575, %v5571
    %v6024 = vpack.c.b16 %v5576, %v5572
    %v6025 = vpack.c.b16 %v5581, %v5577
    %v6026 = vpack.c.b16 %v5582, %v5578
    %v6027 = vpack.c.b16 %v5583, %v5579
    %v6028 = vpack.c.b16 %v5584, %v5580
    %v6029 = vpack.c.b16 %v5589, %v5585
    %v6030 = vpack.c.b16 %v5590, %v5586
    %v6031 = vpack.c.b16 %v5591, %v5587
    %v6032 = vpack.c.b16 %v5592, %v5588
    %v6033 = vpack.c.b16 %v5597, %v5593
    %v6034 = vpack.c.b16 %v5598, %v5594
    %v6035 = vpack.c.b16 %v5599, %v5595
    %v6036 = vpack.c.b16 %v5600, %v5596
    %v6037 = vpack.c.b16 %v5605, %v5601
    %v6038 = vpack.c.b16 %v5606, %v5602
    %v6039 = vpack.c.b16 %v5607, %v5603
    %v6040 = vpack.c.b16 %v5608, %v5604
    %v6041 = vpack.c.b16 %v5613, %v5609
    %v6042 = vpack.c.b16 %v5614, %v5610
    %v6043 = vpack.c.b16 %v5615, %v5611
    %v6044 = vpack.c.b16 %v5616, %v5612
    %v6045 = vpack.c.b16 %v5621, %v5617
    %v6046 = vpack.c.b16 %v5622, %v5618
    %v6047 = vpack.c.b16 %v5623, %v5619
    %v6048 = vpack.c.b16 %v5624, %v5620
    %v6049 = vpack.c.b16 %v5629, %v5625
    %v6050 = vpack.c.b16 %v5630, %v5626
    %v6051 = vpack.c.b16 %v5631, %v5627
    %v6052 = vpack.c.b16 %v5632, %v5628
    %v6053 = vpack.c.b16 %v5637, %v5633
    %v6054 = vpack.c.b16 %v5638, %v5634
    %v6055 = vpack.c.b16 %v5639, %v5635
    %v6056 = vpack.c.b16 %v5640, %v5636
    %v6057 = vpack.c.b16 %v5645, %v5641
    %v6058 = vpack.c.b16 %v5646, %v5642
    %v6059 = vpack.c.b16 %v5647, %v5643
    %v6060 = vpack.c.b16 %v5648, %v5644
    %v6061 = vpack.c.b16 %v5653, %v5649
    %v6062 = vpack.c.b16 %v5654, %v5650
    %v6063 = vpack.c.b16 %v5655, %v5651
    %v6064 = vpack.c.b16 %v5656, %v5652
    %v6065 = vpack.c.b16 %v5661, %v5657
    %v6066 = vpack.c.b16 %v5662, %v5658
    %v6067 = vpack.c.b16 %v5663, %v5659
    %v6068 = vpack.c.b16 %v5664, %v5660
    %v6069 = vpack.c.b16 %v5669, %v5665
    %v6070 = vpack.c.b16 %v5670, %v5666
    %v6071 = vpack.c.b16 %v5671, %v5667
    %v6072 = vpack.c.b16 %v5672, %v5668
    %v6073 = vpack.c.b16 %v5677, %v5673
    %v6074 = vpack.c.b16 %v5678, %v5674
    %v6075 = vpack.c.b16 %v5679, %v5675
    %v6076 = vpack.c.b16 %v5680, %v5676
    %v6077 = vpack.c.b16 %v5685, %v5681
    %v6078 = vpack.c.b16 %v5686, %v5682
    %v6079 = vpack.c.b16 %v5687, %v5683
    %v6080 = vpack.c.b16 %v5688, %v5684
    %v6081 = vpack.c.b16 %v5693, %v5689
    %v6082 = vpack.c.b16 %v5694, %v5690
    %v6083 = vpack.c.b16 %v5695, %v5691
    %v6084 = vpack.c.b16 %v5696, %v5692
    %v6085 = vpack.c.b16 %v5701, %v5697
    %v6086 = vpack.c.b16 %v5702, %v5698
    %v6087 = vpack.c.b16 %v5703, %v5699
    %v6088 = vpack.c.b16 %v5704, %v5700
    %v6089 = vpack.c.b16 %v5709, %v5705
    %v6090 = vpack.c.b16 %v5710, %v5706
    %v6091 = vpack.c.b16 %v5711, %v5707
    %v6092 = vpack.c.b16 %v5712, %v5708
    %v6093 = vpack.c.b16 %v5717, %v5713
    %v6094 = vpack.c.b16 %v5718, %v5714
    %v6095 = vpack.c.b16 %v5719, %v5715
    %v6096 = vpack.c.b16 %v5720, %v5716
    %v6097 = vpack.c.b16 %v5725, %v5721
    %v6098 = vpack.c.b16 %v5726, %v5722
    %v6099 = vpack.c.b16 %v5727, %v5723
    %v6100 = vpack.c.b16 %v5728, %v5724
    %v6101 = vpack.c.b16 %v5733, %v5729
    %v6102 = vpack.c.b16 %v5734, %v5730
    %v6103 = vpack.c.b16 %v5735, %v5731
    %v6104 = vpack.c.b16 %v5736, %v5732
    %v6105 = vpack.c.b16 %v5741, %v5737
    %v6106 = vpack.c.b16 %v5742, %v5738
    %v6107 = vpack.c.b16 %v5743, %v5739
    %v6108 = vpack.c.b16 %v5744, %v5740
    %v6109 = vpack.c.b16 %v5749, %v5745
    %v6110 = vpack.c.b16 %v5750, %v5746
    %v6111 = vpack.c.b16 %v5751, %v5747
    %v6112 = vpack.c.b16 %v5752, %v5748
    %v6113 = vpack.c.b16 %v5757, %v5753
    %v6114 = vpack.c.b16 %v5758, %v5754
    %v6115 = vpack.c.b16 %v5759, %v5755
    %v6116 = vpack.c.b16 %v5760, %v5756
    %v6117 = vpack.c.b16 %v5765, %v5761
    %v6118 = vpack.c.b16 %v5766, %v5762
    %v6119 = vpack.c.b16 %v5767, %v5763
    %v6120 = vpack.c.b16 %v5768, %v5764
    %v6121 = vpack.c.b16 %v5773, %v5769
    %v6122 = vpack.c.b16 %v5774, %v5770
    %v6123 = vpack.c.b16 %v5775, %v5771
    %v6124 = vpack.c.b16 %v5776, %v5772
    %v6125 = vpack.c.b16 %v5781, %v5777
    %v6126 = vpack.c.b16 %v5782, %v5778
    %v6127 = vpack.c.b16 %v5783, %v5779
    %v6128 = vpack.c.b16 %v5784, %v5780
    %v6129 = vpack.c.b16 %v5789, %v5785
    %v6130 = vpack.c.b16 %v5790, %v5786
    %v6131 = vpack.c.b16 %v5791, %v5787
    %v6132 = vpack.c.b16 %v5792, %v5788
    %v6133 = vpack.c.b16 %v5797, %v5793
    %v6134 = vpack.c.b16 %v5798, %v5794
    %v6135 = vpack.c.b16 %v5799, %v5795
    %v6136 = vpack.c.b16 %v5800, %v5796
    %v6137 = vpack.c.b16 %v5805, %v5801
    %v6138 = vpack.c.b16 %v5806, %v5802
    %v6139 = vpack.c.b16 %v5807, %v5803
    %v6140 = vpack.c.b16 %v5808, %v5804
    %v6141 = vpack.c.b16 %v5813, %v5809
    %v6142 = vpack.c.b16 %v5814, %v5810
    %v6143 = vpack.c.b16 %v5815, %v5811
    %v6144 = vpack.c.b16 %v5816, %v5812
    %v6145 = vpack.c.b16 %v5821, %v5817
    %v6146 = vpack.c.b16 %v5822, %v5818
    %v6147 = vpack.c.b16 %v5823, %v5819
    %v6148 = vpack.c.b16 %v5824, %v5820
    %v6149 = vpack.c.b16 %v5829, %v5825
    %v6150 = vpack.c.b16 %v5830, %v5826
    %v6151 = vpack.c.b16 %v5831, %v5827
    %v6152 = vpack.c.b16 %v5832, %v5828
    %v6153 = vpack.c.b16 %v5837, %v5833
    %v6154 = vpack.c.b16 %v5838, %v5834
    %v6155 = vpack.c.b16 %v5839, %v5835
    %v6156 = vpack.c.b16 %v5840, %v5836
    %v6157 = vpack.c.b16 %v5845, %v5841
    %v6158 = vpack.c.b16 %v5846, %v5842
    %v6159 = vpack.c.b16 %v5847, %v5843
    %v6160 = vpack.c.b16 %v5848, %v5844
    %v6161 = vpack.c.b16 %v5853, %v5849
    %v6162 = vpack.c.b16 %v5854, %v5850
    %v6163 = vpack.c.b16 %v5855, %v5851
    %v6164 = vpack.c.b16 %v5856, %v5852
    %v6165 = vpack.c.b16 %v5861, %v5857
    %v6166 = vpack.c.b16 %v5862, %v5858
    %v6167 = vpack.c.b16 %v5863, %v5859
    %v6168 = vpack.c.b16 %v5864, %v5860
    %v6169 = vpack.c.b16 %v5869, %v5865
    %v6170 = vpack.c.b16 %v5870, %v5866
    %v6171 = vpack.c.b16 %v5871, %v5867
    %v6172 = vpack.c.b16 %v5872, %v5868
    %v6173 = vpack.c.b16 %v5877, %v5873
    %v6174 = vpack.c.b16 %v5878, %v5874
    %v6175 = vpack.c.b16 %v5879, %v5875
    %v6176 = vpack.c.b16 %v5880, %v5876
    %v6177 = vpack.c.b16 %v5885, %v5881
    %v6178 = vpack.c.b16 %v5886, %v5882
    %v6179 = vpack.c.b16 %v5887, %v5883
    %v6180 = vpack.c.b16 %v5888, %v5884
    %v6181 = vpack.c.b16 %v5893, %v5889
    %v6182 = vpack.c.b16 %v5894, %v5890
    %v6183 = vpack.c.b16 %v5895, %v5891
    %v6184 = vpack.c.b16 %v5896, %v5892
    %v6185 = vpack.c.b16 %v5901, %v5897
    %v6186 = vpack.c.b16 %v5902, %v5898
    %v6187 = vpack.c.b16 %v5903, %v5899
    %v6188 = vpack.c.b16 %v5904, %v5900
    %v6189 = vpack.c.b16 %v5909, %v5905
    %v6190 = vpack.c.b16 %v5910, %v5906
    %v6191 = vpack.c.b16 %v5911, %v5907
    %v6192 = vpack.c.b16 %v5912, %v5908
    %v6193 = vpack.c.b16 %v5917, %v5913
    %v6194 = vpack.c.b16 %v5918, %v5914
    %v6195 = vpack.c.b16 %v5919, %v5915
    %v6196 = vpack.c.b16 %v5920, %v5916
    %v6197 = vpack.c.b16 %v5925, %v5921
    %v6198 = vpack.c.b16 %v5926, %v5922
    %v6199 = vpack.c.b16 %v5927, %v5923
    %v6200 = vpack.c.b16 %v5928, %v5924
    %v6201 = vpack.c.b16 %v5933, %v5929
    %v6202 = vpack.c.b16 %v5934, %v5930
    %v6203 = vpack.c.b16 %v5935, %v5931
    %v6204 = vpack.c.b16 %v5936, %v5932
    %v6205 = vpack.c.b16 %v5941, %v5937
    %v6206 = vpack.c.b16 %v5942, %v5938
    %v6207 = vpack.c.b16 %v5943, %v5939
    %v6208 = vpack.c.b16 %v5944, %v5940
    %v6209 = vpack.c.b16 %v5949, %v5945
    %v6210 = vpack.c.b16 %v5950, %v5946
    %v6211 = vpack.c.b16 %v5951, %v5947
    %v6212 = vpack.c.b16 %v5952, %v5948
    %v6213 = vpack.c.b16 %v5957, %v5953
    %v6214 = vpack.c.b16 %v5958, %v5954
    %v6215 = vpack.c.b16 %v5959, %v5955
    %v6216 = vpack.c.b16 %v5960, %v5956
    %6473 = vmatpush.bf16.msra.mxu0 %v5989
    %6474 = vmatpush.bf16.msra.mxu0 %v5985
    %6475 = vmatpush.bf16.msra.mxu0 %v5981
    %6476 = vmatpush.bf16.msra.mxu0 %v5977
    %6477 = vmatpush.bf16.msra.mxu0 %v5973
    %6478 = vmatpush.bf16.msra.mxu0 %v5969
    %6479 = vmatpush.bf16.msra.mxu0 %v5965
    %6480 = vmatpush.bf16.msra.mxu0 %v5961
    %6481 = vmatmul.bf16.gmra.mxu0 %v5161
    %v6482 = vpop.f32.mrf.mxu0
    %v6483 = vadd.f32 0.0, %v6482
    %v6484 = vpop.f32.mrf.mxu0
    %v6485 = vadd.f32 0.0, %v6484
    %6486 = vmatmul.bf16.gmra.mxu0 %v5169
    %v6487 = vpop.f32.mrf.mxu0
    %v6488 = vadd.f32 0.0, %v6487
    %v6489 = vpop.f32.mrf.mxu0
    %6490 = vdwg.mxu0
    %6491 = vmatpush.bf16.msra.mxu0 %v6021
    %6492 = vmatpush.bf16.msra.mxu0 %v6017
    %6493 = vmatpush.bf16.msra.mxu0 %v6013
    %6494 = vmatpush.bf16.msra.mxu0 %v6009
    %6495 = vmatpush.bf16.msra.mxu0 %v6005
    %6496 = vmatpush.bf16.msra.mxu0 %v6001
    %6497 = vmatpush.bf16.msra.mxu0 %v5997
    %6498 = vmatpush.bf16.msra.mxu0 %v5993
    %6499 = vmatmul.bf16.gmra.mxu0 %v5162
    %v6500 = vpop.f32.mrf.mxu0
    %v6501 = vadd.f32 %v6483, %v6500
    %v6502 = vpop.f32.mrf.mxu0
    %v6503 = vadd.f32 %v6485, %v6502
    %6504 = vmatmul.bf16.gmra.mxu0 %v5170
    %v6505 = vpop.f32.mrf.mxu0
    %v6506 = vadd.f32 %v6488, %v6505
    %v6507 = vpop.f32.mrf.mxu0
    %6508 = vdwg.mxu0
    %6509 = vmatpush.bf16.msra.mxu0 %v6053
    %6510 = vmatpush.bf16.msra.mxu0 %v6049
    %6511 = vmatpush.bf16.msra.mxu0 %v6045
    %6512 = vmatpush.bf16.msra.mxu0 %v6041
    %6513 = vmatpush.bf16.msra.mxu0 %v6037
    %6514 = vmatpush.bf16.msra.mxu0 %v6033
    %6515 = vmatpush.bf16.msra.mxu0 %v6029
    %6516 = vmatpush.bf16.msra.mxu0 %v6025
    %6517 = vmatmul.bf16.gmra.mxu0 %v5163
    %v6518 = vpop.f32.mrf.mxu0
    %v6519 = vadd.f32 %v6501, %v6518
    %v6520 = vpop.f32.mrf.mxu0
    %v6521 = vadd.f32 %v6503, %v6520
    %6522 = vmatmul.bf16.gmra.mxu0 %v5171
    %v6523 = vpop.f32.mrf.mxu0
    %v6524 = vadd.f32 %v6506, %v6523
    %v6525 = vpop.f32.mrf.mxu0
    %6526 = vdwg.mxu0
    %6527 = vmatpush.bf16.msra.mxu0 %v6085
    %6528 = vmatpush.bf16.msra.mxu0 %v6081
    %6529 = vmatpush.bf16.msra.mxu0 %v6077
    %6530 = vmatpush.bf16.msra.mxu0 %v6073
    %6531 = vmatpush.bf16.msra.mxu0 %v6069
    %6532 = vmatpush.bf16.msra.mxu0 %v6065
    %6533 = vmatpush.bf16.msra.mxu0 %v6061
    %6534 = vmatpush.bf16.msra.mxu0 %v6057
    %6535 = vmatmul.bf16.gmra.mxu0 %v5164
    %v6536 = vpop.f32.mrf.mxu0
    %v6537 = vadd.f32 %v6519, %v6536
    %v6538 = vpop.f32.mrf.mxu0
    %v6539 = vadd.f32 %v6521, %v6538
    %6540 = vmatmul.bf16.gmra.mxu0 %v5172
    %v6541 = vpop.f32.mrf.mxu0
    %v6542 = vadd.f32 %v6524, %v6541
    %v6543 = vpop.f32.mrf.mxu0
    %6544 = vdwg.mxu0
    %6545 = vmatpush.bf16.msra.mxu0 %v6117
    %6546 = vmatpush.bf16.msra.mxu0 %v6113
    %6547 = vmatpush.bf16.msra.mxu0 %v6109
    %6548 = vmatpush.bf16.msra.mxu0 %v6105
    %6549 = vmatpush.bf16.msra.mxu0 %v6101
    %6550 = vmatpush.bf16.msra.mxu0 %v6097
    %6551 = vmatpush.bf16.msra.mxu0 %v6093
    %6552 = vmatpush.bf16.msra.mxu0 %v6089
    %6553 = vmatmul.bf16.gmra.mxu0 %v5165
    %v6554 = vpop.f32.mrf.mxu0
    %v6555 = vadd.f32 %v6537, %v6554
    %v6556 = vpop.f32.mrf.mxu0
    %v6557 = vadd.f32 %v6539, %v6556
    %6558 = vmatmul.bf16.gmra.mxu0 %v5173
    %v6559 = vpop.f32.mrf.mxu0
    %v6560 = vadd.f32 %v6542, %v6559
    %v6561 = vpop.f32.mrf.mxu0
    %6562 = vdwg.mxu0
    %6563 = vmatpush.bf16.msra.mxu0 %v6149
    %6564 = vmatpush.bf16.msra.mxu0 %v6145
    %6565 = vmatpush.bf16.msra.mxu0 %v6141
    %6566 = vmatpush.bf16.msra.mxu0 %v6137
    %6567 = vmatpush.bf16.msra.mxu0 %v6133
    %6568 = vmatpush.bf16.msra.mxu0 %v6129
    %6569 = vmatpush.bf16.msra.mxu0 %v6125
    %6570 = vmatpush.bf16.msra.mxu0 %v6121
    %6571 = vmatmul.bf16.gmra.mxu0 %v5166
    %v6572 = vpop.f32.mrf.mxu0
    %v6573 = vadd.f32 %v6555, %v6572
    %v6574 = vpop.f32.mrf.mxu0
    %v6575 = vadd.f32 %v6557, %v6574
    %6576 = vmatmul.bf16.gmra.mxu0 %v5174
    %v6577 = vpop.f32.mrf.mxu0
    %v6578 = vadd.f32 %v6560, %v6577
    %v6579 = vpop.f32.mrf.mxu0
    %6580 = vdwg.mxu0
    %6581 = vmatpush.bf16.msra.mxu0 %v6181
    %6582 = vmatpush.bf16.msra.mxu0 %v6177
    %6583 = vmatpush.bf16.msra.mxu0 %v6173
    %6584 = vmatpush.bf16.msra.mxu0 %v6169
    %6585 = vmatpush.bf16.msra.mxu0 %v6165
    %6586 = vmatpush.bf16.msra.mxu0 %v6161
    %6587 = vmatpush.bf16.msra.mxu0 %v6157
    %6588 = vmatpush.bf16.msra.mxu0 %v6153
    %6589 = vmatmul.bf16.gmra.mxu0 %v5167
    %v6590 = vpop.f32.mrf.mxu0
    %v6591 = vadd.f32 %v6573, %v6590
    %v6592 = vpop.f32.mrf.mxu0
    %v6593 = vadd.f32 %v6575, %v6592
    %6594 = vmatmul.bf16.gmra.mxu0 %v5175
    %v6595 = vpop.f32.mrf.mxu0
    %v6596 = vadd.f32 %v6578, %v6595
    %v6597 = vpop.f32.mrf.mxu0
    %6598 = vdwg.mxu0
    %6599 = vmatpush.bf16.msra.mxu0 %v6213
    %6600 = vmatpush.bf16.msra.mxu0 %v6209
    %6601 = vmatpush.bf16.msra.mxu0 %v6205
    %6602 = vmatpush.bf16.msra.mxu0 %v6201
    %6603 = vmatpush.bf16.msra.mxu0 %v6197
    %6604 = vmatpush.bf16.msra.mxu0 %v6193
    %6605 = vmatpush.bf16.msra.mxu0 %v6189
    %6606 = vmatpush.bf16.msra.mxu0 %v6185
    %6607 = vmatmul.bf16.gmra.mxu0 %v5168
    %v6608 = vpop.f32.mrf.mxu0
    %v6609 = vadd.f32 %v6591, %v6608
    %v6610 = vpop.f32.mrf.mxu0
    %v6611 = vadd.f32 %v6593, %v6610
    %6612 = vmatmul.bf16.gmra.mxu0 %v5176
    %v6613 = vpop.f32.mrf.mxu0
    %v6614 = vadd.f32 %v6596, %v6613
    %v6615 = vpop.f32.mrf.mxu0
    %6616 = vdwg.mxu0
    %6617 = vmatpush.bf16.msra.mxu0 %v5990
    %6618 = vmatpush.bf16.msra.mxu0 %v5986
    %6619 = vmatpush.bf16.msra.mxu0 %v5982
    %6620 = vmatpush.bf16.msra.mxu0 %v5978
    %6621 = vmatpush.bf16.msra.mxu0 %v5974
    %6622 = vmatpush.bf16.msra.mxu0 %v5970
    %6623 = vmatpush.bf16.msra.mxu0 %v5966
    %6624 = vmatpush.bf16.msra.mxu0 %v5962
    %6625 = vmatmul.bf16.gmra.mxu0 %v5161
    %v6626 = vpop.f32.mrf.mxu0
    %v6627 = vadd.f32 0.0, %v6626
    %v6628 = vpop.f32.mrf.mxu0
    %v6629 = vadd.f32 0.0, %v6628
    %6630 = vmatmul.bf16.gmra.mxu0 %v5169
    %v6631 = vpop.f32.mrf.mxu0
    %v6632 = vadd.f32 0.0, %v6631
    %v6633 = vpop.f32.mrf.mxu0
    %6634 = vdwg.mxu0
    %6635 = vmatpush.bf16.msra.mxu0 %v6022
    %6636 = vmatpush.bf16.msra.mxu0 %v6018
    %6637 = vmatpush.bf16.msra.mxu0 %v6014
    %6638 = vmatpush.bf16.msra.mxu0 %v6010
    %6639 = vmatpush.bf16.msra.mxu0 %v6006
    %6640 = vmatpush.bf16.msra.mxu0 %v6002
    %6641 = vmatpush.bf16.msra.mxu0 %v5998
    %6642 = vmatpush.bf16.msra.mxu0 %v5994
    %6643 = vmatmul.bf16.gmra.mxu0 %v5162
    %v6644 = vpop.f32.mrf.mxu0
    %v6645 = vadd.f32 %v6627, %v6644
    %v6646 = vpop.f32.mrf.mxu0
    %v6647 = vadd.f32 %v6629, %v6646
    %6648 = vmatmul.bf16.gmra.mxu0 %v5170
    %v6649 = vpop.f32.mrf.mxu0
    %v6650 = vadd.f32 %v6632, %v6649
    %v6651 = vpop.f32.mrf.mxu0
    %6652 = vdwg.mxu0
    %6653 = vmatpush.bf16.msra.mxu0 %v6054
    %6654 = vmatpush.bf16.msra.mxu0 %v6050
    %6655 = vmatpush.bf16.msra.mxu0 %v6046
    %6656 = vmatpush.bf16.msra.mxu0 %v6042
    %6657 = vmatpush.bf16.msra.mxu0 %v6038
    %6658 = vmatpush.bf16.msra.mxu0 %v6034
    %6659 = vmatpush.bf16.msra.mxu0 %v6030
    %6660 = vmatpush.bf16.msra.mxu0 %v6026
    %6661 = vmatmul.bf16.gmra.mxu0 %v5163
    %v6662 = vpop.f32.mrf.mxu0
    %v6663 = vadd.f32 %v6645, %v6662
    %v6664 = vpop.f32.mrf.mxu0
    %v6665 = vadd.f32 %v6647, %v6664
    %6666 = vmatmul.bf16.gmra.mxu0 %v5171
    %v6667 = vpop.f32.mrf.mxu0
    %v6668 = vadd.f32 %v6650, %v6667
    %v6669 = vpop.f32.mrf.mxu0
    %6670 = vdwg.mxu0
    %6671 = vmatpush.bf16.msra.mxu0 %v6086
    %6672 = vmatpush.bf16.msra.mxu0 %v6082
    %6673 = vmatpush.bf16.msra.mxu0 %v6078
    %6674 = vmatpush.bf16.msra.mxu0 %v6074
    %6675 = vmatpush.bf16.msra.mxu0 %v6070
    %6676 = vmatpush.bf16.msra.mxu0 %v6066
    %6677 = vmatpush.bf16.msra.mxu0 %v6062
    %6678 = vmatpush.bf16.msra.mxu0 %v6058
    %6679 = vmatmul.bf16.gmra.mxu0 %v5164
    %v6680 = vpop.f32.mrf.mxu0
    %v6681 = vadd.f32 %v6663, %v6680
    %v6682 = vpop.f32.mrf.mxu0
    %v6683 = vadd.f32 %v6665, %v6682
    %6684 = vmatmul.bf16.gmra.mxu0 %v5172
    %v6685 = vpop.f32.mrf.mxu0
    %v6686 = vadd.f32 %v6668, %v6685
    %v6687 = vpop.f32.mrf.mxu0
    %6688 = vdwg.mxu0
    %6689 = vmatpush.bf16.msra.mxu0 %v6118
    %6690 = vmatpush.bf16.msra.mxu0 %v6114
    %6691 = vmatpush.bf16.msra.mxu0 %v6110
    %6692 = vmatpush.bf16.msra.mxu0 %v6106
    %6693 = vmatpush.bf16.msra.mxu0 %v6102
    %6694 = vmatpush.bf16.msra.mxu0 %v6098
    %6695 = vmatpush.bf16.msra.mxu0 %v6094
    %6696 = vmatpush.bf16.msra.mxu0 %v6090
    %6697 = vmatmul.bf16.gmra.mxu0 %v5165
    %v6698 = vpop.f32.mrf.mxu0
    %v6699 = vadd.f32 %v6681, %v6698
    %v6700 = vpop.f32.mrf.mxu0
    %v6701 = vadd.f32 %v6683, %v6700
    %6702 = vmatmul.bf16.gmra.mxu0 %v5173
    %v6703 = vpop.f32.mrf.mxu0
    %v6704 = vadd.f32 %v6686, %v6703
    %v6705 = vpop.f32.mrf.mxu0
    %6706 = vdwg.mxu0
    %6707 = vmatpush.bf16.msra.mxu0 %v6150
    %6708 = vmatpush.bf16.msra.mxu0 %v6146
    %6709 = vmatpush.bf16.msra.mxu0 %v6142
    %6710 = vmatpush.bf16.msra.mxu0 %v6138
    %6711 = vmatpush.bf16.msra.mxu0 %v6134
    %6712 = vmatpush.bf16.msra.mxu0 %v6130
    %6713 = vmatpush.bf16.msra.mxu0 %v6126
    %6714 = vmatpush.bf16.msra.mxu0 %v6122
    %6715 = vmatmul.bf16.gmra.mxu0 %v5166
    %v6716 = vpop.f32.mrf.mxu0
    %v6717 = vadd.f32 %v6699, %v6716
    %v6718 = vpop.f32.mrf.mxu0
    %v6719 = vadd.f32 %v6701, %v6718
    %6720 = vmatmul.bf16.gmra.mxu0 %v5174
    %v6721 = vpop.f32.mrf.mxu0
    %v6722 = vadd.f32 %v6704, %v6721
    %v6723 = vpop.f32.mrf.mxu0
    %6724 = vdwg.mxu0
    %6725 = vmatpush.bf16.msra.mxu0 %v6182
    %6726 = vmatpush.bf16.msra.mxu0 %v6178
    %6727 = vmatpush.bf16.msra.mxu0 %v6174
    %6728 = vmatpush.bf16.msra.mxu0 %v6170
    %6729 = vmatpush.bf16.msra.mxu0 %v6166
    %6730 = vmatpush.bf16.msra.mxu0 %v6162
    %6731 = vmatpush.bf16.msra.mxu0 %v6158
    %6732 = vmatpush.bf16.msra.mxu0 %v6154
    %6733 = vmatmul.bf16.gmra.mxu0 %v5167
    %v6734 = vpop.f32.mrf.mxu0
    %v6735 = vadd.f32 %v6717, %v6734
    %v6736 = vpop.f32.mrf.mxu0
    %v6737 = vadd.f32 %v6719, %v6736
    %6738 = vmatmul.bf16.gmra.mxu0 %v5175
    %v6739 = vpop.f32.mrf.mxu0
    %v6740 = vadd.f32 %v6722, %v6739
    %v6741 = vpop.f32.mrf.mxu0
    %6742 = vdwg.mxu0
    %6743 = vmatpush.bf16.msra.mxu0 %v6214
    %6744 = vmatpush.bf16.msra.mxu0 %v6210
    %6745 = vmatpush.bf16.msra.mxu0 %v6206
    %6746 = vmatpush.bf16.msra.mxu0 %v6202
    %6747 = vmatpush.bf16.msra.mxu0 %v6198
    %6748 = vmatpush.bf16.msra.mxu0 %v6194
    %6749 = vmatpush.bf16.msra.mxu0 %v6190
    %6750 = vmatpush.bf16.msra.mxu0 %v6186
    %6751 = vmatmul.bf16.gmra.mxu0 %v5168
    %v6752 = vpop.f32.mrf.mxu0
    %v6753 = vadd.f32 %v6735, %v6752
    %v6754 = vpop.f32.mrf.mxu0
    %v6755 = vadd.f32 %v6737, %v6754
    %6756 = vmatmul.bf16.gmra.mxu0 %v5176
    %v6757 = vpop.f32.mrf.mxu0
    %v6758 = vadd.f32 %v6740, %v6757
    %v6759 = vpop.f32.mrf.mxu0
    %6760 = vdwg.mxu0
    %6761 = vmatpush.bf16.msra.mxu0 %v5991
    %6762 = vmatpush.bf16.msra.mxu0 %v5987
    %6763 = vmatpush.bf16.msra.mxu0 %v5983
    %6764 = vmatpush.bf16.msra.mxu0 %v5979
    %6765 = vmatpush.bf16.msra.mxu0 %v5975
    %6766 = vmatpush.bf16.msra.mxu0 %v5971
    %6767 = vmatpush.bf16.msra.mxu0 %v5967
    %6768 = vmatpush.bf16.msra.mxu0 %v5963
    %6769 = vmatmul.bf16.gmra.mxu0 %v5161
    %v6770 = vpop.f32.mrf.mxu0
    %v6771 = vadd.f32 0.0, %v6770
    %v6772 = vpop.f32.mrf.mxu0
    %v6773 = vadd.f32 0.0, %v6772
    %6774 = vmatmul.bf16.gmra.mxu0 %v5169
    %v6775 = vpop.f32.mrf.mxu0
    %v6776 = vadd.f32 0.0, %v6775
    %v6777 = vpop.f32.mrf.mxu0
    %6778 = vdwg.mxu0
    %6779 = vmatpush.bf16.msra.mxu0 %v6023
    %6780 = vmatpush.bf16.msra.mxu0 %v6019
    %6781 = vmatpush.bf16.msra.mxu0 %v6015
    %6782 = vmatpush.bf16.msra.mxu0 %v6011
    %6783 = vmatpush.bf16.msra.mxu0 %v6007
    %6784 = vmatpush.bf16.msra.mxu0 %v6003
    %6785 = vmatpush.bf16.msra.mxu0 %v5999
    %6786 = vmatpush.bf16.msra.mxu0 %v5995
    %6787 = vmatmul.bf16.gmra.mxu0 %v5162
    %v6788 = vpop.f32.mrf.mxu0
    %v6789 = vadd.f32 %v6771, %v6788
    %v6790 = vpop.f32.mrf.mxu0
    %v6791 = vadd.f32 %v6773, %v6790
    %6792 = vmatmul.bf16.gmra.mxu0 %v5170
    %v6793 = vpop.f32.mrf.mxu0
    %v6794 = vadd.f32 %v6776, %v6793
    %v6795 = vpop.f32.mrf.mxu0
    %6796 = vdwg.mxu0
    %6797 = vmatpush.bf16.msra.mxu0 %v6055
    %6798 = vmatpush.bf16.msra.mxu0 %v6051
    %6799 = vmatpush.bf16.msra.mxu0 %v6047
    %6800 = vmatpush.bf16.msra.mxu0 %v6043
    %6801 = vmatpush.bf16.msra.mxu0 %v6039
    %6802 = vmatpush.bf16.msra.mxu0 %v6035
    %6803 = vmatpush.bf16.msra.mxu0 %v6031
    %6804 = vmatpush.bf16.msra.mxu0 %v6027
    %6805 = vmatmul.bf16.gmra.mxu0 %v5163
    %v6806 = vpop.f32.mrf.mxu0
    %v6807 = vadd.f32 %v6789, %v6806
    %v6808 = vpop.f32.mrf.mxu0
    %v6809 = vadd.f32 %v6791, %v6808
    %6810 = vmatmul.bf16.gmra.mxu0 %v5171
    %v6811 = vpop.f32.mrf.mxu0
    %v6812 = vadd.f32 %v6794, %v6811
    %v6813 = vpop.f32.mrf.mxu0
    %6814 = vdwg.mxu0
    %6815 = vmatpush.bf16.msra.mxu0 %v6087
    %6816 = vmatpush.bf16.msra.mxu0 %v6083
    %6817 = vmatpush.bf16.msra.mxu0 %v6079
    %6818 = vmatpush.bf16.msra.mxu0 %v6075
    %6819 = vmatpush.bf16.msra.mxu0 %v6071
    %6820 = vmatpush.bf16.msra.mxu0 %v6067
    %6821 = vmatpush.bf16.msra.mxu0 %v6063
    %6822 = vmatpush.bf16.msra.mxu0 %v6059
    %6823 = vmatmul.bf16.gmra.mxu0 %v5164
    %v6824 = vpop.f32.mrf.mxu0
    %v6825 = vadd.f32 %v6807, %v6824
    %v6826 = vpop.f32.mrf.mxu0
    %v6827 = vadd.f32 %v6809, %v6826
    %6828 = vmatmul.bf16.gmra.mxu0 %v5172
    %v6829 = vpop.f32.mrf.mxu0
    %v6830 = vadd.f32 %v6812, %v6829
    %v6831 = vpop.f32.mrf.mxu0
    %6832 = vdwg.mxu0
    %6833 = vmatpush.bf16.msra.mxu0 %v6119
    %6834 = vmatpush.bf16.msra.mxu0 %v6115
    %6835 = vmatpush.bf16.msra.mxu0 %v6111
    %6836 = vmatpush.bf16.msra.mxu0 %v6107
    %6837 = vmatpush.bf16.msra.mxu0 %v6103
    %6838 = vmatpush.bf16.msra.mxu0 %v6099
    %6839 = vmatpush.bf16.msra.mxu0 %v6095
    %6840 = vmatpush.bf16.msra.mxu0 %v6091
    %6841 = vmatmul.bf16.gmra.mxu0 %v5165
    %v6842 = vpop.f32.mrf.mxu0
    %v6843 = vadd.f32 %v6825, %v6842
    %v6844 = vpop.f32.mrf.mxu0
    %v6845 = vadd.f32 %v6827, %v6844
    %6846 = vmatmul.bf16.gmra.mxu0 %v5173
    %v6847 = vpop.f32.mrf.mxu0
    %v6848 = vadd.f32 %v6830, %v6847
    %v6849 = vpop.f32.mrf.mxu0
    %6850 = vdwg.mxu0
    %6851 = vmatpush.bf16.msra.mxu0 %v6151
    %6852 = vmatpush.bf16.msra.mxu0 %v6147
    %6853 = vmatpush.bf16.msra.mxu0 %v6143
    %6854 = vmatpush.bf16.msra.mxu0 %v6139
    %6855 = vmatpush.bf16.msra.mxu0 %v6135
    %6856 = vmatpush.bf16.msra.mxu0 %v6131
    %6857 = vmatpush.bf16.msra.mxu0 %v6127
    %6858 = vmatpush.bf16.msra.mxu0 %v6123
    %6859 = vmatmul.bf16.gmra.mxu0 %v5166
    %v6860 = vpop.f32.mrf.mxu0
    %v6861 = vadd.f32 %v6843, %v6860
    %v6862 = vpop.f32.mrf.mxu0
    %v6863 = vadd.f32 %v6845, %v6862
    %6864 = vmatmul.bf16.gmra.mxu0 %v5174
    %v6865 = vpop.f32.mrf.mxu0
    %v6866 = vadd.f32 %v6848, %v6865
    %v6867 = vpop.f32.mrf.mxu0
    %6868 = vdwg.mxu0
    %6869 = vmatpush.bf16.msra.mxu0 %v6183
    %6870 = vmatpush.bf16.msra.mxu0 %v6179
    %6871 = vmatpush.bf16.msra.mxu0 %v6175
    %6872 = vmatpush.bf16.msra.mxu0 %v6171
    %6873 = vmatpush.bf16.msra.mxu0 %v6167
    %6874 = vmatpush.bf16.msra.mxu0 %v6163
    %6875 = vmatpush.bf16.msra.mxu0 %v6159
    %6876 = vmatpush.bf16.msra.mxu0 %v6155
    %6877 = vmatmul.bf16.gmra.mxu0 %v5167
    %v6878 = vpop.f32.mrf.mxu0
    %v6879 = vadd.f32 %v6861, %v6878
    %v6880 = vpop.f32.mrf.mxu0
    %v6881 = vadd.f32 %v6863, %v6880
    %6882 = vmatmul.bf16.gmra.mxu0 %v5175
    %v6883 = vpop.f32.mrf.mxu0
    %v6884 = vadd.f32 %v6866, %v6883
    %v6885 = vpop.f32.mrf.mxu0
    %6886 = vdwg.mxu0
    %6887 = vmatpush.bf16.msra.mxu0 %v6215
    %6888 = vmatpush.bf16.msra.mxu0 %v6211
    %6889 = vmatpush.bf16.msra.mxu0 %v6207
    %6890 = vmatpush.bf16.msra.mxu0 %v6203
    %6891 = vmatpush.bf16.msra.mxu0 %v6199
    %6892 = vmatpush.bf16.msra.mxu0 %v6195
    %6893 = vmatpush.bf16.msra.mxu0 %v6191
    %6894 = vmatpush.bf16.msra.mxu0 %v6187
    %6895 = vmatmul.bf16.gmra.mxu0 %v5168
    %v6896 = vpop.f32.mrf.mxu0
    %v6897 = vadd.f32 %v6879, %v6896
    %v6898 = vpop.f32.mrf.mxu0
    %v6899 = vadd.f32 %v6881, %v6898
    %6900 = vmatmul.bf16.gmra.mxu0 %v5176
    %v6901 = vpop.f32.mrf.mxu0
    %v6902 = vadd.f32 %v6884, %v6901
    %v6903 = vpop.f32.mrf.mxu0
    %6904 = vdwg.mxu0
    %6905 = vmatpush.bf16.msra.mxu0 %v5992
    %6906 = vmatpush.bf16.msra.mxu0 %v5988
    %6907 = vmatpush.bf16.msra.mxu0 %v5984
    %6908 = vmatpush.bf16.msra.mxu0 %v5980
    %6909 = vmatpush.bf16.msra.mxu0 %v5976
    %6910 = vmatpush.bf16.msra.mxu0 %v5972
    %6911 = vmatpush.bf16.msra.mxu0 %v5968
    %6912 = vmatpush.bf16.msra.mxu0 %v5964
    %6913 = vmatmul.bf16.gmra.mxu0 %v5161
    %v6914 = vpop.f32.mrf.mxu0
    %v6915 = vadd.f32 0.0, %v6914
    %v6916 = vpop.f32.mrf.mxu0
    %v6917 = vadd.f32 0.0, %v6916
    %6918 = vmatmul.bf16.gmra.mxu0 %v5169
    %v6919 = vpop.f32.mrf.mxu0
    %v6920 = vadd.f32 0.0, %v6919
    %v6921 = vpop.f32.mrf.mxu0
    %6922 = vdwg.mxu0
    %6923 = vmatpush.bf16.msra.mxu0 %v6024
    %6924 = vmatpush.bf16.msra.mxu0 %v6020
    %6925 = vmatpush.bf16.msra.mxu0 %v6016
    %6926 = vmatpush.bf16.msra.mxu0 %v6012
    %6927 = vmatpush.bf16.msra.mxu0 %v6008
    %6928 = vmatpush.bf16.msra.mxu0 %v6004
    %6929 = vmatpush.bf16.msra.mxu0 %v6000
    %6930 = vmatpush.bf16.msra.mxu0 %v5996
    %6931 = vmatmul.bf16.gmra.mxu0 %v5162
    %v6932 = vpop.f32.mrf.mxu0
    %v6933 = vadd.f32 %v6915, %v6932
    %v6934 = vpop.f32.mrf.mxu0
    %v6935 = vadd.f32 %v6917, %v6934
    %6936 = vmatmul.bf16.gmra.mxu0 %v5170
    %v6937 = vpop.f32.mrf.mxu0
    %v6938 = vadd.f32 %v6920, %v6937
    %v6939 = vpop.f32.mrf.mxu0
    %6940 = vdwg.mxu0
    %6941 = vmatpush.bf16.msra.mxu0 %v6056
    %6942 = vmatpush.bf16.msra.mxu0 %v6052
    %6943 = vmatpush.bf16.msra.mxu0 %v6048
    %6944 = vmatpush.bf16.msra.mxu0 %v6044
    %6945 = vmatpush.bf16.msra.mxu0 %v6040
    %6946 = vmatpush.bf16.msra.mxu0 %v6036
    %6947 = vmatpush.bf16.msra.mxu0 %v6032
    %6948 = vmatpush.bf16.msra.mxu0 %v6028
    %6949 = vmatmul.bf16.gmra.mxu0 %v5163
    %v6950 = vpop.f32.mrf.mxu0
    %v6951 = vadd.f32 %v6933, %v6950
    %v6952 = vpop.f32.mrf.mxu0
    %v6953 = vadd.f32 %v6935, %v6952
    %6954 = vmatmul.bf16.gmra.mxu0 %v5171
    %v6955 = vpop.f32.mrf.mxu0
    %v6956 = vadd.f32 %v6938, %v6955
    %v6957 = vpop.f32.mrf.mxu0
    %6958 = vdwg.mxu0
    %6959 = vmatpush.bf16.msra.mxu0 %v6088
    %6960 = vmatpush.bf16.msra.mxu0 %v6084
    %6961 = vmatpush.bf16.msra.mxu0 %v6080
    %6962 = vmatpush.bf16.msra.mxu0 %v6076
    %6963 = vmatpush.bf16.msra.mxu0 %v6072
    %6964 = vmatpush.bf16.msra.mxu0 %v6068
    %6965 = vmatpush.bf16.msra.mxu0 %v6064
    %6966 = vmatpush.bf16.msra.mxu0 %v6060
    %6967 = vmatmul.bf16.gmra.mxu0 %v5164
    %v6968 = vpop.f32.mrf.mxu0
    %v6969 = vadd.f32 %v6951, %v6968
    %v6970 = vpop.f32.mrf.mxu0
    %v6971 = vadd.f32 %v6953, %v6970
    %6972 = vmatmul.bf16.gmra.mxu0 %v5172
    %v6973 = vpop.f32.mrf.mxu0
    %v6974 = vadd.f32 %v6956, %v6973
    %v6975 = vpop.f32.mrf.mxu0
    %6976 = vdwg.mxu0
    %6977 = vmatpush.bf16.msra.mxu0 %v6120
    %6978 = vmatpush.bf16.msra.mxu0 %v6116
    %6979 = vmatpush.bf16.msra.mxu0 %v6112
    %6980 = vmatpush.bf16.msra.mxu0 %v6108
    %6981 = vmatpush.bf16.msra.mxu0 %v6104
    %6982 = vmatpush.bf16.msra.mxu0 %v6100
    %6983 = vmatpush.bf16.msra.mxu0 %v6096
    %6984 = vmatpush.bf16.msra.mxu0 %v6092
    %6985 = vmatmul.bf16.gmra.mxu0 %v5165
    %v6986 = vpop.f32.mrf.mxu0
    %v6987 = vadd.f32 %v6969, %v6986
    %v6988 = vpop.f32.mrf.mxu0
    %v6989 = vadd.f32 %v6971, %v6988
    %6990 = vmatmul.bf16.gmra.mxu0 %v5173
    %v6991 = vpop.f32.mrf.mxu0
    %v6992 = vadd.f32 %v6974, %v6991
    %v6993 = vpop.f32.mrf.mxu0
    %6994 = vdwg.mxu0
    %6995 = vmatpush.bf16.msra.mxu0 %v6152
    %6996 = vmatpush.bf16.msra.mxu0 %v6148
    %6997 = vmatpush.bf16.msra.mxu0 %v6144
    %6998 = vmatpush.bf16.msra.mxu0 %v6140
    %6999 = vmatpush.bf16.msra.mxu0 %v6136
    %7000 = vmatpush.bf16.msra.mxu0 %v6132
    %7001 = vmatpush.bf16.msra.mxu0 %v6128
    %7002 = vmatpush.bf16.msra.mxu0 %v6124
    %7003 = vmatmul.bf16.gmra.mxu0 %v5166
    %v7004 = vpop.f32.mrf.mxu0
    %v7005 = vadd.f32 %v6987, %v7004
    %v7006 = vpop.f32.mrf.mxu0
    %v7007 = vadd.f32 %v6989, %v7006
    %7008 = vmatmul.bf16.gmra.mxu0 %v5174
    %v7009 = vpop.f32.mrf.mxu0
    %v7010 = vadd.f32 %v6992, %v7009
    %v7011 = vpop.f32.mrf.mxu0
    %7012 = vdwg.mxu0
    %7013 = vmatpush.bf16.msra.mxu0 %v6184
    %7014 = vmatpush.bf16.msra.mxu0 %v6180
    %7015 = vmatpush.bf16.msra.mxu0 %v6176
    %7016 = vmatpush.bf16.msra.mxu0 %v6172
    %7017 = vmatpush.bf16.msra.mxu0 %v6168
    %7018 = vmatpush.bf16.msra.mxu0 %v6164
    %7019 = vmatpush.bf16.msra.mxu0 %v6160
    %7020 = vmatpush.bf16.msra.mxu0 %v6156
    %7021 = vmatmul.bf16.gmra.mxu0 %v5167
    %v7022 = vpop.f32.mrf.mxu0
    %v7023 = vadd.f32 %v7005, %v7022
    %v7024 = vpop.f32.mrf.mxu0
    %v7025 = vadd.f32 %v7007, %v7024
    %7026 = vmatmul.bf16.gmra.mxu0 %v5175
    %v7027 = vpop.f32.mrf.mxu0
    %v7028 = vadd.f32 %v7010, %v7027
    %v7029 = vpop.f32.mrf.mxu0
    %7030 = vdwg.mxu0
    %7031 = vmatpush.bf16.msra.mxu0 %v6216
    %7032 = vmatpush.bf16.msra.mxu0 %v6212
    %7033 = vmatpush.bf16.msra.mxu0 %v6208
    %7034 = vmatpush.bf16.msra.mxu0 %v6204
    %7035 = vmatpush.bf16.msra.mxu0 %v6200
    %7036 = vmatpush.bf16.msra.mxu0 %v6196
    %7037 = vmatpush.bf16.msra.mxu0 %v6192
    %7038 = vmatpush.bf16.msra.mxu0 %v6188
    %7039 = vmatmul.bf16.gmra.mxu0 %v5168
    %v7040 = vpop.f32.mrf.mxu0
    %v7041 = vadd.f32 %v7023, %v7040
    %v7042 = vpop.f32.mrf.mxu0
    %v7043 = vadd.f32 %v7025, %v7042
    %7044 = vmatmul.bf16.gmra.mxu0 %v5176
    %v7045 = vpop.f32.mrf.mxu0
    %v7046 = vadd.f32 %v7028, %v7045
    %v7047 = vpop.f32.mrf.mxu0
    %7048 = vdwg.mxu0
    %v7049 = vadd.f32 %v4648, 0.0
    %v7050 = vadd.f32 %v4800, 0.0
    %v7051 = vadd.f32 %v4952, 0.0
    %v7052 = vadd.f32 %v5104, 0.0
    %v7053 = vadd.f32 %v4650, %v6609
    %v7054 = vadd.f32 %v4802, %v6753
    %v7055 = vadd.f32 %v4954, %v6897
    %v7056 = vadd.f32 %v5106, %v7041
    %v7057 = vadd.f32 %v4653, %v6611
    %v7058 = vadd.f32 %v4805, %v6755
    %v7059 = vadd.f32 %v4957, %v6899
    %v7060 = vadd.f32 %v5109, %v7043
    %v7061 = vadd.f32 %v4655, %v6614
    %v7062 = vadd.f32 %v4807, %v6758
    %v7063 = vadd.f32 %v4959, %v6902
    %v7064 = vadd.f32 %v5111, %v7046
    %v7066 = vperm.slane %v1176, 0
    %v7067 = vperm.slane %v1176, 1
    %v7068 = vperm.slane %v1176, 2
    %v7069 = vperm.slane %v1176, 3
    %v7074 = vadd.f32 %v7049, %v7066
    %v7075 = vadd.f32 %v7050, %v7067
    %v7076 = vadd.f32 %v7051, %v7068
    %v7077 = vadd.f32 %v7052, %v7069
    %v7078 = vadd.f32 %v7053, %v7066
    %v7079 = vadd.f32 %v7054, %v7067
    %v7080 = vadd.f32 %v7055, %v7068
    %v7081 = vadd.f32 %v7056, %v7069
    %v7082 = vadd.f32 %v7057, %v7066
    %v7083 = vadd.f32 %v7058, %v7067
    %v7084 = vadd.f32 %v7059, %v7068
    %v7085 = vadd.f32 %v7060, %v7069
    %v7086 = vadd.f32 %v7061, %v7066
    %v7087 = vadd.f32 %v7062, %v7067
    %v7088 = vadd.f32 %v7063, %v7068
    %v7089 = vadd.f32 %v7064, %v7069
    %7090 = vmatpush.bf16.msra.mxu0 %v2053
    %7091 = vmatpush.bf16.msra.mxu0 %v2049
    %7092 = vmatpush.bf16.msra.mxu0 %v2045
    %7093 = vmatpush.bf16.msra.mxu0 %v2041
    %7094 = vmatpush.bf16.msra.mxu0 %v2037
    %7095 = vmatpush.bf16.msra.mxu0 %v2033
    %7096 = vmatpush.bf16.msra.mxu0 %v2029
    %7097 = vmatpush.bf16.msra.mxu0 %v2025
    %7098 = vmatmul.bf16.gmra.mxu0 %v5161
    %v7099 = vpop.f32.mrf.mxu0
    %v7100 = vadd.f32 0.0, %v7099
    %v7101 = vpop.f32.mrf.mxu0
    %v7102 = vadd.f32 0.0, %v7101
    %7103 = vmatmul.bf16.gmra.mxu0 %v5169
    %v7104 = vpop.f32.mrf.mxu0
    %v7105 = vadd.f32 0.0, %v7104
    %v7106 = vpop.f32.mrf.mxu0
    %v7107 = vadd.f32 0.0, %v7106
    %7108 = vdwg.mxu0
    %7109 = vmatpush.bf16.msra.mxu0 %v2085
    %7110 = vmatpush.bf16.msra.mxu0 %v2081
    %7111 = vmatpush.bf16.msra.mxu0 %v2077
    %7112 = vmatpush.bf16.msra.mxu0 %v2073
    %7113 = vmatpush.bf16.msra.mxu0 %v2069
    %7114 = vmatpush.bf16.msra.mxu0 %v2065
    %7115 = vmatpush.bf16.msra.mxu0 %v2061
    %7116 = vmatpush.bf16.msra.mxu0 %v2057
    %7117 = vmatmul.bf16.gmra.mxu0 %v5162
    %v7118 = vpop.f32.mrf.mxu0
    %v7119 = vadd.f32 %v7100, %v7118
    %v7120 = vpop.f32.mrf.mxu0
    %v7121 = vadd.f32 %v7102, %v7120
    %7122 = vmatmul.bf16.gmra.mxu0 %v5170
    %v7123 = vpop.f32.mrf.mxu0
    %v7124 = vadd.f32 %v7105, %v7123
    %v7125 = vpop.f32.mrf.mxu0
    %v7126 = vadd.f32 %v7107, %v7125
    %7127 = vdwg.mxu0
    %7128 = vmatpush.bf16.msra.mxu0 %v2117
    %7129 = vmatpush.bf16.msra.mxu0 %v2113
    %7130 = vmatpush.bf16.msra.mxu0 %v2109
    %7131 = vmatpush.bf16.msra.mxu0 %v2105
    %7132 = vmatpush.bf16.msra.mxu0 %v2101
    %7133 = vmatpush.bf16.msra.mxu0 %v2097
    %7134 = vmatpush.bf16.msra.mxu0 %v2093
    %7135 = vmatpush.bf16.msra.mxu0 %v2089
    %7136 = vmatmul.bf16.gmra.mxu0 %v5163
    %v7137 = vpop.f32.mrf.mxu0
    %v7138 = vadd.f32 %v7119, %v7137
    %v7139 = vpop.f32.mrf.mxu0
    %v7140 = vadd.f32 %v7121, %v7139
    %7141 = vmatmul.bf16.gmra.mxu0 %v5171
    %v7142 = vpop.f32.mrf.mxu0
    %v7143 = vadd.f32 %v7124, %v7142
    %v7144 = vpop.f32.mrf.mxu0
    %v7145 = vadd.f32 %v7126, %v7144
    %7146 = vdwg.mxu0
    %7147 = vmatpush.bf16.msra.mxu0 %v2149
    %7148 = vmatpush.bf16.msra.mxu0 %v2145
    %7149 = vmatpush.bf16.msra.mxu0 %v2141
    %7150 = vmatpush.bf16.msra.mxu0 %v2137
    %7151 = vmatpush.bf16.msra.mxu0 %v2133
    %7152 = vmatpush.bf16.msra.mxu0 %v2129
    %7153 = vmatpush.bf16.msra.mxu0 %v2125
    %7154 = vmatpush.bf16.msra.mxu0 %v2121
    %7155 = vmatmul.bf16.gmra.mxu0 %v5164
    %v7156 = vpop.f32.mrf.mxu0
    %v7157 = vadd.f32 %v7138, %v7156
    %v7158 = vpop.f32.mrf.mxu0
    %v7159 = vadd.f32 %v7140, %v7158
    %7160 = vmatmul.bf16.gmra.mxu0 %v5172
    %v7161 = vpop.f32.mrf.mxu0
    %v7162 = vadd.f32 %v7143, %v7161
    %v7163 = vpop.f32.mrf.mxu0
    %v7164 = vadd.f32 %v7145, %v7163
    %7165 = vdwg.mxu0
    %7166 = vmatpush.bf16.msra.mxu0 %v2181
    %7167 = vmatpush.bf16.msra.mxu0 %v2177
    %7168 = vmatpush.bf16.msra.mxu0 %v2173
    %7169 = vmatpush.bf16.msra.mxu0 %v2169
    %7170 = vmatpush.bf16.msra.mxu0 %v2165
    %7171 = vmatpush.bf16.msra.mxu0 %v2161
    %7172 = vmatpush.bf16.msra.mxu0 %v2157
    %7173 = vmatpush.bf16.msra.mxu0 %v2153
    %7174 = vmatmul.bf16.gmra.mxu0 %v5165
    %v7175 = vpop.f32.mrf.mxu0
    %v7176 = vadd.f32 %v7157, %v7175
    %v7177 = vpop.f32.mrf.mxu0
    %v7178 = vadd.f32 %v7159, %v7177
    %7179 = vmatmul.bf16.gmra.mxu0 %v5173
    %v7180 = vpop.f32.mrf.mxu0
    %v7181 = vadd.f32 %v7162, %v7180
    %v7182 = vpop.f32.mrf.mxu0
    %v7183 = vadd.f32 %v7164, %v7182
    %7184 = vdwg.mxu0
    %7185 = vmatpush.bf16.msra.mxu0 %v2213
    %7186 = vmatpush.bf16.msra.mxu0 %v2209
    %7187 = vmatpush.bf16.msra.mxu0 %v2205
    %7188 = vmatpush.bf16.msra.mxu0 %v2201
    %7189 = vmatpush.bf16.msra.mxu0 %v2197
    %7190 = vmatpush.bf16.msra.mxu0 %v2193
    %7191 = vmatpush.bf16.msra.mxu0 %v2189
    %7192 = vmatpush.bf16.msra.mxu0 %v2185
    %7193 = vmatmul.bf16.gmra.mxu0 %v5166
    %v7194 = vpop.f32.mrf.mxu0
    %v7195 = vadd.f32 %v7176, %v7194
    %v7196 = vpop.f32.mrf.mxu0
    %v7197 = vadd.f32 %v7178, %v7196
    %7198 = vmatmul.bf16.gmra.mxu0 %v5174
    %v7199 = vpop.f32.mrf.mxu0
    %v7200 = vadd.f32 %v7181, %v7199
    %v7201 = vpop.f32.mrf.mxu0
    %v7202 = vadd.f32 %v7183, %v7201
    %7203 = vdwg.mxu0
    %7204 = vmatpush.bf16.msra.mxu0 %v2245
    %7205 = vmatpush.bf16.msra.mxu0 %v2241
    %7206 = vmatpush.bf16.msra.mxu0 %v2237
    %7207 = vmatpush.bf16.msra.mxu0 %v2233
    %7208 = vmatpush.bf16.msra.mxu0 %v2229
    %7209 = vmatpush.bf16.msra.mxu0 %v2225
    %7210 = vmatpush.bf16.msra.mxu0 %v2221
    %7211 = vmatpush.bf16.msra.mxu0 %v2217
    %7212 = vmatmul.bf16.gmra.mxu0 %v5167
    %v7213 = vpop.f32.mrf.mxu0
    %v7214 = vadd.f32 %v7195, %v7213
    %v7215 = vpop.f32.mrf.mxu0
    %v7216 = vadd.f32 %v7197, %v7215
    %7217 = vmatmul.bf16.gmra.mxu0 %v5175
    %v7218 = vpop.f32.mrf.mxu0
    %v7219 = vadd.f32 %v7200, %v7218
    %v7220 = vpop.f32.mrf.mxu0
    %v7221 = vadd.f32 %v7202, %v7220
    %7222 = vdwg.mxu0
    %7223 = vmatpush.bf16.msra.mxu0 %v2277
    %7224 = vmatpush.bf16.msra.mxu0 %v2273
    %7225 = vmatpush.bf16.msra.mxu0 %v2269
    %7226 = vmatpush.bf16.msra.mxu0 %v2265
    %7227 = vmatpush.bf16.msra.mxu0 %v2261
    %7228 = vmatpush.bf16.msra.mxu0 %v2257
    %7229 = vmatpush.bf16.msra.mxu0 %v2253
    %7230 = vmatpush.bf16.msra.mxu0 %v2249
    %7231 = vmatmul.bf16.gmra.mxu0 %v5168
    %v7232 = vpop.f32.mrf.mxu0
    %v7233 = vadd.f32 %v7214, %v7232
    %v7234 = vpop.f32.mrf.mxu0
    %v7235 = vadd.f32 %v7216, %v7234
    %7236 = vmatmul.bf16.gmra.mxu0 %v5176
    %v7237 = vpop.f32.mrf.mxu0
    %v7238 = vadd.f32 %v7219, %v7237
    %v7239 = vpop.f32.mrf.mxu0
    %v7240 = vadd.f32 %v7221, %v7239
    %7241 = vdwg.mxu0
    %7242 = vmatpush.bf16.msra.mxu0 %v2054
    %7243 = vmatpush.bf16.msra.mxu0 %v2050
    %7244 = vmatpush.bf16.msra.mxu0 %v2046
    %7245 = vmatpush.bf16.msra.mxu0 %v2042
    %7246 = vmatpush.bf16.msra.mxu0 %v2038
    %7247 = vmatpush.bf16.msra.mxu0 %v2034
    %7248 = vmatpush.bf16.msra.mxu0 %v2030
    %7249 = vmatpush.bf16.msra.mxu0 %v2026
    %7250 = vmatmul.bf16.gmra.mxu0 %v5161
    %v7251 = vpop.f32.mrf.mxu0
    %v7252 = vadd.f32 0.0, %v7251
    %v7253 = vpop.f32.mrf.mxu0
    %v7254 = vadd.f32 0.0, %v7253
    %7255 = vmatmul.bf16.gmra.mxu0 %v5169
    %v7256 = vpop.f32.mrf.mxu0
    %v7257 = vadd.f32 0.0, %v7256
    %v7258 = vpop.f32.mrf.mxu0
    %v7259 = vadd.f32 0.0, %v7258
    %7260 = vdwg.mxu0
    %7261 = vmatpush.bf16.msra.mxu0 %v2086
    %7262 = vmatpush.bf16.msra.mxu0 %v2082
    %7263 = vmatpush.bf16.msra.mxu0 %v2078
    %7264 = vmatpush.bf16.msra.mxu0 %v2074
    %7265 = vmatpush.bf16.msra.mxu0 %v2070
    %7266 = vmatpush.bf16.msra.mxu0 %v2066
    %7267 = vmatpush.bf16.msra.mxu0 %v2062
    %7268 = vmatpush.bf16.msra.mxu0 %v2058
    %7269 = vmatmul.bf16.gmra.mxu0 %v5162
    %v7270 = vpop.f32.mrf.mxu0
    %v7271 = vadd.f32 %v7252, %v7270
    %v7272 = vpop.f32.mrf.mxu0
    %v7273 = vadd.f32 %v7254, %v7272
    %7274 = vmatmul.bf16.gmra.mxu0 %v5170
    %v7275 = vpop.f32.mrf.mxu0
    %v7276 = vadd.f32 %v7257, %v7275
    %v7277 = vpop.f32.mrf.mxu0
    %v7278 = vadd.f32 %v7259, %v7277
    %7279 = vdwg.mxu0
    %7280 = vmatpush.bf16.msra.mxu0 %v2118
    %7281 = vmatpush.bf16.msra.mxu0 %v2114
    %7282 = vmatpush.bf16.msra.mxu0 %v2110
    %7283 = vmatpush.bf16.msra.mxu0 %v2106
    %7284 = vmatpush.bf16.msra.mxu0 %v2102
    %7285 = vmatpush.bf16.msra.mxu0 %v2098
    %7286 = vmatpush.bf16.msra.mxu0 %v2094
    %7287 = vmatpush.bf16.msra.mxu0 %v2090
    %7288 = vmatmul.bf16.gmra.mxu0 %v5163
    %v7289 = vpop.f32.mrf.mxu0
    %v7290 = vadd.f32 %v7271, %v7289
    %v7291 = vpop.f32.mrf.mxu0
    %v7292 = vadd.f32 %v7273, %v7291
    %7293 = vmatmul.bf16.gmra.mxu0 %v5171
    %v7294 = vpop.f32.mrf.mxu0
    %v7295 = vadd.f32 %v7276, %v7294
    %v7296 = vpop.f32.mrf.mxu0
    %v7297 = vadd.f32 %v7278, %v7296
    %7298 = vdwg.mxu0
    %7299 = vmatpush.bf16.msra.mxu0 %v2150
    %7300 = vmatpush.bf16.msra.mxu0 %v2146
    %7301 = vmatpush.bf16.msra.mxu0 %v2142
    %7302 = vmatpush.bf16.msra.mxu0 %v2138
    %7303 = vmatpush.bf16.msra.mxu0 %v2134
    %7304 = vmatpush.bf16.msra.mxu0 %v2130
    %7305 = vmatpush.bf16.msra.mxu0 %v2126
    %7306 = vmatpush.bf16.msra.mxu0 %v2122
    %7307 = vmatmul.bf16.gmra.mxu0 %v5164
    %v7308 = vpop.f32.mrf.mxu0
    %v7309 = vadd.f32 %v7290, %v7308
    %v7310 = vpop.f32.mrf.mxu0
    %v7311 = vadd.f32 %v7292, %v7310
    %7312 = vmatmul.bf16.gmra.mxu0 %v5172
    %v7313 = vpop.f32.mrf.mxu0
    %v7314 = vadd.f32 %v7295, %v7313
    %v7315 = vpop.f32.mrf.mxu0
    %v7316 = vadd.f32 %v7297, %v7315
    %7317 = vdwg.mxu0
    %7318 = vmatpush.bf16.msra.mxu0 %v2182
    %7319 = vmatpush.bf16.msra.mxu0 %v2178
    %7320 = vmatpush.bf16.msra.mxu0 %v2174
    %7321 = vmatpush.bf16.msra.mxu0 %v2170
    %7322 = vmatpush.bf16.msra.mxu0 %v2166
    %7323 = vmatpush.bf16.msra.mxu0 %v2162
    %7324 = vmatpush.bf16.msra.mxu0 %v2158
    %7325 = vmatpush.bf16.msra.mxu0 %v2154
    %7326 = vmatmul.bf16.gmra.mxu0 %v5165
    %v7327 = vpop.f32.mrf.mxu0
    %v7328 = vadd.f32 %v7309, %v7327
    %v7329 = vpop.f32.mrf.mxu0
    %v7330 = vadd.f32 %v7311, %v7329
    %7331 = vmatmul.bf16.gmra.mxu0 %v5173
    %v7332 = vpop.f32.mrf.mxu0
    %v7333 = vadd.f32 %v7314, %v7332
    %v7334 = vpop.f32.mrf.mxu0
    %v7335 = vadd.f32 %v7316, %v7334
    %7336 = vdwg.mxu0
    %7337 = vmatpush.bf16.msra.mxu0 %v2214
    %7338 = vmatpush.bf16.msra.mxu0 %v2210
    %7339 = vmatpush.bf16.msra.mxu0 %v2206
    %7340 = vmatpush.bf16.msra.mxu0 %v2202
    %7341 = vmatpush.bf16.msra.mxu0 %v2198
    %7342 = vmatpush.bf16.msra.mxu0 %v2194
    %7343 = vmatpush.bf16.msra.mxu0 %v2190
    %7344 = vmatpush.bf16.msra.mxu0 %v2186
    %7345 = vmatmul.bf16.gmra.mxu0 %v5166
    %v7346 = vpop.f32.mrf.mxu0
    %v7347 = vadd.f32 %v7328, %v7346
    %v7348 = vpop.f32.mrf.mxu0
    %v7349 = vadd.f32 %v7330, %v7348
    %7350 = vmatmul.bf16.gmra.mxu0 %v5174
    %v7351 = vpop.f32.mrf.mxu0
    %v7352 = vadd.f32 %v7333, %v7351
    %v7353 = vpop.f32.mrf.mxu0
    %v7354 = vadd.f32 %v7335, %v7353
    %7355 = vdwg.mxu0
    %7356 = vmatpush.bf16.msra.mxu0 %v2246
    %7357 = vmatpush.bf16.msra.mxu0 %v2242
    %7358 = vmatpush.bf16.msra.mxu0 %v2238
    %7359 = vmatpush.bf16.msra.mxu0 %v2234
    %7360 = vmatpush.bf16.msra.mxu0 %v2230
    %7361 = vmatpush.bf16.msra.mxu0 %v2226
    %7362 = vmatpush.bf16.msra.mxu0 %v2222
    %7363 = vmatpush.bf16.msra.mxu0 %v2218
    %7364 = vmatmul.bf16.gmra.mxu0 %v5167
    %v7365 = vpop.f32.mrf.mxu0
    %v7366 = vadd.f32 %v7347, %v7365
    %v7367 = vpop.f32.mrf.mxu0
    %v7368 = vadd.f32 %v7349, %v7367
    %7369 = vmatmul.bf16.gmra.mxu0 %v5175
    %v7370 = vpop.f32.mrf.mxu0
    %v7371 = vadd.f32 %v7352, %v7370
    %v7372 = vpop.f32.mrf.mxu0
    %v7373 = vadd.f32 %v7354, %v7372
    %7374 = vdwg.mxu0
    %7375 = vmatpush.bf16.msra.mxu0 %v2278
    %7376 = vmatpush.bf16.msra.mxu0 %v2274
    %7377 = vmatpush.bf16.msra.mxu0 %v2270
    %7378 = vmatpush.bf16.msra.mxu0 %v2266
    %7379 = vmatpush.bf16.msra.mxu0 %v2262
    %7380 = vmatpush.bf16.msra.mxu0 %v2258
    %7381 = vmatpush.bf16.msra.mxu0 %v2254
    %7382 = vmatpush.bf16.msra.mxu0 %v2250
    %7383 = vmatmul.bf16.gmra.mxu0 %v5168
    %v7384 = vpop.f32.mrf.mxu0
    %v7385 = vadd.f32 %v7366, %v7384
    %v7386 = vpop.f32.mrf.mxu0
    %v7387 = vadd.f32 %v7368, %v7386
    %7388 = vmatmul.bf16.gmra.mxu0 %v5176
    %v7389 = vpop.f32.mrf.mxu0
    %v7390 = vadd.f32 %v7371, %v7389
    %v7391 = vpop.f32.mrf.mxu0
    %v7392 = vadd.f32 %v7373, %v7391
    %7393 = vdwg.mxu0
    %7394 = vmatpush.bf16.msra.mxu0 %v2055
    %7395 = vmatpush.bf16.msra.mxu0 %v2051
    %7396 = vmatpush.bf16.msra.mxu0 %v2047
    %7397 = vmatpush.bf16.msra.mxu0 %v2043
    %7398 = vmatpush.bf16.msra.mxu0 %v2039
    %7399 = vmatpush.bf16.msra.mxu0 %v2035
    %7400 = vmatpush.bf16.msra.mxu0 %v2031
    %7401 = vmatpush.bf16.msra.mxu0 %v2027
    %7402 = vmatmul.bf16.gmra.mxu0 %v5161
    %v7403 = vpop.f32.mrf.mxu0
    %v7404 = vadd.f32 0.0, %v7403
    %v7405 = vpop.f32.mrf.mxu0
    %v7406 = vadd.f32 0.0, %v7405
    %7407 = vmatmul.bf16.gmra.mxu0 %v5169
    %v7408 = vpop.f32.mrf.mxu0
    %v7409 = vadd.f32 0.0, %v7408
    %v7410 = vpop.f32.mrf.mxu0
    %v7411 = vadd.f32 0.0, %v7410
    %7412 = vdwg.mxu0
    %7413 = vmatpush.bf16.msra.mxu0 %v2087
    %7414 = vmatpush.bf16.msra.mxu0 %v2083
    %7415 = vmatpush.bf16.msra.mxu0 %v2079
    %7416 = vmatpush.bf16.msra.mxu0 %v2075
    %7417 = vmatpush.bf16.msra.mxu0 %v2071
    %7418 = vmatpush.bf16.msra.mxu0 %v2067
    %7419 = vmatpush.bf16.msra.mxu0 %v2063
    %7420 = vmatpush.bf16.msra.mxu0 %v2059
    %7421 = vmatmul.bf16.gmra.mxu0 %v5162
    %v7422 = vpop.f32.mrf.mxu0
    %v7423 = vadd.f32 %v7404, %v7422
    %v7424 = vpop.f32.mrf.mxu0
    %v7425 = vadd.f32 %v7406, %v7424
    %7426 = vmatmul.bf16.gmra.mxu0 %v5170
    %v7427 = vpop.f32.mrf.mxu0
    %v7428 = vadd.f32 %v7409, %v7427
    %v7429 = vpop.f32.mrf.mxu0
    %v7430 = vadd.f32 %v7411, %v7429
    %7431 = vdwg.mxu0
    %7432 = vmatpush.bf16.msra.mxu0 %v2119
    %7433 = vmatpush.bf16.msra.mxu0 %v2115
    %7434 = vmatpush.bf16.msra.mxu0 %v2111
    %7435 = vmatpush.bf16.msra.mxu0 %v2107
    %7436 = vmatpush.bf16.msra.mxu0 %v2103
    %7437 = vmatpush.bf16.msra.mxu0 %v2099
    %7438 = vmatpush.bf16.msra.mxu0 %v2095
    %7439 = vmatpush.bf16.msra.mxu0 %v2091
    %7440 = vmatmul.bf16.gmra.mxu0 %v5163
    %v7441 = vpop.f32.mrf.mxu0
    %v7442 = vadd.f32 %v7423, %v7441
    %v7443 = vpop.f32.mrf.mxu0
    %v7444 = vadd.f32 %v7425, %v7443
    %7445 = vmatmul.bf16.gmra.mxu0 %v5171
    %v7446 = vpop.f32.mrf.mxu0
    %v7447 = vadd.f32 %v7428, %v7446
    %v7448 = vpop.f32.mrf.mxu0
    %v7449 = vadd.f32 %v7430, %v7448
    %7450 = vdwg.mxu0
    %7451 = vmatpush.bf16.msra.mxu0 %v2151
    %7452 = vmatpush.bf16.msra.mxu0 %v2147
    %7453 = vmatpush.bf16.msra.mxu0 %v2143
    %7454 = vmatpush.bf16.msra.mxu0 %v2139
    %7455 = vmatpush.bf16.msra.mxu0 %v2135
    %7456 = vmatpush.bf16.msra.mxu0 %v2131
    %7457 = vmatpush.bf16.msra.mxu0 %v2127
    %7458 = vmatpush.bf16.msra.mxu0 %v2123
    %7459 = vmatmul.bf16.gmra.mxu0 %v5164
    %v7460 = vpop.f32.mrf.mxu0
    %v7461 = vadd.f32 %v7442, %v7460
    %v7462 = vpop.f32.mrf.mxu0
    %v7463 = vadd.f32 %v7444, %v7462
    %7464 = vmatmul.bf16.gmra.mxu0 %v5172
    %v7465 = vpop.f32.mrf.mxu0
    %v7466 = vadd.f32 %v7447, %v7465
    %v7467 = vpop.f32.mrf.mxu0
    %v7468 = vadd.f32 %v7449, %v7467
    %7469 = vdwg.mxu0
    %7470 = vmatpush.bf16.msra.mxu0 %v2183
    %7471 = vmatpush.bf16.msra.mxu0 %v2179
    %7472 = vmatpush.bf16.msra.mxu0 %v2175
    %7473 = vmatpush.bf16.msra.mxu0 %v2171
    %7474 = vmatpush.bf16.msra.mxu0 %v2167
    %7475 = vmatpush.bf16.msra.mxu0 %v2163
    %7476 = vmatpush.bf16.msra.mxu0 %v2159
    %7477 = vmatpush.bf16.msra.mxu0 %v2155
    %7478 = vmatmul.bf16.gmra.mxu0 %v5165
    %v7479 = vpop.f32.mrf.mxu0
    %v7480 = vadd.f32 %v7461, %v7479
    %v7481 = vpop.f32.mrf.mxu0
    %v7482 = vadd.f32 %v7463, %v7481
    %7483 = vmatmul.bf16.gmra.mxu0 %v5173
    %v7484 = vpop.f32.mrf.mxu0
    %v7485 = vadd.f32 %v7466, %v7484
    %v7486 = vpop.f32.mrf.mxu0
    %v7487 = vadd.f32 %v7468, %v7486
    %7488 = vdwg.mxu0
    %7489 = vmatpush.bf16.msra.mxu0 %v2215
    %7490 = vmatpush.bf16.msra.mxu0 %v2211
    %7491 = vmatpush.bf16.msra.mxu0 %v2207
    %7492 = vmatpush.bf16.msra.mxu0 %v2203
    %7493 = vmatpush.bf16.msra.mxu0 %v2199
    %7494 = vmatpush.bf16.msra.mxu0 %v2195
    %7495 = vmatpush.bf16.msra.mxu0 %v2191
    %7496 = vmatpush.bf16.msra.mxu0 %v2187
    %7497 = vmatmul.bf16.gmra.mxu0 %v5166
    %v7498 = vpop.f32.mrf.mxu0
    %v7499 = vadd.f32 %v7480, %v7498
    %v7500 = vpop.f32.mrf.mxu0
    %v7501 = vadd.f32 %v7482, %v7500
    %7502 = vmatmul.bf16.gmra.mxu0 %v5174
    %v7503 = vpop.f32.mrf.mxu0
    %v7504 = vadd.f32 %v7485, %v7503
    %v7505 = vpop.f32.mrf.mxu0
    %v7506 = vadd.f32 %v7487, %v7505
    %7507 = vdwg.mxu0
    %7508 = vmatpush.bf16.msra.mxu0 %v2247
    %7509 = vmatpush.bf16.msra.mxu0 %v2243
    %7510 = vmatpush.bf16.msra.mxu0 %v2239
    %7511 = vmatpush.bf16.msra.mxu0 %v2235
    %7512 = vmatpush.bf16.msra.mxu0 %v2231
    %7513 = vmatpush.bf16.msra.mxu0 %v2227
    %7514 = vmatpush.bf16.msra.mxu0 %v2223
    %7515 = vmatpush.bf16.msra.mxu0 %v2219
    %7516 = vmatmul.bf16.gmra.mxu0 %v5167
    %v7517 = vpop.f32.mrf.mxu0
    %v7518 = vadd.f32 %v7499, %v7517
    %v7519 = vpop.f32.mrf.mxu0
    %v7520 = vadd.f32 %v7501, %v7519
    %7521 = vmatmul.bf16.gmra.mxu0 %v5175
    %v7522 = vpop.f32.mrf.mxu0
    %v7523 = vadd.f32 %v7504, %v7522
    %v7524 = vpop.f32.mrf.mxu0
    %v7525 = vadd.f32 %v7506, %v7524
    %7526 = vdwg.mxu0
    %7527 = vmatpush.bf16.msra.mxu0 %v2279
    %7528 = vmatpush.bf16.msra.mxu0 %v2275
    %7529 = vmatpush.bf16.msra.mxu0 %v2271
    %7530 = vmatpush.bf16.msra.mxu0 %v2267
    %7531 = vmatpush.bf16.msra.mxu0 %v2263
    %7532 = vmatpush.bf16.msra.mxu0 %v2259
    %7533 = vmatpush.bf16.msra.mxu0 %v2255
    %7534 = vmatpush.bf16.msra.mxu0 %v2251
    %7535 = vmatmul.bf16.gmra.mxu0 %v5168
    %v7536 = vpop.f32.mrf.mxu0
    %v7537 = vadd.f32 %v7518, %v7536
    %v7538 = vpop.f32.mrf.mxu0
    %v7539 = vadd.f32 %v7520, %v7538
    %7540 = vmatmul.bf16.gmra.mxu0 %v5176
    %v7541 = vpop.f32.mrf.mxu0
    %v7542 = vadd.f32 %v7523, %v7541
    %v7543 = vpop.f32.mrf.mxu0
    %v7544 = vadd.f32 %v7525, %v7543
    %7545 = vdwg.mxu0
    %7546 = vmatpush.bf16.msra.mxu0 %v2056
    %7547 = vmatpush.bf16.msra.mxu0 %v2052
    %7548 = vmatpush.bf16.msra.mxu0 %v2048
    %7549 = vmatpush.bf16.msra.mxu0 %v2044
    %7550 = vmatpush.bf16.msra.mxu0 %v2040
    %7551 = vmatpush.bf16.msra.mxu0 %v2036
    %7552 = vmatpush.bf16.msra.mxu0 %v2032
    %7553 = vmatpush.bf16.msra.mxu0 %v2028
    %7554 = vmatmul.bf16.gmra.mxu0 %v5161
    %v7555 = vpop.f32.mrf.mxu0
    %v7556 = vadd.f32 0.0, %v7555
    %v7557 = vpop.f32.mrf.mxu0
    %v7558 = vadd.f32 0.0, %v7557
    %7559 = vmatmul.bf16.gmra.mxu0 %v5169
    %v7560 = vpop.f32.mrf.mxu0
    %v7561 = vadd.f32 0.0, %v7560
    %v7562 = vpop.f32.mrf.mxu0
    %v7563 = vadd.f32 0.0, %v7562
    %7564 = vdwg.mxu0
    %7565 = vmatpush.bf16.msra.mxu0 %v2088
    %7566 = vmatpush.bf16.msra.mxu0 %v2084
    %7567 = vmatpush.bf16.msra.mxu0 %v2080
    %7568 = vmatpush.bf16.msra.mxu0 %v2076
    %7569 = vmatpush.bf16.msra.mxu0 %v2072
    %7570 = vmatpush.bf16.msra.mxu0 %v2068
    %7571 = vmatpush.bf16.msra.mxu0 %v2064
    %7572 = vmatpush.bf16.msra.mxu0 %v2060
    %7573 = vmatmul.bf16.gmra.mxu0 %v5162
    %v7574 = vpop.f32.mrf.mxu0
    %v7575 = vadd.f32 %v7556, %v7574
    %v7576 = vpop.f32.mrf.mxu0
    %v7577 = vadd.f32 %v7558, %v7576
    %7578 = vmatmul.bf16.gmra.mxu0 %v5170
    %v7579 = vpop.f32.mrf.mxu0
    %v7580 = vadd.f32 %v7561, %v7579
    %v7581 = vpop.f32.mrf.mxu0
    %v7582 = vadd.f32 %v7563, %v7581
    %7583 = vdwg.mxu0
    %7584 = vmatpush.bf16.msra.mxu0 %v2120
    %7585 = vmatpush.bf16.msra.mxu0 %v2116
    %7586 = vmatpush.bf16.msra.mxu0 %v2112
    %7587 = vmatpush.bf16.msra.mxu0 %v2108
    %7588 = vmatpush.bf16.msra.mxu0 %v2104
    %7589 = vmatpush.bf16.msra.mxu0 %v2100
    %7590 = vmatpush.bf16.msra.mxu0 %v2096
    %7591 = vmatpush.bf16.msra.mxu0 %v2092
    %7592 = vmatmul.bf16.gmra.mxu0 %v5163
    %v7593 = vpop.f32.mrf.mxu0
    %v7594 = vadd.f32 %v7575, %v7593
    %v7595 = vpop.f32.mrf.mxu0
    %v7596 = vadd.f32 %v7577, %v7595
    %7597 = vmatmul.bf16.gmra.mxu0 %v5171
    %v7598 = vpop.f32.mrf.mxu0
    %v7599 = vadd.f32 %v7580, %v7598
    %v7600 = vpop.f32.mrf.mxu0
    %v7601 = vadd.f32 %v7582, %v7600
    %7602 = vdwg.mxu0
    %7603 = vmatpush.bf16.msra.mxu0 %v2152
    %7604 = vmatpush.bf16.msra.mxu0 %v2148
    %7605 = vmatpush.bf16.msra.mxu0 %v2144
    %7606 = vmatpush.bf16.msra.mxu0 %v2140
    %7607 = vmatpush.bf16.msra.mxu0 %v2136
    %7608 = vmatpush.bf16.msra.mxu0 %v2132
    %7609 = vmatpush.bf16.msra.mxu0 %v2128
    %7610 = vmatpush.bf16.msra.mxu0 %v2124
    %7611 = vmatmul.bf16.gmra.mxu0 %v5164
    %v7612 = vpop.f32.mrf.mxu0
    %v7613 = vadd.f32 %v7594, %v7612
    %v7614 = vpop.f32.mrf.mxu0
    %v7615 = vadd.f32 %v7596, %v7614
    %7616 = vmatmul.bf16.gmra.mxu0 %v5172
    %v7617 = vpop.f32.mrf.mxu0
    %v7618 = vadd.f32 %v7599, %v7617
    %v7619 = vpop.f32.mrf.mxu0
    %v7620 = vadd.f32 %v7601, %v7619
    %7621 = vdwg.mxu0
    %7622 = vmatpush.bf16.msra.mxu0 %v2184
    %7623 = vmatpush.bf16.msra.mxu0 %v2180
    %7624 = vmatpush.bf16.msra.mxu0 %v2176
    %7625 = vmatpush.bf16.msra.mxu0 %v2172
    %7626 = vmatpush.bf16.msra.mxu0 %v2168
    %7627 = vmatpush.bf16.msra.mxu0 %v2164
    %7628 = vmatpush.bf16.msra.mxu0 %v2160
    %7629 = vmatpush.bf16.msra.mxu0 %v2156
    %7630 = vmatmul.bf16.gmra.mxu0 %v5165
    %v7631 = vpop.f32.mrf.mxu0
    %v7632 = vadd.f32 %v7613, %v7631
    %v7633 = vpop.f32.mrf.mxu0
    %v7634 = vadd.f32 %v7615, %v7633
    %7635 = vmatmul.bf16.gmra.mxu0 %v5173
    %v7636 = vpop.f32.mrf.mxu0
    %v7637 = vadd.f32 %v7618, %v7636
    %v7638 = vpop.f32.mrf.mxu0
    %v7639 = vadd.f32 %v7620, %v7638
    %7640 = vdwg.mxu0
    %7641 = vmatpush.bf16.msra.mxu0 %v2216
    %7642 = vmatpush.bf16.msra.mxu0 %v2212
    %7643 = vmatpush.bf16.msra.mxu0 %v2208
    %7644 = vmatpush.bf16.msra.mxu0 %v2204
    %7645 = vmatpush.bf16.msra.mxu0 %v2200
    %7646 = vmatpush.bf16.msra.mxu0 %v2196
    %7647 = vmatpush.bf16.msra.mxu0 %v2192
    %7648 = vmatpush.bf16.msra.mxu0 %v2188
    %7649 = vmatmul.bf16.gmra.mxu0 %v5166
    %v7650 = vpop.f32.mrf.mxu0
    %v7651 = vadd.f32 %v7632, %v7650
    %v7652 = vpop.f32.mrf.mxu0
    %v7653 = vadd.f32 %v7634, %v7652
    %7654 = vmatmul.bf16.gmra.mxu0 %v5174
    %v7655 = vpop.f32.mrf.mxu0
    %v7656 = vadd.f32 %v7637, %v7655
    %v7657 = vpop.f32.mrf.mxu0
    %v7658 = vadd.f32 %v7639, %v7657
    %7659 = vdwg.mxu0
    %7660 = vmatpush.bf16.msra.mxu0 %v2248
    %7661 = vmatpush.bf16.msra.mxu0 %v2244
    %7662 = vmatpush.bf16.msra.mxu0 %v2240
    %7663 = vmatpush.bf16.msra.mxu0 %v2236
    %7664 = vmatpush.bf16.msra.mxu0 %v2232
    %7665 = vmatpush.bf16.msra.mxu0 %v2228
    %7666 = vmatpush.bf16.msra.mxu0 %v2224
    %7667 = vmatpush.bf16.msra.mxu0 %v2220
    %7668 = vmatmul.bf16.gmra.mxu0 %v5167
    %v7669 = vpop.f32.mrf.mxu0
    %v7670 = vadd.f32 %v7651, %v7669
    %v7671 = vpop.f32.mrf.mxu0
    %v7672 = vadd.f32 %v7653, %v7671
    %7673 = vmatmul.bf16.gmra.mxu0 %v5175
    %v7674 = vpop.f32.mrf.mxu0
    %v7675 = vadd.f32 %v7656, %v7674
    %v7676 = vpop.f32.mrf.mxu0
    %v7677 = vadd.f32 %v7658, %v7676
    %7678 = vdwg.mxu0
    %7679 = vmatpush.bf16.msra.mxu0 %v2280
    %7680 = vmatpush.bf16.msra.mxu0 %v2276
    %7681 = vmatpush.bf16.msra.mxu0 %v2272
    %7682 = vmatpush.bf16.msra.mxu0 %v2268
    %7683 = vmatpush.bf16.msra.mxu0 %v2264
    %7684 = vmatpush.bf16.msra.mxu0 %v2260
    %7685 = vmatpush.bf16.msra.mxu0 %v2256
    %7686 = vmatpush.bf16.msra.mxu0 %v2252
    %7687 = vmatmul.bf16.gmra.mxu0 %v5168
    %v7688 = vpop.f32.mrf.mxu0
    %v7689 = vadd.f32 %v7670, %v7688
    %v7690 = vpop.f32.mrf.mxu0
    %v7691 = vadd.f32 %v7672, %v7690
    %7692 = vmatmul.bf16.gmra.mxu0 %v5176
    %v7693 = vpop.f32.mrf.mxu0
    %v7694 = vadd.f32 %v7675, %v7693
    %v7695 = vpop.f32.mrf.mxu0
    %v7696 = vadd.f32 %v7677, %v7695
    %7697 = vdwg.mxu0
    %v7714 = vunpack.c.l.b16 %v180
    %v7715 = vunpack.c.h.b16 %v180
    %v7716 = vunpack.c.l.b16 %v181
    %v7717 = vunpack.c.h.b16 %v181
    %v7718 = vunpack.c.l.b16 %v182
    %v7719 = vunpack.c.h.b16 %v182
    %v7720 = vunpack.c.l.b16 %v183
    %v7721 = vunpack.c.h.b16 %v183
    %v7722 = vunpack.c.l.b16 %v184
    %v7723 = vunpack.c.h.b16 %v184
    %v7724 = vunpack.c.l.b16 %v185
    %v7725 = vunpack.c.h.b16 %v185
    %v7726 = vunpack.c.l.b16 %v186
    %v7727 = vunpack.c.h.b16 %v186
    %v7728 = vunpack.c.l.b16 %v187
    %v7729 = vunpack.c.h.b16 %v187
    %v7730 = vunpack.c.l.b16 %v188
    %v7731 = vunpack.c.h.b16 %v188
    %v7732 = vunpack.c.l.b16 %v189
    %v7733 = vunpack.c.h.b16 %v189
    %v7734 = vunpack.c.l.b16 %v190
    %v7735 = vunpack.c.h.b16 %v190
    %v7736 = vunpack.c.l.b16 %v191
    %v7737 = vunpack.c.h.b16 %v191
    %v7738 = vunpack.c.l.b16 %v192
    %v7739 = vunpack.c.h.b16 %v192
    %v7740 = vunpack.c.l.b16 %v193
    %v7741 = vunpack.c.h.b16 %v193
    %v7742 = vunpack.c.l.b16 %v194
    %v7743 = vunpack.c.h.b16 %v194
    %v7744 = vunpack.c.l.b16 %v195
    %v7745 = vunpack.c.h.b16 %v195
    %v7746 = vpack.c.b16 %v7722, %v7714
    %v7747 = vpack.c.b16 %v7723, %v7715
    %v7748 = vpack.c.b16 %v7724, %v7716
    %v7749 = vpack.c.b16 %v7725, %v7717
    %v7750 = vpack.c.b16 %v7726, %v7718
    %v7751 = vpack.c.b16 %v7727, %v7719
    %v7752 = vpack.c.b16 %v7728, %v7720
    %v7753 = vpack.c.b16 %v7729, %v7721
    %v7754 = vpack.c.b16 %v7738, %v7730
    %v7755 = vpack.c.b16 %v7739, %v7731
    %v7756 = vpack.c.b16 %v7740, %v7732
    %v7757 = vpack.c.b16 %v7741, %v7733
    %v7758 = vpack.c.b16 %v7742, %v7734
    %v7759 = vpack.c.b16 %v7743, %v7735
    %v7760 = vpack.c.b16 %v7744, %v7736
    %v7761 = vpack.c.b16 %v7745, %v7737
    %7778 = vmatpush.bf16.msra.mxu0 %v4021
    %7779 = vmatpush.bf16.msra.mxu0 %v4017
    %7780 = vmatpush.bf16.msra.mxu0 %v4013
    %7781 = vmatpush.bf16.msra.mxu0 %v4009
    %7782 = vmatpush.bf16.msra.mxu0 %v4005
    %7783 = vmatpush.bf16.msra.mxu0 %v4001
    %7784 = vmatpush.bf16.msra.mxu0 %v3997
    %7785 = vmatpush.bf16.msra.mxu0 %v3993
    %7786 = vmatmul.bf16.gmra.mxu0 %v7746
    %v7787 = vpop.f32.mrf.mxu0
    %v7788 = vadd.f32 %v7233, %v7787
    %v7789 = vpop.f32.mrf.mxu0
    %v7790 = vadd.f32 %v7235, %v7789
    %7791 = vmatmul.bf16.gmra.mxu0 %v7754
    %v7792 = vpop.f32.mrf.mxu0
    %v7793 = vadd.f32 %v7238, %v7792
    %v7794 = vpop.f32.mrf.mxu0
    %v7795 = vadd.f32 %v7240, %v7794
    %7796 = vdwg.mxu0
    %7797 = vmatpush.bf16.msra.mxu0 %v4053
    %7798 = vmatpush.bf16.msra.mxu0 %v4049
    %7799 = vmatpush.bf16.msra.mxu0 %v4045
    %7800 = vmatpush.bf16.msra.mxu0 %v4041
    %7801 = vmatpush.bf16.msra.mxu0 %v4037
    %7802 = vmatpush.bf16.msra.mxu0 %v4033
    %7803 = vmatpush.bf16.msra.mxu0 %v4029
    %7804 = vmatpush.bf16.msra.mxu0 %v4025
    %7805 = vmatmul.bf16.gmra.mxu0 %v7747
    %v7806 = vpop.f32.mrf.mxu0
    %v7807 = vadd.f32 %v7788, %v7806
    %v7808 = vpop.f32.mrf.mxu0
    %v7809 = vadd.f32 %v7790, %v7808
    %7810 = vmatmul.bf16.gmra.mxu0 %v7755
    %v7811 = vpop.f32.mrf.mxu0
    %v7812 = vadd.f32 %v7793, %v7811
    %v7813 = vpop.f32.mrf.mxu0
    %v7814 = vadd.f32 %v7795, %v7813
    %7815 = vdwg.mxu0
    %7816 = vmatpush.bf16.msra.mxu0 %v4085
    %7817 = vmatpush.bf16.msra.mxu0 %v4081
    %7818 = vmatpush.bf16.msra.mxu0 %v4077
    %7819 = vmatpush.bf16.msra.mxu0 %v4073
    %7820 = vmatpush.bf16.msra.mxu0 %v4069
    %7821 = vmatpush.bf16.msra.mxu0 %v4065
    %7822 = vmatpush.bf16.msra.mxu0 %v4061
    %7823 = vmatpush.bf16.msra.mxu0 %v4057
    %7824 = vmatmul.bf16.gmra.mxu0 %v7748
    %v7825 = vpop.f32.mrf.mxu0
    %v7826 = vadd.f32 %v7807, %v7825
    %v7827 = vpop.f32.mrf.mxu0
    %v7828 = vadd.f32 %v7809, %v7827
    %7829 = vmatmul.bf16.gmra.mxu0 %v7756
    %v7830 = vpop.f32.mrf.mxu0
    %v7831 = vadd.f32 %v7812, %v7830
    %v7832 = vpop.f32.mrf.mxu0
    %v7833 = vadd.f32 %v7814, %v7832
    %7834 = vdwg.mxu0
    %7835 = vmatpush.bf16.msra.mxu0 %v4117
    %7836 = vmatpush.bf16.msra.mxu0 %v4113
    %7837 = vmatpush.bf16.msra.mxu0 %v4109
    %7838 = vmatpush.bf16.msra.mxu0 %v4105
    %7839 = vmatpush.bf16.msra.mxu0 %v4101
    %7840 = vmatpush.bf16.msra.mxu0 %v4097
    %7841 = vmatpush.bf16.msra.mxu0 %v4093
    %7842 = vmatpush.bf16.msra.mxu0 %v4089
    %7843 = vmatmul.bf16.gmra.mxu0 %v7749
    %v7844 = vpop.f32.mrf.mxu0
    %v7845 = vadd.f32 %v7826, %v7844
    %v7846 = vpop.f32.mrf.mxu0
    %v7847 = vadd.f32 %v7828, %v7846
    %7848 = vmatmul.bf16.gmra.mxu0 %v7757
    %v7849 = vpop.f32.mrf.mxu0
    %v7850 = vadd.f32 %v7831, %v7849
    %v7851 = vpop.f32.mrf.mxu0
    %v7852 = vadd.f32 %v7833, %v7851
    %7853 = vdwg.mxu0
    %7854 = vmatpush.bf16.msra.mxu0 %v4149
    %7855 = vmatpush.bf16.msra.mxu0 %v4145
    %7856 = vmatpush.bf16.msra.mxu0 %v4141
    %7857 = vmatpush.bf16.msra.mxu0 %v4137
    %7858 = vmatpush.bf16.msra.mxu0 %v4133
    %7859 = vmatpush.bf16.msra.mxu0 %v4129
    %7860 = vmatpush.bf16.msra.mxu0 %v4125
    %7861 = vmatpush.bf16.msra.mxu0 %v4121
    %7862 = vmatmul.bf16.gmra.mxu0 %v7750
    %v7863 = vpop.f32.mrf.mxu0
    %v7864 = vadd.f32 %v7845, %v7863
    %v7865 = vpop.f32.mrf.mxu0
    %v7866 = vadd.f32 %v7847, %v7865
    %7867 = vmatmul.bf16.gmra.mxu0 %v7758
    %v7868 = vpop.f32.mrf.mxu0
    %v7869 = vadd.f32 %v7850, %v7868
    %v7870 = vpop.f32.mrf.mxu0
    %v7871 = vadd.f32 %v7852, %v7870
    %7872 = vdwg.mxu0
    %7873 = vmatpush.bf16.msra.mxu0 %v4181
    %7874 = vmatpush.bf16.msra.mxu0 %v4177
    %7875 = vmatpush.bf16.msra.mxu0 %v4173
    %7876 = vmatpush.bf16.msra.mxu0 %v4169
    %7877 = vmatpush.bf16.msra.mxu0 %v4165
    %7878 = vmatpush.bf16.msra.mxu0 %v4161
    %7879 = vmatpush.bf16.msra.mxu0 %v4157
    %7880 = vmatpush.bf16.msra.mxu0 %v4153
    %7881 = vmatmul.bf16.gmra.mxu0 %v7751
    %v7882 = vpop.f32.mrf.mxu0
    %v7883 = vadd.f32 %v7864, %v7882
    %v7884 = vpop.f32.mrf.mxu0
    %v7885 = vadd.f32 %v7866, %v7884
    %7886 = vmatmul.bf16.gmra.mxu0 %v7759
    %v7887 = vpop.f32.mrf.mxu0
    %v7888 = vadd.f32 %v7869, %v7887
    %v7889 = vpop.f32.mrf.mxu0
    %v7890 = vadd.f32 %v7871, %v7889
    %7891 = vdwg.mxu0
    %7892 = vmatpush.bf16.msra.mxu0 %v4213
    %7893 = vmatpush.bf16.msra.mxu0 %v4209
    %7894 = vmatpush.bf16.msra.mxu0 %v4205
    %7895 = vmatpush.bf16.msra.mxu0 %v4201
    %7896 = vmatpush.bf16.msra.mxu0 %v4197
    %7897 = vmatpush.bf16.msra.mxu0 %v4193
    %7898 = vmatpush.bf16.msra.mxu0 %v4189
    %7899 = vmatpush.bf16.msra.mxu0 %v4185
    %7900 = vmatmul.bf16.gmra.mxu0 %v7752
    %v7901 = vpop.f32.mrf.mxu0
    %v7902 = vadd.f32 %v7883, %v7901
    %v7903 = vpop.f32.mrf.mxu0
    %v7904 = vadd.f32 %v7885, %v7903
    %7905 = vmatmul.bf16.gmra.mxu0 %v7760
    %v7906 = vpop.f32.mrf.mxu0
    %v7907 = vadd.f32 %v7888, %v7906
    %v7908 = vpop.f32.mrf.mxu0
    %v7909 = vadd.f32 %v7890, %v7908
    %7910 = vdwg.mxu0
    %7911 = vmatpush.bf16.msra.mxu0 %v4245
    %7912 = vmatpush.bf16.msra.mxu0 %v4241
    %7913 = vmatpush.bf16.msra.mxu0 %v4237
    %7914 = vmatpush.bf16.msra.mxu0 %v4233
    %7915 = vmatpush.bf16.msra.mxu0 %v4229
    %7916 = vmatpush.bf16.msra.mxu0 %v4225
    %7917 = vmatpush.bf16.msra.mxu0 %v4221
    %7918 = vmatpush.bf16.msra.mxu0 %v4217
    %7919 = vmatmul.bf16.gmra.mxu0 %v7753
    %v7920 = vpop.f32.mrf.mxu0
    %v7921 = vadd.f32 %v7902, %v7920
    %v7922 = vpop.f32.mrf.mxu0
    %v7923 = vadd.f32 %v7904, %v7922
    %7924 = vmatmul.bf16.gmra.mxu0 %v7761
    %v7925 = vpop.f32.mrf.mxu0
    %v7926 = vadd.f32 %v7907, %v7925
    %v7927 = vpop.f32.mrf.mxu0
    %v7928 = vadd.f32 %v7909, %v7927
    %7929 = vdwg.mxu0
    %7930 = vmatpush.bf16.msra.mxu0 %v4022
    %7931 = vmatpush.bf16.msra.mxu0 %v4018
    %7932 = vmatpush.bf16.msra.mxu0 %v4014
    %7933 = vmatpush.bf16.msra.mxu0 %v4010
    %7934 = vmatpush.bf16.msra.mxu0 %v4006
    %7935 = vmatpush.bf16.msra.mxu0 %v4002
    %7936 = vmatpush.bf16.msra.mxu0 %v3998
    %7937 = vmatpush.bf16.msra.mxu0 %v3994
    %7938 = vmatmul.bf16.gmra.mxu0 %v7746
    %v7939 = vpop.f32.mrf.mxu0
    %v7940 = vadd.f32 %v7385, %v7939
    %v7941 = vpop.f32.mrf.mxu0
    %v7942 = vadd.f32 %v7387, %v7941
    %7943 = vmatmul.bf16.gmra.mxu0 %v7754
    %v7944 = vpop.f32.mrf.mxu0
    %v7945 = vadd.f32 %v7390, %v7944
    %v7946 = vpop.f32.mrf.mxu0
    %v7947 = vadd.f32 %v7392, %v7946
    %7948 = vdwg.mxu0
    %7949 = vmatpush.bf16.msra.mxu0 %v4054
    %7950 = vmatpush.bf16.msra.mxu0 %v4050
    %7951 = vmatpush.bf16.msra.mxu0 %v4046
    %7952 = vmatpush.bf16.msra.mxu0 %v4042
    %7953 = vmatpush.bf16.msra.mxu0 %v4038
    %7954 = vmatpush.bf16.msra.mxu0 %v4034
    %7955 = vmatpush.bf16.msra.mxu0 %v4030
    %7956 = vmatpush.bf16.msra.mxu0 %v4026
    %7957 = vmatmul.bf16.gmra.mxu0 %v7747
    %v7958 = vpop.f32.mrf.mxu0
    %v7959 = vadd.f32 %v7940, %v7958
    %v7960 = vpop.f32.mrf.mxu0
    %v7961 = vadd.f32 %v7942, %v7960
    %7962 = vmatmul.bf16.gmra.mxu0 %v7755
    %v7963 = vpop.f32.mrf.mxu0
    %v7964 = vadd.f32 %v7945, %v7963
    %v7965 = vpop.f32.mrf.mxu0
    %v7966 = vadd.f32 %v7947, %v7965
    %7967 = vdwg.mxu0
    %7968 = vmatpush.bf16.msra.mxu0 %v4086
    %7969 = vmatpush.bf16.msra.mxu0 %v4082
    %7970 = vmatpush.bf16.msra.mxu0 %v4078
    %7971 = vmatpush.bf16.msra.mxu0 %v4074
    %7972 = vmatpush.bf16.msra.mxu0 %v4070
    %7973 = vmatpush.bf16.msra.mxu0 %v4066
    %7974 = vmatpush.bf16.msra.mxu0 %v4062
    %7975 = vmatpush.bf16.msra.mxu0 %v4058
    %7976 = vmatmul.bf16.gmra.mxu0 %v7748
    %v7977 = vpop.f32.mrf.mxu0
    %v7978 = vadd.f32 %v7959, %v7977
    %v7979 = vpop.f32.mrf.mxu0
    %v7980 = vadd.f32 %v7961, %v7979
    %7981 = vmatmul.bf16.gmra.mxu0 %v7756
    %v7982 = vpop.f32.mrf.mxu0
    %v7983 = vadd.f32 %v7964, %v7982
    %v7984 = vpop.f32.mrf.mxu0
    %v7985 = vadd.f32 %v7966, %v7984
    %7986 = vdwg.mxu0
    %7987 = vmatpush.bf16.msra.mxu0 %v4118
    %7988 = vmatpush.bf16.msra.mxu0 %v4114
    %7989 = vmatpush.bf16.msra.mxu0 %v4110
    %7990 = vmatpush.bf16.msra.mxu0 %v4106
    %7991 = vmatpush.bf16.msra.mxu0 %v4102
    %7992 = vmatpush.bf16.msra.mxu0 %v4098
    %7993 = vmatpush.bf16.msra.mxu0 %v4094
    %7994 = vmatpush.bf16.msra.mxu0 %v4090
    %7995 = vmatmul.bf16.gmra.mxu0 %v7749
    %v7996 = vpop.f32.mrf.mxu0
    %v7997 = vadd.f32 %v7978, %v7996
    %v7998 = vpop.f32.mrf.mxu0
    %v7999 = vadd.f32 %v7980, %v7998
    %8000 = vmatmul.bf16.gmra.mxu0 %v7757
    %v8001 = vpop.f32.mrf.mxu0
    %v8002 = vadd.f32 %v7983, %v8001
    %v8003 = vpop.f32.mrf.mxu0
    %v8004 = vadd.f32 %v7985, %v8003
    %8005 = vdwg.mxu0
    %8006 = vmatpush.bf16.msra.mxu0 %v4150
    %8007 = vmatpush.bf16.msra.mxu0 %v4146
    %8008 = vmatpush.bf16.msra.mxu0 %v4142
    %8009 = vmatpush.bf16.msra.mxu0 %v4138
    %8010 = vmatpush.bf16.msra.mxu0 %v4134
    %8011 = vmatpush.bf16.msra.mxu0 %v4130
    %8012 = vmatpush.bf16.msra.mxu0 %v4126
    %8013 = vmatpush.bf16.msra.mxu0 %v4122
    %8014 = vmatmul.bf16.gmra.mxu0 %v7750
    %v8015 = vpop.f32.mrf.mxu0
    %v8016 = vadd.f32 %v7997, %v8015
    %v8017 = vpop.f32.mrf.mxu0
    %v8018 = vadd.f32 %v7999, %v8017
    %8019 = vmatmul.bf16.gmra.mxu0 %v7758
    %v8020 = vpop.f32.mrf.mxu0
    %v8021 = vadd.f32 %v8002, %v8020
    %v8022 = vpop.f32.mrf.mxu0
    %v8023 = vadd.f32 %v8004, %v8022
    %8024 = vdwg.mxu0
    %8025 = vmatpush.bf16.msra.mxu0 %v4182
    %8026 = vmatpush.bf16.msra.mxu0 %v4178
    %8027 = vmatpush.bf16.msra.mxu0 %v4174
    %8028 = vmatpush.bf16.msra.mxu0 %v4170
    %8029 = vmatpush.bf16.msra.mxu0 %v4166
    %8030 = vmatpush.bf16.msra.mxu0 %v4162
    %8031 = vmatpush.bf16.msra.mxu0 %v4158
    %8032 = vmatpush.bf16.msra.mxu0 %v4154
    %8033 = vmatmul.bf16.gmra.mxu0 %v7751
    %v8034 = vpop.f32.mrf.mxu0
    %v8035 = vadd.f32 %v8016, %v8034
    %v8036 = vpop.f32.mrf.mxu0
    %v8037 = vadd.f32 %v8018, %v8036
    %8038 = vmatmul.bf16.gmra.mxu0 %v7759
    %v8039 = vpop.f32.mrf.mxu0
    %v8040 = vadd.f32 %v8021, %v8039
    %v8041 = vpop.f32.mrf.mxu0
    %v8042 = vadd.f32 %v8023, %v8041
    %8043 = vdwg.mxu0
    %8044 = vmatpush.bf16.msra.mxu0 %v4214
    %8045 = vmatpush.bf16.msra.mxu0 %v4210
    %8046 = vmatpush.bf16.msra.mxu0 %v4206
    %8047 = vmatpush.bf16.msra.mxu0 %v4202
    %8048 = vmatpush.bf16.msra.mxu0 %v4198
    %8049 = vmatpush.bf16.msra.mxu0 %v4194
    %8050 = vmatpush.bf16.msra.mxu0 %v4190
    %8051 = vmatpush.bf16.msra.mxu0 %v4186
    %8052 = vmatmul.bf16.gmra.mxu0 %v7752
    %v8053 = vpop.f32.mrf.mxu0
    %v8054 = vadd.f32 %v8035, %v8053
    %v8055 = vpop.f32.mrf.mxu0
    %v8056 = vadd.f32 %v8037, %v8055
    %8057 = vmatmul.bf16.gmra.mxu0 %v7760
    %v8058 = vpop.f32.mrf.mxu0
    %v8059 = vadd.f32 %v8040, %v8058
    %v8060 = vpop.f32.mrf.mxu0
    %v8061 = vadd.f32 %v8042, %v8060
    %8062 = vdwg.mxu0
    %8063 = vmatpush.bf16.msra.mxu0 %v4246
    %8064 = vmatpush.bf16.msra.mxu0 %v4242
    %8065 = vmatpush.bf16.msra.mxu0 %v4238
    %8066 = vmatpush.bf16.msra.mxu0 %v4234
    %8067 = vmatpush.bf16.msra.mxu0 %v4230
    %8068 = vmatpush.bf16.msra.mxu0 %v4226
    %8069 = vmatpush.bf16.msra.mxu0 %v4222
    %8070 = vmatpush.bf16.msra.mxu0 %v4218
    %8071 = vmatmul.bf16.gmra.mxu0 %v7753
    %v8072 = vpop.f32.mrf.mxu0
    %v8073 = vadd.f32 %v8054, %v8072
    %v8074 = vpop.f32.mrf.mxu0
    %v8075 = vadd.f32 %v8056, %v8074
    %8076 = vmatmul.bf16.gmra.mxu0 %v7761
    %v8077 = vpop.f32.mrf.mxu0
    %v8078 = vadd.f32 %v8059, %v8077
    %v8079 = vpop.f32.mrf.mxu0
    %v8080 = vadd.f32 %v8061, %v8079
    %8081 = vdwg.mxu0
    %8082 = vmatpush.bf16.msra.mxu0 %v4023
    %8083 = vmatpush.bf16.msra.mxu0 %v4019
    %8084 = vmatpush.bf16.msra.mxu0 %v4015
    %8085 = vmatpush.bf16.msra.mxu0 %v4011
    %8086 = vmatpush.bf16.msra.mxu0 %v4007
    %8087 = vmatpush.bf16.msra.mxu0 %v4003
    %8088 = vmatpush.bf16.msra.mxu0 %v3999
    %8089 = vmatpush.bf16.msra.mxu0 %v3995
    %8090 = vmatmul.bf16.gmra.mxu0 %v7746
    %v8091 = vpop.f32.mrf.mxu0
    %v8092 = vadd.f32 %v7537, %v8091
    %v8093 = vpop.f32.mrf.mxu0
    %v8094 = vadd.f32 %v7539, %v8093
    %8095 = vmatmul.bf16.gmra.mxu0 %v7754
    %v8096 = vpop.f32.mrf.mxu0
    %v8097 = vadd.f32 %v7542, %v8096
    %v8098 = vpop.f32.mrf.mxu0
    %v8099 = vadd.f32 %v7544, %v8098
    %8100 = vdwg.mxu0
    %8101 = vmatpush.bf16.msra.mxu0 %v4055
    %8102 = vmatpush.bf16.msra.mxu0 %v4051
    %8103 = vmatpush.bf16.msra.mxu0 %v4047
    %8104 = vmatpush.bf16.msra.mxu0 %v4043
    %8105 = vmatpush.bf16.msra.mxu0 %v4039
    %8106 = vmatpush.bf16.msra.mxu0 %v4035
    %8107 = vmatpush.bf16.msra.mxu0 %v4031
    %8108 = vmatpush.bf16.msra.mxu0 %v4027
    %8109 = vmatmul.bf16.gmra.mxu0 %v7747
    %v8110 = vpop.f32.mrf.mxu0
    %v8111 = vadd.f32 %v8092, %v8110
    %v8112 = vpop.f32.mrf.mxu0
    %v8113 = vadd.f32 %v8094, %v8112
    %8114 = vmatmul.bf16.gmra.mxu0 %v7755
    %v8115 = vpop.f32.mrf.mxu0
    %v8116 = vadd.f32 %v8097, %v8115
    %v8117 = vpop.f32.mrf.mxu0
    %v8118 = vadd.f32 %v8099, %v8117
    %8119 = vdwg.mxu0
    %8120 = vmatpush.bf16.msra.mxu0 %v4087
    %8121 = vmatpush.bf16.msra.mxu0 %v4083
    %8122 = vmatpush.bf16.msra.mxu0 %v4079
    %8123 = vmatpush.bf16.msra.mxu0 %v4075
    %8124 = vmatpush.bf16.msra.mxu0 %v4071
    %8125 = vmatpush.bf16.msra.mxu0 %v4067
    %8126 = vmatpush.bf16.msra.mxu0 %v4063
    %8127 = vmatpush.bf16.msra.mxu0 %v4059
    %8128 = vmatmul.bf16.gmra.mxu0 %v7748
    %v8129 = vpop.f32.mrf.mxu0
    %v8130 = vadd.f32 %v8111, %v8129
    %v8131 = vpop.f32.mrf.mxu0
    %v8132 = vadd.f32 %v8113, %v8131
    %8133 = vmatmul.bf16.gmra.mxu0 %v7756
    %v8134 = vpop.f32.mrf.mxu0
    %v8135 = vadd.f32 %v8116, %v8134
    %v8136 = vpop.f32.mrf.mxu0
    %v8137 = vadd.f32 %v8118, %v8136
    %8138 = vdwg.mxu0
    %8139 = vmatpush.bf16.msra.mxu0 %v4119
    %8140 = vmatpush.bf16.msra.mxu0 %v4115
    %8141 = vmatpush.bf16.msra.mxu0 %v4111
    %8142 = vmatpush.bf16.msra.mxu0 %v4107
    %8143 = vmatpush.bf16.msra.mxu0 %v4103
    %8144 = vmatpush.bf16.msra.mxu0 %v4099
    %8145 = vmatpush.bf16.msra.mxu0 %v4095
    %8146 = vmatpush.bf16.msra.mxu0 %v4091
    %8147 = vmatmul.bf16.gmra.mxu0 %v7749
    %v8148 = vpop.f32.mrf.mxu0
    %v8149 = vadd.f32 %v8130, %v8148
    %v8150 = vpop.f32.mrf.mxu0
    %v8151 = vadd.f32 %v8132, %v8150
    %8152 = vmatmul.bf16.gmra.mxu0 %v7757
    %v8153 = vpop.f32.mrf.mxu0
    %v8154 = vadd.f32 %v8135, %v8153
    %v8155 = vpop.f32.mrf.mxu0
    %v8156 = vadd.f32 %v8137, %v8155
    %8157 = vdwg.mxu0
    %8158 = vmatpush.bf16.msra.mxu0 %v4151
    %8159 = vmatpush.bf16.msra.mxu0 %v4147
    %8160 = vmatpush.bf16.msra.mxu0 %v4143
    %8161 = vmatpush.bf16.msra.mxu0 %v4139
    %8162 = vmatpush.bf16.msra.mxu0 %v4135
    %8163 = vmatpush.bf16.msra.mxu0 %v4131
    %8164 = vmatpush.bf16.msra.mxu0 %v4127
    %8165 = vmatpush.bf16.msra.mxu0 %v4123
    %8166 = vmatmul.bf16.gmra.mxu0 %v7750
    %v8167 = vpop.f32.mrf.mxu0
    %v8168 = vadd.f32 %v8149, %v8167
    %v8169 = vpop.f32.mrf.mxu0
    %v8170 = vadd.f32 %v8151, %v8169
    %8171 = vmatmul.bf16.gmra.mxu0 %v7758
    %v8172 = vpop.f32.mrf.mxu0
    %v8173 = vadd.f32 %v8154, %v8172
    %v8174 = vpop.f32.mrf.mxu0
    %v8175 = vadd.f32 %v8156, %v8174
    %8176 = vdwg.mxu0
    %8177 = vmatpush.bf16.msra.mxu0 %v4183
    %8178 = vmatpush.bf16.msra.mxu0 %v4179
    %8179 = vmatpush.bf16.msra.mxu0 %v4175
    %8180 = vmatpush.bf16.msra.mxu0 %v4171
    %8181 = vmatpush.bf16.msra.mxu0 %v4167
    %8182 = vmatpush.bf16.msra.mxu0 %v4163
    %8183 = vmatpush.bf16.msra.mxu0 %v4159
    %8184 = vmatpush.bf16.msra.mxu0 %v4155
    %8185 = vmatmul.bf16.gmra.mxu0 %v7751
    %v8186 = vpop.f32.mrf.mxu0
    %v8187 = vadd.f32 %v8168, %v8186
    %v8188 = vpop.f32.mrf.mxu0
    %v8189 = vadd.f32 %v8170, %v8188
    %8190 = vmatmul.bf16.gmra.mxu0 %v7759
    %v8191 = vpop.f32.mrf.mxu0
    %v8192 = vadd.f32 %v8173, %v8191
    %v8193 = vpop.f32.mrf.mxu0
    %v8194 = vadd.f32 %v8175, %v8193
    %8195 = vdwg.mxu0
    %8196 = vmatpush.bf16.msra.mxu0 %v4215
    %8197 = vmatpush.bf16.msra.mxu0 %v4211
    %8198 = vmatpush.bf16.msra.mxu0 %v4207
    %8199 = vmatpush.bf16.msra.mxu0 %v4203
    %8200 = vmatpush.bf16.msra.mxu0 %v4199
    %8201 = vmatpush.bf16.msra.mxu0 %v4195
    %8202 = vmatpush.bf16.msra.mxu0 %v4191
    %8203 = vmatpush.bf16.msra.mxu0 %v4187
    %8204 = vmatmul.bf16.gmra.mxu0 %v7752
    %v8205 = vpop.f32.mrf.mxu0
    %v8206 = vadd.f32 %v8187, %v8205
    %v8207 = vpop.f32.mrf.mxu0
    %v8208 = vadd.f32 %v8189, %v8207
    %8209 = vmatmul.bf16.gmra.mxu0 %v7760
    %v8210 = vpop.f32.mrf.mxu0
    %v8211 = vadd.f32 %v8192, %v8210
    %v8212 = vpop.f32.mrf.mxu0
    %v8213 = vadd.f32 %v8194, %v8212
    %8214 = vdwg.mxu0
    %8215 = vmatpush.bf16.msra.mxu0 %v4247
    %8216 = vmatpush.bf16.msra.mxu0 %v4243
    %8217 = vmatpush.bf16.msra.mxu0 %v4239
    %8218 = vmatpush.bf16.msra.mxu0 %v4235
    %8219 = vmatpush.bf16.msra.mxu0 %v4231
    %8220 = vmatpush.bf16.msra.mxu0 %v4227
    %8221 = vmatpush.bf16.msra.mxu0 %v4223
    %8222 = vmatpush.bf16.msra.mxu0 %v4219
    %8223 = vmatmul.bf16.gmra.mxu0 %v7753
    %v8224 = vpop.f32.mrf.mxu0
    %v8225 = vadd.f32 %v8206, %v8224
    %v8226 = vpop.f32.mrf.mxu0
    %v8227 = vadd.f32 %v8208, %v8226
    %8228 = vmatmul.bf16.gmra.mxu0 %v7761
    %v8229 = vpop.f32.mrf.mxu0
    %v8230 = vadd.f32 %v8211, %v8229
    %v8231 = vpop.f32.mrf.mxu0
    %v8232 = vadd.f32 %v8213, %v8231
    %8233 = vdwg.mxu0
    %8234 = vmatpush.bf16.msra.mxu0 %v4024
    %8235 = vmatpush.bf16.msra.mxu0 %v4020
    %8236 = vmatpush.bf16.msra.mxu0 %v4016
    %8237 = vmatpush.bf16.msra.mxu0 %v4012
    %8238 = vmatpush.bf16.msra.mxu0 %v4008
    %8239 = vmatpush.bf16.msra.mxu0 %v4004
    %8240 = vmatpush.bf16.msra.mxu0 %v4000
    %8241 = vmatpush.bf16.msra.mxu0 %v3996
    %8242 = vmatmul.bf16.gmra.mxu0 %v7746
    %v8243 = vpop.f32.mrf.mxu0
    %v8244 = vadd.f32 %v7689, %v8243
    %v8245 = vpop.f32.mrf.mxu0
    %v8246 = vadd.f32 %v7691, %v8245
    %8247 = vmatmul.bf16.gmra.mxu0 %v7754
    %v8248 = vpop.f32.mrf.mxu0
    %v8249 = vadd.f32 %v7694, %v8248
    %v8250 = vpop.f32.mrf.mxu0
    %v8251 = vadd.f32 %v7696, %v8250
    %8252 = vdwg.mxu0
    %8253 = vmatpush.bf16.msra.mxu0 %v4056
    %8254 = vmatpush.bf16.msra.mxu0 %v4052
    %8255 = vmatpush.bf16.msra.mxu0 %v4048
    %8256 = vmatpush.bf16.msra.mxu0 %v4044
    %8257 = vmatpush.bf16.msra.mxu0 %v4040
    %8258 = vmatpush.bf16.msra.mxu0 %v4036
    %8259 = vmatpush.bf16.msra.mxu0 %v4032
    %8260 = vmatpush.bf16.msra.mxu0 %v4028
    %8261 = vmatmul.bf16.gmra.mxu0 %v7747
    %v8262 = vpop.f32.mrf.mxu0
    %v8263 = vadd.f32 %v8244, %v8262
    %v8264 = vpop.f32.mrf.mxu0
    %v8265 = vadd.f32 %v8246, %v8264
    %8266 = vmatmul.bf16.gmra.mxu0 %v7755
    %v8267 = vpop.f32.mrf.mxu0
    %v8268 = vadd.f32 %v8249, %v8267
    %v8269 = vpop.f32.mrf.mxu0
    %v8270 = vadd.f32 %v8251, %v8269
    %8271 = vdwg.mxu0
    %8272 = vmatpush.bf16.msra.mxu0 %v4088
    %8273 = vmatpush.bf16.msra.mxu0 %v4084
    %8274 = vmatpush.bf16.msra.mxu0 %v4080
    %8275 = vmatpush.bf16.msra.mxu0 %v4076
    %8276 = vmatpush.bf16.msra.mxu0 %v4072
    %8277 = vmatpush.bf16.msra.mxu0 %v4068
    %8278 = vmatpush.bf16.msra.mxu0 %v4064
    %8279 = vmatpush.bf16.msra.mxu0 %v4060
    %8280 = vmatmul.bf16.gmra.mxu0 %v7748
    %v8281 = vpop.f32.mrf.mxu0
    %v8282 = vadd.f32 %v8263, %v8281
    %v8283 = vpop.f32.mrf.mxu0
    %v8284 = vadd.f32 %v8265, %v8283
    %8285 = vmatmul.bf16.gmra.mxu0 %v7756
    %v8286 = vpop.f32.mrf.mxu0
    %v8287 = vadd.f32 %v8268, %v8286
    %v8288 = vpop.f32.mrf.mxu0
    %v8289 = vadd.f32 %v8270, %v8288
    %8290 = vdwg.mxu0
    %8291 = vmatpush.bf16.msra.mxu0 %v4120
    %8292 = vmatpush.bf16.msra.mxu0 %v4116
    %8293 = vmatpush.bf16.msra.mxu0 %v4112
    %8294 = vmatpush.bf16.msra.mxu0 %v4108
    %8295 = vmatpush.bf16.msra.mxu0 %v4104
    %8296 = vmatpush.bf16.msra.mxu0 %v4100
    %8297 = vmatpush.bf16.msra.mxu0 %v4096
    %8298 = vmatpush.bf16.msra.mxu0 %v4092
    %8299 = vmatmul.bf16.gmra.mxu0 %v7749
    %v8300 = vpop.f32.mrf.mxu0
    %v8301 = vadd.f32 %v8282, %v8300
    %v8302 = vpop.f32.mrf.mxu0
    %v8303 = vadd.f32 %v8284, %v8302
    %8304 = vmatmul.bf16.gmra.mxu0 %v7757
    %v8305 = vpop.f32.mrf.mxu0
    %v8306 = vadd.f32 %v8287, %v8305
    %v8307 = vpop.f32.mrf.mxu0
    %v8308 = vadd.f32 %v8289, %v8307
    %8309 = vdwg.mxu0
    %8310 = vmatpush.bf16.msra.mxu0 %v4152
    %8311 = vmatpush.bf16.msra.mxu0 %v4148
    %8312 = vmatpush.bf16.msra.mxu0 %v4144
    %8313 = vmatpush.bf16.msra.mxu0 %v4140
    %8314 = vmatpush.bf16.msra.mxu0 %v4136
    %8315 = vmatpush.bf16.msra.mxu0 %v4132
    %8316 = vmatpush.bf16.msra.mxu0 %v4128
    %8317 = vmatpush.bf16.msra.mxu0 %v4124
    %8318 = vmatmul.bf16.gmra.mxu0 %v7750
    %v8319 = vpop.f32.mrf.mxu0
    %v8320 = vadd.f32 %v8301, %v8319
    %v8321 = vpop.f32.mrf.mxu0
    %v8322 = vadd.f32 %v8303, %v8321
    %8323 = vmatmul.bf16.gmra.mxu0 %v7758
    %v8324 = vpop.f32.mrf.mxu0
    %v8325 = vadd.f32 %v8306, %v8324
    %v8326 = vpop.f32.mrf.mxu0
    %v8327 = vadd.f32 %v8308, %v8326
    %8328 = vdwg.mxu0
    %8329 = vmatpush.bf16.msra.mxu0 %v4184
    %8330 = vmatpush.bf16.msra.mxu0 %v4180
    %8331 = vmatpush.bf16.msra.mxu0 %v4176
    %8332 = vmatpush.bf16.msra.mxu0 %v4172
    %8333 = vmatpush.bf16.msra.mxu0 %v4168
    %8334 = vmatpush.bf16.msra.mxu0 %v4164
    %8335 = vmatpush.bf16.msra.mxu0 %v4160
    %8336 = vmatpush.bf16.msra.mxu0 %v4156
    %8337 = vmatmul.bf16.gmra.mxu0 %v7751
    %v8338 = vpop.f32.mrf.mxu0
    %v8339 = vadd.f32 %v8320, %v8338
    %v8340 = vpop.f32.mrf.mxu0
    %v8341 = vadd.f32 %v8322, %v8340
    %8342 = vmatmul.bf16.gmra.mxu0 %v7759
    %v8343 = vpop.f32.mrf.mxu0
    %v8344 = vadd.f32 %v8325, %v8343
    %v8345 = vpop.f32.mrf.mxu0
    %v8346 = vadd.f32 %v8327, %v8345
    %8347 = vdwg.mxu0
    %8348 = vmatpush.bf16.msra.mxu0 %v4216
    %8349 = vmatpush.bf16.msra.mxu0 %v4212
    %8350 = vmatpush.bf16.msra.mxu0 %v4208
    %8351 = vmatpush.bf16.msra.mxu0 %v4204
    %8352 = vmatpush.bf16.msra.mxu0 %v4200
    %8353 = vmatpush.bf16.msra.mxu0 %v4196
    %8354 = vmatpush.bf16.msra.mxu0 %v4192
    %8355 = vmatpush.bf16.msra.mxu0 %v4188
    %8356 = vmatmul.bf16.gmra.mxu0 %v7752
    %v8357 = vpop.f32.mrf.mxu0
    %v8358 = vadd.f32 %v8339, %v8357
    %v8359 = vpop.f32.mrf.mxu0
    %v8360 = vadd.f32 %v8341, %v8359
    %8361 = vmatmul.bf16.gmra.mxu0 %v7760
    %v8362 = vpop.f32.mrf.mxu0
    %v8363 = vadd.f32 %v8344, %v8362
    %v8364 = vpop.f32.mrf.mxu0
    %v8365 = vadd.f32 %v8346, %v8364
    %8366 = vdwg.mxu0
    %8367 = vmatpush.bf16.msra.mxu0 %v4248
    %8368 = vmatpush.bf16.msra.mxu0 %v4244
    %8369 = vmatpush.bf16.msra.mxu0 %v4240
    %8370 = vmatpush.bf16.msra.mxu0 %v4236
    %8371 = vmatpush.bf16.msra.mxu0 %v4232
    %8372 = vmatpush.bf16.msra.mxu0 %v4228
    %8373 = vmatpush.bf16.msra.mxu0 %v4224
    %8374 = vmatpush.bf16.msra.mxu0 %v4220
    %8375 = vmatmul.bf16.gmra.mxu0 %v7753
    %v8376 = vpop.f32.mrf.mxu0
    %v8377 = vadd.f32 %v8358, %v8376
    %v8378 = vpop.f32.mrf.mxu0
    %v8379 = vadd.f32 %v8360, %v8378
    %8380 = vmatmul.bf16.gmra.mxu0 %v7761
    %v8381 = vpop.f32.mrf.mxu0
    %v8382 = vadd.f32 %v8363, %v8381
    %v8383 = vpop.f32.mrf.mxu0
    %v8384 = vadd.f32 %v8365, %v8383
    %8385 = vdwg.mxu0
    %8386 = vmatpush.bf16.msra.mxu0 %v5989
    %8387 = vmatpush.bf16.msra.mxu0 %v5985
    %8388 = vmatpush.bf16.msra.mxu0 %v5981
    %8389 = vmatpush.bf16.msra.mxu0 %v5977
    %8390 = vmatpush.bf16.msra.mxu0 %v5973
    %8391 = vmatpush.bf16.msra.mxu0 %v5969
    %8392 = vmatpush.bf16.msra.mxu0 %v5965
    %8393 = vmatpush.bf16.msra.mxu0 %v5961
    %8394 = vmatmul.bf16.gmra.mxu0 %v1225
    %v8395 = vpop.f32.mrf.mxu0
    %v8396 = vadd.f32 0.0, %v8395
    %v8397 = vpop.f32.mrf.mxu0
    %v8398 = vadd.f32 0.0, %v8397
    %8399 = vmatmul.bf16.gmra.mxu0 %v1233
    %v8400 = vpop.f32.mrf.mxu0
    %v8401 = vadd.f32 0.0, %v8400
    %v8402 = vpop.f32.mrf.mxu0
    %v8403 = vadd.f32 0.0, %v8402
    %8404 = vdwg.mxu0
    %8405 = vmatpush.bf16.msra.mxu0 %v6021
    %8406 = vmatpush.bf16.msra.mxu0 %v6017
    %8407 = vmatpush.bf16.msra.mxu0 %v6013
    %8408 = vmatpush.bf16.msra.mxu0 %v6009
    %8409 = vmatpush.bf16.msra.mxu0 %v6005
    %8410 = vmatpush.bf16.msra.mxu0 %v6001
    %8411 = vmatpush.bf16.msra.mxu0 %v5997
    %8412 = vmatpush.bf16.msra.mxu0 %v5993
    %8413 = vmatmul.bf16.gmra.mxu0 %v1226
    %v8414 = vpop.f32.mrf.mxu0
    %v8415 = vadd.f32 %v8396, %v8414
    %v8416 = vpop.f32.mrf.mxu0
    %v8417 = vadd.f32 %v8398, %v8416
    %8418 = vmatmul.bf16.gmra.mxu0 %v1234
    %v8419 = vpop.f32.mrf.mxu0
    %v8420 = vadd.f32 %v8401, %v8419
    %v8421 = vpop.f32.mrf.mxu0
    %v8422 = vadd.f32 %v8403, %v8421
    %8423 = vdwg.mxu0
    %8424 = vmatpush.bf16.msra.mxu0 %v6053
    %8425 = vmatpush.bf16.msra.mxu0 %v6049
    %8426 = vmatpush.bf16.msra.mxu0 %v6045
    %8427 = vmatpush.bf16.msra.mxu0 %v6041
    %8428 = vmatpush.bf16.msra.mxu0 %v6037
    %8429 = vmatpush.bf16.msra.mxu0 %v6033
    %8430 = vmatpush.bf16.msra.mxu0 %v6029
    %8431 = vmatpush.bf16.msra.mxu0 %v6025
    %8432 = vmatmul.bf16.gmra.mxu0 %v1227
    %v8433 = vpop.f32.mrf.mxu0
    %v8434 = vadd.f32 %v8415, %v8433
    %v8435 = vpop.f32.mrf.mxu0
    %v8436 = vadd.f32 %v8417, %v8435
    %8437 = vmatmul.bf16.gmra.mxu0 %v1235
    %v8438 = vpop.f32.mrf.mxu0
    %v8439 = vadd.f32 %v8420, %v8438
    %v8440 = vpop.f32.mrf.mxu0
    %v8441 = vadd.f32 %v8422, %v8440
    %8442 = vdwg.mxu0
    %8443 = vmatpush.bf16.msra.mxu0 %v6085
    %8444 = vmatpush.bf16.msra.mxu0 %v6081
    %8445 = vmatpush.bf16.msra.mxu0 %v6077
    %8446 = vmatpush.bf16.msra.mxu0 %v6073
    %8447 = vmatpush.bf16.msra.mxu0 %v6069
    %8448 = vmatpush.bf16.msra.mxu0 %v6065
    %8449 = vmatpush.bf16.msra.mxu0 %v6061
    %8450 = vmatpush.bf16.msra.mxu0 %v6057
    %8451 = vmatmul.bf16.gmra.mxu0 %v1228
    %v8452 = vpop.f32.mrf.mxu0
    %v8453 = vadd.f32 %v8434, %v8452
    %v8454 = vpop.f32.mrf.mxu0
    %v8455 = vadd.f32 %v8436, %v8454
    %8456 = vmatmul.bf16.gmra.mxu0 %v1236
    %v8457 = vpop.f32.mrf.mxu0
    %v8458 = vadd.f32 %v8439, %v8457
    %v8459 = vpop.f32.mrf.mxu0
    %v8460 = vadd.f32 %v8441, %v8459
    %8461 = vdwg.mxu0
    %8462 = vmatpush.bf16.msra.mxu0 %v6117
    %8463 = vmatpush.bf16.msra.mxu0 %v6113
    %8464 = vmatpush.bf16.msra.mxu0 %v6109
    %8465 = vmatpush.bf16.msra.mxu0 %v6105
    %8466 = vmatpush.bf16.msra.mxu0 %v6101
    %8467 = vmatpush.bf16.msra.mxu0 %v6097
    %8468 = vmatpush.bf16.msra.mxu0 %v6093
    %8469 = vmatpush.bf16.msra.mxu0 %v6089
    %8470 = vmatmul.bf16.gmra.mxu0 %v1229
    %v8471 = vpop.f32.mrf.mxu0
    %v8472 = vadd.f32 %v8453, %v8471
    %v8473 = vpop.f32.mrf.mxu0
    %v8474 = vadd.f32 %v8455, %v8473
    %8475 = vmatmul.bf16.gmra.mxu0 %v1237
    %v8476 = vpop.f32.mrf.mxu0
    %v8477 = vadd.f32 %v8458, %v8476
    %v8478 = vpop.f32.mrf.mxu0
    %v8479 = vadd.f32 %v8460, %v8478
    %8480 = vdwg.mxu0
    %8481 = vmatpush.bf16.msra.mxu0 %v6149
    %8482 = vmatpush.bf16.msra.mxu0 %v6145
    %8483 = vmatpush.bf16.msra.mxu0 %v6141
    %8484 = vmatpush.bf16.msra.mxu0 %v6137
    %8485 = vmatpush.bf16.msra.mxu0 %v6133
    %8486 = vmatpush.bf16.msra.mxu0 %v6129
    %8487 = vmatpush.bf16.msra.mxu0 %v6125
    %8488 = vmatpush.bf16.msra.mxu0 %v6121
    %8489 = vmatmul.bf16.gmra.mxu0 %v1230
    %v8490 = vpop.f32.mrf.mxu0
    %v8491 = vadd.f32 %v8472, %v8490
    %v8492 = vpop.f32.mrf.mxu0
    %v8493 = vadd.f32 %v8474, %v8492
    %8494 = vmatmul.bf16.gmra.mxu0 %v1238
    %v8495 = vpop.f32.mrf.mxu0
    %v8496 = vadd.f32 %v8477, %v8495
    %v8497 = vpop.f32.mrf.mxu0
    %v8498 = vadd.f32 %v8479, %v8497
    %8499 = vdwg.mxu0
    %8500 = vmatpush.bf16.msra.mxu0 %v6181
    %8501 = vmatpush.bf16.msra.mxu0 %v6177
    %8502 = vmatpush.bf16.msra.mxu0 %v6173
    %8503 = vmatpush.bf16.msra.mxu0 %v6169
    %8504 = vmatpush.bf16.msra.mxu0 %v6165
    %8505 = vmatpush.bf16.msra.mxu0 %v6161
    %8506 = vmatpush.bf16.msra.mxu0 %v6157
    %8507 = vmatpush.bf16.msra.mxu0 %v6153
    %8508 = vmatmul.bf16.gmra.mxu0 %v1231
    %v8509 = vpop.f32.mrf.mxu0
    %v8510 = vadd.f32 %v8491, %v8509
    %v8511 = vpop.f32.mrf.mxu0
    %v8512 = vadd.f32 %v8493, %v8511
    %8513 = vmatmul.bf16.gmra.mxu0 %v1239
    %v8514 = vpop.f32.mrf.mxu0
    %v8515 = vadd.f32 %v8496, %v8514
    %v8516 = vpop.f32.mrf.mxu0
    %v8517 = vadd.f32 %v8498, %v8516
    %8518 = vdwg.mxu0
    %8519 = vmatpush.bf16.msra.mxu0 %v6213
    %8520 = vmatpush.bf16.msra.mxu0 %v6209
    %8521 = vmatpush.bf16.msra.mxu0 %v6205
    %8522 = vmatpush.bf16.msra.mxu0 %v6201
    %8523 = vmatpush.bf16.msra.mxu0 %v6197
    %8524 = vmatpush.bf16.msra.mxu0 %v6193
    %8525 = vmatpush.bf16.msra.mxu0 %v6189
    %8526 = vmatpush.bf16.msra.mxu0 %v6185
    %8527 = vmatmul.bf16.gmra.mxu0 %v1232
    %v8528 = vpop.f32.mrf.mxu0
    %v8529 = vadd.f32 %v8510, %v8528
    %v8530 = vpop.f32.mrf.mxu0
    %v8531 = vadd.f32 %v8512, %v8530
    %8532 = vmatmul.bf16.gmra.mxu0 %v1240
    %v8533 = vpop.f32.mrf.mxu0
    %v8534 = vadd.f32 %v8515, %v8533
    %v8535 = vpop.f32.mrf.mxu0
    %v8536 = vadd.f32 %v8517, %v8535
    %8537 = vdwg.mxu0
    %8538 = vmatpush.bf16.msra.mxu0 %v5990
    %8539 = vmatpush.bf16.msra.mxu0 %v5986
    %8540 = vmatpush.bf16.msra.mxu0 %v5982
    %8541 = vmatpush.bf16.msra.mxu0 %v5978
    %8542 = vmatpush.bf16.msra.mxu0 %v5974
    %8543 = vmatpush.bf16.msra.mxu0 %v5970
    %8544 = vmatpush.bf16.msra.mxu0 %v5966
    %8545 = vmatpush.bf16.msra.mxu0 %v5962
    %8546 = vmatmul.bf16.gmra.mxu0 %v1225
    %v8547 = vpop.f32.mrf.mxu0
    %v8548 = vadd.f32 0.0, %v8547
    %v8549 = vpop.f32.mrf.mxu0
    %v8550 = vadd.f32 0.0, %v8549
    %8551 = vmatmul.bf16.gmra.mxu0 %v1233
    %v8552 = vpop.f32.mrf.mxu0
    %v8553 = vadd.f32 0.0, %v8552
    %v8554 = vpop.f32.mrf.mxu0
    %v8555 = vadd.f32 0.0, %v8554
    %8556 = vdwg.mxu0
    %8557 = vmatpush.bf16.msra.mxu0 %v6022
    %8558 = vmatpush.bf16.msra.mxu0 %v6018
    %8559 = vmatpush.bf16.msra.mxu0 %v6014
    %8560 = vmatpush.bf16.msra.mxu0 %v6010
    %8561 = vmatpush.bf16.msra.mxu0 %v6006
    %8562 = vmatpush.bf16.msra.mxu0 %v6002
    %8563 = vmatpush.bf16.msra.mxu0 %v5998
    %8564 = vmatpush.bf16.msra.mxu0 %v5994
    %8565 = vmatmul.bf16.gmra.mxu0 %v1226
    %v8566 = vpop.f32.mrf.mxu0
    %v8567 = vadd.f32 %v8548, %v8566
    %v8568 = vpop.f32.mrf.mxu0
    %v8569 = vadd.f32 %v8550, %v8568
    %8570 = vmatmul.bf16.gmra.mxu0 %v1234
    %v8571 = vpop.f32.mrf.mxu0
    %v8572 = vadd.f32 %v8553, %v8571
    %v8573 = vpop.f32.mrf.mxu0
    %v8574 = vadd.f32 %v8555, %v8573
    %8575 = vdwg.mxu0
    %8576 = vmatpush.bf16.msra.mxu0 %v6054
    %8577 = vmatpush.bf16.msra.mxu0 %v6050
    %8578 = vmatpush.bf16.msra.mxu0 %v6046
    %8579 = vmatpush.bf16.msra.mxu0 %v6042
    %8580 = vmatpush.bf16.msra.mxu0 %v6038
    %8581 = vmatpush.bf16.msra.mxu0 %v6034
    %8582 = vmatpush.bf16.msra.mxu0 %v6030
    %8583 = vmatpush.bf16.msra.mxu0 %v6026
    %8584 = vmatmul.bf16.gmra.mxu0 %v1227
    %v8585 = vpop.f32.mrf.mxu0
    %v8586 = vadd.f32 %v8567, %v8585
    %v8587 = vpop.f32.mrf.mxu0
    %v8588 = vadd.f32 %v8569, %v8587
    %8589 = vmatmul.bf16.gmra.mxu0 %v1235
    %v8590 = vpop.f32.mrf.mxu0
    %v8591 = vadd.f32 %v8572, %v8590
    %v8592 = vpop.f32.mrf.mxu0
    %v8593 = vadd.f32 %v8574, %v8592
    %8594 = vdwg.mxu0
    %8595 = vmatpush.bf16.msra.mxu0 %v6086
    %8596 = vmatpush.bf16.msra.mxu0 %v6082
    %8597 = vmatpush.bf16.msra.mxu0 %v6078
    %8598 = vmatpush.bf16.msra.mxu0 %v6074
    %8599 = vmatpush.bf16.msra.mxu0 %v6070
    %8600 = vmatpush.bf16.msra.mxu0 %v6066
    %8601 = vmatpush.bf16.msra.mxu0 %v6062
    %8602 = vmatpush.bf16.msra.mxu0 %v6058
    %8603 = vmatmul.bf16.gmra.mxu0 %v1228
    %v8604 = vpop.f32.mrf.mxu0
    %v8605 = vadd.f32 %v8586, %v8604
    %v8606 = vpop.f32.mrf.mxu0
    %v8607 = vadd.f32 %v8588, %v8606
    %8608 = vmatmul.bf16.gmra.mxu0 %v1236
    %v8609 = vpop.f32.mrf.mxu0
    %v8610 = vadd.f32 %v8591, %v8609
    %v8611 = vpop.f32.mrf.mxu0
    %v8612 = vadd.f32 %v8593, %v8611
    %8613 = vdwg.mxu0
    %8614 = vmatpush.bf16.msra.mxu0 %v6118
    %8615 = vmatpush.bf16.msra.mxu0 %v6114
    %8616 = vmatpush.bf16.msra.mxu0 %v6110
    %8617 = vmatpush.bf16.msra.mxu0 %v6106
    %8618 = vmatpush.bf16.msra.mxu0 %v6102
    %8619 = vmatpush.bf16.msra.mxu0 %v6098
    %8620 = vmatpush.bf16.msra.mxu0 %v6094
    %8621 = vmatpush.bf16.msra.mxu0 %v6090
    %8622 = vmatmul.bf16.gmra.mxu0 %v1229
    %v8623 = vpop.f32.mrf.mxu0
    %v8624 = vadd.f32 %v8605, %v8623
    %v8625 = vpop.f32.mrf.mxu0
    %v8626 = vadd.f32 %v8607, %v8625
    %8627 = vmatmul.bf16.gmra.mxu0 %v1237
    %v8628 = vpop.f32.mrf.mxu0
    %v8629 = vadd.f32 %v8610, %v8628
    %v8630 = vpop.f32.mrf.mxu0
    %v8631 = vadd.f32 %v8612, %v8630
    %8632 = vdwg.mxu0
    %8633 = vmatpush.bf16.msra.mxu0 %v6150
    %8634 = vmatpush.bf16.msra.mxu0 %v6146
    %8635 = vmatpush.bf16.msra.mxu0 %v6142
    %8636 = vmatpush.bf16.msra.mxu0 %v6138
    %8637 = vmatpush.bf16.msra.mxu0 %v6134
    %8638 = vmatpush.bf16.msra.mxu0 %v6130
    %8639 = vmatpush.bf16.msra.mxu0 %v6126
    %8640 = vmatpush.bf16.msra.mxu0 %v6122
    %8641 = vmatmul.bf16.gmra.mxu0 %v1230
    %v8642 = vpop.f32.mrf.mxu0
    %v8643 = vadd.f32 %v8624, %v8642
    %v8644 = vpop.f32.mrf.mxu0
    %v8645 = vadd.f32 %v8626, %v8644
    %8646 = vmatmul.bf16.gmra.mxu0 %v1238
    %v8647 = vpop.f32.mrf.mxu0
    %v8648 = vadd.f32 %v8629, %v8647
    %v8649 = vpop.f32.mrf.mxu0
    %v8650 = vadd.f32 %v8631, %v8649
    %8651 = vdwg.mxu0
    %8652 = vmatpush.bf16.msra.mxu0 %v6182
    %8653 = vmatpush.bf16.msra.mxu0 %v6178
    %8654 = vmatpush.bf16.msra.mxu0 %v6174
    %8655 = vmatpush.bf16.msra.mxu0 %v6170
    %8656 = vmatpush.bf16.msra.mxu0 %v6166
    %8657 = vmatpush.bf16.msra.mxu0 %v6162
    %8658 = vmatpush.bf16.msra.mxu0 %v6158
    %8659 = vmatpush.bf16.msra.mxu0 %v6154
    %8660 = vmatmul.bf16.gmra.mxu0 %v1231
    %v8661 = vpop.f32.mrf.mxu0
    %v8662 = vadd.f32 %v8643, %v8661
    %v8663 = vpop.f32.mrf.mxu0
    %v8664 = vadd.f32 %v8645, %v8663
    %8665 = vmatmul.bf16.gmra.mxu0 %v1239
    %v8666 = vpop.f32.mrf.mxu0
    %v8667 = vadd.f32 %v8648, %v8666
    %v8668 = vpop.f32.mrf.mxu0
    %v8669 = vadd.f32 %v8650, %v8668
    %8670 = vdwg.mxu0
    %8671 = vmatpush.bf16.msra.mxu0 %v6214
    %8672 = vmatpush.bf16.msra.mxu0 %v6210
    %8673 = vmatpush.bf16.msra.mxu0 %v6206
    %8674 = vmatpush.bf16.msra.mxu0 %v6202
    %8675 = vmatpush.bf16.msra.mxu0 %v6198
    %8676 = vmatpush.bf16.msra.mxu0 %v6194
    %8677 = vmatpush.bf16.msra.mxu0 %v6190
    %8678 = vmatpush.bf16.msra.mxu0 %v6186
    %8679 = vmatmul.bf16.gmra.mxu0 %v1232
    %v8680 = vpop.f32.mrf.mxu0
    %v8681 = vadd.f32 %v8662, %v8680
    %v8682 = vpop.f32.mrf.mxu0
    %v8683 = vadd.f32 %v8664, %v8682
    %8684 = vmatmul.bf16.gmra.mxu0 %v1240
    %v8685 = vpop.f32.mrf.mxu0
    %v8686 = vadd.f32 %v8667, %v8685
    %v8687 = vpop.f32.mrf.mxu0
    %v8688 = vadd.f32 %v8669, %v8687
    %8689 = vdwg.mxu0
    %8690 = vmatpush.bf16.msra.mxu0 %v5991
    %8691 = vmatpush.bf16.msra.mxu0 %v5987
    %8692 = vmatpush.bf16.msra.mxu0 %v5983
    %8693 = vmatpush.bf16.msra.mxu0 %v5979
    %8694 = vmatpush.bf16.msra.mxu0 %v5975
    %8695 = vmatpush.bf16.msra.mxu0 %v5971
    %8696 = vmatpush.bf16.msra.mxu0 %v5967
    %8697 = vmatpush.bf16.msra.mxu0 %v5963
    %8698 = vmatmul.bf16.gmra.mxu0 %v1225
    %v8699 = vpop.f32.mrf.mxu0
    %v8700 = vadd.f32 0.0, %v8699
    %v8701 = vpop.f32.mrf.mxu0
    %v8702 = vadd.f32 0.0, %v8701
    %8703 = vmatmul.bf16.gmra.mxu0 %v1233
    %v8704 = vpop.f32.mrf.mxu0
    %v8705 = vadd.f32 0.0, %v8704
    %v8706 = vpop.f32.mrf.mxu0
    %v8707 = vadd.f32 0.0, %v8706
    %8708 = vdwg.mxu0
    %8709 = vmatpush.bf16.msra.mxu0 %v6023
    %8710 = vmatpush.bf16.msra.mxu0 %v6019
    %8711 = vmatpush.bf16.msra.mxu0 %v6015
    %8712 = vmatpush.bf16.msra.mxu0 %v6011
    %8713 = vmatpush.bf16.msra.mxu0 %v6007
    %8714 = vmatpush.bf16.msra.mxu0 %v6003
    %8715 = vmatpush.bf16.msra.mxu0 %v5999
    %8716 = vmatpush.bf16.msra.mxu0 %v5995
    %8717 = vmatmul.bf16.gmra.mxu0 %v1226
    %v8718 = vpop.f32.mrf.mxu0
    %v8719 = vadd.f32 %v8700, %v8718
    %v8720 = vpop.f32.mrf.mxu0
    %v8721 = vadd.f32 %v8702, %v8720
    %8722 = vmatmul.bf16.gmra.mxu0 %v1234
    %v8723 = vpop.f32.mrf.mxu0
    %v8724 = vadd.f32 %v8705, %v8723
    %v8725 = vpop.f32.mrf.mxu0
    %v8726 = vadd.f32 %v8707, %v8725
    %8727 = vdwg.mxu0
    %8728 = vmatpush.bf16.msra.mxu0 %v6055
    %8729 = vmatpush.bf16.msra.mxu0 %v6051
    %8730 = vmatpush.bf16.msra.mxu0 %v6047
    %8731 = vmatpush.bf16.msra.mxu0 %v6043
    %8732 = vmatpush.bf16.msra.mxu0 %v6039
    %8733 = vmatpush.bf16.msra.mxu0 %v6035
    %8734 = vmatpush.bf16.msra.mxu0 %v6031
    %8735 = vmatpush.bf16.msra.mxu0 %v6027
    %8736 = vmatmul.bf16.gmra.mxu0 %v1227
    %v8737 = vpop.f32.mrf.mxu0
    %v8738 = vadd.f32 %v8719, %v8737
    %v8739 = vpop.f32.mrf.mxu0
    %v8740 = vadd.f32 %v8721, %v8739
    %8741 = vmatmul.bf16.gmra.mxu0 %v1235
    %v8742 = vpop.f32.mrf.mxu0
    %v8743 = vadd.f32 %v8724, %v8742
    %v8744 = vpop.f32.mrf.mxu0
    %v8745 = vadd.f32 %v8726, %v8744
    %8746 = vdwg.mxu0
    %8747 = vmatpush.bf16.msra.mxu0 %v6087
    %8748 = vmatpush.bf16.msra.mxu0 %v6083
    %8749 = vmatpush.bf16.msra.mxu0 %v6079
    %8750 = vmatpush.bf16.msra.mxu0 %v6075
    %8751 = vmatpush.bf16.msra.mxu0 %v6071
    %8752 = vmatpush.bf16.msra.mxu0 %v6067
    %8753 = vmatpush.bf16.msra.mxu0 %v6063
    %8754 = vmatpush.bf16.msra.mxu0 %v6059
    %8755 = vmatmul.bf16.gmra.mxu0 %v1228
    %v8756 = vpop.f32.mrf.mxu0
    %v8757 = vadd.f32 %v8738, %v8756
    %v8758 = vpop.f32.mrf.mxu0
    %v8759 = vadd.f32 %v8740, %v8758
    %8760 = vmatmul.bf16.gmra.mxu0 %v1236
    %v8761 = vpop.f32.mrf.mxu0
    %v8762 = vadd.f32 %v8743, %v8761
    %v8763 = vpop.f32.mrf.mxu0
    %v8764 = vadd.f32 %v8745, %v8763
    %8765 = vdwg.mxu0
    %8766 = vmatpush.bf16.msra.mxu0 %v6119
    %8767 = vmatpush.bf16.msra.mxu0 %v6115
    %8768 = vmatpush.bf16.msra.mxu0 %v6111
    %8769 = vmatpush.bf16.msra.mxu0 %v6107
    %8770 = vmatpush.bf16.msra.mxu0 %v6103
    %8771 = vmatpush.bf16.msra.mxu0 %v6099
    %8772 = vmatpush.bf16.msra.mxu0 %v6095
    %8773 = vmatpush.bf16.msra.mxu0 %v6091
    %8774 = vmatmul.bf16.gmra.mxu0 %v1229
    %v8775 = vpop.f32.mrf.mxu0
    %v8776 = vadd.f32 %v8757, %v8775
    %v8777 = vpop.f32.mrf.mxu0
    %v8778 = vadd.f32 %v8759, %v8777
    %8779 = vmatmul.bf16.gmra.mxu0 %v1237
    %v8780 = vpop.f32.mrf.mxu0
    %v8781 = vadd.f32 %v8762, %v8780
    %v8782 = vpop.f32.mrf.mxu0
    %v8783 = vadd.f32 %v8764, %v8782
    %8784 = vdwg.mxu0
    %8785 = vmatpush.bf16.msra.mxu0 %v6151
    %8786 = vmatpush.bf16.msra.mxu0 %v6147
    %8787 = vmatpush.bf16.msra.mxu0 %v6143
    %8788 = vmatpush.bf16.msra.mxu0 %v6139
    %8789 = vmatpush.bf16.msra.mxu0 %v6135
    %8790 = vmatpush.bf16.msra.mxu0 %v6131
    %8791 = vmatpush.bf16.msra.mxu0 %v6127
    %8792 = vmatpush.bf16.msra.mxu0 %v6123
    %8793 = vmatmul.bf16.gmra.mxu0 %v1230
    %v8794 = vpop.f32.mrf.mxu0
    %v8795 = vadd.f32 %v8776, %v8794
    %v8796 = vpop.f32.mrf.mxu0
    %v8797 = vadd.f32 %v8778, %v8796
    %8798 = vmatmul.bf16.gmra.mxu0 %v1238
    %v8799 = vpop.f32.mrf.mxu0
    %v8800 = vadd.f32 %v8781, %v8799
    %v8801 = vpop.f32.mrf.mxu0
    %v8802 = vadd.f32 %v8783, %v8801
    %8803 = vdwg.mxu0
    %8804 = vmatpush.bf16.msra.mxu0 %v6183
    %8805 = vmatpush.bf16.msra.mxu0 %v6179
    %8806 = vmatpush.bf16.msra.mxu0 %v6175
    %8807 = vmatpush.bf16.msra.mxu0 %v6171
    %8808 = vmatpush.bf16.msra.mxu0 %v6167
    %8809 = vmatpush.bf16.msra.mxu0 %v6163
    %8810 = vmatpush.bf16.msra.mxu0 %v6159
    %8811 = vmatpush.bf16.msra.mxu0 %v6155
    %8812 = vmatmul.bf16.gmra.mxu0 %v1231
    %v8813 = vpop.f32.mrf.mxu0
    %v8814 = vadd.f32 %v8795, %v8813
    %v8815 = vpop.f32.mrf.mxu0
    %v8816 = vadd.f32 %v8797, %v8815
    %8817 = vmatmul.bf16.gmra.mxu0 %v1239
    %v8818 = vpop.f32.mrf.mxu0
    %v8819 = vadd.f32 %v8800, %v8818
    %v8820 = vpop.f32.mrf.mxu0
    %v8821 = vadd.f32 %v8802, %v8820
    %8822 = vdwg.mxu0
    %8823 = vmatpush.bf16.msra.mxu0 %v6215
    %8824 = vmatpush.bf16.msra.mxu0 %v6211
    %8825 = vmatpush.bf16.msra.mxu0 %v6207
    %8826 = vmatpush.bf16.msra.mxu0 %v6203
    %8827 = vmatpush.bf16.msra.mxu0 %v6199
    %8828 = vmatpush.bf16.msra.mxu0 %v6195
    %8829 = vmatpush.bf16.msra.mxu0 %v6191
    %8830 = vmatpush.bf16.msra.mxu0 %v6187
    %8831 = vmatmul.bf16.gmra.mxu0 %v1232
    %v8832 = vpop.f32.mrf.mxu0
    %v8833 = vadd.f32 %v8814, %v8832
    %v8834 = vpop.f32.mrf.mxu0
    %v8835 = vadd.f32 %v8816, %v8834
    %8836 = vmatmul.bf16.gmra.mxu0 %v1240
    %v8837 = vpop.f32.mrf.mxu0
    %v8838 = vadd.f32 %v8819, %v8837
    %v8839 = vpop.f32.mrf.mxu0
    %v8840 = vadd.f32 %v8821, %v8839
    %8841 = vdwg.mxu0
    %8842 = vmatpush.bf16.msra.mxu0 %v5992
    %8843 = vmatpush.bf16.msra.mxu0 %v5988
    %8844 = vmatpush.bf16.msra.mxu0 %v5984
    %8845 = vmatpush.bf16.msra.mxu0 %v5980
    %8846 = vmatpush.bf16.msra.mxu0 %v5976
    %8847 = vmatpush.bf16.msra.mxu0 %v5972
    %8848 = vmatpush.bf16.msra.mxu0 %v5968
    %8849 = vmatpush.bf16.msra.mxu0 %v5964
    %8850 = vmatmul.bf16.gmra.mxu0 %v1225
    %v8851 = vpop.f32.mrf.mxu0
    %v8852 = vadd.f32 0.0, %v8851
    %v8853 = vpop.f32.mrf.mxu0
    %v8854 = vadd.f32 0.0, %v8853
    %8855 = vmatmul.bf16.gmra.mxu0 %v1233
    %v8856 = vpop.f32.mrf.mxu0
    %v8857 = vadd.f32 0.0, %v8856
    %v8858 = vpop.f32.mrf.mxu0
    %v8859 = vadd.f32 0.0, %v8858
    %8860 = vdwg.mxu0
    %8861 = vmatpush.bf16.msra.mxu0 %v6024
    %8862 = vmatpush.bf16.msra.mxu0 %v6020
    %8863 = vmatpush.bf16.msra.mxu0 %v6016
    %8864 = vmatpush.bf16.msra.mxu0 %v6012
    %8865 = vmatpush.bf16.msra.mxu0 %v6008
    %8866 = vmatpush.bf16.msra.mxu0 %v6004
    %8867 = vmatpush.bf16.msra.mxu0 %v6000
    %8868 = vmatpush.bf16.msra.mxu0 %v5996
    %8869 = vmatmul.bf16.gmra.mxu0 %v1226
    %v8870 = vpop.f32.mrf.mxu0
    %v8871 = vadd.f32 %v8852, %v8870
    %v8872 = vpop.f32.mrf.mxu0
    %v8873 = vadd.f32 %v8854, %v8872
    %8874 = vmatmul.bf16.gmra.mxu0 %v1234
    %v8875 = vpop.f32.mrf.mxu0
    %v8876 = vadd.f32 %v8857, %v8875
    %v8877 = vpop.f32.mrf.mxu0
    %v8878 = vadd.f32 %v8859, %v8877
    %8879 = vdwg.mxu0
    %8880 = vmatpush.bf16.msra.mxu0 %v6056
    %8881 = vmatpush.bf16.msra.mxu0 %v6052
    %8882 = vmatpush.bf16.msra.mxu0 %v6048
    %8883 = vmatpush.bf16.msra.mxu0 %v6044
    %8884 = vmatpush.bf16.msra.mxu0 %v6040
    %8885 = vmatpush.bf16.msra.mxu0 %v6036
    %8886 = vmatpush.bf16.msra.mxu0 %v6032
    %8887 = vmatpush.bf16.msra.mxu0 %v6028
    %8888 = vmatmul.bf16.gmra.mxu0 %v1227
    %v8889 = vpop.f32.mrf.mxu0
    %v8890 = vadd.f32 %v8871, %v8889
    %v8891 = vpop.f32.mrf.mxu0
    %v8892 = vadd.f32 %v8873, %v8891
    %8893 = vmatmul.bf16.gmra.mxu0 %v1235
    %v8894 = vpop.f32.mrf.mxu0
    %v8895 = vadd.f32 %v8876, %v8894
    %v8896 = vpop.f32.mrf.mxu0
    %v8897 = vadd.f32 %v8878, %v8896
    %8898 = vdwg.mxu0
    %8899 = vmatpush.bf16.msra.mxu0 %v6088
    %8900 = vmatpush.bf16.msra.mxu0 %v6084
    %8901 = vmatpush.bf16.msra.mxu0 %v6080
    %8902 = vmatpush.bf16.msra.mxu0 %v6076
    %8903 = vmatpush.bf16.msra.mxu0 %v6072
    %8904 = vmatpush.bf16.msra.mxu0 %v6068
    %8905 = vmatpush.bf16.msra.mxu0 %v6064
    %8906 = vmatpush.bf16.msra.mxu0 %v6060
    %8907 = vmatmul.bf16.gmra.mxu0 %v1228
    %v8908 = vpop.f32.mrf.mxu0
    %v8909 = vadd.f32 %v8890, %v8908
    %v8910 = vpop.f32.mrf.mxu0
    %v8911 = vadd.f32 %v8892, %v8910
    %8912 = vmatmul.bf16.gmra.mxu0 %v1236
    %v8913 = vpop.f32.mrf.mxu0
    %v8914 = vadd.f32 %v8895, %v8913
    %v8915 = vpop.f32.mrf.mxu0
    %v8916 = vadd.f32 %v8897, %v8915
    %8917 = vdwg.mxu0
    %8918 = vmatpush.bf16.msra.mxu0 %v6120
    %8919 = vmatpush.bf16.msra.mxu0 %v6116
    %8920 = vmatpush.bf16.msra.mxu0 %v6112
    %8921 = vmatpush.bf16.msra.mxu0 %v6108
    %8922 = vmatpush.bf16.msra.mxu0 %v6104
    %8923 = vmatpush.bf16.msra.mxu0 %v6100
    %8924 = vmatpush.bf16.msra.mxu0 %v6096
    %8925 = vmatpush.bf16.msra.mxu0 %v6092
    %8926 = vmatmul.bf16.gmra.mxu0 %v1229
    %v8927 = vpop.f32.mrf.mxu0
    %v8928 = vadd.f32 %v8909, %v8927
    %v8929 = vpop.f32.mrf.mxu0
    %v8930 = vadd.f32 %v8911, %v8929
    %8931 = vmatmul.bf16.gmra.mxu0 %v1237
    %v8932 = vpop.f32.mrf.mxu0
    %v8933 = vadd.f32 %v8914, %v8932
    %v8934 = vpop.f32.mrf.mxu0
    %v8935 = vadd.f32 %v8916, %v8934
    %8936 = vdwg.mxu0
    %8937 = vmatpush.bf16.msra.mxu0 %v6152
    %8938 = vmatpush.bf16.msra.mxu0 %v6148
    %8939 = vmatpush.bf16.msra.mxu0 %v6144
    %8940 = vmatpush.bf16.msra.mxu0 %v6140
    %8941 = vmatpush.bf16.msra.mxu0 %v6136
    %8942 = vmatpush.bf16.msra.mxu0 %v6132
    %8943 = vmatpush.bf16.msra.mxu0 %v6128
    %8944 = vmatpush.bf16.msra.mxu0 %v6124
    %8945 = vmatmul.bf16.gmra.mxu0 %v1230
    %v8946 = vpop.f32.mrf.mxu0
    %v8947 = vadd.f32 %v8928, %v8946
    %v8948 = vpop.f32.mrf.mxu0
    %v8949 = vadd.f32 %v8930, %v8948
    %8950 = vmatmul.bf16.gmra.mxu0 %v1238
    %v8951 = vpop.f32.mrf.mxu0
    %v8952 = vadd.f32 %v8933, %v8951
    %v8953 = vpop.f32.mrf.mxu0
    %v8954 = vadd.f32 %v8935, %v8953
    %8955 = vdwg.mxu0
    %8956 = vmatpush.bf16.msra.mxu0 %v6184
    %8957 = vmatpush.bf16.msra.mxu0 %v6180
    %8958 = vmatpush.bf16.msra.mxu0 %v6176
    %8959 = vmatpush.bf16.msra.mxu0 %v6172
    %8960 = vmatpush.bf16.msra.mxu0 %v6168
    %8961 = vmatpush.bf16.msra.mxu0 %v6164
    %8962 = vmatpush.bf16.msra.mxu0 %v6160
    %8963 = vmatpush.bf16.msra.mxu0 %v6156
    %8964 = vmatmul.bf16.gmra.mxu0 %v1231
    %v8965 = vpop.f32.mrf.mxu0
    %v8966 = vadd.f32 %v8947, %v8965
    %v8967 = vpop.f32.mrf.mxu0
    %v8968 = vadd.f32 %v8949, %v8967
    %8969 = vmatmul.bf16.gmra.mxu0 %v1239
    %v8970 = vpop.f32.mrf.mxu0
    %v8971 = vadd.f32 %v8952, %v8970
    %v8972 = vpop.f32.mrf.mxu0
    %v8973 = vadd.f32 %v8954, %v8972
    %8974 = vdwg.mxu0
    %8975 = vmatpush.bf16.msra.mxu0 %v6216
    %8976 = vmatpush.bf16.msra.mxu0 %v6212
    %8977 = vmatpush.bf16.msra.mxu0 %v6208
    %8978 = vmatpush.bf16.msra.mxu0 %v6204
    %8979 = vmatpush.bf16.msra.mxu0 %v6200
    %8980 = vmatpush.bf16.msra.mxu0 %v6196
    %8981 = vmatpush.bf16.msra.mxu0 %v6192
    %8982 = vmatpush.bf16.msra.mxu0 %v6188
    %8983 = vmatmul.bf16.gmra.mxu0 %v1232
    %v8984 = vpop.f32.mrf.mxu0
    %v8985 = vadd.f32 %v8966, %v8984
    %v8986 = vpop.f32.mrf.mxu0
    %v8987 = vadd.f32 %v8968, %v8986
    %8988 = vmatmul.bf16.gmra.mxu0 %v1240
    %v8989 = vpop.f32.mrf.mxu0
    %v8990 = vadd.f32 %v8971, %v8989
    %v8991 = vpop.f32.mrf.mxu0
    %v8992 = vadd.f32 %v8973, %v8991
    %8993 = vdwg.mxu0
    %v8994 = vadd.f32 %v7921, %v8529
    %v8995 = vadd.f32 %v8073, %v8681
    %v8996 = vadd.f32 %v8225, %v8833
    %v8997 = vadd.f32 %v8377, %v8985
    %v8998 = vadd.f32 %v7923, %v8531
    %v8999 = vadd.f32 %v8075, %v8683
    %v9000 = vadd.f32 %v8227, %v8835
    %v9001 = vadd.f32 %v8379, %v8987
    %v9002 = vadd.f32 %v7926, %v8534
    %v9003 = vadd.f32 %v8078, %v8686
    %v9004 = vadd.f32 %v8230, %v8838
    %v9005 = vadd.f32 %v8382, %v8990
    %v9006 = vadd.f32 %v7928, %v8536
    %v9007 = vadd.f32 %v8080, %v8688
    %v9008 = vadd.f32 %v8232, %v8840
    %v9009 = vadd.f32 %v8384, %v8992
    %v9010 = vadd.f32 %v8994, %v7066
    %v9011 = vadd.f32 %v8995, %v7067
    %v9012 = vadd.f32 %v8996, %v7068
    %v9013 = vadd.f32 %v8997, %v7069
    %v9014 = vadd.f32 %v8998, %v7066
    %v9015 = vadd.f32 %v8999, %v7067
    %v9016 = vadd.f32 %v9000, %v7068
    %v9017 = vadd.f32 %v9001, %v7069
    %v9018 = vadd.f32 %v9002, %v7066
    %v9019 = vadd.f32 %v9003, %v7067
    %v9020 = vadd.f32 %v9004, %v7068
    %v9021 = vadd.f32 %v9005, %v7069
    %v9022 = vadd.f32 %v9006, %v7066
    %v9023 = vadd.f32 %v9007, %v7067
    %v9024 = vadd.f32 %v9008, %v7068
    %v9025 = vadd.f32 %v9009, %v7069
    %v9026 = vmax.f32 %v7074, 0.0
    %v9027 = vmax.f32 %v7075, 0.0
    %v9028 = vmax.f32 %v7076, 0.0
    %v9029 = vmax.f32 %v7077, 0.0
    %v9030 = vmax.f32 %v7078, 0.0
    %v9031 = vmax.f32 %v7079, 0.0
    %v9032 = vmax.f32 %v7080, 0.0
    %v9033 = vmax.f32 %v7081, 0.0
    %v9034 = vmax.f32 %v7082, 0.0
    %v9035 = vmax.f32 %v7083, 0.0
    %v9036 = vmax.f32 %v7084, 0.0
    %v9037 = vmax.f32 %v7085, 0.0
    %v9038 = vmax.f32 %v7086, 0.0
    %v9039 = vmax.f32 %v7087, 0.0
    %v9040 = vmax.f32 %v7088, 0.0
    %v9041 = vmax.f32 %v7089, 0.0
    %v9042 = vmax.f32 %v9010, 0.0
    %v9043 = vmax.f32 %v9011, 0.0
    %v9044 = vmax.f32 %v9012, 0.0
    %v9045 = vmax.f32 %v9013, 0.0
    %v9046 = vmax.f32 %v9014, 0.0
    %v9047 = vmax.f32 %v9015, 0.0
    %v9048 = vmax.f32 %v9016, 0.0
    %v9049 = vmax.f32 %v9017, 0.0
    %v9050 = vmax.f32 %v9018, 0.0
    %v9051 = vmax.f32 %v9019, 0.0
    %v9052 = vmax.f32 %v9020, 0.0
    %v9053 = vmax.f32 %v9021, 0.0
    %v9054 = vmax.f32 %v9022, 0.0
    %v9055 = vmax.f32 %v9023, 0.0
    %v9056 = vmax.f32 %v9024, 0.0
    %v9057 = vmax.f32 %v9025, 0.0
    %v9058 = vld [vmem:[%s7] sm:$0xff]
    %v9059 = vld [vmem:[%s7 + $0x8] sm:$0xff]
    %v9060 = vld [vmem:[%s7 + $0x10] sm:$0xff]
    %v9061 = vld [vmem:[%s7 + $0x18] sm:$0xff]
    %v9062 = vld [vmem:[%s7 + $0x20] sm:$0xff]
    %v9063 = vld [vmem:[%s7 + $0x28] sm:$0xff]
    %v9064 = vld [vmem:[%s7 + $0x30] sm:$0xff]
    %v9065 = vld [vmem:[%s7 + $0x38] sm:$0xff]
    %v9066 = vld [vmem:[%s7 + $0x40] sm:$0xff]
    %v9067 = vld [vmem:[%s7 + $0x48] sm:$0xff]
    %v9068 = vld [vmem:[%s7 + $0x50] sm:$0xff]
    %v9069 = vld [vmem:[%s7 + $0x58] sm:$0xff]
    %v9070 = vld [vmem:[%s7 + $0x60] sm:$0xff]
    %v9071 = vld [vmem:[%s7 + $0x68] sm:$0xff]
    %v9072 = vld [vmem:[%s7 + $0x70] sm:$0xff]
    %v9073 = vld [vmem:[%s7 + $0x78] sm:$0xff]
    %v9074 = vld [vmem:[%s7 + $0x80] sm:$0xff]
    %v9075 = vld [vmem:[%s7 + $0x88] sm:$0xff]
    %v9076 = vld [vmem:[%s7 + $0x90] sm:$0xff]
    %v9077 = vld [vmem:[%s7 + $0x98] sm:$0xff]
    %v9078 = vld [vmem:[%s7 + $0xa0] sm:$0xff]
    %v9079 = vld [vmem:[%s7 + $0xa8] sm:$0xff]
    %v9080 = vld [vmem:[%s7 + $0xb0] sm:$0xff]
    %v9081 = vld [vmem:[%s7 + $0xb8] sm:$0xff]
    %v9082 = vld [vmem:[%s7 + $0xc0] sm:$0xff]
    %v9083 = vld [vmem:[%s7 + $0xc8] sm:$0xff]
    %v9084 = vld [vmem:[%s7 + $0xd0] sm:$0xff]
    %v9085 = vld [vmem:[%s7 + $0xd8] sm:$0xff]
    %v9086 = vld [vmem:[%s7 + $0xe0] sm:$0xff]
    %v9087 = vld [vmem:[%s7 + $0xe8] sm:$0xff]
    %v9088 = vld [vmem:[%s7 + $0xf0] sm:$0xff]
    %v9089 = vld [vmem:[%s7 + $0xf8] sm:$0xff]
    %v9090 = vld [vmem:[%s7 + $0x100] sm:$0xff]
    %v9091 = vld [vmem:[%s7 + $0x108] sm:$0xff]
    %v9092 = vld [vmem:[%s7 + $0x110] sm:$0xff]
    %v9093 = vld [vmem:[%s7 + $0x118] sm:$0xff]
    %v9094 = vld [vmem:[%s7 + $0x120] sm:$0xff]
    %v9095 = vld [vmem:[%s7 + $0x128] sm:$0xff]
    %v9096 = vld [vmem:[%s7 + $0x130] sm:$0xff]
    %v9097 = vld [vmem:[%s7 + $0x138] sm:$0xff]
    %v9098 = vld [vmem:[%s7 + $0x140] sm:$0xff]
    %v9099 = vld [vmem:[%s7 + $0x148] sm:$0xff]
    %v9100 = vld [vmem:[%s7 + $0x150] sm:$0xff]
    %v9101 = vld [vmem:[%s7 + $0x158] sm:$0xff]
    %v9102 = vld [vmem:[%s7 + $0x160] sm:$0xff]
    %v9103 = vld [vmem:[%s7 + $0x168] sm:$0xff]
    %v9104 = vld [vmem:[%s7 + $0x170] sm:$0xff]
    %v9105 = vld [vmem:[%s7 + $0x178] sm:$0xff]
    %v9106 = vld [vmem:[%s7 + $0x180] sm:$0xff]
    %v9107 = vld [vmem:[%s7 + $0x188] sm:$0xff]
    %v9108 = vld [vmem:[%s7 + $0x190] sm:$0xff]
    %v9109 = vld [vmem:[%s7 + $0x198] sm:$0xff]
    %v9110 = vld [vmem:[%s7 + $0x1a0] sm:$0xff]
    %v9111 = vld [vmem:[%s7 + $0x1a8] sm:$0xff]
    %v9112 = vld [vmem:[%s7 + $0x1b0] sm:$0xff]
    %v9113 = vld [vmem:[%s7 + $0x1b8] sm:$0xff]
    %v9114 = vld [vmem:[%s7 + $0x1c0] sm:$0xff]
    %v9115 = vld [vmem:[%s7 + $0x1c8] sm:$0xff]
    %v9116 = vld [vmem:[%s7 + $0x1d0] sm:$0xff]
    %v9117 = vld [vmem:[%s7 + $0x1d8] sm:$0xff]
    %v9118 = vld [vmem:[%s7 + $0x1e0] sm:$0xff]
    %v9119 = vld [vmem:[%s7 + $0x1e8] sm:$0xff]
    %v9120 = vld [vmem:[%s7 + $0x1f0] sm:$0xff]
    %v9121 = vld [vmem:[%s7 + $0x1f8] sm:$0xff]
    %v9122 = vld [vmem:[#allocation10] sm:$0xff]
    %v9123 = vld [vmem:[#allocation10 + $0x8] sm:$0xff]
    %v9124 = vld [vmem:[#allocation10 + $0x10] sm:$0xff]
    %v9125 = vld [vmem:[#allocation10 + $0x18] sm:$0xff]
    %v9126 = vld [vmem:[#allocation10 + $0x20] sm:$0xff]
    %v9127 = vld [vmem:[#allocation10 + $0x28] sm:$0xff]
    %v9128 = vld [vmem:[#allocation10 + $0x30] sm:$0xff]
    %v9129 = vld [vmem:[#allocation10 + $0x38] sm:$0xff]
    %v9130 = vld [vmem:[#allocation10 + $0x40] sm:$0xff]
    %v9131 = vld [vmem:[#allocation10 + $0x48] sm:$0xff]
    %v9132 = vld [vmem:[#allocation10 + $0x50] sm:$0xff]
    %v9133 = vld [vmem:[#allocation10 + $0x58] sm:$0xff]
    %v9134 = vld [vmem:[#allocation10 + $0x60] sm:$0xff]
    %v9135 = vld [vmem:[#allocation10 + $0x68] sm:$0xff]
    %v9136 = vld [vmem:[#allocation10 + $0x70] sm:$0xff]
    %v9137 = vld [vmem:[#allocation10 + $0x78] sm:$0xff]
    %v9138 = vld [vmem:[#allocation10 + $0x80] sm:$0xff]
    %v9139 = vld [vmem:[#allocation10 + $0x88] sm:$0xff]
    %v9140 = vld [vmem:[#allocation10 + $0x90] sm:$0xff]
    %v9141 = vld [vmem:[#allocation10 + $0x98] sm:$0xff]
    %v9142 = vld [vmem:[#allocation10 + $0xa0] sm:$0xff]
    %v9143 = vld [vmem:[#allocation10 + $0xa8] sm:$0xff]
    %v9144 = vld [vmem:[#allocation10 + $0xb0] sm:$0xff]
    %v9145 = vld [vmem:[#allocation10 + $0xb8] sm:$0xff]
    %v9146 = vld [vmem:[#allocation10 + $0xc0] sm:$0xff]
    %v9147 = vld [vmem:[#allocation10 + $0xc8] sm:$0xff]
    %v9148 = vld [vmem:[#allocation10 + $0xd0] sm:$0xff]
    %v9149 = vld [vmem:[#allocation10 + $0xd8] sm:$0xff]
    %v9150 = vld [vmem:[#allocation10 + $0xe0] sm:$0xff]
    %v9151 = vld [vmem:[#allocation10 + $0xe8] sm:$0xff]
    %v9152 = vld [vmem:[#allocation10 + $0xf0] sm:$0xff]
    %v9153 = vld [vmem:[#allocation10 + $0xf8] sm:$0xff]
    %v9154 = vld [vmem:[#allocation12 + $0x1] ss:$0 sm:$0xff]
    %v9155 = vld [vmem:[#allocation12 + $0x2] ss:$0 sm:$0xff]
    %9157 = vset.pattern.permute.xlu0 0
    %9158 = vperm.xlu0 %9157, %v144
    %v9159 = vpop.permute.xlu0 %9158
    %9162 = vset.pattern.permute.xlu0 0
    %9163 = vperm.xlu0 %9162, %v145
    %v9164 = vpop.permute.xlu0 %9163
    %9167 = vset.pattern.permute.xlu0 0
    %9168 = vperm.xlu0 %9167, %v146
    %v9169 = vpop.permute.xlu0 %9168
    %9172 = vset.pattern.permute.xlu0 0
    %9173 = vperm.xlu0 %9172, %v147
    %v9174 = vpop.permute.xlu0 %9173
    %v9176 = vmul.f32 %v9026, %v9159
    %v9177 = vmul.f32 %v9027, %v9159
    %v9178 = vmul.f32 %v9028, %v9159
    %v9179 = vmul.f32 %v9029, %v9159
    %v9180 = vmul.f32 %v9030, %v9164
    %v9181 = vmul.f32 %v9031, %v9164
    %v9182 = vmul.f32 %v9032, %v9164
    %v9183 = vmul.f32 %v9033, %v9164
    %v9184 = vmul.f32 %v9034, %v9169
    %v9185 = vmul.f32 %v9035, %v9169
    %v9186 = vmul.f32 %v9036, %v9169
    %v9187 = vmul.f32 %v9037, %v9169
    %v9188 = vmul.f32 %v9038, %v9174
    %v9189 = vmul.f32 %v9039, %v9174
    %v9190 = vmul.f32 %v9040, %v9174
    %v9191 = vmul.f32 %v9041, %v9174
    %v9192 = vadd.f32 %v9176, %v9180
    %v9193 = vadd.f32 %v9192, %v9184
    %v9194 = vadd.f32 %v9193, %v9188
    %v9195 = vrot.slane %v9194, 4
    %v9196 = vadd.f32 %v9194, %v9195
    %v9197 = vrot.slane %v9196, 2
    %v9198 = vadd.f32 %v9196, %v9197
    %v9199 = vrot.slane %v9198, 1
    %v9200 = vadd.f32 %v9198, %v9199
    %v9201 = vadd.f32 %v9177, %v9181
    %v9202 = vadd.f32 %v9201, %v9185
    %v9203 = vadd.f32 %v9202, %v9189
    %v9204 = vrot.slane %v9203, 4
    %v9205 = vadd.f32 %v9203, %v9204
    %v9206 = vrot.slane %v9205, 2
    %v9207 = vadd.f32 %v9205, %v9206
    %v9208 = vrot.slane %v9207, 1
    %v9209 = vadd.f32 %v9207, %v9208
    %v9210 = vadd.f32 %v9178, %v9182
    %v9211 = vadd.f32 %v9210, %v9186
    %v9212 = vadd.f32 %v9211, %v9190
    %v9213 = vrot.slane %v9212, 4
    %v9214 = vadd.f32 %v9212, %v9213
    %v9215 = vrot.slane %v9214, 2
    %v9216 = vadd.f32 %v9214, %v9215
    %v9217 = vrot.slane %v9216, 1
    %v9218 = vadd.f32 %v9216, %v9217
    %v9219 = vadd.f32 %v9179, %v9183
    %v9220 = vadd.f32 %v9219, %v9187
    %v9221 = vadd.f32 %v9220, %v9191
    %v9222 = vrot.slane %v9221, 4
    %v9223 = vadd.f32 %v9221, %v9222
    %v9224 = vrot.slane %v9223, 2
    %v9225 = vadd.f32 %v9223, %v9224
    %v9226 = vrot.slane %v9225, 1
    %v9227 = vadd.f32 %v9225, %v9226
    %v9228 = vmul.f32 %v9176, %v9176
    %v9229 = vmul.f32 %v9177, %v9177
    %v9230 = vmul.f32 %v9178, %v9178
    %v9231 = vmul.f32 %v9179, %v9179
    %v9232 = vmul.f32 %v9180, %v9180
    %v9233 = vmul.f32 %v9181, %v9181
    %v9234 = vmul.f32 %v9182, %v9182
    %v9235 = vmul.f32 %v9183, %v9183
    %v9236 = vmul.f32 %v9184, %v9184
    %v9237 = vmul.f32 %v9185, %v9185
    %v9238 = vmul.f32 %v9186, %v9186
    %v9239 = vmul.f32 %v9187, %v9187
    %v9240 = vmul.f32 %v9188, %v9188
    %v9241 = vmul.f32 %v9189, %v9189
    %v9242 = vmul.f32 %v9190, %v9190
    %v9243 = vmul.f32 %v9191, %v9191
    %v9244 = vadd.f32 %v9228, %v9232
    %v9245 = vadd.f32 %v9244, %v9236
    %v9246 = vadd.f32 %v9245, %v9240
    %v9247 = vrot.slane %v9246, 4
    %v9248 = vadd.f32 %v9246, %v9247
    %v9249 = vrot.slane %v9248, 2
    %v9250 = vadd.f32 %v9248, %v9249
    %v9251 = vrot.slane %v9250, 1
    %v9252 = vadd.f32 %v9250, %v9251
    %v9253 = vadd.f32 %v9229, %v9233
    %v9254 = vadd.f32 %v9253, %v9237
    %v9255 = vadd.f32 %v9254, %v9241
    %v9256 = vrot.slane %v9255, 4
    %v9257 = vadd.f32 %v9255, %v9256
    %v9258 = vrot.slane %v9257, 2
    %v9259 = vadd.f32 %v9257, %v9258
    %v9260 = vrot.slane %v9259, 1
    %v9261 = vadd.f32 %v9259, %v9260
    %v9262 = vadd.f32 %v9230, %v9234
    %v9263 = vadd.f32 %v9262, %v9238
    %v9264 = vadd.f32 %v9263, %v9242
    %v9265 = vrot.slane %v9264, 4
    %v9266 = vadd.f32 %v9264, %v9265
    %v9267 = vrot.slane %v9266, 2
    %v9268 = vadd.f32 %v9266, %v9267
    %v9269 = vrot.slane %v9268, 1
    %v9270 = vadd.f32 %v9268, %v9269
    %v9271 = vadd.f32 %v9231, %v9235
    %v9272 = vadd.f32 %v9271, %v9239
    %v9273 = vadd.f32 %v9272, %v9243
    %v9274 = vrot.slane %v9273, 4
    %v9275 = vadd.f32 %v9273, %v9274
    %v9276 = vrot.slane %v9275, 2
    %v9277 = vadd.f32 %v9275, %v9276
    %v9278 = vrot.slane %v9277, 1
    %v9279 = vadd.f32 %v9277, %v9278
    %v9280 = vmul.f32 %v9042, %v9159
    %v9281 = vmul.f32 %v9043, %v9159
    %v9282 = vmul.f32 %v9044, %v9159
    %v9283 = vmul.f32 %v9045, %v9159
    %v9284 = vmul.f32 %v9046, %v9164
    %v9285 = vmul.f32 %v9047, %v9164
    %v9286 = vmul.f32 %v9048, %v9164
    %v9287 = vmul.f32 %v9049, %v9164
    %v9288 = vmul.f32 %v9050, %v9169
    %v9289 = vmul.f32 %v9051, %v9169
    %v9290 = vmul.f32 %v9052, %v9169
    %v9291 = vmul.f32 %v9053, %v9169
    %v9292 = vmul.f32 %v9054, %v9174
    %v9293 = vmul.f32 %v9055, %v9174
    %v9294 = vmul.f32 %v9056, %v9174
    %v9295 = vmul.f32 %v9057, %v9174
    %v9296 = vadd.f32 %v9280, %v9284
    %v9297 = vadd.f32 %v9296, %v9288
    %v9298 = vadd.f32 %v9297, %v9292
    %v9299 = vrot.slane %v9298, 4
    %v9300 = vadd.f32 %v9298, %v9299
    %v9301 = vrot.slane %v9300, 2
    %v9302 = vadd.f32 %v9300, %v9301
    %v9303 = vrot.slane %v9302, 1
    %v9304 = vadd.f32 %v9302, %v9303
    %v9305 = vadd.f32 %v9281, %v9285
    %v9306 = vadd.f32 %v9305, %v9289
    %v9307 = vadd.f32 %v9306, %v9293
    %v9308 = vrot.slane %v9307, 4
    %v9309 = vadd.f32 %v9307, %v9308
    %v9310 = vrot.slane %v9309, 2
    %v9311 = vadd.f32 %v9309, %v9310
    %v9312 = vrot.slane %v9311, 1
    %v9313 = vadd.f32 %v9311, %v9312
    %v9314 = vadd.f32 %v9282, %v9286
    %v9315 = vadd.f32 %v9314, %v9290
    %v9316 = vadd.f32 %v9315, %v9294
    %v9317 = vrot.slane %v9316, 4
    %v9318 = vadd.f32 %v9316, %v9317
    %v9319 = vrot.slane %v9318, 2
    %v9320 = vadd.f32 %v9318, %v9319
    %v9321 = vrot.slane %v9320, 1
    %v9322 = vadd.f32 %v9320, %v9321
    %v9323 = vadd.f32 %v9283, %v9287
    %v9324 = vadd.f32 %v9323, %v9291
    %v9325 = vadd.f32 %v9324, %v9295
    %v9326 = vrot.slane %v9325, 4
    %v9327 = vadd.f32 %v9325, %v9326
    %v9328 = vrot.slane %v9327, 2
    %v9329 = vadd.f32 %v9327, %v9328
    %v9330 = vrot.slane %v9329, 1
    %v9331 = vadd.f32 %v9329, %v9330
    %v9332 = vmul.f32 %v9280, %v9280
    %v9333 = vmul.f32 %v9281, %v9281
    %v9334 = vmul.f32 %v9282, %v9282
    %v9335 = vmul.f32 %v9283, %v9283
    %v9336 = vmul.f32 %v9284, %v9284
    %v9337 = vmul.f32 %v9285, %v9285
    %v9338 = vmul.f32 %v9286, %v9286
    %v9339 = vmul.f32 %v9287, %v9287
    %v9340 = vmul.f32 %v9288, %v9288
    %v9341 = vmul.f32 %v9289, %v9289
    %v9342 = vmul.f32 %v9290, %v9290
    %v9343 = vmul.f32 %v9291, %v9291
    %v9344 = vmul.f32 %v9292, %v9292
    %v9345 = vmul.f32 %v9293, %v9293
    %v9346 = vmul.f32 %v9294, %v9294
    %v9347 = vmul.f32 %v9295, %v9295
    %v9348 = vadd.f32 %v9332, %v9336
    %v9349 = vadd.f32 %v9348, %v9340
    %v9350 = vadd.f32 %v9349, %v9344
    %v9351 = vrot.slane %v9350, 4
    %v9352 = vadd.f32 %v9350, %v9351
    %v9353 = vrot.slane %v9352, 2
    %v9354 = vadd.f32 %v9352, %v9353
    %v9355 = vrot.slane %v9354, 1
    %v9356 = vadd.f32 %v9354, %v9355
    %v9357 = vadd.f32 %v9333, %v9337
    %v9358 = vadd.f32 %v9357, %v9341
    %v9359 = vadd.f32 %v9358, %v9345
    %v9360 = vrot.slane %v9359, 4
    %v9361 = vadd.f32 %v9359, %v9360
    %v9362 = vrot.slane %v9361, 2
    %v9363 = vadd.f32 %v9361, %v9362
    %v9364 = vrot.slane %v9363, 1
    %v9365 = vadd.f32 %v9363, %v9364
    %v9366 = vadd.f32 %v9334, %v9338
    %v9367 = vadd.f32 %v9366, %v9342
    %v9368 = vadd.f32 %v9367, %v9346
    %v9369 = vrot.slane %v9368, 4
    %v9370 = vadd.f32 %v9368, %v9369
    %v9371 = vrot.slane %v9370, 2
    %v9372 = vadd.f32 %v9370, %v9371
    %v9373 = vrot.slane %v9372, 1
    %v9374 = vadd.f32 %v9372, %v9373
    %v9375 = vadd.f32 %v9335, %v9339
    %v9376 = vadd.f32 %v9375, %v9343
    %v9377 = vadd.f32 %v9376, %v9347
    %v9378 = vrot.slane %v9377, 4
    %v9379 = vadd.f32 %v9377, %v9378
    %v9380 = vrot.slane %v9379, 2
    %v9381 = vadd.f32 %v9379, %v9380
    %v9382 = vrot.slane %v9381, 1
    %v9383 = vadd.f32 %v9381, %v9382
    %v9384 = vadd.f32 %v9200, %v9304
    %v9385 = vadd.f32 %v9209, %v9313
    %v9386 = vadd.f32 %v9218, %v9322
    %v9387 = vadd.f32 %v9227, %v9331
    %v9388 = vadd.f32 %v9252, %v9356
    %v9389 = vadd.f32 %v9261, %v9365
    %v9390 = vadd.f32 %v9270, %v9374
    %v9391 = vadd.f32 %v9279, %v9383
    %9392 = vmatpush.msra.mxu0 %v9073
    %9393 = vmatpush.msra.mxu0 %v9072
    %9394 = vmatpush.msra.mxu0 %v9071
    %9395 = vmatpush.msra.mxu0 %v9070
    %9396 = vmatpush.msra.mxu0 %v9069
    %9397 = vmatpush.msra.mxu0 %v9068
    %9398 = vmatpush.msra.mxu0 %v9067
    %9399 = vmatpush.msra.mxu0 %v9066
    %9400 = vmatpush.msra.mxu0 %v9065
    %9401 = vmatpush.msra.mxu0 %v9064
    %9402 = vmatpush.msra.mxu0 %v9063
    %9403 = vmatpush.msra.mxu0 %v9062
    %9404 = vmatpush.msra.mxu0 %v9061
    %9405 = vmatpush.msra.mxu0 %v9060
    %9406 = vmatpush.msra.mxu0 %v9059
    %9407 = vmatpush.msra.mxu0 %v9058
    %9408 = vmatmul.f32.gmra.mxu0 %v9384
    %v9409 = vpop.f32.mrf.mxu0
    %v9410 = vadd.f32 0.0, %v9409
    %9411 = vdwg.mxu0
    %9412 = vmatpush.msra.mxu0 %v9089
    %9413 = vmatpush.msra.mxu0 %v9088
    %9414 = vmatpush.msra.mxu0 %v9087
    %9415 = vmatpush.msra.mxu0 %v9086
    %9416 = vmatpush.msra.mxu0 %v9085
    %9417 = vmatpush.msra.mxu0 %v9084
    %9418 = vmatpush.msra.mxu0 %v9083
    %9419 = vmatpush.msra.mxu0 %v9082
    %9420 = vmatpush.msra.mxu0 %v9081
    %9421 = vmatpush.msra.mxu0 %v9080
    %9422 = vmatpush.msra.mxu0 %v9079
    %9423 = vmatpush.msra.mxu0 %v9078
    %9424 = vmatpush.msra.mxu0 %v9077
    %9425 = vmatpush.msra.mxu0 %v9076
    %9426 = vmatpush.msra.mxu0 %v9075
    %9427 = vmatpush.msra.mxu0 %v9074
    %9428 = vmatmul.f32.gmra.mxu0 %v9385
    %v9429 = vpop.f32.mrf.mxu0
    %v9430 = vadd.f32 %v9410, %v9429
    %9431 = vdwg.mxu0
    %9432 = vmatpush.msra.mxu0 %v9105
    %9433 = vmatpush.msra.mxu0 %v9104
    %9434 = vmatpush.msra.mxu0 %v9103
    %9435 = vmatpush.msra.mxu0 %v9102
    %9436 = vmatpush.msra.mxu0 %v9101
    %9437 = vmatpush.msra.mxu0 %v9100
    %9438 = vmatpush.msra.mxu0 %v9099
    %9439 = vmatpush.msra.mxu0 %v9098
    %9440 = vmatpush.msra.mxu0 %v9097
    %9441 = vmatpush.msra.mxu0 %v9096
    %9442 = vmatpush.msra.mxu0 %v9095
    %9443 = vmatpush.msra.mxu0 %v9094
    %9444 = vmatpush.msra.mxu0 %v9093
    %9445 = vmatpush.msra.mxu0 %v9092
    %9446 = vmatpush.msra.mxu0 %v9091
    %9447 = vmatpush.msra.mxu0 %v9090
    %9448 = vmatmul.f32.gmra.mxu0 %v9386
    %v9449 = vpop.f32.mrf.mxu0
    %v9450 = vadd.f32 %v9430, %v9449
    %9451 = vdwg.mxu0
    %9452 = vmatpush.msra.mxu0 %v9121
    %9453 = vmatpush.msra.mxu0 %v9120
    %9454 = vmatpush.msra.mxu0 %v9119
    %9455 = vmatpush.msra.mxu0 %v9118
    %9456 = vmatpush.msra.mxu0 %v9117
    %9457 = vmatpush.msra.mxu0 %v9116
    %9458 = vmatpush.msra.mxu0 %v9115
    %9459 = vmatpush.msra.mxu0 %v9114
    %9460 = vmatpush.msra.mxu0 %v9113
    %9461 = vmatpush.msra.mxu0 %v9112
    %9462 = vmatpush.msra.mxu0 %v9111
    %9463 = vmatpush.msra.mxu0 %v9110
    %9464 = vmatpush.msra.mxu0 %v9109
    %9465 = vmatpush.msra.mxu0 %v9108
    %9466 = vmatpush.msra.mxu0 %v9107
    %9467 = vmatpush.msra.mxu0 %v9106
    %9468 = vmatmul.f32.gmra.mxu0 %v9387
    %v9469 = vpop.f32.mrf.mxu0
    %v9470 = vadd.f32 %v9450, %v9469
    %9471 = vdwg.mxu0
    %9472 = vmatpush.msra.mxu0 %v9073
    %9473 = vmatpush.msra.mxu0 %v9072
    %9474 = vmatpush.msra.mxu0 %v9071
    %9475 = vmatpush.msra.mxu0 %v9070
    %9476 = vmatpush.msra.mxu0 %v9069
    %9477 = vmatpush.msra.mxu0 %v9068
    %9478 = vmatpush.msra.mxu0 %v9067
    %9479 = vmatpush.msra.mxu0 %v9066
    %9480 = vmatpush.msra.mxu0 %v9065
    %9481 = vmatpush.msra.mxu0 %v9064
    %9482 = vmatpush.msra.mxu0 %v9063
    %9483 = vmatpush.msra.mxu0 %v9062
    %9484 = vmatpush.msra.mxu0 %v9061
    %9485 = vmatpush.msra.mxu0 %v9060
    %9486 = vmatpush.msra.mxu0 %v9059
    %9487 = vmatpush.msra.mxu0 %v9058
    %9488 = vmatmul.f32.gmra.mxu0 %v9388
    %v9489 = vpop.f32.mrf.mxu0
    %v9490 = vadd.f32 0.0, %v9489
    %9491 = vdwg.mxu0
    %9492 = vmatpush.msra.mxu0 %v9089
    %9493 = vmatpush.msra.mxu0 %v9088
    %9494 = vmatpush.msra.mxu0 %v9087
    %9495 = vmatpush.msra.mxu0 %v9086
    %9496 = vmatpush.msra.mxu0 %v9085
    %9497 = vmatpush.msra.mxu0 %v9084
    %9498 = vmatpush.msra.mxu0 %v9083
    %9499 = vmatpush.msra.mxu0 %v9082
    %9500 = vmatpush.msra.mxu0 %v9081
    %9501 = vmatpush.msra.mxu0 %v9080
    %9502 = vmatpush.msra.mxu0 %v9079
    %9503 = vmatpush.msra.mxu0 %v9078
    %9504 = vmatpush.msra.mxu0 %v9077
    %9505 = vmatpush.msra.mxu0 %v9076
    %9506 = vmatpush.msra.mxu0 %v9075
    %9507 = vmatpush.msra.mxu0 %v9074
    %9508 = vmatmul.f32.gmra.mxu0 %v9389
    %v9509 = vpop.f32.mrf.mxu0
    %v9510 = vadd.f32 %v9490, %v9509
    %9511 = vdwg.mxu0
    %9512 = vmatpush.msra.mxu0 %v9105
    %9513 = vmatpush.msra.mxu0 %v9104
    %9514 = vmatpush.msra.mxu0 %v9103
    %9515 = vmatpush.msra.mxu0 %v9102
    %9516 = vmatpush.msra.mxu0 %v9101
    %9517 = vmatpush.msra.mxu0 %v9100
    %9518 = vmatpush.msra.mxu0 %v9099
    %9519 = vmatpush.msra.mxu0 %v9098
    %9520 = vmatpush.msra.mxu0 %v9097
    %9521 = vmatpush.msra.mxu0 %v9096
    %9522 = vmatpush.msra.mxu0 %v9095
    %9523 = vmatpush.msra.mxu0 %v9094
    %9524 = vmatpush.msra.mxu0 %v9093
    %9525 = vmatpush.msra.mxu0 %v9092
    %9526 = vmatpush.msra.mxu0 %v9091
    %9527 = vmatpush.msra.mxu0 %v9090
    %9528 = vmatmul.f32.gmra.mxu0 %v9390
    %v9529 = vpop.f32.mrf.mxu0
    %v9530 = vadd.f32 %v9510, %v9529
    %9531 = vdwg.mxu0
    %9532 = vmatpush.msra.mxu0 %v9121
    %9533 = vmatpush.msra.mxu0 %v9120
    %9534 = vmatpush.msra.mxu0 %v9119
    %9535 = vmatpush.msra.mxu0 %v9118
    %9536 = vmatpush.msra.mxu0 %v9117
    %9537 = vmatpush.msra.mxu0 %v9116
    %9538 = vmatpush.msra.mxu0 %v9115
    %9539 = vmatpush.msra.mxu0 %v9114
    %9540 = vmatpush.msra.mxu0 %v9113
    %9541 = vmatpush.msra.mxu0 %v9112
    %9542 = vmatpush.msra.mxu0 %v9111
    %9543 = vmatpush.msra.mxu0 %v9110
    %9544 = vmatpush.msra.mxu0 %v9109
    %9545 = vmatpush.msra.mxu0 %v9108
    %9546 = vmatpush.msra.mxu0 %v9107
    %9547 = vmatpush.msra.mxu0 %v9106
    %9548 = vmatmul.f32.gmra.mxu0 %v9391
    %v9549 = vpop.f32.mrf.mxu0
    %v9550 = vadd.f32 %v9530, %v9549
    %9551 = vdwg.mxu0
    %v9552 = vmul.f32 %v9470, 0.0078125
    %v9553 = vmul.f32 %v9550, 0.0078125
    %v9554 = vmul.f32 %v9552, %v9552
    %v9555 = vsub.f32 %v9553, %v9554
    %v9556 = vadd.f32 %v9555, 1e-05
    %v9557 = vrsqrt.pop %v9556
    %v9558 = vmul.f32 %v9557, %v9556
    %v9559 = vmul.f32 %v9558, %v9557
    %v9560 = vmul.f32 0.5, %v9559
    %v9561 = vsub.f32 1.5, %v9560
    %v9562 = vmul.f32 %v9557, %v9561
    %vm9563 = vweird.f32 %v9556
    %vm9564 = vweird.f32 %v9557
    %vm9565 = vmor %vm9563, %vm9564
    %v9566 = vsel %vm9565, %v9557, %v9562
    %v9567 = vmul.f32 %v9154, %v9566
    %v9568 = vmul.f32 %v9552, %v9567
    %v9569 = vsub.f32 %v9155, %v9568
    %vm9570 = vcmask 523264
    %v9572 = vsel %vm9570, %v9567, 0
    %9574 = vmatpush.msra.mxu0 0.0
    %9575 = vmatpush.msra.mxu0 0.0
    %9576 = vmatpush.msra.mxu0 0.0
    %9577 = vmatpush.msra.mxu0 0.0
    %9578 = vmatpush.msra.mxu0 0.0
    %9579 = vmatpush.msra.mxu0 0.0
    %9580 = vmatpush.msra.mxu0 0.0
    %9581 = vmatpush.msra.mxu0 0.0
    %9582 = vmatpush.msra.mxu0 %v9150
    %9583 = vmatpush.msra.mxu0 %v9146
    %9584 = vmatpush.msra.mxu0 %v9142
    %9585 = vmatpush.msra.mxu0 %v9138
    %9586 = vmatpush.msra.mxu0 %v9134
    %9587 = vmatpush.msra.mxu0 %v9130
    %9588 = vmatpush.msra.mxu0 %v9126
    %9589 = vmatpush.msra.mxu0 %v9122
    %9590 = vmatmul.f32.gmra.mxu0 %v9572
    %v9591 = vpop.f32.mrf.mxu0
    %v9592 = vadd.f32 0.0, %v9591
    %9593 = vdwg.mxu0
    %9594 = vmatpush.msra.mxu0 0.0
    %9595 = vmatpush.msra.mxu0 0.0
    %9596 = vmatpush.msra.mxu0 0.0
    %9597 = vmatpush.msra.mxu0 0.0
    %9598 = vmatpush.msra.mxu0 0.0
    %9599 = vmatpush.msra.mxu0 0.0
    %9600 = vmatpush.msra.mxu0 0.0
    %9601 = vmatpush.msra.mxu0 0.0
    %9602 = vmatpush.msra.mxu0 %v9151
    %9603 = vmatpush.msra.mxu0 %v9147
    %9604 = vmatpush.msra.mxu0 %v9143
    %9605 = vmatpush.msra.mxu0 %v9139
    %9606 = vmatpush.msra.mxu0 %v9135
    %9607 = vmatpush.msra.mxu0 %v9131
    %9608 = vmatpush.msra.mxu0 %v9127
    %9609 = vmatpush.msra.mxu0 %v9123
    %9610 = vmatmul.f32.gmra.mxu0 %v9572
    %v9611 = vpop.f32.mrf.mxu0
    %v9612 = vadd.f32 0.0, %v9611
    %9613 = vdwg.mxu0
    %9614 = vmatpush.msra.mxu0 0.0
    %9615 = vmatpush.msra.mxu0 0.0
    %9616 = vmatpush.msra.mxu0 0.0
    %9617 = vmatpush.msra.mxu0 0.0
    %9618 = vmatpush.msra.mxu0 0.0
    %9619 = vmatpush.msra.mxu0 0.0
    %9620 = vmatpush.msra.mxu0 0.0
    %9621 = vmatpush.msra.mxu0 0.0
    %9622 = vmatpush.msra.mxu0 %v9152
    %9623 = vmatpush.msra.mxu0 %v9148
    %9624 = vmatpush.msra.mxu0 %v9144
    %9625 = vmatpush.msra.mxu0 %v9140
    %9626 = vmatpush.msra.mxu0 %v9136
    %9627 = vmatpush.msra.mxu0 %v9132
    %9628 = vmatpush.msra.mxu0 %v9128
    %9629 = vmatpush.msra.mxu0 %v9124
    %9630 = vmatmul.f32.gmra.mxu0 %v9572
    %v9631 = vpop.f32.mrf.mxu0
    %v9632 = vadd.f32 0.0, %v9631
    %9633 = vdwg.mxu0
    %9634 = vmatpush.msra.mxu0 0.0
    %9635 = vmatpush.msra.mxu0 0.0
    %9636 = vmatpush.msra.mxu0 0.0
    %9637 = vmatpush.msra.mxu0 0.0
    %9638 = vmatpush.msra.mxu0 0.0
    %9639 = vmatpush.msra.mxu0 0.0
    %9640 = vmatpush.msra.mxu0 0.0
    %9641 = vmatpush.msra.mxu0 0.0
    %9642 = vmatpush.msra.mxu0 %v9153
    %9643 = vmatpush.msra.mxu0 %v9149
    %9644 = vmatpush.msra.mxu0 %v9145
    %9645 = vmatpush.msra.mxu0 %v9141
    %9646 = vmatpush.msra.mxu0 %v9137
    %9647 = vmatpush.msra.mxu0 %v9133
    %9648 = vmatpush.msra.mxu0 %v9129
    %9649 = vmatpush.msra.mxu0 %v9125
    %9650 = vmatmul.f32.gmra.mxu0 %v9572
    %v9651 = vpop.f32.mrf.mxu0
    %v9652 = vadd.f32 0.0, %v9651
    %9653 = vdwg.mxu0
    %v9655 = vsel %vm9570, %v9569, 0
    %9657 = vmatpush.msra.mxu0 0.0
    %9658 = vmatpush.msra.mxu0 0.0
    %9659 = vmatpush.msra.mxu0 0.0
    %9660 = vmatpush.msra.mxu0 0.0
    %9661 = vmatpush.msra.mxu0 0.0
    %9662 = vmatpush.msra.mxu0 0.0
    %9663 = vmatpush.msra.mxu0 0.0
    %9664 = vmatpush.msra.mxu0 0.0
    %9665 = vmatpush.msra.mxu0 %v9150
    %9666 = vmatpush.msra.mxu0 %v9146
    %9667 = vmatpush.msra.mxu0 %v9142
    %9668 = vmatpush.msra.mxu0 %v9138
    %9669 = vmatpush.msra.mxu0 %v9134
    %9670 = vmatpush.msra.mxu0 %v9130
    %9671 = vmatpush.msra.mxu0 %v9126
    %9672 = vmatpush.msra.mxu0 %v9122
    %9673 = vmatmul.f32.gmra.mxu0 %v9655
    %v9674 = vpop.f32.mrf.mxu0
    %v9675 = vadd.f32 0.0, %v9674
    %9676 = vdwg.mxu0
    %9677 = vmatpush.msra.mxu0 0.0
    %9678 = vmatpush.msra.mxu0 0.0
    %9679 = vmatpush.msra.mxu0 0.0
    %9680 = vmatpush.msra.mxu0 0.0
    %9681 = vmatpush.msra.mxu0 0.0
    %9682 = vmatpush.msra.mxu0 0.0
    %9683 = vmatpush.msra.mxu0 0.0
    %9684 = vmatpush.msra.mxu0 0.0
    %9685 = vmatpush.msra.mxu0 %v9151
    %9686 = vmatpush.msra.mxu0 %v9147
    %9687 = vmatpush.msra.mxu0 %v9143
    %9688 = vmatpush.msra.mxu0 %v9139
    %9689 = vmatpush.msra.mxu0 %v9135
    %9690 = vmatpush.msra.mxu0 %v9131
    %9691 = vmatpush.msra.mxu0 %v9127
    %9692 = vmatpush.msra.mxu0 %v9123
    %9693 = vmatmul.f32.gmra.mxu0 %v9655
    %v9694 = vpop.f32.mrf.mxu0
    %v9695 = vadd.f32 0.0, %v9694
    %9696 = vdwg.mxu0
    %9697 = vmatpush.msra.mxu0 0.0
    %9698 = vmatpush.msra.mxu0 0.0
    %9699 = vmatpush.msra.mxu0 0.0
    %9700 = vmatpush.msra.mxu0 0.0
    %9701 = vmatpush.msra.mxu0 0.0
    %9702 = vmatpush.msra.mxu0 0.0
    %9703 = vmatpush.msra.mxu0 0.0
    %9704 = vmatpush.msra.mxu0 0.0
    %9705 = vmatpush.msra.mxu0 %v9152
    %9706 = vmatpush.msra.mxu0 %v9148
    %9707 = vmatpush.msra.mxu0 %v9144
    %9708 = vmatpush.msra.mxu0 %v9140
    %9709 = vmatpush.msra.mxu0 %v9136
    %9710 = vmatpush.msra.mxu0 %v9132
    %9711 = vmatpush.msra.mxu0 %v9128
    %9712 = vmatpush.msra.mxu0 %v9124
    %9713 = vmatmul.f32.gmra.mxu0 %v9655
    %v9714 = vpop.f32.mrf.mxu0
    %v9715 = vadd.f32 0.0, %v9714
    %9716 = vdwg.mxu0
    %9717 = vmatpush.msra.mxu0 0.0
    %9718 = vmatpush.msra.mxu0 0.0
    %9719 = vmatpush.msra.mxu0 0.0
    %9720 = vmatpush.msra.mxu0 0.0
    %9721 = vmatpush.msra.mxu0 0.0
    %9722 = vmatpush.msra.mxu0 0.0
    %9723 = vmatpush.msra.mxu0 0.0
    %9724 = vmatpush.msra.mxu0 0.0
    %9725 = vmatpush.msra.mxu0 %v9153
    %9726 = vmatpush.msra.mxu0 %v9149
    %9727 = vmatpush.msra.mxu0 %v9145
    %9728 = vmatpush.msra.mxu0 %v9141
    %9729 = vmatpush.msra.mxu0 %v9137
    %9730 = vmatpush.msra.mxu0 %v9133
    %9731 = vmatpush.msra.mxu0 %v9129
    %9732 = vmatpush.msra.mxu0 %v9125
    %9733 = vmatmul.f32.gmra.mxu0 %v9655
    %v9734 = vpop.f32.mrf.mxu0
    %v9735 = vadd.f32 0.0, %v9734
    %9736 = vdwg.mxu0
    %v9737 = vperm.slane %v9592, 0
    %v9738 = vperm.slane %v9612, 0
    %v9739 = vperm.slane %v9632, 0
    %v9740 = vperm.slane %v9652, 0
    %v9741 = vmul.f32 %v9026, %v9737
    %v9742 = vmul.f32 %v9027, %v9738
    %v9743 = vmul.f32 %v9028, %v9739
    %v9744 = vmul.f32 %v9029, %v9740
    %v9745 = vmul.f32 %v9030, %v9737
    %v9746 = vmul.f32 %v9031, %v9738
    %v9747 = vmul.f32 %v9032, %v9739
    %v9748 = vmul.f32 %v9033, %v9740
    %v9749 = vmul.f32 %v9034, %v9737
    %v9750 = vmul.f32 %v9035, %v9738
    %v9751 = vmul.f32 %v9036, %v9739
    %v9752 = vmul.f32 %v9037, %v9740
    %v9753 = vmul.f32 %v9038, %v9737
    %v9754 = vmul.f32 %v9039, %v9738
    %v9755 = vmul.f32 %v9040, %v9739
    %v9756 = vmul.f32 %v9041, %v9740
    %v9757 = vperm.slane %v9675, 0
    %v9758 = vperm.slane %v9695, 0
    %v9759 = vperm.slane %v9715, 0
    %v9760 = vperm.slane %v9735, 0
    %v9761 = vadd.f32 %v9741, %v9757
    %v9762 = vadd.f32 %v9742, %v9758
    %v9763 = vadd.f32 %v9743, %v9759
    %v9764 = vadd.f32 %v9744, %v9760
    %v9765 = vadd.f32 %v9745, %v9757
    %v9766 = vadd.f32 %v9746, %v9758
    %v9767 = vadd.f32 %v9747, %v9759
    %v9768 = vadd.f32 %v9748, %v9760
    %v9769 = vadd.f32 %v9749, %v9757
    %v9770 = vadd.f32 %v9750, %v9758
    %v9771 = vadd.f32 %v9751, %v9759
    %v9772 = vadd.f32 %v9752, %v9760
    %v9773 = vadd.f32 %v9753, %v9757
    %v9774 = vadd.f32 %v9754, %v9758
    %v9775 = vadd.f32 %v9755, %v9759
    %v9776 = vadd.f32 %v9756, %v9760
    %v9777 = vpack.c.bf16 %v9765, %v9761
    %v9778 = vpack.c.bf16 %v9766, %v9762
    %v9779 = vpack.c.bf16 %v9767, %v9763
    %v9780 = vpack.c.bf16 %v9768, %v9764
    %v9781 = vpack.c.bf16 %v9773, %v9769
    %v9782 = vpack.c.bf16 %v9774, %v9770
    %v9783 = vpack.c.bf16 %v9775, %v9771
    %v9784 = vpack.c.bf16 %v9776, %v9772
    %v9785 = vmul.f32 %v9042, %v9737
    %v9786 = vmul.f32 %v9043, %v9738
    %v9787 = vmul.f32 %v9044, %v9739
    %v9788 = vmul.f32 %v9045, %v9740
    %v9789 = vmul.f32 %v9046, %v9737
    %v9790 = vmul.f32 %v9047, %v9738
    %v9791 = vmul.f32 %v9048, %v9739
    %v9792 = vmul.f32 %v9049, %v9740
    %v9793 = vmul.f32 %v9050, %v9737
    %v9794 = vmul.f32 %v9051, %v9738
    %v9795 = vmul.f32 %v9052, %v9739
    %v9796 = vmul.f32 %v9053, %v9740
    %v9797 = vmul.f32 %v9054, %v9737
    %v9798 = vmul.f32 %v9055, %v9738
    %v9799 = vmul.f32 %v9056, %v9739
    %v9800 = vmul.f32 %v9057, %v9740
    %v9801 = vadd.f32 %v9785, %v9757
    %v9802 = vadd.f32 %v9786, %v9758
    %v9803 = vadd.f32 %v9787, %v9759
    %v9804 = vadd.f32 %v9788, %v9760
    %v9805 = vadd.f32 %v9789, %v9757
    %v9806 = vadd.f32 %v9790, %v9758
    %v9807 = vadd.f32 %v9791, %v9759
    %v9808 = vadd.f32 %v9792, %v9760
    %v9809 = vadd.f32 %v9793, %v9757
    %v9810 = vadd.f32 %v9794, %v9758
    %v9811 = vadd.f32 %v9795, %v9759
    %v9812 = vadd.f32 %v9796, %v9760
    %v9813 = vadd.f32 %v9797, %v9757
    %v9814 = vadd.f32 %v9798, %v9758
    %v9815 = vadd.f32 %v9799, %v9759
    %v9816 = vadd.f32 %v9800, %v9760
    %v9817 = vpack.c.bf16 %v9805, %v9801
    %v9818 = vpack.c.bf16 %v9806, %v9802
    %v9819 = vpack.c.bf16 %v9807, %v9803
    %v9820 = vpack.c.bf16 %v9808, %v9804
    %v9821 = vpack.c.bf16 %v9813, %v9809
    %v9822 = vpack.c.bf16 %v9814, %v9810
    %v9823 = vpack.c.bf16 %v9815, %v9811
    %v9824 = vpack.c.bf16 %v9816, %v9812
    %s9825 = scalar_lea.vmem [#allocation12], 3
    %v9826 = vld [vmem:[%s9825] ss:$8 sm:$0x3]
    %v9891 = vunpack.c.l.b16 %v1112
    %v9892 = vunpack.c.h.b16 %v1112
    %v9893 = vunpack.c.l.b16 %v1113
    %v9894 = vunpack.c.h.b16 %v1113
    %v9895 = vunpack.c.l.b16 %v1114
    %v9896 = vunpack.c.h.b16 %v1114
    %v9897 = vunpack.c.l.b16 %v1115
    %v9898 = vunpack.c.h.b16 %v1115
    %v9899 = vunpack.c.l.b16 %v1116
    %v9900 = vunpack.c.h.b16 %v1116
    %v9901 = vunpack.c.l.b16 %v1117
    %v9902 = vunpack.c.h.b16 %v1117
    %v9903 = vunpack.c.l.b16 %v1118
    %v9904 = vunpack.c.h.b16 %v1118
    %v9905 = vunpack.c.l.b16 %v1119
    %v9906 = vunpack.c.h.b16 %v1119
    %v9907 = vunpack.c.l.b16 %v1120
    %v9908 = vunpack.c.h.b16 %v1120
    %v9909 = vunpack.c.l.b16 %v1121
    %v9910 = vunpack.c.h.b16 %v1121
    %v9911 = vunpack.c.l.b16 %v1122
    %v9912 = vunpack.c.h.b16 %v1122
    %v9913 = vunpack.c.l.b16 %v1123
    %v9914 = vunpack.c.h.b16 %v1123
    %v9915 = vunpack.c.l.b16 %v1124
    %v9916 = vunpack.c.h.b16 %v1124
    %v9917 = vunpack.c.l.b16 %v1125
    %v9918 = vunpack.c.h.b16 %v1125
    %v9919 = vunpack.c.l.b16 %v1126
    %v9920 = vunpack.c.h.b16 %v1126
    %v9921 = vunpack.c.l.b16 %v1127
    %v9922 = vunpack.c.h.b16 %v1127
    %v9923 = vunpack.c.l.b16 %v1128
    %v9924 = vunpack.c.h.b16 %v1128
    %v9925 = vunpack.c.l.b16 %v1129
    %v9926 = vunpack.c.h.b16 %v1129
    %v9927 = vunpack.c.l.b16 %v1130
    %v9928 = vunpack.c.h.b16 %v1130
    %v9929 = vunpack.c.l.b16 %v1131
    %v9930 = vunpack.c.h.b16 %v1131
    %v9931 = vunpack.c.l.b16 %v1132
    %v9932 = vunpack.c.h.b16 %v1132
    %v9933 = vunpack.c.l.b16 %v1133
    %v9934 = vunpack.c.h.b16 %v1133
    %v9935 = vunpack.c.l.b16 %v1134
    %v9936 = vunpack.c.h.b16 %v1134
    %v9937 = vunpack.c.l.b16 %v1135
    %v9938 = vunpack.c.h.b16 %v1135
    %v9939 = vunpack.c.l.b16 %v1136
    %v9940 = vunpack.c.h.b16 %v1136
    %v9941 = vunpack.c.l.b16 %v1137
    %v9942 = vunpack.c.h.b16 %v1137
    %v9943 = vunpack.c.l.b16 %v1138
    %v9944 = vunpack.c.h.b16 %v1138
    %v9945 = vunpack.c.l.b16 %v1139
    %v9946 = vunpack.c.h.b16 %v1139
    %v9947 = vunpack.c.l.b16 %v1140
    %v9948 = vunpack.c.h.b16 %v1140
    %v9949 = vunpack.c.l.b16 %v1141
    %v9950 = vunpack.c.h.b16 %v1141
    %v9951 = vunpack.c.l.b16 %v1142
    %v9952 = vunpack.c.h.b16 %v1142
    %v9953 = vunpack.c.l.b16 %v1143
    %v9954 = vunpack.c.h.b16 %v1143
    %v9955 = vunpack.c.l.b16 %v1144
    %v9956 = vunpack.c.h.b16 %v1144
    %v9957 = vunpack.c.l.b16 %v1145
    %v9958 = vunpack.c.h.b16 %v1145
    %v9959 = vunpack.c.l.b16 %v1146
    %v9960 = vunpack.c.h.b16 %v1146
    %v9961 = vunpack.c.l.b16 %v1147
    %v9962 = vunpack.c.h.b16 %v1147
    %v9963 = vunpack.c.l.b16 %v1148
    %v9964 = vunpack.c.h.b16 %v1148
    %v9965 = vunpack.c.l.b16 %v1149
    %v9966 = vunpack.c.h.b16 %v1149
    %v9967 = vunpack.c.l.b16 %v1150
    %v9968 = vunpack.c.h.b16 %v1150
    %v9969 = vunpack.c.l.b16 %v1151
    %v9970 = vunpack.c.h.b16 %v1151
    %v9971 = vunpack.c.l.b16 %v1152
    %v9972 = vunpack.c.h.b16 %v1152
    %v9973 = vunpack.c.l.b16 %v1153
    %v9974 = vunpack.c.h.b16 %v1153
    %v9975 = vunpack.c.l.b16 %v1154
    %v9976 = vunpack.c.h.b16 %v1154
    %v9977 = vunpack.c.l.b16 %v1155
    %v9978 = vunpack.c.h.b16 %v1155
    %v9979 = vunpack.c.l.b16 %v1156
    %v9980 = vunpack.c.h.b16 %v1156
    %v9981 = vunpack.c.l.b16 %v1157
    %v9982 = vunpack.c.h.b16 %v1157
    %v9983 = vunpack.c.l.b16 %v1158
    %v9984 = vunpack.c.h.b16 %v1158
    %v9985 = vunpack.c.l.b16 %v1159
    %v9986 = vunpack.c.h.b16 %v1159
    %v9987 = vunpack.c.l.b16 %v1160
    %v9988 = vunpack.c.h.b16 %v1160
    %v9989 = vunpack.c.l.b16 %v1161
    %v9990 = vunpack.c.h.b16 %v1161
    %v9991 = vunpack.c.l.b16 %v1162
    %v9992 = vunpack.c.h.b16 %v1162
    %v9993 = vunpack.c.l.b16 %v1163
    %v9994 = vunpack.c.h.b16 %v1163
    %v9995 = vunpack.c.l.b16 %v1164
    %v9996 = vunpack.c.h.b16 %v1164
    %v9997 = vunpack.c.l.b16 %v1165
    %v9998 = vunpack.c.h.b16 %v1165
    %v9999 = vunpack.c.l.b16 %v1166
    %v10000 = vunpack.c.h.b16 %v1166
    %v10001 = vunpack.c.l.b16 %v1167
    %v10002 = vunpack.c.h.b16 %v1167
    %v10003 = vunpack.c.l.b16 %v1168
    %v10004 = vunpack.c.h.b16 %v1168
    %v10005 = vunpack.c.l.b16 %v1169
    %v10006 = vunpack.c.h.b16 %v1169
    %v10007 = vunpack.c.l.b16 %v1170
    %v10008 = vunpack.c.h.b16 %v1170
    %v10009 = vunpack.c.l.b16 %v1171
    %v10010 = vunpack.c.h.b16 %v1171
    %v10011 = vunpack.c.l.b16 %v1172
    %v10012 = vunpack.c.h.b16 %v1172
    %v10013 = vunpack.c.l.b16 %v1173
    %v10014 = vunpack.c.h.b16 %v1173
    %v10015 = vunpack.c.l.b16 %v1174
    %v10016 = vunpack.c.h.b16 %v1174
    %v10017 = vunpack.c.l.b16 %v1175
    %v10018 = vunpack.c.h.b16 %v1175
    %v10019 = vpack.c.b16 %v9893, %v9891
    %v10020 = vpack.c.b16 %v9894, %v9892
    %v10021 = vpack.c.b16 %v9897, %v9895
    %v10022 = vpack.c.b16 %v9898, %v9896
    %v10023 = vpack.c.b16 %v9901, %v9899
    %v10024 = vpack.c.b16 %v9902, %v9900
    %v10025 = vpack.c.b16 %v9905, %v9903
    %v10026 = vpack.c.b16 %v9906, %v9904
    %v10027 = vpack.c.b16 %v9909, %v9907
    %v10028 = vpack.c.b16 %v9910, %v9908
    %v10029 = vpack.c.b16 %v9913, %v9911
    %v10030 = vpack.c.b16 %v9914, %v9912
    %v10031 = vpack.c.b16 %v9917, %v9915
    %v10032 = vpack.c.b16 %v9918, %v9916
    %v10033 = vpack.c.b16 %v9921, %v9919
    %v10034 = vpack.c.b16 %v9922, %v9920
    %v10035 = vpack.c.b16 %v9925, %v9923
    %v10036 = vpack.c.b16 %v9926, %v9924
    %v10037 = vpack.c.b16 %v9929, %v9927
    %v10038 = vpack.c.b16 %v9930, %v9928
    %v10039 = vpack.c.b16 %v9933, %v9931
    %v10040 = vpack.c.b16 %v9934, %v9932
    %v10041 = vpack.c.b16 %v9937, %v9935
    %v10042 = vpack.c.b16 %v9938, %v9936
    %v10043 = vpack.c.b16 %v9941, %v9939
    %v10044 = vpack.c.b16 %v9942, %v9940
    %v10045 = vpack.c.b16 %v9945, %v9943
    %v10046 = vpack.c.b16 %v9946, %v9944
    %v10047 = vpack.c.b16 %v9949, %v9947
    %v10048 = vpack.c.b16 %v9950, %v9948
    %v10049 = vpack.c.b16 %v9953, %v9951
    %v10050 = vpack.c.b16 %v9954, %v9952
    %v10051 = vpack.c.b16 %v9957, %v9955
    %v10052 = vpack.c.b16 %v9958, %v9956
    %v10053 = vpack.c.b16 %v9961, %v9959
    %v10054 = vpack.c.b16 %v9962, %v9960
    %v10055 = vpack.c.b16 %v9965, %v9963
    %v10056 = vpack.c.b16 %v9966, %v9964
    %v10057 = vpack.c.b16 %v9969, %v9967
    %v10058 = vpack.c.b16 %v9970, %v9968
    %v10059 = vpack.c.b16 %v9973, %v9971
    %v10060 = vpack.c.b16 %v9974, %v9972
    %v10061 = vpack.c.b16 %v9977, %v9975
    %v10062 = vpack.c.b16 %v9978, %v9976
    %v10063 = vpack.c.b16 %v9981, %v9979
    %v10064 = vpack.c.b16 %v9982, %v9980
    %v10065 = vpack.c.b16 %v9985, %v9983
    %v10066 = vpack.c.b16 %v9986, %v9984
    %v10067 = vpack.c.b16 %v9989, %v9987
    %v10068 = vpack.c.b16 %v9990, %v9988
    %v10069 = vpack.c.b16 %v9993, %v9991
    %v10070 = vpack.c.b16 %v9994, %v9992
    %v10071 = vpack.c.b16 %v9997, %v9995
    %v10072 = vpack.c.b16 %v9998, %v9996
    %v10073 = vpack.c.b16 %v10001, %v9999
    %v10074 = vpack.c.b16 %v10002, %v10000
    %v10075 = vpack.c.b16 %v10005, %v10003
    %v10076 = vpack.c.b16 %v10006, %v10004
    %v10077 = vpack.c.b16 %v10009, %v10007
    %v10078 = vpack.c.b16 %v10010, %v10008
    %v10079 = vpack.c.b16 %v10013, %v10011
    %v10080 = vpack.c.b16 %v10014, %v10012
    %v10081 = vpack.c.b16 %v10017, %v10015
    %v10082 = vpack.c.b16 %v10018, %v10016
    %10147 = vmatpush.bf16.msra.mxu0 %v10033
    %10148 = vmatpush.bf16.msra.mxu0 %v10031
    %10149 = vmatpush.bf16.msra.mxu0 %v10029
    %10150 = vmatpush.bf16.msra.mxu0 %v10027
    %10151 = vmatpush.bf16.msra.mxu0 %v10025
    %10152 = vmatpush.bf16.msra.mxu0 %v10023
    %10153 = vmatpush.bf16.msra.mxu0 %v10021
    %10154 = vmatpush.bf16.msra.mxu0 %v10019
    %10155 = vmatmul.bf16.gmra.mxu0 %v9817
    %v10156 = vpop.f32.mrf.mxu0
    %v10157 = vadd.f32 0.0, %v10156
    %v10158 = vpop.f32.mrf.mxu0
    %v10159 = vadd.f32 0.0, %v10158
    %10160 = vmatmul.bf16.gmra.mxu0 %v9821
    %v10161 = vpop.f32.mrf.mxu0
    %v10162 = vadd.f32 0.0, %v10161
    %v10163 = vpop.f32.mrf.mxu0
    %v10164 = vadd.f32 0.0, %v10163
    %10165 = vdwg.mxu0
    %10166 = vmatpush.bf16.msra.mxu0 %v10049
    %10167 = vmatpush.bf16.msra.mxu0 %v10047
    %10168 = vmatpush.bf16.msra.mxu0 %v10045
    %10169 = vmatpush.bf16.msra.mxu0 %v10043
    %10170 = vmatpush.bf16.msra.mxu0 %v10041
    %10171 = vmatpush.bf16.msra.mxu0 %v10039
    %10172 = vmatpush.bf16.msra.mxu0 %v10037
    %10173 = vmatpush.bf16.msra.mxu0 %v10035
    %10174 = vmatmul.bf16.gmra.mxu0 %v9818
    %v10175 = vpop.f32.mrf.mxu0
    %v10176 = vadd.f32 %v10157, %v10175
    %v10177 = vpop.f32.mrf.mxu0
    %v10178 = vadd.f32 %v10159, %v10177
    %10179 = vmatmul.bf16.gmra.mxu0 %v9822
    %v10180 = vpop.f32.mrf.mxu0
    %v10181 = vadd.f32 %v10162, %v10180
    %v10182 = vpop.f32.mrf.mxu0
    %v10183 = vadd.f32 %v10164, %v10182
    %10184 = vdwg.mxu0
    %10185 = vmatpush.bf16.msra.mxu0 %v10065
    %10186 = vmatpush.bf16.msra.mxu0 %v10063
    %10187 = vmatpush.bf16.msra.mxu0 %v10061
    %10188 = vmatpush.bf16.msra.mxu0 %v10059
    %10189 = vmatpush.bf16.msra.mxu0 %v10057
    %10190 = vmatpush.bf16.msra.mxu0 %v10055
    %10191 = vmatpush.bf16.msra.mxu0 %v10053
    %10192 = vmatpush.bf16.msra.mxu0 %v10051
    %10193 = vmatmul.bf16.gmra.mxu0 %v9819
    %v10194 = vpop.f32.mrf.mxu0
    %v10195 = vadd.f32 %v10176, %v10194
    %v10196 = vpop.f32.mrf.mxu0
    %v10197 = vadd.f32 %v10178, %v10196
    %10198 = vmatmul.bf16.gmra.mxu0 %v9823
    %v10199 = vpop.f32.mrf.mxu0
    %v10200 = vadd.f32 %v10181, %v10199
    %v10201 = vpop.f32.mrf.mxu0
    %v10202 = vadd.f32 %v10183, %v10201
    %10203 = vdwg.mxu0
    %10204 = vmatpush.bf16.msra.mxu0 %v10081
    %10205 = vmatpush.bf16.msra.mxu0 %v10079
    %10206 = vmatpush.bf16.msra.mxu0 %v10077
    %10207 = vmatpush.bf16.msra.mxu0 %v10075
    %10208 = vmatpush.bf16.msra.mxu0 %v10073
    %10209 = vmatpush.bf16.msra.mxu0 %v10071
    %10210 = vmatpush.bf16.msra.mxu0 %v10069
    %10211 = vmatpush.bf16.msra.mxu0 %v10067
    %10212 = vmatmul.bf16.gmra.mxu0 %v9820
    %v10213 = vpop.f32.mrf.mxu0
    %v10214 = vadd.f32 %v10195, %v10213
    %v10215 = vpop.f32.mrf.mxu0
    %v10216 = vadd.f32 %v10197, %v10215
    %10217 = vmatmul.bf16.gmra.mxu0 %v9824
    %v10218 = vpop.f32.mrf.mxu0
    %v10219 = vadd.f32 %v10200, %v10218
    %v10220 = vpop.f32.mrf.mxu0
    %v10221 = vadd.f32 %v10202, %v10220
    %10222 = vdwg.mxu0
    %10223 = vmatpush.bf16.msra.mxu0 %v10034
    %10224 = vmatpush.bf16.msra.mxu0 %v10032
    %10225 = vmatpush.bf16.msra.mxu0 %v10030
    %10226 = vmatpush.bf16.msra.mxu0 %v10028
    %10227 = vmatpush.bf16.msra.mxu0 %v10026
    %10228 = vmatpush.bf16.msra.mxu0 %v10024
    %10229 = vmatpush.bf16.msra.mxu0 %v10022
    %10230 = vmatpush.bf16.msra.mxu0 %v10020
    %10231 = vmatmul.bf16.gmra.mxu0 %v9817
    %v10232 = vpop.f32.mrf.mxu0
    %v10233 = vadd.f32 0.0, %v10232
    %v10234 = vpop.f32.mrf.mxu0
    %v10235 = vadd.f32 0.0, %v10234
    %10236 = vmatmul.bf16.gmra.mxu0 %v9821
    %v10237 = vpop.f32.mrf.mxu0
    %v10238 = vadd.f32 0.0, %v10237
    %v10239 = vpop.f32.mrf.mxu0
    %v10240 = vadd.f32 0.0, %v10239
    %10241 = vdwg.mxu0
    %10242 = vmatpush.bf16.msra.mxu0 %v10050
    %10243 = vmatpush.bf16.msra.mxu0 %v10048
    %10244 = vmatpush.bf16.msra.mxu0 %v10046
    %10245 = vmatpush.bf16.msra.mxu0 %v10044
    %10246 = vmatpush.bf16.msra.mxu0 %v10042
    %10247 = vmatpush.bf16.msra.mxu0 %v10040
    %10248 = vmatpush.bf16.msra.mxu0 %v10038
    %10249 = vmatpush.bf16.msra.mxu0 %v10036
    %10250 = vmatmul.bf16.gmra.mxu0 %v9818
    %v10251 = vpop.f32.mrf.mxu0
    %v10252 = vadd.f32 %v10233, %v10251
    %v10253 = vpop.f32.mrf.mxu0
    %v10254 = vadd.f32 %v10235, %v10253
    %10255 = vmatmul.bf16.gmra.mxu0 %v9822
    %v10256 = vpop.f32.mrf.mxu0
    %v10257 = vadd.f32 %v10238, %v10256
    %v10258 = vpop.f32.mrf.mxu0
    %v10259 = vadd.f32 %v10240, %v10258
    %10260 = vdwg.mxu0
    %10261 = vmatpush.bf16.msra.mxu0 %v10066
    %10262 = vmatpush.bf16.msra.mxu0 %v10064
    %10263 = vmatpush.bf16.msra.mxu0 %v10062
    %10264 = vmatpush.bf16.msra.mxu0 %v10060
    %10265 = vmatpush.bf16.msra.mxu0 %v10058
    %10266 = vmatpush.bf16.msra.mxu0 %v10056
    %10267 = vmatpush.bf16.msra.mxu0 %v10054
    %10268 = vmatpush.bf16.msra.mxu0 %v10052
    %10269 = vmatmul.bf16.gmra.mxu0 %v9819
    %v10270 = vpop.f32.mrf.mxu0
    %v10271 = vadd.f32 %v10252, %v10270
    %v10272 = vpop.f32.mrf.mxu0
    %v10273 = vadd.f32 %v10254, %v10272
    %10274 = vmatmul.bf16.gmra.mxu0 %v9823
    %v10275 = vpop.f32.mrf.mxu0
    %v10276 = vadd.f32 %v10257, %v10275
    %v10277 = vpop.f32.mrf.mxu0
    %v10278 = vadd.f32 %v10259, %v10277
    %10279 = vdwg.mxu0
    %10280 = vmatpush.bf16.msra.mxu0 %v10082
    %10281 = vmatpush.bf16.msra.mxu0 %v10080
    %10282 = vmatpush.bf16.msra.mxu0 %v10078
    %10283 = vmatpush.bf16.msra.mxu0 %v10076
    %10284 = vmatpush.bf16.msra.mxu0 %v10074
    %10285 = vmatpush.bf16.msra.mxu0 %v10072
    %10286 = vmatpush.bf16.msra.mxu0 %v10070
    %10287 = vmatpush.bf16.msra.mxu0 %v10068
    %10288 = vmatmul.bf16.gmra.mxu0 %v9820
    %v10289 = vpop.f32.mrf.mxu0
    %v10290 = vadd.f32 %v10271, %v10289
    %v10291 = vpop.f32.mrf.mxu0
    %v10292 = vadd.f32 %v10273, %v10291
    %10293 = vmatmul.bf16.gmra.mxu0 %v9824
    %v10294 = vpop.f32.mrf.mxu0
    %v10295 = vadd.f32 %v10276, %v10294
    %v10296 = vpop.f32.mrf.mxu0
    %v10297 = vadd.f32 %v10278, %v10296
    %10298 = vdwg.mxu0
    %v10363 = vunpack.c.l.b16 %v1047
    %v10364 = vunpack.c.h.b16 %v1047
    %v10365 = vunpack.c.l.b16 %v1048
    %v10366 = vunpack.c.h.b16 %v1048
    %v10367 = vunpack.c.l.b16 %v1049
    %v10368 = vunpack.c.h.b16 %v1049
    %v10369 = vunpack.c.l.b16 %v1050
    %v10370 = vunpack.c.h.b16 %v1050
    %v10371 = vunpack.c.l.b16 %v1051
    %v10372 = vunpack.c.h.b16 %v1051
    %v10373 = vunpack.c.l.b16 %v1052
    %v10374 = vunpack.c.h.b16 %v1052
    %v10375 = vunpack.c.l.b16 %v1053
    %v10376 = vunpack.c.h.b16 %v1053
    %v10377 = vunpack.c.l.b16 %v1054
    %v10378 = vunpack.c.h.b16 %v1054
    %v10379 = vunpack.c.l.b16 %v1055
    %v10380 = vunpack.c.h.b16 %v1055
    %v10381 = vunpack.c.l.b16 %v1056
    %v10382 = vunpack.c.h.b16 %v1056
    %v10383 = vunpack.c.l.b16 %v1057
    %v10384 = vunpack.c.h.b16 %v1057
    %v10385 = vunpack.c.l.b16 %v1058
    %v10386 = vunpack.c.h.b16 %v1058
    %v10387 = vunpack.c.l.b16 %v1059
    %v10388 = vunpack.c.h.b16 %v1059
    %v10389 = vunpack.c.l.b16 %v1060
    %v10390 = vunpack.c.h.b16 %v1060
    %v10391 = vunpack.c.l.b16 %v1061
    %v10392 = vunpack.c.h.b16 %v1061
    %v10393 = vunpack.c.l.b16 %v1062
    %v10394 = vunpack.c.h.b16 %v1062
    %v10395 = vunpack.c.l.b16 %v1063
    %v10396 = vunpack.c.h.b16 %v1063
    %v10397 = vunpack.c.l.b16 %v1064
    %v10398 = vunpack.c.h.b16 %v1064
    %v10399 = vunpack.c.l.b16 %v1065
    %v10400 = vunpack.c.h.b16 %v1065
    %v10401 = vunpack.c.l.b16 %v1066
    %v10402 = vunpack.c.h.b16 %v1066
    %v10403 = vunpack.c.l.b16 %v1067
    %v10404 = vunpack.c.h.b16 %v1067
    %v10405 = vunpack.c.l.b16 %v1068
    %v10406 = vunpack.c.h.b16 %v1068
    %v10407 = vunpack.c.l.b16 %v1069
    %v10408 = vunpack.c.h.b16 %v1069
    %v10409 = vunpack.c.l.b16 %v1070
    %v10410 = vunpack.c.h.b16 %v1070
    %v10411 = vunpack.c.l.b16 %v1071
    %v10412 = vunpack.c.h.b16 %v1071
    %v10413 = vunpack.c.l.b16 %v1072
    %v10414 = vunpack.c.h.b16 %v1072
    %v10415 = vunpack.c.l.b16 %v1073
    %v10416 = vunpack.c.h.b16 %v1073
    %v10417 = vunpack.c.l.b16 %v1074
    %v10418 = vunpack.c.h.b16 %v1074
    %v10419 = vunpack.c.l.b16 %v1075
    %v10420 = vunpack.c.h.b16 %v1075
    %v10421 = vunpack.c.l.b16 %v1076
    %v10422 = vunpack.c.h.b16 %v1076
    %v10423 = vunpack.c.l.b16 %v1077
    %v10424 = vunpack.c.h.b16 %v1077
    %v10425 = vunpack.c.l.b16 %v1078
    %v10426 = vunpack.c.h.b16 %v1078
    %v10427 = vunpack.c.l.b16 %v1079
    %v10428 = vunpack.c.h.b16 %v1079
    %v10429 = vunpack.c.l.b16 %v1080
    %v10430 = vunpack.c.h.b16 %v1080
    %v10431 = vunpack.c.l.b16 %v1081
    %v10432 = vunpack.c.h.b16 %v1081
    %v10433 = vunpack.c.l.b16 %v1082
    %v10434 = vunpack.c.h.b16 %v1082
    %v10435 = vunpack.c.l.b16 %v1083
    %v10436 = vunpack.c.h.b16 %v1083
    %v10437 = vunpack.c.l.b16 %v1084
    %v10438 = vunpack.c.h.b16 %v1084
    %v10439 = vunpack.c.l.b16 %v1085
    %v10440 = vunpack.c.h.b16 %v1085
    %v10441 = vunpack.c.l.b16 %v1086
    %v10442 = vunpack.c.h.b16 %v1086
    %v10443 = vunpack.c.l.b16 %v1087
    %v10444 = vunpack.c.h.b16 %v1087
    %v10445 = vunpack.c.l.b16 %v1088
    %v10446 = vunpack.c.h.b16 %v1088
    %v10447 = vunpack.c.l.b16 %v1089
    %v10448 = vunpack.c.h.b16 %v1089
    %v10449 = vunpack.c.l.b16 %v1090
    %v10450 = vunpack.c.h.b16 %v1090
    %v10451 = vunpack.c.l.b16 %v1091
    %v10452 = vunpack.c.h.b16 %v1091
    %v10453 = vunpack.c.l.b16 %v1092
    %v10454 = vunpack.c.h.b16 %v1092
    %v10455 = vunpack.c.l.b16 %v1093
    %v10456 = vunpack.c.h.b16 %v1093
    %v10457 = vunpack.c.l.b16 %v1094
    %v10458 = vunpack.c.h.b16 %v1094
    %v10459 = vunpack.c.l.b16 %v1095
    %v10460 = vunpack.c.h.b16 %v1095
    %v10461 = vunpack.c.l.b16 %v1096
    %v10462 = vunpack.c.h.b16 %v1096
    %v10463 = vunpack.c.l.b16 %v1097
    %v10464 = vunpack.c.h.b16 %v1097
    %v10465 = vunpack.c.l.b16 %v1098
    %v10466 = vunpack.c.h.b16 %v1098
    %v10467 = vunpack.c.l.b16 %v1099
    %v10468 = vunpack.c.h.b16 %v1099
    %v10469 = vunpack.c.l.b16 %v1100
    %v10470 = vunpack.c.h.b16 %v1100
    %v10471 = vunpack.c.l.b16 %v1101
    %v10472 = vunpack.c.h.b16 %v1101
    %v10473 = vunpack.c.l.b16 %v1102
    %v10474 = vunpack.c.h.b16 %v1102
    %v10475 = vunpack.c.l.b16 %v1103
    %v10476 = vunpack.c.h.b16 %v1103
    %v10477 = vunpack.c.l.b16 %v1104
    %v10478 = vunpack.c.h.b16 %v1104
    %v10479 = vunpack.c.l.b16 %v1105
    %v10480 = vunpack.c.h.b16 %v1105
    %v10481 = vunpack.c.l.b16 %v1106
    %v10482 = vunpack.c.h.b16 %v1106
    %v10483 = vunpack.c.l.b16 %v1107
    %v10484 = vunpack.c.h.b16 %v1107
    %v10485 = vunpack.c.l.b16 %v1108
    %v10486 = vunpack.c.h.b16 %v1108
    %v10487 = vunpack.c.l.b16 %v1109
    %v10488 = vunpack.c.h.b16 %v1109
    %v10489 = vunpack.c.l.b16 %v1110
    %v10490 = vunpack.c.h.b16 %v1110
    %v10491 = vpack.c.b16 %v10365, %v10363
    %v10492 = vpack.c.b16 %v10366, %v10364
    %v10493 = vpack.c.b16 %v10369, %v10367
    %v10494 = vpack.c.b16 %v10370, %v10368
    %v10495 = vpack.c.b16 %v10373, %v10371
    %v10496 = vpack.c.b16 %v10374, %v10372
    %v10497 = vpack.c.b16 %v10377, %v10375
    %v10498 = vpack.c.b16 %v10378, %v10376
    %v10499 = vpack.c.b16 %v10381, %v10379
    %v10500 = vpack.c.b16 %v10382, %v10380
    %v10501 = vpack.c.b16 %v10385, %v10383
    %v10502 = vpack.c.b16 %v10386, %v10384
    %v10503 = vpack.c.b16 %v10389, %v10387
    %v10504 = vpack.c.b16 %v10390, %v10388
    %v10505 = vpack.c.b16 %v10393, %v10391
    %v10506 = vpack.c.b16 %v10394, %v10392
    %v10507 = vpack.c.b16 %v10397, %v10395
    %v10508 = vpack.c.b16 %v10398, %v10396
    %v10509 = vpack.c.b16 %v10401, %v10399
    %v10510 = vpack.c.b16 %v10402, %v10400
    %v10511 = vpack.c.b16 %v10405, %v10403
    %v10512 = vpack.c.b16 %v10406, %v10404
    %v10513 = vpack.c.b16 %v10409, %v10407
    %v10514 = vpack.c.b16 %v10410, %v10408
    %v10515 = vpack.c.b16 %v10413, %v10411
    %v10516 = vpack.c.b16 %v10414, %v10412
    %v10517 = vpack.c.b16 %v10417, %v10415
    %v10518 = vpack.c.b16 %v10418, %v10416
    %v10519 = vpack.c.b16 %v10421, %v10419
    %v10520 = vpack.c.b16 %v10422, %v10420
    %v10521 = vpack.c.b16 %v10425, %v10423
    %v10522 = vpack.c.b16 %v10426, %v10424
    %v10523 = vpack.c.b16 %v10429, %v10427
    %v10524 = vpack.c.b16 %v10430, %v10428
    %v10525 = vpack.c.b16 %v10433, %v10431
    %v10526 = vpack.c.b16 %v10434, %v10432
    %v10527 = vpack.c.b16 %v10437, %v10435
    %v10528 = vpack.c.b16 %v10438, %v10436
    %v10529 = vpack.c.b16 %v10441, %v10439
    %v10530 = vpack.c.b16 %v10442, %v10440
    %v10531 = vpack.c.b16 %v10445, %v10443
    %v10532 = vpack.c.b16 %v10446, %v10444
    %v10533 = vpack.c.b16 %v10449, %v10447
    %v10534 = vpack.c.b16 %v10450, %v10448
    %v10535 = vpack.c.b16 %v10453, %v10451
    %v10536 = vpack.c.b16 %v10454, %v10452
    %v10537 = vpack.c.b16 %v10457, %v10455
    %v10538 = vpack.c.b16 %v10458, %v10456
    %v10539 = vpack.c.b16 %v10461, %v10459
    %v10540 = vpack.c.b16 %v10462, %v10460
    %v10541 = vpack.c.b16 %v10465, %v10463
    %v10542 = vpack.c.b16 %v10466, %v10464
    %v10543 = vpack.c.b16 %v10469, %v10467
    %v10544 = vpack.c.b16 %v10470, %v10468
    %v10545 = vpack.c.b16 %v10473, %v10471
    %v10546 = vpack.c.b16 %v10474, %v10472
    %v10547 = vpack.c.b16 %v10477, %v10475
    %v10548 = vpack.c.b16 %v10478, %v10476
    %v10549 = vpack.c.b16 %v10481, %v10479
    %v10550 = vpack.c.b16 %v10482, %v10480
    %v10551 = vpack.c.b16 %v10485, %v10483
    %v10552 = vpack.c.b16 %v10486, %v10484
    %v10553 = vpack.c.b16 %v10489, %v10487
    %v10554 = vpack.c.b16 %v10490, %v10488
    %10619 = vmatpush.bf16.msra.mxu0 %v10505
    %10620 = vmatpush.bf16.msra.mxu0 %v10503
    %10621 = vmatpush.bf16.msra.mxu0 %v10501
    %10622 = vmatpush.bf16.msra.mxu0 %v10499
    %10623 = vmatpush.bf16.msra.mxu0 %v10497
    %10624 = vmatpush.bf16.msra.mxu0 %v10495
    %10625 = vmatpush.bf16.msra.mxu0 %v10493
    %10626 = vmatpush.bf16.msra.mxu0 %v10491
    %10627 = vmatmul.bf16.gmra.mxu0 %v9777
    %v10628 = vpop.f32.mrf.mxu0
    %v10629 = vadd.f32 %v10214, %v10628
    %v10630 = vpop.f32.mrf.mxu0
    %v10631 = vadd.f32 %v10216, %v10630
    %10632 = vmatmul.bf16.gmra.mxu0 %v9781
    %v10633 = vpop.f32.mrf.mxu0
    %v10634 = vadd.f32 %v10219, %v10633
    %v10635 = vpop.f32.mrf.mxu0
    %v10636 = vadd.f32 %v10221, %v10635
    %10637 = vdwg.mxu0
    %10638 = vmatpush.bf16.msra.mxu0 %v10521
    %10639 = vmatpush.bf16.msra.mxu0 %v10519
    %10640 = vmatpush.bf16.msra.mxu0 %v10517
    %10641 = vmatpush.bf16.msra.mxu0 %v10515
    %10642 = vmatpush.bf16.msra.mxu0 %v10513
    %10643 = vmatpush.bf16.msra.mxu0 %v10511
    %10644 = vmatpush.bf16.msra.mxu0 %v10509
    %10645 = vmatpush.bf16.msra.mxu0 %v10507
    %10646 = vmatmul.bf16.gmra.mxu0 %v9778
    %v10647 = vpop.f32.mrf.mxu0
    %v10648 = vadd.f32 %v10629, %v10647
    %v10649 = vpop.f32.mrf.mxu0
    %v10650 = vadd.f32 %v10631, %v10649
    %10651 = vmatmul.bf16.gmra.mxu0 %v9782
    %v10652 = vpop.f32.mrf.mxu0
    %v10653 = vadd.f32 %v10634, %v10652
    %v10654 = vpop.f32.mrf.mxu0
    %v10655 = vadd.f32 %v10636, %v10654
    %10656 = vdwg.mxu0
    %10657 = vmatpush.bf16.msra.mxu0 %v10537
    %10658 = vmatpush.bf16.msra.mxu0 %v10535
    %10659 = vmatpush.bf16.msra.mxu0 %v10533
    %10660 = vmatpush.bf16.msra.mxu0 %v10531
    %10661 = vmatpush.bf16.msra.mxu0 %v10529
    %10662 = vmatpush.bf16.msra.mxu0 %v10527
    %10663 = vmatpush.bf16.msra.mxu0 %v10525
    %10664 = vmatpush.bf16.msra.mxu0 %v10523
    %10665 = vmatmul.bf16.gmra.mxu0 %v9779
    %v10666 = vpop.f32.mrf.mxu0
    %v10667 = vadd.f32 %v10648, %v10666
    %v10668 = vpop.f32.mrf.mxu0
    %v10669 = vadd.f32 %v10650, %v10668
    %10670 = vmatmul.bf16.gmra.mxu0 %v9783
    %v10671 = vpop.f32.mrf.mxu0
    %v10672 = vadd.f32 %v10653, %v10671
    %v10673 = vpop.f32.mrf.mxu0
    %v10674 = vadd.f32 %v10655, %v10673
    %10675 = vdwg.mxu0
    %10676 = vmatpush.bf16.msra.mxu0 %v10553
    %10677 = vmatpush.bf16.msra.mxu0 %v10551
    %10678 = vmatpush.bf16.msra.mxu0 %v10549
    %10679 = vmatpush.bf16.msra.mxu0 %v10547
    %10680 = vmatpush.bf16.msra.mxu0 %v10545
    %10681 = vmatpush.bf16.msra.mxu0 %v10543
    %10682 = vmatpush.bf16.msra.mxu0 %v10541
    %10683 = vmatpush.bf16.msra.mxu0 %v10539
    %10684 = vmatmul.bf16.gmra.mxu0 %v9780
    %v10685 = vpop.f32.mrf.mxu0
    %v10686 = vadd.f32 %v10667, %v10685
    %v10687 = vpop.f32.mrf.mxu0
    %v10688 = vadd.f32 %v10669, %v10687
    %10689 = vmatmul.bf16.gmra.mxu0 %v9784
    %v10690 = vpop.f32.mrf.mxu0
    %v10691 = vadd.f32 %v10672, %v10690
    %v10692 = vpop.f32.mrf.mxu0
    %v10693 = vadd.f32 %v10674, %v10692
    %10694 = vdwg.mxu0
    %10695 = vmatpush.bf16.msra.mxu0 %v10506
    %10696 = vmatpush.bf16.msra.mxu0 %v10504
    %10697 = vmatpush.bf16.msra.mxu0 %v10502
    %10698 = vmatpush.bf16.msra.mxu0 %v10500
    %10699 = vmatpush.bf16.msra.mxu0 %v10498
    %10700 = vmatpush.bf16.msra.mxu0 %v10496
    %10701 = vmatpush.bf16.msra.mxu0 %v10494
    %10702 = vmatpush.bf16.msra.mxu0 %v10492
    %10703 = vmatmul.bf16.gmra.mxu0 %v9777
    %v10704 = vpop.f32.mrf.mxu0
    %v10705 = vadd.f32 %v10290, %v10704
    %v10706 = vpop.f32.mrf.mxu0
    %v10707 = vadd.f32 %v10292, %v10706
    %10708 = vmatmul.bf16.gmra.mxu0 %v9781
    %v10709 = vpop.f32.mrf.mxu0
    %v10710 = vadd.f32 %v10295, %v10709
    %v10711 = vpop.f32.mrf.mxu0
    %v10712 = vadd.f32 %v10297, %v10711
    %10713 = vdwg.mxu0
    %10714 = vmatpush.bf16.msra.mxu0 %v10522
    %10715 = vmatpush.bf16.msra.mxu0 %v10520
    %10716 = vmatpush.bf16.msra.mxu0 %v10518
    %10717 = vmatpush.bf16.msra.mxu0 %v10516
    %10718 = vmatpush.bf16.msra.mxu0 %v10514
    %10719 = vmatpush.bf16.msra.mxu0 %v10512
    %10720 = vmatpush.bf16.msra.mxu0 %v10510
    %10721 = vmatpush.bf16.msra.mxu0 %v10508
    %10722 = vmatmul.bf16.gmra.mxu0 %v9778
    %v10723 = vpop.f32.mrf.mxu0
    %v10724 = vadd.f32 %v10705, %v10723
    %v10725 = vpop.f32.mrf.mxu0
    %v10726 = vadd.f32 %v10707, %v10725
    %10727 = vmatmul.bf16.gmra.mxu0 %v9782
    %v10728 = vpop.f32.mrf.mxu0
    %v10729 = vadd.f32 %v10710, %v10728
    %v10730 = vpop.f32.mrf.mxu0
    %v10731 = vadd.f32 %v10712, %v10730
    %10732 = vdwg.mxu0
    %10733 = vmatpush.bf16.msra.mxu0 %v10538
    %10734 = vmatpush.bf16.msra.mxu0 %v10536
    %10735 = vmatpush.bf16.msra.mxu0 %v10534
    %10736 = vmatpush.bf16.msra.mxu0 %v10532
    %10737 = vmatpush.bf16.msra.mxu0 %v10530
    %10738 = vmatpush.bf16.msra.mxu0 %v10528
    %10739 = vmatpush.bf16.msra.mxu0 %v10526
    %10740 = vmatpush.bf16.msra.mxu0 %v10524
    %10741 = vmatmul.bf16.gmra.mxu0 %v9779
    %v10742 = vpop.f32.mrf.mxu0
    %v10743 = vadd.f32 %v10724, %v10742
    %v10744 = vpop.f32.mrf.mxu0
    %v10745 = vadd.f32 %v10726, %v10744
    %10746 = vmatmul.bf16.gmra.mxu0 %v9783
    %v10747 = vpop.f32.mrf.mxu0
    %v10748 = vadd.f32 %v10729, %v10747
    %v10749 = vpop.f32.mrf.mxu0
    %v10750 = vadd.f32 %v10731, %v10749
    %10751 = vdwg.mxu0
    %10752 = vmatpush.bf16.msra.mxu0 %v10554
    %10753 = vmatpush.bf16.msra.mxu0 %v10552
    %10754 = vmatpush.bf16.msra.mxu0 %v10550
    %10755 = vmatpush.bf16.msra.mxu0 %v10548
    %10756 = vmatpush.bf16.msra.mxu0 %v10546
    %10757 = vmatpush.bf16.msra.mxu0 %v10544
    %10758 = vmatpush.bf16.msra.mxu0 %v10542
    %10759 = vmatpush.bf16.msra.mxu0 %v10540
    %10760 = vmatmul.bf16.gmra.mxu0 %v9780
    %v10761 = vpop.f32.mrf.mxu0
    %v10762 = vadd.f32 %v10743, %v10761
    %v10763 = vpop.f32.mrf.mxu0
    %v10764 = vadd.f32 %v10745, %v10763
    %10765 = vmatmul.bf16.gmra.mxu0 %v9784
    %v10766 = vpop.f32.mrf.mxu0
    %v10767 = vadd.f32 %v10748, %v10766
    %v10768 = vpop.f32.mrf.mxu0
    %v10769 = vadd.f32 %v10750, %v10768
    %10770 = vdwg.mxu0
    %v10835 = vunpack.c.l.b16 %v982
    %v10836 = vunpack.c.h.b16 %v982
    %v10837 = vunpack.c.l.b16 %v983
    %v10838 = vunpack.c.h.b16 %v983
    %v10839 = vunpack.c.l.b16 %v984
    %v10840 = vunpack.c.h.b16 %v984
    %v10841 = vunpack.c.l.b16 %v985
    %v10842 = vunpack.c.h.b16 %v985
    %v10843 = vunpack.c.l.b16 %v986
    %v10844 = vunpack.c.h.b16 %v986
    %v10845 = vunpack.c.l.b16 %v987
    %v10846 = vunpack.c.h.b16 %v987
    %v10847 = vunpack.c.l.b16 %v988
    %v10848 = vunpack.c.h.b16 %v988
    %v10849 = vunpack.c.l.b16 %v989
    %v10850 = vunpack.c.h.b16 %v989
    %v10851 = vunpack.c.l.b16 %v990
    %v10852 = vunpack.c.h.b16 %v990
    %v10853 = vunpack.c.l.b16 %v991
    %v10854 = vunpack.c.h.b16 %v991
    %v10855 = vunpack.c.l.b16 %v992
    %v10856 = vunpack.c.h.b16 %v992
    %v10857 = vunpack.c.l.b16 %v993
    %v10858 = vunpack.c.h.b16 %v993
    %v10859 = vunpack.c.l.b16 %v994
    %v10860 = vunpack.c.h.b16 %v994
    %v10861 = vunpack.c.l.b16 %v995
    %v10862 = vunpack.c.h.b16 %v995
    %v10863 = vunpack.c.l.b16 %v996
    %v10864 = vunpack.c.h.b16 %v996
    %v10865 = vunpack.c.l.b16 %v997
    %v10866 = vunpack.c.h.b16 %v997
    %v10867 = vunpack.c.l.b16 %v998
    %v10868 = vunpack.c.h.b16 %v998
    %v10869 = vunpack.c.l.b16 %v999
    %v10870 = vunpack.c.h.b16 %v999
    %v10871 = vunpack.c.l.b16 %v1000
    %v10872 = vunpack.c.h.b16 %v1000
    %v10873 = vunpack.c.l.b16 %v1001
    %v10874 = vunpack.c.h.b16 %v1001
    %v10875 = vunpack.c.l.b16 %v1002
    %v10876 = vunpack.c.h.b16 %v1002
    %v10877 = vunpack.c.l.b16 %v1003
    %v10878 = vunpack.c.h.b16 %v1003
    %v10879 = vunpack.c.l.b16 %v1004
    %v10880 = vunpack.c.h.b16 %v1004
    %v10881 = vunpack.c.l.b16 %v1005
    %v10882 = vunpack.c.h.b16 %v1005
    %v10883 = vunpack.c.l.b16 %v1006
    %v10884 = vunpack.c.h.b16 %v1006
    %v10885 = vunpack.c.l.b16 %v1007
    %v10886 = vunpack.c.h.b16 %v1007
    %v10887 = vunpack.c.l.b16 %v1008
    %v10888 = vunpack.c.h.b16 %v1008
    %v10889 = vunpack.c.l.b16 %v1009
    %v10890 = vunpack.c.h.b16 %v1009
    %v10891 = vunpack.c.l.b16 %v1010
    %v10892 = vunpack.c.h.b16 %v1010
    %v10893 = vunpack.c.l.b16 %v1011
    %v10894 = vunpack.c.h.b16 %v1011
    %v10895 = vunpack.c.l.b16 %v1012
    %v10896 = vunpack.c.h.b16 %v1012
    %v10897 = vunpack.c.l.b16 %v1013
    %v10898 = vunpack.c.h.b16 %v1013
    %v10899 = vunpack.c.l.b16 %v1014
    %v10900 = vunpack.c.h.b16 %v1014
    %v10901 = vunpack.c.l.b16 %v1015
    %v10902 = vunpack.c.h.b16 %v1015
    %v10903 = vunpack.c.l.b16 %v1016
    %v10904 = vunpack.c.h.b16 %v1016
    %v10905 = vunpack.c.l.b16 %v1017
    %v10906 = vunpack.c.h.b16 %v1017
    %v10907 = vunpack.c.l.b16 %v1018
    %v10908 = vunpack.c.h.b16 %v1018
    %v10909 = vunpack.c.l.b16 %v1019
    %v10910 = vunpack.c.h.b16 %v1019
    %v10911 = vunpack.c.l.b16 %v1020
    %v10912 = vunpack.c.h.b16 %v1020
    %v10913 = vunpack.c.l.b16 %v1021
    %v10914 = vunpack.c.h.b16 %v1021
    %v10915 = vunpack.c.l.b16 %v1022
    %v10916 = vunpack.c.h.b16 %v1022
    %v10917 = vunpack.c.l.b16 %v1023
    %v10918 = vunpack.c.h.b16 %v1023
    %v10919 = vunpack.c.l.b16 %v1024
    %v10920 = vunpack.c.h.b16 %v1024
    %v10921 = vunpack.c.l.b16 %v1025
    %v10922 = vunpack.c.h.b16 %v1025
    %v10923 = vunpack.c.l.b16 %v1026
    %v10924 = vunpack.c.h.b16 %v1026
    %v10925 = vunpack.c.l.b16 %v1027
    %v10926 = vunpack.c.h.b16 %v1027
    %v10927 = vunpack.c.l.b16 %v1028
    %v10928 = vunpack.c.h.b16 %v1028
    %v10929 = vunpack.c.l.b16 %v1029
    %v10930 = vunpack.c.h.b16 %v1029
    %v10931 = vunpack.c.l.b16 %v1030
    %v10932 = vunpack.c.h.b16 %v1030
    %v10933 = vunpack.c.l.b16 %v1031
    %v10934 = vunpack.c.h.b16 %v1031
    %v10935 = vunpack.c.l.b16 %v1032
    %v10936 = vunpack.c.h.b16 %v1032
    %v10937 = vunpack.c.l.b16 %v1033
    %v10938 = vunpack.c.h.b16 %v1033
    %v10939 = vunpack.c.l.b16 %v1034
    %v10940 = vunpack.c.h.b16 %v1034
    %v10941 = vunpack.c.l.b16 %v1035
    %v10942 = vunpack.c.h.b16 %v1035
    %v10943 = vunpack.c.l.b16 %v1036
    %v10944 = vunpack.c.h.b16 %v1036
    %v10945 = vunpack.c.l.b16 %v1037
    %v10946 = vunpack.c.h.b16 %v1037
    %v10947 = vunpack.c.l.b16 %v1038
    %v10948 = vunpack.c.h.b16 %v1038
    %v10949 = vunpack.c.l.b16 %v1039
    %v10950 = vunpack.c.h.b16 %v1039
    %v10951 = vunpack.c.l.b16 %v1040
    %v10952 = vunpack.c.h.b16 %v1040
    %v10953 = vunpack.c.l.b16 %v1041
    %v10954 = vunpack.c.h.b16 %v1041
    %v10955 = vunpack.c.l.b16 %v1042
    %v10956 = vunpack.c.h.b16 %v1042
    %v10957 = vunpack.c.l.b16 %v1043
    %v10958 = vunpack.c.h.b16 %v1043
    %v10959 = vunpack.c.l.b16 %v1044
    %v10960 = vunpack.c.h.b16 %v1044
    %v10961 = vunpack.c.l.b16 %v1045
    %v10962 = vunpack.c.h.b16 %v1045
    %v10963 = vpack.c.b16 %v10837, %v10835
    %v10964 = vpack.c.b16 %v10838, %v10836
    %v10965 = vpack.c.b16 %v10841, %v10839
    %v10966 = vpack.c.b16 %v10842, %v10840
    %v10967 = vpack.c.b16 %v10845, %v10843
    %v10968 = vpack.c.b16 %v10846, %v10844
    %v10969 = vpack.c.b16 %v10849, %v10847
    %v10970 = vpack.c.b16 %v10850, %v10848
    %v10971 = vpack.c.b16 %v10853, %v10851
    %v10972 = vpack.c.b16 %v10854, %v10852
    %v10973 = vpack.c.b16 %v10857, %v10855
    %v10974 = vpack.c.b16 %v10858, %v10856
    %v10975 = vpack.c.b16 %v10861, %v10859
    %v10976 = vpack.c.b16 %v10862, %v10860
    %v10977 = vpack.c.b16 %v10865, %v10863
    %v10978 = vpack.c.b16 %v10866, %v10864
    %v10979 = vpack.c.b16 %v10869, %v10867
    %v10980 = vpack.c.b16 %v10870, %v10868
    %v10981 = vpack.c.b16 %v10873, %v10871
    %v10982 = vpack.c.b16 %v10874, %v10872
    %v10983 = vpack.c.b16 %v10877, %v10875
    %v10984 = vpack.c.b16 %v10878, %v10876
    %v10985 = vpack.c.b16 %v10881, %v10879
    %v10986 = vpack.c.b16 %v10882, %v10880
    %v10987 = vpack.c.b16 %v10885, %v10883
    %v10988 = vpack.c.b16 %v10886, %v10884
    %v10989 = vpack.c.b16 %v10889, %v10887
    %v10990 = vpack.c.b16 %v10890, %v10888
    %v10991 = vpack.c.b16 %v10893, %v10891
    %v10992 = vpack.c.b16 %v10894, %v10892
    %v10993 = vpack.c.b16 %v10897, %v10895
    %v10994 = vpack.c.b16 %v10898, %v10896
    %v10995 = vpack.c.b16 %v10901, %v10899
    %v10996 = vpack.c.b16 %v10902, %v10900
    %v10997 = vpack.c.b16 %v10905, %v10903
    %v10998 = vpack.c.b16 %v10906, %v10904
    %v10999 = vpack.c.b16 %v10909, %v10907
    %v11000 = vpack.c.b16 %v10910, %v10908
    %v11001 = vpack.c.b16 %v10913, %v10911
    %v11002 = vpack.c.b16 %v10914, %v10912
    %v11003 = vpack.c.b16 %v10917, %v10915
    %v11004 = vpack.c.b16 %v10918, %v10916
    %v11005 = vpack.c.b16 %v10921, %v10919
    %v11006 = vpack.c.b16 %v10922, %v10920
    %v11007 = vpack.c.b16 %v10925, %v10923
    %v11008 = vpack.c.b16 %v10926, %v10924
    %v11009 = vpack.c.b16 %v10929, %v10927
    %v11010 = vpack.c.b16 %v10930, %v10928
    %v11011 = vpack.c.b16 %v10933, %v10931
    %v11012 = vpack.c.b16 %v10934, %v10932
    %v11013 = vpack.c.b16 %v10937, %v10935
    %v11014 = vpack.c.b16 %v10938, %v10936
    %v11015 = vpack.c.b16 %v10941, %v10939
    %v11016 = vpack.c.b16 %v10942, %v10940
    %v11017 = vpack.c.b16 %v10945, %v10943
    %v11018 = vpack.c.b16 %v10946, %v10944
    %v11019 = vpack.c.b16 %v10949, %v10947
    %v11020 = vpack.c.b16 %v10950, %v10948
    %v11021 = vpack.c.b16 %v10953, %v10951
    %v11022 = vpack.c.b16 %v10954, %v10952
    %v11023 = vpack.c.b16 %v10957, %v10955
    %v11024 = vpack.c.b16 %v10958, %v10956
    %v11025 = vpack.c.b16 %v10961, %v10959
    %v11026 = vpack.c.b16 %v10962, %v10960
    %11091 = vmatpush.bf16.msra.mxu0 %v10977
    %11092 = vmatpush.bf16.msra.mxu0 %v10975
    %11093 = vmatpush.bf16.msra.mxu0 %v10973
    %11094 = vmatpush.bf16.msra.mxu0 %v10971
    %11095 = vmatpush.bf16.msra.mxu0 %v10969
    %11096 = vmatpush.bf16.msra.mxu0 %v10967
    %11097 = vmatpush.bf16.msra.mxu0 %v10965
    %11098 = vmatpush.bf16.msra.mxu0 %v10963
    %11099 = vmatmul.bf16.gmra.mxu0 %v9817
    %v11100 = vpop.f32.mrf.mxu0
    %v11101 = vadd.f32 0.0, %v11100
    %v11102 = vpop.f32.mrf.mxu0
    %v11103 = vadd.f32 0.0, %v11102
    %11104 = vmatmul.bf16.gmra.mxu0 %v9821
    %v11105 = vpop.f32.mrf.mxu0
    %v11106 = vadd.f32 0.0, %v11105
    %v11107 = vpop.f32.mrf.mxu0
    %11108 = vdwg.mxu0
    %11109 = vmatpush.bf16.msra.mxu0 %v10993
    %11110 = vmatpush.bf16.msra.mxu0 %v10991
    %11111 = vmatpush.bf16.msra.mxu0 %v10989
    %11112 = vmatpush.bf16.msra.mxu0 %v10987
    %11113 = vmatpush.bf16.msra.mxu0 %v10985
    %11114 = vmatpush.bf16.msra.mxu0 %v10983
    %11115 = vmatpush.bf16.msra.mxu0 %v10981
    %11116 = vmatpush.bf16.msra.mxu0 %v10979
    %11117 = vmatmul.bf16.gmra.mxu0 %v9818
    %v11118 = vpop.f32.mrf.mxu0
    %v11119 = vadd.f32 %v11101, %v11118
    %v11120 = vpop.f32.mrf.mxu0
    %v11121 = vadd.f32 %v11103, %v11120
    %11122 = vmatmul.bf16.gmra.mxu0 %v9822
    %v11123 = vpop.f32.mrf.mxu0
    %v11124 = vadd.f32 %v11106, %v11123
    %v11125 = vpop.f32.mrf.mxu0
    %11126 = vdwg.mxu0
    %11127 = vmatpush.bf16.msra.mxu0 %v11009
    %11128 = vmatpush.bf16.msra.mxu0 %v11007
    %11129 = vmatpush.bf16.msra.mxu0 %v11005
    %11130 = vmatpush.bf16.msra.mxu0 %v11003
    %11131 = vmatpush.bf16.msra.mxu0 %v11001
    %11132 = vmatpush.bf16.msra.mxu0 %v10999
    %11133 = vmatpush.bf16.msra.mxu0 %v10997
    %11134 = vmatpush.bf16.msra.mxu0 %v10995
    %11135 = vmatmul.bf16.gmra.mxu0 %v9819
    %v11136 = vpop.f32.mrf.mxu0
    %v11137 = vadd.f32 %v11119, %v11136
    %v11138 = vpop.f32.mrf.mxu0
    %v11139 = vadd.f32 %v11121, %v11138
    %11140 = vmatmul.bf16.gmra.mxu0 %v9823
    %v11141 = vpop.f32.mrf.mxu0
    %v11142 = vadd.f32 %v11124, %v11141
    %v11143 = vpop.f32.mrf.mxu0
    %11144 = vdwg.mxu0
    %11145 = vmatpush.bf16.msra.mxu0 %v11025
    %11146 = vmatpush.bf16.msra.mxu0 %v11023
    %11147 = vmatpush.bf16.msra.mxu0 %v11021
    %11148 = vmatpush.bf16.msra.mxu0 %v11019
    %11149 = vmatpush.bf16.msra.mxu0 %v11017
    %11150 = vmatpush.bf16.msra.mxu0 %v11015
    %11151 = vmatpush.bf16.msra.mxu0 %v11013
    %11152 = vmatpush.bf16.msra.mxu0 %v11011
    %11153 = vmatmul.bf16.gmra.mxu0 %v9820
    %v11154 = vpop.f32.mrf.mxu0
    %v11155 = vadd.f32 %v11137, %v11154
    %v11156 = vpop.f32.mrf.mxu0
    %v11157 = vadd.f32 %v11139, %v11156
    %11158 = vmatmul.bf16.gmra.mxu0 %v9824
    %v11159 = vpop.f32.mrf.mxu0
    %v11160 = vadd.f32 %v11142, %v11159
    %v11161 = vpop.f32.mrf.mxu0
    %11162 = vdwg.mxu0
    %11163 = vmatpush.bf16.msra.mxu0 %v10978
    %11164 = vmatpush.bf16.msra.mxu0 %v10976
    %11165 = vmatpush.bf16.msra.mxu0 %v10974
    %11166 = vmatpush.bf16.msra.mxu0 %v10972
    %11167 = vmatpush.bf16.msra.mxu0 %v10970
    %11168 = vmatpush.bf16.msra.mxu0 %v10968
    %11169 = vmatpush.bf16.msra.mxu0 %v10966
    %11170 = vmatpush.bf16.msra.mxu0 %v10964
    %11171 = vmatmul.bf16.gmra.mxu0 %v9817
    %v11172 = vpop.f32.mrf.mxu0
    %v11173 = vadd.f32 0.0, %v11172
    %v11174 = vpop.f32.mrf.mxu0
    %v11175 = vadd.f32 0.0, %v11174
    %11176 = vmatmul.bf16.gmra.mxu0 %v9821
    %v11177 = vpop.f32.mrf.mxu0
    %v11178 = vadd.f32 0.0, %v11177
    %v11179 = vpop.f32.mrf.mxu0
    %11180 = vdwg.mxu0
    %11181 = vmatpush.bf16.msra.mxu0 %v10994
    %11182 = vmatpush.bf16.msra.mxu0 %v10992
    %11183 = vmatpush.bf16.msra.mxu0 %v10990
    %11184 = vmatpush.bf16.msra.mxu0 %v10988
    %11185 = vmatpush.bf16.msra.mxu0 %v10986
    %11186 = vmatpush.bf16.msra.mxu0 %v10984
    %11187 = vmatpush.bf16.msra.mxu0 %v10982
    %11188 = vmatpush.bf16.msra.mxu0 %v10980
    %11189 = vmatmul.bf16.gmra.mxu0 %v9818
    %v11190 = vpop.f32.mrf.mxu0
    %v11191 = vadd.f32 %v11173, %v11190
    %v11192 = vpop.f32.mrf.mxu0
    %v11193 = vadd.f32 %v11175, %v11192
    %11194 = vmatmul.bf16.gmra.mxu0 %v9822
    %v11195 = vpop.f32.mrf.mxu0
    %v11196 = vadd.f32 %v11178, %v11195
    %v11197 = vpop.f32.mrf.mxu0
    %11198 = vdwg.mxu0
    %11199 = vmatpush.bf16.msra.mxu0 %v11010
    %11200 = vmatpush.bf16.msra.mxu0 %v11008
    %11201 = vmatpush.bf16.msra.mxu0 %v11006
    %11202 = vmatpush.bf16.msra.mxu0 %v11004
    %11203 = vmatpush.bf16.msra.mxu0 %v11002
    %11204 = vmatpush.bf16.msra.mxu0 %v11000
    %11205 = vmatpush.bf16.msra.mxu0 %v10998
    %11206 = vmatpush.bf16.msra.mxu0 %v10996
    %11207 = vmatmul.bf16.gmra.mxu0 %v9819
    %v11208 = vpop.f32.mrf.mxu0
    %v11209 = vadd.f32 %v11191, %v11208
    %v11210 = vpop.f32.mrf.mxu0
    %v11211 = vadd.f32 %v11193, %v11210
    %11212 = vmatmul.bf16.gmra.mxu0 %v9823
    %v11213 = vpop.f32.mrf.mxu0
    %v11214 = vadd.f32 %v11196, %v11213
    %v11215 = vpop.f32.mrf.mxu0
    %11216 = vdwg.mxu0
    %11217 = vmatpush.bf16.msra.mxu0 %v11026
    %11218 = vmatpush.bf16.msra.mxu0 %v11024
    %11219 = vmatpush.bf16.msra.mxu0 %v11022
    %11220 = vmatpush.bf16.msra.mxu0 %v11020
    %11221 = vmatpush.bf16.msra.mxu0 %v11018
    %11222 = vmatpush.bf16.msra.mxu0 %v11016
    %11223 = vmatpush.bf16.msra.mxu0 %v11014
    %11224 = vmatpush.bf16.msra.mxu0 %v11012
    %11225 = vmatmul.bf16.gmra.mxu0 %v9820
    %v11226 = vpop.f32.mrf.mxu0
    %v11227 = vadd.f32 %v11209, %v11226
    %v11228 = vpop.f32.mrf.mxu0
    %v11229 = vadd.f32 %v11211, %v11228
    %11230 = vmatmul.bf16.gmra.mxu0 %v9824
    %v11231 = vpop.f32.mrf.mxu0
    %v11232 = vadd.f32 %v11214, %v11231
    %v11233 = vpop.f32.mrf.mxu0
    %11234 = vdwg.mxu0
    %v11235 = vadd.f32 %v10686, 0.0
    %v11236 = vadd.f32 %v10762, 0.0
    %v11237 = vadd.f32 %v10688, %v11155
    %v11238 = vadd.f32 %v10764, %v11227
    %v11239 = vadd.f32 %v10691, %v11157
    %v11240 = vadd.f32 %v10767, %v11229
    %v11241 = vadd.f32 %v10693, %v11160
    %v11242 = vadd.f32 %v10769, %v11232
    %v11244 = vperm.slane %v9826, 0
    %v11245 = vperm.slane %v9826, 1
    %v11248 = vadd.f32 %v11235, %v11244
    %v11249 = vadd.f32 %v11236, %v11245
    %v11250 = vadd.f32 %v11237, %v11244
    %v11251 = vadd.f32 %v11238, %v11245
    %v11252 = vadd.f32 %v11239, %v11244
    %v11253 = vadd.f32 %v11240, %v11245
    %v11254 = vadd.f32 %v11241, %v11244
    %v11255 = vadd.f32 %v11242, %v11245
    %v11256 = vmax.f32 %v11248, 0.0
    %v11257 = vmax.f32 %v11249, 0.0
    %v11258 = vmax.f32 %v11250, 0.0
    %v11259 = vmax.f32 %v11251, 0.0
    %v11260 = vmax.f32 %v11252, 0.0
    %v11261 = vmax.f32 %v11253, 0.0
    %v11262 = vmax.f32 %v11254, 0.0
    %v11263 = vmax.f32 %v11255, 0.0
    %v11264 = vld [vmem:[%s7 + $0x200] sm:$0xff]
    %v11265 = vld [vmem:[%s7 + $0x208] sm:$0xff]
    %v11266 = vld [vmem:[%s7 + $0x210] sm:$0xff]
    %v11267 = vld [vmem:[%s7 + $0x218] sm:$0xff]
    %v11268 = vld [vmem:[%s7 + $0x220] sm:$0xff]
    %v11269 = vld [vmem:[%s7 + $0x228] sm:$0xff]
    %v11270 = vld [vmem:[%s7 + $0x230] sm:$0xff]
    %v11271 = vld [vmem:[%s7 + $0x238] sm:$0xff]
    %v11272 = vld [vmem:[%s7 + $0x240] sm:$0xff]
    %v11273 = vld [vmem:[%s7 + $0x248] sm:$0xff]
    %v11274 = vld [vmem:[%s7 + $0x250] sm:$0xff]
    %v11275 = vld [vmem:[%s7 + $0x258] sm:$0xff]
    %v11276 = vld [vmem:[%s7 + $0x260] sm:$0xff]
    %v11277 = vld [vmem:[%s7 + $0x268] sm:$0xff]
    %v11278 = vld [vmem:[%s7 + $0x270] sm:$0xff]
    %v11279 = vld [vmem:[%s7 + $0x278] sm:$0xff]
    %v11280 = vld [vmem:[%s7 + $0x280] sm:$0xff]
    %v11281 = vld [vmem:[%s7 + $0x288] sm:$0xff]
    %v11282 = vld [vmem:[%s7 + $0x290] sm:$0xff]
    %v11283 = vld [vmem:[%s7 + $0x298] sm:$0xff]
    %v11284 = vld [vmem:[%s7 + $0x2a0] sm:$0xff]
    %v11285 = vld [vmem:[%s7 + $0x2a8] sm:$0xff]
    %v11286 = vld [vmem:[%s7 + $0x2b0] sm:$0xff]
    %v11287 = vld [vmem:[%s7 + $0x2b8] sm:$0xff]
    %v11288 = vld [vmem:[%s7 + $0x2c0] sm:$0xff]
    %v11289 = vld [vmem:[%s7 + $0x2c8] sm:$0xff]
    %v11290 = vld [vmem:[%s7 + $0x2d0] sm:$0xff]
    %v11291 = vld [vmem:[%s7 + $0x2d8] sm:$0xff]
    %v11292 = vld [vmem:[%s7 + $0x2e0] sm:$0xff]
    %v11293 = vld [vmem:[%s7 + $0x2e8] sm:$0xff]
    %v11294 = vld [vmem:[%s7 + $0x2f0] sm:$0xff]
    %v11295 = vld [vmem:[%s7 + $0x2f8] sm:$0xff]
    %v11296 = vld [vmem:[#allocation10 + $0x100] sm:$0xff]
    %v11297 = vld [vmem:[#allocation10 + $0x108] sm:$0xff]
    %v11298 = vld [vmem:[#allocation10 + $0x120] sm:$0xff]
    %v11299 = vld [vmem:[#allocation10 + $0x128] sm:$0xff]
    %v11300 = vld [vmem:[#allocation10 + $0x140] sm:$0xff]
    %v11301 = vld [vmem:[#allocation10 + $0x148] sm:$0xff]
    %v11302 = vld [vmem:[#allocation10 + $0x160] sm:$0xff]
    %v11303 = vld [vmem:[#allocation10 + $0x168] sm:$0xff]
    %v11304 = vld [vmem:[#allocation10 + $0x180] sm:$0xff]
    %v11305 = vld [vmem:[#allocation10 + $0x188] sm:$0xff]
    %v11306 = vld [vmem:[#allocation10 + $0x1a0] sm:$0xff]
    %v11307 = vld [vmem:[#allocation10 + $0x1a8] sm:$0xff]
    %v11308 = vld [vmem:[#allocation10 + $0x1c0] sm:$0xff]
    %v11309 = vld [vmem:[#allocation10 + $0x1c8] sm:$0xff]
    %v11310 = vld [vmem:[#allocation10 + $0x1e0] sm:$0xff]
    %v11311 = vld [vmem:[#allocation10 + $0x1e8] sm:$0xff]
    %v11312 = vld [vmem:[#allocation12 + $0x4] ss:$0 sm:$0xff]
    %v11313 = vld [vmem:[#allocation12 + $0x5] ss:$0 sm:$0xff]
    %v11314 = vmul.f32 %v11256, %v9159
    %v11315 = vmul.f32 %v11257, %v9159
    %v11316 = vmul.f32 %v11258, %v9164
    %v11317 = vmul.f32 %v11259, %v9164
    %v11318 = vmul.f32 %v11260, %v9169
    %v11319 = vmul.f32 %v11261, %v9169
    %v11320 = vmul.f32 %v11262, %v9174
    %v11321 = vmul.f32 %v11263, %v9174
    %v11322 = vadd.f32 %v11314, %v11316
    %v11323 = vadd.f32 %v11322, %v11318
    %v11324 = vadd.f32 %v11323, %v11320
    %v11325 = vrot.slane %v11324, 4
    %v11326 = vadd.f32 %v11324, %v11325
    %v11327 = vrot.slane %v11326, 2
    %v11328 = vadd.f32 %v11326, %v11327
    %v11329 = vrot.slane %v11328, 1
    %v11330 = vadd.f32 %v11328, %v11329
    %v11331 = vadd.f32 %v11315, %v11317
    %v11332 = vadd.f32 %v11331, %v11319
    %v11333 = vadd.f32 %v11332, %v11321
    %v11334 = vrot.slane %v11333, 4
    %v11335 = vadd.f32 %v11333, %v11334
    %v11336 = vrot.slane %v11335, 2
    %v11337 = vadd.f32 %v11335, %v11336
    %v11338 = vrot.slane %v11337, 1
    %v11339 = vadd.f32 %v11337, %v11338
    %v11340 = vmul.f32 %v11314, %v11314
    %v11341 = vmul.f32 %v11315, %v11315
    %v11342 = vmul.f32 %v11316, %v11316
    %v11343 = vmul.f32 %v11317, %v11317
    %v11344 = vmul.f32 %v11318, %v11318
    %v11345 = vmul.f32 %v11319, %v11319
    %v11346 = vmul.f32 %v11320, %v11320
    %v11347 = vmul.f32 %v11321, %v11321
    %v11348 = vadd.f32 %v11340, %v11342
    %v11349 = vadd.f32 %v11348, %v11344
    %v11350 = vadd.f32 %v11349, %v11346
    %v11351 = vrot.slane %v11350, 4
    %v11352 = vadd.f32 %v11350, %v11351
    %v11353 = vrot.slane %v11352, 2
    %v11354 = vadd.f32 %v11352, %v11353
    %v11355 = vrot.slane %v11354, 1
    %v11356 = vadd.f32 %v11354, %v11355
    %v11357 = vadd.f32 %v11341, %v11343
    %v11358 = vadd.f32 %v11357, %v11345
    %v11359 = vadd.f32 %v11358, %v11347
    %v11360 = vrot.slane %v11359, 4
    %v11361 = vadd.f32 %v11359, %v11360
    %v11362 = vrot.slane %v11361, 2
    %v11363 = vadd.f32 %v11361, %v11362
    %v11364 = vrot.slane %v11363, 1
    %v11365 = vadd.f32 %v11363, %v11364
    %11366 = vmatpush.msra.mxu0 %v11279
    %11367 = vmatpush.msra.mxu0 %v11278
    %11368 = vmatpush.msra.mxu0 %v11277
    %11369 = vmatpush.msra.mxu0 %v11276
    %11370 = vmatpush.msra.mxu0 %v11275
    %11371 = vmatpush.msra.mxu0 %v11274
    %11372 = vmatpush.msra.mxu0 %v11273
    %11373 = vmatpush.msra.mxu0 %v11272
    %11374 = vmatpush.msra.mxu0 %v11271
    %11375 = vmatpush.msra.mxu0 %v11270
    %11376 = vmatpush.msra.mxu0 %v11269
    %11377 = vmatpush.msra.mxu0 %v11268
    %11378 = vmatpush.msra.mxu0 %v11267
    %11379 = vmatpush.msra.mxu0 %v11266
    %11380 = vmatpush.msra.mxu0 %v11265
    %11381 = vmatpush.msra.mxu0 %v11264
    %11382 = vmatmul.f32.gmra.mxu0 %v11330
    %v11383 = vpop.f32.mrf.mxu0
    %v11384 = vadd.f32 0.0, %v11383
    %11385 = vdwg.mxu0
    %11386 = vmatpush.msra.mxu0 %v11295
    %11387 = vmatpush.msra.mxu0 %v11294
    %11388 = vmatpush.msra.mxu0 %v11293
    %11389 = vmatpush.msra.mxu0 %v11292
    %11390 = vmatpush.msra.mxu0 %v11291
    %11391 = vmatpush.msra.mxu0 %v11290
    %11392 = vmatpush.msra.mxu0 %v11289
    %11393 = vmatpush.msra.mxu0 %v11288
    %11394 = vmatpush.msra.mxu0 %v11287
    %11395 = vmatpush.msra.mxu0 %v11286
    %11396 = vmatpush.msra.mxu0 %v11285
    %11397 = vmatpush.msra.mxu0 %v11284
    %11398 = vmatpush.msra.mxu0 %v11283
    %11399 = vmatpush.msra.mxu0 %v11282
    %11400 = vmatpush.msra.mxu0 %v11281
    %11401 = vmatpush.msra.mxu0 %v11280
    %11402 = vmatmul.f32.gmra.mxu0 %v11339
    %v11403 = vpop.f32.mrf.mxu0
    %v11404 = vadd.f32 %v11384, %v11403
    %11405 = vdwg.mxu0
    %11406 = vmatpush.msra.mxu0 %v11279
    %11407 = vmatpush.msra.mxu0 %v11278
    %11408 = vmatpush.msra.mxu0 %v11277
    %11409 = vmatpush.msra.mxu0 %v11276
    %11410 = vmatpush.msra.mxu0 %v11275
    %11411 = vmatpush.msra.mxu0 %v11274
    %11412 = vmatpush.msra.mxu0 %v11273
    %11413 = vmatpush.msra.mxu0 %v11272
    %11414 = vmatpush.msra.mxu0 %v11271
    %11415 = vmatpush.msra.mxu0 %v11270
    %11416 = vmatpush.msra.mxu0 %v11269
    %11417 = vmatpush.msra.mxu0 %v11268
    %11418 = vmatpush.msra.mxu0 %v11267
    %11419 = vmatpush.msra.mxu0 %v11266
    %11420 = vmatpush.msra.mxu0 %v11265
    %11421 = vmatpush.msra.mxu0 %v11264
    %11422 = vmatmul.f32.gmra.mxu0 %v11356
    %v11423 = vpop.f32.mrf.mxu0
    %v11424 = vadd.f32 0.0, %v11423
    %11425 = vdwg.mxu0
    %11426 = vmatpush.msra.mxu0 %v11295
    %11427 = vmatpush.msra.mxu0 %v11294
    %11428 = vmatpush.msra.mxu0 %v11293
    %11429 = vmatpush.msra.mxu0 %v11292
    %11430 = vmatpush.msra.mxu0 %v11291
    %11431 = vmatpush.msra.mxu0 %v11290
    %11432 = vmatpush.msra.mxu0 %v11289
    %11433 = vmatpush.msra.mxu0 %v11288
    %11434 = vmatpush.msra.mxu0 %v11287
    %11435 = vmatpush.msra.mxu0 %v11286
    %11436 = vmatpush.msra.mxu0 %v11285
    %11437 = vmatpush.msra.mxu0 %v11284
    %11438 = vmatpush.msra.mxu0 %v11283
    %11439 = vmatpush.msra.mxu0 %v11282
    %11440 = vmatpush.msra.mxu0 %v11281
    %11441 = vmatpush.msra.mxu0 %v11280
    %11442 = vmatmul.f32.gmra.mxu0 %v11365
    %v11443 = vpop.f32.mrf.mxu0
    %v11444 = vadd.f32 %v11424, %v11443
    %11445 = vdwg.mxu0
    %v11446 = vmul.f32 %v11404, 0.03125
    %v11447 = vmul.f32 %v11444, 0.03125
    %v11448 = vmul.f32 %v11446, %v11446
    %v11449 = vsub.f32 %v11447, %v11448
    %v11450 = vadd.f32 %v11449, 1e-05
    %v11451 = vrsqrt.pop %v11450
    %v11452 = vmul.f32 %v11451, %v11450
    %v11453 = vmul.f32 %v11452, %v11451
    %v11454 = vmul.f32 0.5, %v11453
    %v11455 = vsub.f32 1.5, %v11454
    %v11456 = vmul.f32 %v11451, %v11455
    %vm11457 = vweird.f32 %v11450
    %vm11458 = vweird.f32 %v11451
    %vm11459 = vmor %vm11457, %vm11458
    %v11460 = vsel %vm11459, %v11451, %v11456
    %v11461 = vmul.f32 %v11312, %v11460
    %v11462 = vmul.f32 %v11446, %v11461
    %v11463 = vsub.f32 %v11313, %v11462
    %v11465 = vsel %vm9570, %v11461, 0
    %11467 = vmatpush.msra.mxu0 0.0
    %11468 = vmatpush.msra.mxu0 0.0
    %11469 = vmatpush.msra.mxu0 0.0
    %11470 = vmatpush.msra.mxu0 0.0
    %11471 = vmatpush.msra.mxu0 0.0
    %11472 = vmatpush.msra.mxu0 0.0
    %11473 = vmatpush.msra.mxu0 0.0
    %11474 = vmatpush.msra.mxu0 0.0
    %11475 = vmatpush.msra.mxu0 %v11310
    %11476 = vmatpush.msra.mxu0 %v11308
    %11477 = vmatpush.msra.mxu0 %v11306
    %11478 = vmatpush.msra.mxu0 %v11304
    %11479 = vmatpush.msra.mxu0 %v11302
    %11480 = vmatpush.msra.mxu0 %v11300
    %11481 = vmatpush.msra.mxu0 %v11298
    %11482 = vmatpush.msra.mxu0 %v11296
    %11483 = vmatmul.f32.gmra.mxu0 %v11465
    %v11484 = vpop.f32.mrf.mxu0
    %v11485 = vadd.f32 0.0, %v11484
    %11486 = vdwg.mxu0
    %11487 = vmatpush.msra.mxu0 0.0
    %11488 = vmatpush.msra.mxu0 0.0
    %11489 = vmatpush.msra.mxu0 0.0
    %11490 = vmatpush.msra.mxu0 0.0
    %11491 = vmatpush.msra.mxu0 0.0
    %11492 = vmatpush.msra.mxu0 0.0
    %11493 = vmatpush.msra.mxu0 0.0
    %11494 = vmatpush.msra.mxu0 0.0
    %11495 = vmatpush.msra.mxu0 %v11311
    %11496 = vmatpush.msra.mxu0 %v11309
    %11497 = vmatpush.msra.mxu0 %v11307
    %11498 = vmatpush.msra.mxu0 %v11305
    %11499 = vmatpush.msra.mxu0 %v11303
    %11500 = vmatpush.msra.mxu0 %v11301
    %11501 = vmatpush.msra.mxu0 %v11299
    %11502 = vmatpush.msra.mxu0 %v11297
    %11503 = vmatmul.f32.gmra.mxu0 %v11465
    %v11504 = vpop.f32.mrf.mxu0
    %v11505 = vadd.f32 0.0, %v11504
    %11506 = vdwg.mxu0
    %v11508 = vsel %vm9570, %v11463, 0
    %11510 = vmatpush.msra.mxu0 0.0
    %11511 = vmatpush.msra.mxu0 0.0
    %11512 = vmatpush.msra.mxu0 0.0
    %11513 = vmatpush.msra.mxu0 0.0
    %11514 = vmatpush.msra.mxu0 0.0
    %11515 = vmatpush.msra.mxu0 0.0
    %11516 = vmatpush.msra.mxu0 0.0
    %11517 = vmatpush.msra.mxu0 0.0
    %11518 = vmatpush.msra.mxu0 %v11310
    %11519 = vmatpush.msra.mxu0 %v11308
    %11520 = vmatpush.msra.mxu0 %v11306
    %11521 = vmatpush.msra.mxu0 %v11304
    %11522 = vmatpush.msra.mxu0 %v11302
    %11523 = vmatpush.msra.mxu0 %v11300
    %11524 = vmatpush.msra.mxu0 %v11298
    %11525 = vmatpush.msra.mxu0 %v11296
    %11526 = vmatmul.f32.gmra.mxu0 %v11508
    %v11527 = vpop.f32.mrf.mxu0
    %v11528 = vadd.f32 0.0, %v11527
    %11529 = vdwg.mxu0
    %11530 = vmatpush.msra.mxu0 0.0
    %11531 = vmatpush.msra.mxu0 0.0
    %11532 = vmatpush.msra.mxu0 0.0
    %11533 = vmatpush.msra.mxu0 0.0
    %11534 = vmatpush.msra.mxu0 0.0
    %11535 = vmatpush.msra.mxu0 0.0
    %11536 = vmatpush.msra.mxu0 0.0
    %11537 = vmatpush.msra.mxu0 0.0
    %11538 = vmatpush.msra.mxu0 %v11311
    %11539 = vmatpush.msra.mxu0 %v11309
    %11540 = vmatpush.msra.mxu0 %v11307
    %11541 = vmatpush.msra.mxu0 %v11305
    %11542 = vmatpush.msra.mxu0 %v11303
    %11543 = vmatpush.msra.mxu0 %v11301
    %11544 = vmatpush.msra.mxu0 %v11299
    %11545 = vmatpush.msra.mxu0 %v11297
    %11546 = vmatmul.f32.gmra.mxu0 %v11508
    %v11547 = vpop.f32.mrf.mxu0
    %v11548 = vadd.f32 0.0, %v11547
    %11549 = vdwg.mxu0
    %v11550 = vperm.slane %v11485, 0
    %v11551 = vperm.slane %v11505, 0
    %v11552 = vmul.f32 %v11256, %v11550
    %v11553 = vmul.f32 %v11257, %v11551
    %v11554 = vmul.f32 %v11258, %v11550
    %v11555 = vmul.f32 %v11259, %v11551
    %v11556 = vmul.f32 %v11260, %v11550
    %v11557 = vmul.f32 %v11261, %v11551
    %v11558 = vmul.f32 %v11262, %v11550
    %v11559 = vmul.f32 %v11263, %v11551
    %v11560 = vperm.slane %v11528, 0
    %v11561 = vperm.slane %v11548, 0
    %v11562 = vadd.f32 %v11552, %v11560
    %v11563 = vadd.f32 %v11553, %v11561
    %v11564 = vadd.f32 %v11554, %v11560
    %v11565 = vadd.f32 %v11555, %v11561
    %v11566 = vadd.f32 %v11556, %v11560
    %v11567 = vadd.f32 %v11557, %v11561
    %v11568 = vadd.f32 %v11558, %v11560
    %v11569 = vadd.f32 %v11559, %v11561
    %v11570 = vpack.c.bf16 %v11563, %v11562
    %v11571 = vpack.c.bf16 %v11565, %v11564
    %v11572 = vpack.c.bf16 %v11567, %v11566
    %v11573 = vpack.c.bf16 %v11569, %v11568
    %s11574 = scalar_lea.vmem [#allocation12], 6
    %v11575 = vld [vmem:[%s11574] ss:$8 sm:$0x3]
    %v11576 = vld [vmem:[#allocation7] sm:$0xff]
    %v11577 = vld [vmem:[#allocation7 + $0x8] sm:$0xff]
    %v11578 = vld [vmem:[#allocation7 + $0x10] sm:$0xff]
    %v11579 = vld [vmem:[#allocation7 + $0x18] sm:$0xff]
    %v11580 = vld [vmem:[#allocation7 + $0x20] sm:$0xff]
    %v11581 = vld [vmem:[#allocation7 + $0x28] sm:$0xff]
    %v11582 = vld [vmem:[#allocation7 + $0x30] sm:$0xff]
    %v11583 = vld [vmem:[#allocation7 + $0x38] sm:$0xff]
    %v11584 = vld [vmem:[#allocation7 + $0x40] sm:$0xff]
    %v11585 = vld [vmem:[#allocation7 + $0x48] sm:$0xff]
    %v11586 = vld [vmem:[#allocation7 + $0x50] sm:$0xff]
    %v11587 = vld [vmem:[#allocation7 + $0x58] sm:$0xff]
    %v11588 = vld [vmem:[#allocation7 + $0x60] sm:$0xff]
    %v11589 = vld [vmem:[#allocation7 + $0x68] sm:$0xff]
    %v11590 = vld [vmem:[#allocation7 + $0x70] sm:$0xff]
    %v11591 = vld [vmem:[#allocation7 + $0x78] sm:$0xff]
    %v11592 = vld [vmem:[#allocation7 + $0x80] sm:$0xff]
    %v11593 = vld [vmem:[#allocation7 + $0x88] sm:$0xff]
    %v11594 = vld [vmem:[#allocation7 + $0x90] sm:$0xff]
    %v11595 = vld [vmem:[#allocation7 + $0x98] sm:$0xff]
    %v11596 = vld [vmem:[#allocation7 + $0xa0] sm:$0xff]
    %v11597 = vld [vmem:[#allocation7 + $0xa8] sm:$0xff]
    %v11598 = vld [vmem:[#allocation7 + $0xb0] sm:$0xff]
    %v11599 = vld [vmem:[#allocation7 + $0xb8] sm:$0xff]
    %v11600 = vld [vmem:[#allocation7 + $0xc0] sm:$0xff]
    %v11601 = vld [vmem:[#allocation7 + $0xc8] sm:$0xff]
    %v11602 = vld [vmem:[#allocation7 + $0xd0] sm:$0xff]
    %v11603 = vld [vmem:[#allocation7 + $0xd8] sm:$0xff]
    %v11604 = vld [vmem:[#allocation7 + $0xe0] sm:$0xff]
    %v11605 = vld [vmem:[#allocation7 + $0xe8] sm:$0xff]
    %v11606 = vld [vmem:[#allocation7 + $0xf0] sm:$0xff]
    %v11607 = vld [vmem:[#allocation7 + $0xf8] sm:$0xff]
    %v11609 = vunpack.c.l.b16 %v11570
    %v11610 = vunpack.c.h.b16 %v11570
    %v11611 = vpack.c.b16 %v11609, %v11609
    %v11612 = vpack.c.b16 %v11610, %v11610
    %v11647 = vunpack.c.l.b16 %v11576
    %v11648 = vunpack.c.h.b16 %v11576
    %v11649 = vunpack.c.l.b16 %v11577
    %v11650 = vunpack.c.h.b16 %v11577
    %v11651 = vunpack.c.l.b16 %v11578
    %v11652 = vunpack.c.h.b16 %v11578
    %v11653 = vunpack.c.l.b16 %v11579
    %v11654 = vunpack.c.h.b16 %v11579
    %v11655 = vunpack.c.l.b16 %v11580
    %v11656 = vunpack.c.h.b16 %v11580
    %v11657 = vunpack.c.l.b16 %v11581
    %v11658 = vunpack.c.h.b16 %v11581
    %v11659 = vunpack.c.l.b16 %v11582
    %v11660 = vunpack.c.h.b16 %v11582
    %v11661 = vunpack.c.l.b16 %v11583
    %v11662 = vunpack.c.h.b16 %v11583
    %v11663 = vunpack.c.l.b16 %v11584
    %v11664 = vunpack.c.h.b16 %v11584
    %v11665 = vunpack.c.l.b16 %v11585
    %v11666 = vunpack.c.h.b16 %v11585
    %v11667 = vunpack.c.l.b16 %v11586
    %v11668 = vunpack.c.h.b16 %v11586
    %v11669 = vunpack.c.l.b16 %v11587
    %v11670 = vunpack.c.h.b16 %v11587
    %v11671 = vunpack.c.l.b16 %v11588
    %v11672 = vunpack.c.h.b16 %v11588
    %v11673 = vunpack.c.l.b16 %v11589
    %v11674 = vunpack.c.h.b16 %v11589
    %v11675 = vunpack.c.l.b16 %v11590
    %v11676 = vunpack.c.h.b16 %v11590
    %v11677 = vunpack.c.l.b16 %v11591
    %v11678 = vunpack.c.h.b16 %v11591
    %v11679 = vunpack.c.l.b16 %v11592
    %v11680 = vunpack.c.h.b16 %v11592
    %v11681 = vunpack.c.l.b16 %v11593
    %v11682 = vunpack.c.h.b16 %v11593
    %v11683 = vunpack.c.l.b16 %v11594
    %v11684 = vunpack.c.h.b16 %v11594
    %v11685 = vunpack.c.l.b16 %v11595
    %v11686 = vunpack.c.h.b16 %v11595
    %v11687 = vunpack.c.l.b16 %v11596
    %v11688 = vunpack.c.h.b16 %v11596
    %v11689 = vunpack.c.l.b16 %v11597
    %v11690 = vunpack.c.h.b16 %v11597
    %v11691 = vunpack.c.l.b16 %v11598
    %v11692 = vunpack.c.h.b16 %v11598
    %v11693 = vunpack.c.l.b16 %v11599
    %v11694 = vunpack.c.h.b16 %v11599
    %v11695 = vunpack.c.l.b16 %v11600
    %v11696 = vunpack.c.h.b16 %v11600
    %v11697 = vunpack.c.l.b16 %v11601
    %v11698 = vunpack.c.h.b16 %v11601
    %v11699 = vunpack.c.l.b16 %v11602
    %v11700 = vunpack.c.h.b16 %v11602
    %v11701 = vunpack.c.l.b16 %v11603
    %v11702 = vunpack.c.h.b16 %v11603
    %v11703 = vunpack.c.l.b16 %v11604
    %v11704 = vunpack.c.h.b16 %v11604
    %v11705 = vunpack.c.l.b16 %v11605
    %v11706 = vunpack.c.h.b16 %v11605
    %v11707 = vunpack.c.l.b16 %v11606
    %v11708 = vunpack.c.h.b16 %v11606
    %v11709 = vunpack.c.l.b16 %v11607
    %v11710 = vunpack.c.h.b16 %v11607
    %v11711 = vpack.c.b16 %v11649, %v11647
    %v11712 = vpack.c.b16 %v11650, %v11648
    %v11713 = vpack.c.b16 %v11653, %v11651
    %v11714 = vpack.c.b16 %v11654, %v11652
    %v11715 = vpack.c.b16 %v11657, %v11655
    %v11716 = vpack.c.b16 %v11658, %v11656
    %v11717 = vpack.c.b16 %v11661, %v11659
    %v11718 = vpack.c.b16 %v11662, %v11660
    %v11719 = vpack.c.b16 %v11665, %v11663
    %v11720 = vpack.c.b16 %v11666, %v11664
    %v11721 = vpack.c.b16 %v11669, %v11667
    %v11722 = vpack.c.b16 %v11670, %v11668
    %v11723 = vpack.c.b16 %v11673, %v11671
    %v11724 = vpack.c.b16 %v11674, %v11672
    %v11725 = vpack.c.b16 %v11677, %v11675
    %v11726 = vpack.c.b16 %v11678, %v11676
    %v11727 = vpack.c.b16 %v11681, %v11679
    %v11728 = vpack.c.b16 %v11682, %v11680
    %v11729 = vpack.c.b16 %v11685, %v11683
    %v11730 = vpack.c.b16 %v11686, %v11684
    %v11731 = vpack.c.b16 %v11689, %v11687
    %v11732 = vpack.c.b16 %v11690, %v11688
    %v11733 = vpack.c.b16 %v11693, %v11691
    %v11734 = vpack.c.b16 %v11694, %v11692
    %v11735 = vpack.c.b16 %v11697, %v11695
    %v11736 = vpack.c.b16 %v11698, %v11696
    %v11737 = vpack.c.b16 %v11701, %v11699
    %v11738 = vpack.c.b16 %v11702, %v11700
    %v11739 = vpack.c.b16 %v11705, %v11703
    %v11740 = vpack.c.b16 %v11706, %v11704
    %v11741 = vpack.c.b16 %v11709, %v11707
    %v11742 = vpack.c.b16 %v11710, %v11708
    %11775 = vmatpush.bf16.msra.mxu0 %v11725
    %11776 = vmatpush.bf16.msra.mxu0 %v11723
    %11777 = vmatpush.bf16.msra.mxu0 %v11721
    %11778 = vmatpush.bf16.msra.mxu0 %v11719
    %11779 = vmatpush.bf16.msra.mxu0 %v11717
    %11780 = vmatpush.bf16.msra.mxu0 %v11715
    %11781 = vmatpush.bf16.msra.mxu0 %v11713
    %11782 = vmatpush.bf16.msra.mxu0 %v11711
    %11783 = vmatmul.bf16.gmra.mxu0 %v11611
    %v11784 = vpop.f32.mrf.mxu0
    %v11785 = vadd.f32 0.0, %v11784
    %v11786 = vpop.f32.mrf.mxu0
    %11787 = vdwg.mxu0
    %11788 = vmatpush.bf16.msra.mxu0 %v11741
    %11789 = vmatpush.bf16.msra.mxu0 %v11739
    %11790 = vmatpush.bf16.msra.mxu0 %v11737
    %11791 = vmatpush.bf16.msra.mxu0 %v11735
    %11792 = vmatpush.bf16.msra.mxu0 %v11733
    %11793 = vmatpush.bf16.msra.mxu0 %v11731
    %11794 = vmatpush.bf16.msra.mxu0 %v11729
    %11795 = vmatpush.bf16.msra.mxu0 %v11727
    %11796 = vmatmul.bf16.gmra.mxu0 %v11612
    %v11797 = vpop.f32.mrf.mxu0
    %v11798 = vadd.f32 %v11785, %v11797
    %v11799 = vpop.f32.mrf.mxu0
    %11800 = vdwg.mxu0
    %11801 = vmatpush.bf16.msra.mxu0 %v11726
    %11802 = vmatpush.bf16.msra.mxu0 %v11724
    %11803 = vmatpush.bf16.msra.mxu0 %v11722
    %11804 = vmatpush.bf16.msra.mxu0 %v11720
    %11805 = vmatpush.bf16.msra.mxu0 %v11718
    %11806 = vmatpush.bf16.msra.mxu0 %v11716
    %11807 = vmatpush.bf16.msra.mxu0 %v11714
    %11808 = vmatpush.bf16.msra.mxu0 %v11712
    %11809 = vmatmul.bf16.gmra.mxu0 %v11611
    %v11810 = vpop.f32.mrf.mxu0
    %v11811 = vadd.f32 0.0, %v11810
    %v11812 = vpop.f32.mrf.mxu0
    %11813 = vdwg.mxu0
    %11814 = vmatpush.bf16.msra.mxu0 %v11742
    %11815 = vmatpush.bf16.msra.mxu0 %v11740
    %11816 = vmatpush.bf16.msra.mxu0 %v11738
    %11817 = vmatpush.bf16.msra.mxu0 %v11736
    %11818 = vmatpush.bf16.msra.mxu0 %v11734
    %11819 = vmatpush.bf16.msra.mxu0 %v11732
    %11820 = vmatpush.bf16.msra.mxu0 %v11730
    %11821 = vmatpush.bf16.msra.mxu0 %v11728
    %11822 = vmatmul.bf16.gmra.mxu0 %v11612
    %v11823 = vpop.f32.mrf.mxu0
    %v11824 = vadd.f32 %v11811, %v11823
    %v11825 = vpop.f32.mrf.mxu0
    %11826 = vdwg.mxu0
    %v11828 = vperm.slane %v11575, 0
    %v11829 = vperm.slane %v11575, 1
    %v11832 = vadd.f32 %v11828, %v11798
    %v11833 = vadd.f32 %v11829, %v11824
    %v11834 = vld [vmem:[#allocation7 + $0x100] sm:$0xff]
    %v11835 = vld [vmem:[#allocation7 + $0x108] sm:$0xff]
    %v11836 = vld [vmem:[#allocation7 + $0x110] sm:$0xff]
    %v11837 = vld [vmem:[#allocation7 + $0x118] sm:$0xff]
    %v11838 = vld [vmem:[#allocation7 + $0x120] sm:$0xff]
    %v11839 = vld [vmem:[#allocation7 + $0x128] sm:$0xff]
    %v11840 = vld [vmem:[#allocation7 + $0x130] sm:$0xff]
    %v11841 = vld [vmem:[#allocation7 + $0x138] sm:$0xff]
    %v11842 = vld [vmem:[#allocation7 + $0x140] sm:$0xff]
    %v11843 = vld [vmem:[#allocation7 + $0x148] sm:$0xff]
    %v11844 = vld [vmem:[#allocation7 + $0x150] sm:$0xff]
    %v11845 = vld [vmem:[#allocation7 + $0x158] sm:$0xff]
    %v11846 = vld [vmem:[#allocation7 + $0x160] sm:$0xff]
    %v11847 = vld [vmem:[#allocation7 + $0x168] sm:$0xff]
    %v11848 = vld [vmem:[#allocation7 + $0x170] sm:$0xff]
    %v11849 = vld [vmem:[#allocation7 + $0x178] sm:$0xff]
    %v11850 = vld [vmem:[#allocation7 + $0x180] sm:$0xff]
    %v11851 = vld [vmem:[#allocation7 + $0x188] sm:$0xff]
    %v11852 = vld [vmem:[#allocation7 + $0x190] sm:$0xff]
    %v11853 = vld [vmem:[#allocation7 + $0x198] sm:$0xff]
    %v11854 = vld [vmem:[#allocation7 + $0x1a0] sm:$0xff]
    %v11855 = vld [vmem:[#allocation7 + $0x1a8] sm:$0xff]
    %v11856 = vld [vmem:[#allocation7 + $0x1b0] sm:$0xff]
    %v11857 = vld [vmem:[#allocation7 + $0x1b8] sm:$0xff]
    %v11858 = vld [vmem:[#allocation7 + $0x1c0] sm:$0xff]
    %v11859 = vld [vmem:[#allocation7 + $0x1c8] sm:$0xff]
    %v11860 = vld [vmem:[#allocation7 + $0x1d0] sm:$0xff]
    %v11861 = vld [vmem:[#allocation7 + $0x1d8] sm:$0xff]
    %v11862 = vld [vmem:[#allocation7 + $0x1e0] sm:$0xff]
    %v11863 = vld [vmem:[#allocation7 + $0x1e8] sm:$0xff]
    %v11864 = vld [vmem:[#allocation7 + $0x1f0] sm:$0xff]
    %v11865 = vld [vmem:[#allocation7 + $0x1f8] sm:$0xff]
    %v11867 = vunpack.c.l.b16 %v11571
    %v11868 = vunpack.c.h.b16 %v11571
    %v11869 = vpack.c.b16 %v11867, %v11867
    %v11870 = vpack.c.b16 %v11868, %v11868
    %v11905 = vunpack.c.l.b16 %v11834
    %v11906 = vunpack.c.h.b16 %v11834
    %v11907 = vunpack.c.l.b16 %v11835
    %v11908 = vunpack.c.h.b16 %v11835
    %v11909 = vunpack.c.l.b16 %v11836
    %v11910 = vunpack.c.h.b16 %v11836
    %v11911 = vunpack.c.l.b16 %v11837
    %v11912 = vunpack.c.h.b16 %v11837
    %v11913 = vunpack.c.l.b16 %v11838
    %v11914 = vunpack.c.h.b16 %v11838
    %v11915 = vunpack.c.l.b16 %v11839
    %v11916 = vunpack.c.h.b16 %v11839
    %v11917 = vunpack.c.l.b16 %v11840
    %v11918 = vunpack.c.h.b16 %v11840
    %v11919 = vunpack.c.l.b16 %v11841
    %v11920 = vunpack.c.h.b16 %v11841
    %v11921 = vunpack.c.l.b16 %v11842
    %v11922 = vunpack.c.h.b16 %v11842
    %v11923 = vunpack.c.l.b16 %v11843
    %v11924 = vunpack.c.h.b16 %v11843
    %v11925 = vunpack.c.l.b16 %v11844
    %v11926 = vunpack.c.h.b16 %v11844
    %v11927 = vunpack.c.l.b16 %v11845
    %v11928 = vunpack.c.h.b16 %v11845
    %v11929 = vunpack.c.l.b16 %v11846
    %v11930 = vunpack.c.h.b16 %v11846
    %v11931 = vunpack.c.l.b16 %v11847
    %v11932 = vunpack.c.h.b16 %v11847
    %v11933 = vunpack.c.l.b16 %v11848
    %v11934 = vunpack.c.h.b16 %v11848
    %v11935 = vunpack.c.l.b16 %v11849
    %v11936 = vunpack.c.h.b16 %v11849
    %v11937 = vunpack.c.l.b16 %v11850
    %v11938 = vunpack.c.h.b16 %v11850
    %v11939 = vunpack.c.l.b16 %v11851
    %v11940 = vunpack.c.h.b16 %v11851
    %v11941 = vunpack.c.l.b16 %v11852
    %v11942 = vunpack.c.h.b16 %v11852
    %v11943 = vunpack.c.l.b16 %v11853
    %v11944 = vunpack.c.h.b16 %v11853
    %v11945 = vunpack.c.l.b16 %v11854
    %v11946 = vunpack.c.h.b16 %v11854
    %v11947 = vunpack.c.l.b16 %v11855
    %v11948 = vunpack.c.h.b16 %v11855
    %v11949 = vunpack.c.l.b16 %v11856
    %v11950 = vunpack.c.h.b16 %v11856
    %v11951 = vunpack.c.l.b16 %v11857
    %v11952 = vunpack.c.h.b16 %v11857
    %v11953 = vunpack.c.l.b16 %v11858
    %v11954 = vunpack.c.h.b16 %v11858
    %v11955 = vunpack.c.l.b16 %v11859
    %v11956 = vunpack.c.h.b16 %v11859
    %v11957 = vunpack.c.l.b16 %v11860
    %v11958 = vunpack.c.h.b16 %v11860
    %v11959 = vunpack.c.l.b16 %v11861
    %v11960 = vunpack.c.h.b16 %v11861
    %v11961 = vunpack.c.l.b16 %v11862
    %v11962 = vunpack.c.h.b16 %v11862
    %v11963 = vunpack.c.l.b16 %v11863
    %v11964 = vunpack.c.h.b16 %v11863
    %v11965 = vunpack.c.l.b16 %v11864
    %v11966 = vunpack.c.h.b16 %v11864
    %v11967 = vunpack.c.l.b16 %v11865
    %v11968 = vunpack.c.h.b16 %v11865
    %v11969 = vpack.c.b16 %v11907, %v11905
    %v11970 = vpack.c.b16 %v11908, %v11906
    %v11971 = vpack.c.b16 %v11911, %v11909
    %v11972 = vpack.c.b16 %v11912, %v11910
    %v11973 = vpack.c.b16 %v11915, %v11913
    %v11974 = vpack.c.b16 %v11916, %v11914
    %v11975 = vpack.c.b16 %v11919, %v11917
    %v11976 = vpack.c.b16 %v11920, %v11918
    %v11977 = vpack.c.b16 %v11923, %v11921
    %v11978 = vpack.c.b16 %v11924, %v11922
    %v11979 = vpack.c.b16 %v11927, %v11925
    %v11980 = vpack.c.b16 %v11928, %v11926
    %v11981 = vpack.c.b16 %v11931, %v11929
    %v11982 = vpack.c.b16 %v11932, %v11930
    %v11983 = vpack.c.b16 %v11935, %v11933
    %v11984 = vpack.c.b16 %v11936, %v11934
    %v11985 = vpack.c.b16 %v11939, %v11937
    %v11986 = vpack.c.b16 %v11940, %v11938
    %v11987 = vpack.c.b16 %v11943, %v11941
    %v11988 = vpack.c.b16 %v11944, %v11942
    %v11989 = vpack.c.b16 %v11947, %v11945
    %v11990 = vpack.c.b16 %v11948, %v11946
    %v11991 = vpack.c.b16 %v11951, %v11949
    %v11992 = vpack.c.b16 %v11952, %v11950
    %v11993 = vpack.c.b16 %v11955, %v11953
    %v11994 = vpack.c.b16 %v11956, %v11954
    %v11995 = vpack.c.b16 %v11959, %v11957
    %v11996 = vpack.c.b16 %v11960, %v11958
    %v11997 = vpack.c.b16 %v11963, %v11961
    %v11998 = vpack.c.b16 %v11964, %v11962
    %v11999 = vpack.c.b16 %v11967, %v11965
    %v12000 = vpack.c.b16 %v11968, %v11966
    %12033 = vmatpush.bf16.msra.mxu0 %v11983
    %12034 = vmatpush.bf16.msra.mxu0 %v11981
    %12035 = vmatpush.bf16.msra.mxu0 %v11979
    %12036 = vmatpush.bf16.msra.mxu0 %v11977
    %12037 = vmatpush.bf16.msra.mxu0 %v11975
    %12038 = vmatpush.bf16.msra.mxu0 %v11973
    %12039 = vmatpush.bf16.msra.mxu0 %v11971
    %12040 = vmatpush.bf16.msra.mxu0 %v11969
    %12041 = vmatmul.bf16.gmra.mxu0 %v11869
    %v12042 = vpop.f32.mrf.mxu0
    %v12043 = vadd.f32 0.0, %v12042
    %v12044 = vpop.f32.mrf.mxu0
    %12045 = vdwg.mxu0
    %12046 = vmatpush.bf16.msra.mxu0 %v11999
    %12047 = vmatpush.bf16.msra.mxu0 %v11997
    %12048 = vmatpush.bf16.msra.mxu0 %v11995
    %12049 = vmatpush.bf16.msra.mxu0 %v11993
    %12050 = vmatpush.bf16.msra.mxu0 %v11991
    %12051 = vmatpush.bf16.msra.mxu0 %v11989
    %12052 = vmatpush.bf16.msra.mxu0 %v11987
    %12053 = vmatpush.bf16.msra.mxu0 %v11985
    %12054 = vmatmul.bf16.gmra.mxu0 %v11870
    %v12055 = vpop.f32.mrf.mxu0
    %v12056 = vadd.f32 %v12043, %v12055
    %v12057 = vpop.f32.mrf.mxu0
    %12058 = vdwg.mxu0
    %12059 = vmatpush.bf16.msra.mxu0 %v11984
    %12060 = vmatpush.bf16.msra.mxu0 %v11982
    %12061 = vmatpush.bf16.msra.mxu0 %v11980
    %12062 = vmatpush.bf16.msra.mxu0 %v11978
    %12063 = vmatpush.bf16.msra.mxu0 %v11976
    %12064 = vmatpush.bf16.msra.mxu0 %v11974
    %12065 = vmatpush.bf16.msra.mxu0 %v11972
    %12066 = vmatpush.bf16.msra.mxu0 %v11970
    %12067 = vmatmul.bf16.gmra.mxu0 %v11869
    %v12068 = vpop.f32.mrf.mxu0
    %v12069 = vadd.f32 0.0, %v12068
    %v12070 = vpop.f32.mrf.mxu0
    %12071 = vdwg.mxu0
    %12072 = vmatpush.bf16.msra.mxu0 %v12000
    %12073 = vmatpush.bf16.msra.mxu0 %v11998
    %12074 = vmatpush.bf16.msra.mxu0 %v11996
    %12075 = vmatpush.bf16.msra.mxu0 %v11994
    %12076 = vmatpush.bf16.msra.mxu0 %v11992
    %12077 = vmatpush.bf16.msra.mxu0 %v11990
    %12078 = vmatpush.bf16.msra.mxu0 %v11988
    %12079 = vmatpush.bf16.msra.mxu0 %v11986
    %12080 = vmatmul.bf16.gmra.mxu0 %v11870
    %v12081 = vpop.f32.mrf.mxu0
    %v12082 = vadd.f32 %v12069, %v12081
    %v12083 = vpop.f32.mrf.mxu0
    %12084 = vdwg.mxu0
    %v12085 = vadd.f32 %v11832, %v12056
    %v12086 = vadd.f32 %v11833, %v12082
    %v12087 = vld [vmem:[#allocation7 + $0x200] sm:$0xff]
    %v12088 = vld [vmem:[#allocation7 + $0x208] sm:$0xff]
    %v12089 = vld [vmem:[#allocation7 + $0x210] sm:$0xff]
    %v12090 = vld [vmem:[#allocation7 + $0x218] sm:$0xff]
    %v12091 = vld [vmem:[#allocation7 + $0x220] sm:$0xff]
    %v12092 = vld [vmem:[#allocation7 + $0x228] sm:$0xff]
    %v12093 = vld [vmem:[#allocation7 + $0x230] sm:$0xff]
    %v12094 = vld [vmem:[#allocation7 + $0x238] sm:$0xff]
    %v12095 = vld [vmem:[#allocation7 + $0x240] sm:$0xff]
    %v12096 = vld [vmem:[#allocation7 + $0x248] sm:$0xff]
    %v12097 = vld [vmem:[#allocation7 + $0x250] sm:$0xff]
    %v12098 = vld [vmem:[#allocation7 + $0x258] sm:$0xff]
    %v12099 = vld [vmem:[#allocation7 + $0x260] sm:$0xff]
    %v12100 = vld [vmem:[#allocation7 + $0x268] sm:$0xff]
    %v12101 = vld [vmem:[#allocation7 + $0x270] sm:$0xff]
    %v12102 = vld [vmem:[#allocation7 + $0x278] sm:$0xff]
    %v12103 = vld [vmem:[#allocation7 + $0x280] sm:$0xff]
    %v12104 = vld [vmem:[#allocation7 + $0x288] sm:$0xff]
    %v12105 = vld [vmem:[#allocation7 + $0x290] sm:$0xff]
    %v12106 = vld [vmem:[#allocation7 + $0x298] sm:$0xff]
    %v12107 = vld [vmem:[#allocation7 + $0x2a0] sm:$0xff]
    %v12108 = vld [vmem:[#allocation7 + $0x2a8] sm:$0xff]
    %v12109 = vld [vmem:[#allocation7 + $0x2b0] sm:$0xff]
    %v12110 = vld [vmem:[#allocation7 + $0x2b8] sm:$0xff]
    %v12111 = vld [vmem:[#allocation7 + $0x2c0] sm:$0xff]
    %v12112 = vld [vmem:[#allocation7 + $0x2c8] sm:$0xff]
    %v12113 = vld [vmem:[#allocation7 + $0x2d0] sm:$0xff]
    %v12114 = vld [vmem:[#allocation7 + $0x2d8] sm:$0xff]
    %v12115 = vld [vmem:[#allocation7 + $0x2e0] sm:$0xff]
    %v12116 = vld [vmem:[#allocation7 + $0x2e8] sm:$0xff]
    %v12117 = vld [vmem:[#allocation7 + $0x2f0] sm:$0xff]
    %v12118 = vld [vmem:[#allocation7 + $0x2f8] sm:$0xff]
    %v12120 = vunpack.c.l.b16 %v11572
    %v12121 = vunpack.c.h.b16 %v11572
    %v12122 = vpack.c.b16 %v12120, %v12120
    %v12123 = vpack.c.b16 %v12121, %v12121
    %v12158 = vunpack.c.l.b16 %v12087
    %v12159 = vunpack.c.h.b16 %v12087
    %v12160 = vunpack.c.l.b16 %v12088
    %v12161 = vunpack.c.h.b16 %v12088
    %v12162 = vunpack.c.l.b16 %v12089
    %v12163 = vunpack.c.h.b16 %v12089
    %v12164 = vunpack.c.l.b16 %v12090
    %v12165 = vunpack.c.h.b16 %v12090
    %v12166 = vunpack.c.l.b16 %v12091
    %v12167 = vunpack.c.h.b16 %v12091
    %v12168 = vunpack.c.l.b16 %v12092
    %v12169 = vunpack.c.h.b16 %v12092
    %v12170 = vunpack.c.l.b16 %v12093
    %v12171 = vunpack.c.h.b16 %v12093
    %v12172 = vunpack.c.l.b16 %v12094
    %v12173 = vunpack.c.h.b16 %v12094
    %v12174 = vunpack.c.l.b16 %v12095
    %v12175 = vunpack.c.h.b16 %v12095
    %v12176 = vunpack.c.l.b16 %v12096
    %v12177 = vunpack.c.h.b16 %v12096
    %v12178 = vunpack.c.l.b16 %v12097
    %v12179 = vunpack.c.h.b16 %v12097
    %v12180 = vunpack.c.l.b16 %v12098
    %v12181 = vunpack.c.h.b16 %v12098
    %v12182 = vunpack.c.l.b16 %v12099
    %v12183 = vunpack.c.h.b16 %v12099
    %v12184 = vunpack.c.l.b16 %v12100
    %v12185 = vunpack.c.h.b16 %v12100
    %v12186 = vunpack.c.l.b16 %v12101
    %v12187 = vunpack.c.h.b16 %v12101
    %v12188 = vunpack.c.l.b16 %v12102
    %v12189 = vunpack.c.h.b16 %v12102
    %v12190 = vunpack.c.l.b16 %v12103
    %v12191 = vunpack.c.h.b16 %v12103
    %v12192 = vunpack.c.l.b16 %v12104
    %v12193 = vunpack.c.h.b16 %v12104
    %v12194 = vunpack.c.l.b16 %v12105
    %v12195 = vunpack.c.h.b16 %v12105
    %v12196 = vunpack.c.l.b16 %v12106
    %v12197 = vunpack.c.h.b16 %v12106
    %v12198 = vunpack.c.l.b16 %v12107
    %v12199 = vunpack.c.h.b16 %v12107
    %v12200 = vunpack.c.l.b16 %v12108
    %v12201 = vunpack.c.h.b16 %v12108
    %v12202 = vunpack.c.l.b16 %v12109
    %v12203 = vunpack.c.h.b16 %v12109
    %v12204 = vunpack.c.l.b16 %v12110
    %v12205 = vunpack.c.h.b16 %v12110
    %v12206 = vunpack.c.l.b16 %v12111
    %v12207 = vunpack.c.h.b16 %v12111
    %v12208 = vunpack.c.l.b16 %v12112
    %v12209 = vunpack.c.h.b16 %v12112
    %v12210 = vunpack.c.l.b16 %v12113
    %v12211 = vunpack.c.h.b16 %v12113
    %v12212 = vunpack.c.l.b16 %v12114
    %v12213 = vunpack.c.h.b16 %v12114
    %v12214 = vunpack.c.l.b16 %v12115
    %v12215 = vunpack.c.h.b16 %v12115
    %v12216 = vunpack.c.l.b16 %v12116
    %v12217 = vunpack.c.h.b16 %v12116
    %v12218 = vunpack.c.l.b16 %v12117
    %v12219 = vunpack.c.h.b16 %v12117
    %v12220 = vunpack.c.l.b16 %v12118
    %v12221 = vunpack.c.h.b16 %v12118
    %v12222 = vpack.c.b16 %v12160, %v12158
    %v12223 = vpack.c.b16 %v12161, %v12159
    %v12224 = vpack.c.b16 %v12164, %v12162
    %v12225 = vpack.c.b16 %v12165, %v12163
    %v12226 = vpack.c.b16 %v12168, %v12166
    %v12227 = vpack.c.b16 %v12169, %v12167
    %v12228 = vpack.c.b16 %v12172, %v12170
    %v12229 = vpack.c.b16 %v12173, %v12171
    %v12230 = vpack.c.b16 %v12176, %v12174
    %v12231 = vpack.c.b16 %v12177, %v12175
    %v12232 = vpack.c.b16 %v12180, %v12178
    %v12233 = vpack.c.b16 %v12181, %v12179
    %v12234 = vpack.c.b16 %v12184, %v12182
    %v12235 = vpack.c.b16 %v12185, %v12183
    %v12236 = vpack.c.b16 %v12188, %v12186
    %v12237 = vpack.c.b16 %v12189, %v12187
    %v12238 = vpack.c.b16 %v12192, %v12190
    %v12239 = vpack.c.b16 %v12193, %v12191
    %v12240 = vpack.c.b16 %v12196, %v12194
    %v12241 = vpack.c.b16 %v12197, %v12195
    %v12242 = vpack.c.b16 %v12200, %v12198
    %v12243 = vpack.c.b16 %v12201, %v12199
    %v12244 = vpack.c.b16 %v12204, %v12202
    %v12245 = vpack.c.b16 %v12205, %v12203
    %v12246 = vpack.c.b16 %v12208, %v12206
    %v12247 = vpack.c.b16 %v12209, %v12207
    %v12248 = vpack.c.b16 %v12212, %v12210
    %v12249 = vpack.c.b16 %v12213, %v12211
    %v12250 = vpack.c.b16 %v12216, %v12214
    %v12251 = vpack.c.b16 %v12217, %v12215
    %v12252 = vpack.c.b16 %v12220, %v12218
    %v12253 = vpack.c.b16 %v12221, %v12219
    %12286 = vmatpush.bf16.msra.mxu0 %v12236
    %12287 = vmatpush.bf16.msra.mxu0 %v12234
    %12288 = vmatpush.bf16.msra.mxu0 %v12232
    %12289 = vmatpush.bf16.msra.mxu0 %v12230
    %12290 = vmatpush.bf16.msra.mxu0 %v12228
    %12291 = vmatpush.bf16.msra.mxu0 %v12226
    %12292 = vmatpush.bf16.msra.mxu0 %v12224
    %12293 = vmatpush.bf16.msra.mxu0 %v12222
    %12294 = vmatmul.bf16.gmra.mxu0 %v12122
    %v12295 = vpop.f32.mrf.mxu0
    %v12296 = vadd.f32 0.0, %v12295
    %v12297 = vpop.f32.mrf.mxu0
    %12298 = vdwg.mxu0
    %12299 = vmatpush.bf16.msra.mxu0 %v12252
    %12300 = vmatpush.bf16.msra.mxu0 %v12250
    %12301 = vmatpush.bf16.msra.mxu0 %v12248
    %12302 = vmatpush.bf16.msra.mxu0 %v12246
    %12303 = vmatpush.bf16.msra.mxu0 %v12244
    %12304 = vmatpush.bf16.msra.mxu0 %v12242
    %12305 = vmatpush.bf16.msra.mxu0 %v12240
    %12306 = vmatpush.bf16.msra.mxu0 %v12238
    %12307 = vmatmul.bf16.gmra.mxu0 %v12123
    %v12308 = vpop.f32.mrf.mxu0
    %v12309 = vadd.f32 %v12296, %v12308
    %v12310 = vpop.f32.mrf.mxu0
    %12311 = vdwg.mxu0
    %12312 = vmatpush.bf16.msra.mxu0 %v12237
    %12313 = vmatpush.bf16.msra.mxu0 %v12235
    %12314 = vmatpush.bf16.msra.mxu0 %v12233
    %12315 = vmatpush.bf16.msra.mxu0 %v12231
    %12316 = vmatpush.bf16.msra.mxu0 %v12229
    %12317 = vmatpush.bf16.msra.mxu0 %v12227
    %12318 = vmatpush.bf16.msra.mxu0 %v12225
    %12319 = vmatpush.bf16.msra.mxu0 %v12223
    %12320 = vmatmul.bf16.gmra.mxu0 %v12122
    %v12321 = vpop.f32.mrf.mxu0
    %v12322 = vadd.f32 0.0, %v12321
    %v12323 = vpop.f32.mrf.mxu0
    %12324 = vdwg.mxu0
    %12325 = vmatpush.bf16.msra.mxu0 %v12253
    %12326 = vmatpush.bf16.msra.mxu0 %v12251
    %12327 = vmatpush.bf16.msra.mxu0 %v12249
    %12328 = vmatpush.bf16.msra.mxu0 %v12247
    %12329 = vmatpush.bf16.msra.mxu0 %v12245
    %12330 = vmatpush.bf16.msra.mxu0 %v12243
    %12331 = vmatpush.bf16.msra.mxu0 %v12241
    %12332 = vmatpush.bf16.msra.mxu0 %v12239
    %12333 = vmatmul.bf16.gmra.mxu0 %v12123
    %v12334 = vpop.f32.mrf.mxu0
    %v12335 = vadd.f32 %v12322, %v12334
    %v12336 = vpop.f32.mrf.mxu0
    %12337 = vdwg.mxu0
    %v12338 = vadd.f32 %v12085, %v12309
    %v12339 = vadd.f32 %v12086, %v12335
    %v12340 = vld [vmem:[#allocation7 + $0x300] sm:$0xff]
    %v12341 = vld [vmem:[#allocation7 + $0x308] sm:$0xff]
    %v12342 = vld [vmem:[#allocation7 + $0x310] sm:$0xff]
    %v12343 = vld [vmem:[#allocation7 + $0x318] sm:$0xff]
    %v12344 = vld [vmem:[#allocation7 + $0x320] sm:$0xff]
    %v12345 = vld [vmem:[#allocation7 + $0x328] sm:$0xff]
    %v12346 = vld [vmem:[#allocation7 + $0x330] sm:$0xff]
    %v12347 = vld [vmem:[#allocation7 + $0x338] sm:$0xff]
    %v12348 = vld [vmem:[#allocation7 + $0x340] sm:$0xff]
    %v12349 = vld [vmem:[#allocation7 + $0x348] sm:$0xff]
    %v12350 = vld [vmem:[#allocation7 + $0x350] sm:$0xff]
    %v12351 = vld [vmem:[#allocation7 + $0x358] sm:$0xff]
    %v12352 = vld [vmem:[#allocation7 + $0x360] sm:$0xff]
    %v12353 = vld [vmem:[#allocation7 + $0x368] sm:$0xff]
    %v12354 = vld [vmem:[#allocation7 + $0x370] sm:$0xff]
    %v12355 = vld [vmem:[#allocation7 + $0x378] sm:$0xff]
    %v12356 = vld [vmem:[#allocation7 + $0x380] sm:$0xff]
    %v12357 = vld [vmem:[#allocation7 + $0x388] sm:$0xff]
    %v12358 = vld [vmem:[#allocation7 + $0x390] sm:$0xff]
    %v12359 = vld [vmem:[#allocation7 + $0x398] sm:$0xff]
    %v12360 = vld [vmem:[#allocation7 + $0x3a0] sm:$0xff]
    %v12361 = vld [vmem:[#allocation7 + $0x3a8] sm:$0xff]
    %v12362 = vld [vmem:[#allocation7 + $0x3b0] sm:$0xff]
    %v12363 = vld [vmem:[#allocation7 + $0x3b8] sm:$0xff]
    %v12364 = vld [vmem:[#allocation7 + $0x3c0] sm:$0xff]
    %v12365 = vld [vmem:[#allocation7 + $0x3c8] sm:$0xff]
    %v12366 = vld [vmem:[#allocation7 + $0x3d0] sm:$0xff]
    %v12367 = vld [vmem:[#allocation7 + $0x3d8] sm:$0xff]
    %v12368 = vld [vmem:[#allocation7 + $0x3e0] sm:$0xff]
    %v12369 = vld [vmem:[#allocation7 + $0x3e8] sm:$0xff]
    %v12370 = vld [vmem:[#allocation7 + $0x3f0] sm:$0xff]
    %v12371 = vld [vmem:[#allocation7 + $0x3f8] sm:$0xff]
    %v12373 = vunpack.c.l.b16 %v11573
    %v12374 = vunpack.c.h.b16 %v11573
    %v12375 = vpack.c.b16 %v12373, %v12373
    %v12376 = vpack.c.b16 %v12374, %v12374
    %v12411 = vunpack.c.l.b16 %v12340
    %v12412 = vunpack.c.h.b16 %v12340
    %v12413 = vunpack.c.l.b16 %v12341
    %v12414 = vunpack.c.h.b16 %v12341
    %v12415 = vunpack.c.l.b16 %v12342
    %v12416 = vunpack.c.h.b16 %v12342
    %v12417 = vunpack.c.l.b16 %v12343
    %v12418 = vunpack.c.h.b16 %v12343
    %v12419 = vunpack.c.l.b16 %v12344
    %v12420 = vunpack.c.h.b16 %v12344
    %v12421 = vunpack.c.l.b16 %v12345
    %v12422 = vunpack.c.h.b16 %v12345
    %v12423 = vunpack.c.l.b16 %v12346
    %v12424 = vunpack.c.h.b16 %v12346
    %v12425 = vunpack.c.l.b16 %v12347
    %v12426 = vunpack.c.h.b16 %v12347
    %v12427 = vunpack.c.l.b16 %v12348
    %v12428 = vunpack.c.h.b16 %v12348
    %v12429 = vunpack.c.l.b16 %v12349
    %v12430 = vunpack.c.h.b16 %v12349
    %v12431 = vunpack.c.l.b16 %v12350
    %v12432 = vunpack.c.h.b16 %v12350
    %v12433 = vunpack.c.l.b16 %v12351
    %v12434 = vunpack.c.h.b16 %v12351
    %v12435 = vunpack.c.l.b16 %v12352
    %v12436 = vunpack.c.h.b16 %v12352
    %v12437 = vunpack.c.l.b16 %v12353
    %v12438 = vunpack.c.h.b16 %v12353
    %v12439 = vunpack.c.l.b16 %v12354
    %v12440 = vunpack.c.h.b16 %v12354
    %v12441 = vunpack.c.l.b16 %v12355
    %v12442 = vunpack.c.h.b16 %v12355
    %v12443 = vunpack.c.l.b16 %v12356
    %v12444 = vunpack.c.h.b16 %v12356
    %v12445 = vunpack.c.l.b16 %v12357
    %v12446 = vunpack.c.h.b16 %v12357
    %v12447 = vunpack.c.l.b16 %v12358
    %v12448 = vunpack.c.h.b16 %v12358
    %v12449 = vunpack.c.l.b16 %v12359
    %v12450 = vunpack.c.h.b16 %v12359
    %v12451 = vunpack.c.l.b16 %v12360
    %v12452 = vunpack.c.h.b16 %v12360
    %v12453 = vunpack.c.l.b16 %v12361
    %v12454 = vunpack.c.h.b16 %v12361
    %v12455 = vunpack.c.l.b16 %v12362
    %v12456 = vunpack.c.h.b16 %v12362
    %v12457 = vunpack.c.l.b16 %v12363
    %v12458 = vunpack.c.h.b16 %v12363
    %v12459 = vunpack.c.l.b16 %v12364
    %v12460 = vunpack.c.h.b16 %v12364
    %v12461 = vunpack.c.l.b16 %v12365
    %v12462 = vunpack.c.h.b16 %v12365
    %v12463 = vunpack.c.l.b16 %v12366
    %v12464 = vunpack.c.h.b16 %v12366
    %v12465 = vunpack.c.l.b16 %v12367
    %v12466 = vunpack.c.h.b16 %v12367
    %v12467 = vunpack.c.l.b16 %v12368
    %v12468 = vunpack.c.h.b16 %v12368
    %v12469 = vunpack.c.l.b16 %v12369
    %v12470 = vunpack.c.h.b16 %v12369
    %v12471 = vunpack.c.l.b16 %v12370
    %v12472 = vunpack.c.h.b16 %v12370
    %v12473 = vunpack.c.l.b16 %v12371
    %v12474 = vunpack.c.h.b16 %v12371
    %v12475 = vpack.c.b16 %v12413, %v12411
    %v12476 = vpack.c.b16 %v12414, %v12412
    %v12477 = vpack.c.b16 %v12417, %v12415
    %v12478 = vpack.c.b16 %v12418, %v12416
    %v12479 = vpack.c.b16 %v12421, %v12419
    %v12480 = vpack.c.b16 %v12422, %v12420
    %v12481 = vpack.c.b16 %v12425, %v12423
    %v12482 = vpack.c.b16 %v12426, %v12424
    %v12483 = vpack.c.b16 %v12429, %v12427
    %v12484 = vpack.c.b16 %v12430, %v12428
    %v12485 = vpack.c.b16 %v12433, %v12431
    %v12486 = vpack.c.b16 %v12434, %v12432
    %v12487 = vpack.c.b16 %v12437, %v12435
    %v12488 = vpack.c.b16 %v12438, %v12436
    %v12489 = vpack.c.b16 %v12441, %v12439
    %v12490 = vpack.c.b16 %v12442, %v12440
    %v12491 = vpack.c.b16 %v12445, %v12443
    %v12492 = vpack.c.b16 %v12446, %v12444
    %v12493 = vpack.c.b16 %v12449, %v12447
    %v12494 = vpack.c.b16 %v12450, %v12448
    %v12495 = vpack.c.b16 %v12453, %v12451
    %v12496 = vpack.c.b16 %v12454, %v12452
    %v12497 = vpack.c.b16 %v12457, %v12455
    %v12498 = vpack.c.b16 %v12458, %v12456
    %v12499 = vpack.c.b16 %v12461, %v12459
    %v12500 = vpack.c.b16 %v12462, %v12460
    %v12501 = vpack.c.b16 %v12465, %v12463
    %v12502 = vpack.c.b16 %v12466, %v12464
    %v12503 = vpack.c.b16 %v12469, %v12467
    %v12504 = vpack.c.b16 %v12470, %v12468
    %v12505 = vpack.c.b16 %v12473, %v12471
    %v12506 = vpack.c.b16 %v12474, %v12472
    %12539 = vmatpush.bf16.msra.mxu0 %v12489
    %12540 = vmatpush.bf16.msra.mxu0 %v12487
    %12541 = vmatpush.bf16.msra.mxu0 %v12485
    %12542 = vmatpush.bf16.msra.mxu0 %v12483
    %12543 = vmatpush.bf16.msra.mxu0 %v12481
    %12544 = vmatpush.bf16.msra.mxu0 %v12479
    %12545 = vmatpush.bf16.msra.mxu0 %v12477
    %12546 = vmatpush.bf16.msra.mxu0 %v12475
    %12547 = vmatmul.bf16.gmra.mxu0 %v12375
    %v12548 = vpop.f32.mrf.mxu0
    %v12549 = vadd.f32 0.0, %v12548
    %v12550 = vpop.f32.mrf.mxu0
    %12551 = vdwg.mxu0
    %12552 = vmatpush.bf16.msra.mxu0 %v12505
    %12553 = vmatpush.bf16.msra.mxu0 %v12503
    %12554 = vmatpush.bf16.msra.mxu0 %v12501
    %12555 = vmatpush.bf16.msra.mxu0 %v12499
    %12556 = vmatpush.bf16.msra.mxu0 %v12497
    %12557 = vmatpush.bf16.msra.mxu0 %v12495
    %12558 = vmatpush.bf16.msra.mxu0 %v12493
    %12559 = vmatpush.bf16.msra.mxu0 %v12491
    %12560 = vmatmul.bf16.gmra.mxu0 %v12376
    %v12561 = vpop.f32.mrf.mxu0
    %v12562 = vadd.f32 %v12549, %v12561
    %v12563 = vpop.f32.mrf.mxu0
    %12564 = vdwg.mxu0
    %12565 = vmatpush.bf16.msra.mxu0 %v12490
    %12566 = vmatpush.bf16.msra.mxu0 %v12488
    %12567 = vmatpush.bf16.msra.mxu0 %v12486
    %12568 = vmatpush.bf16.msra.mxu0 %v12484
    %12569 = vmatpush.bf16.msra.mxu0 %v12482
    %12570 = vmatpush.bf16.msra.mxu0 %v12480
    %12571 = vmatpush.bf16.msra.mxu0 %v12478
    %12572 = vmatpush.bf16.msra.mxu0 %v12476
    %12573 = vmatmul.bf16.gmra.mxu0 %v12375
    %v12574 = vpop.f32.mrf.mxu0
    %v12575 = vadd.f32 0.0, %v12574
    %v12576 = vpop.f32.mrf.mxu0
    %12577 = vdwg.mxu0
    %12578 = vmatpush.bf16.msra.mxu0 %v12506
    %12579 = vmatpush.bf16.msra.mxu0 %v12504
    %12580 = vmatpush.bf16.msra.mxu0 %v12502
    %12581 = vmatpush.bf16.msra.mxu0 %v12500
    %12582 = vmatpush.bf16.msra.mxu0 %v12498
    %12583 = vmatpush.bf16.msra.mxu0 %v12496
    %12584 = vmatpush.bf16.msra.mxu0 %v12494
    %12585 = vmatpush.bf16.msra.mxu0 %v12492
    %12586 = vmatmul.bf16.gmra.mxu0 %v12376
    %v12587 = vpop.f32.mrf.mxu0
    %v12588 = vadd.f32 %v12575, %v12587
    %v12589 = vpop.f32.mrf.mxu0
    %12590 = vdwg.mxu0
    %v12591 = vadd.f32 %v12338, %v12562
    %v12592 = vadd.f32 %v12339, %v12588
    %v12593 = vmax.f32 %v12591, 0.0
    %v12594 = vmax.f32 %v12592, 0.0
    %v12595 = vld [vmem:[#allocation9] sm:$0xff]
    %v12596 = vld [vmem:[#allocation9 + $0x8] sm:$0xff]
    %v12597 = vld [vmem:[#allocation9 + $0x10] sm:$0xff]
    %v12598 = vld [vmem:[#allocation9 + $0x18] sm:$0xff]
    %v12599 = vld [vmem:[#allocation9 + $0x20] sm:$0xff]
    %v12600 = vld [vmem:[#allocation9 + $0x28] sm:$0xff]
    %v12601 = vld [vmem:[#allocation9 + $0x30] sm:$0xff]
    %v12602 = vld [vmem:[#allocation9 + $0x38] sm:$0xff]
    %v12603 = vld [vmem:[#allocation9 + $0x40] sm:$0xff]
    %v12604 = vld [vmem:[#allocation9 + $0x48] sm:$0xff]
    %v12605 = vld [vmem:[#allocation9 + $0x50] sm:$0xff]
    %v12606 = vld [vmem:[#allocation9 + $0x58] sm:$0xff]
    %v12607 = vld [vmem:[#allocation9 + $0x60] sm:$0xff]
    %v12608 = vld [vmem:[#allocation9 + $0x68] sm:$0xff]
    %v12609 = vld [vmem:[#allocation9 + $0x70] sm:$0xff]
    %v12610 = vld [vmem:[#allocation9 + $0x78] sm:$0xff]
    %v12611 = vld [vmem:[#allocation9 + $0x80] sm:$0xff]
    %v12612 = vld [vmem:[#allocation9 + $0x88] sm:$0xff]
    %v12613 = vld [vmem:[#allocation9 + $0x90] sm:$0xff]
    %v12614 = vld [vmem:[#allocation9 + $0x98] sm:$0xff]
    %v12615 = vld [vmem:[#allocation9 + $0xa0] sm:$0xff]
    %v12616 = vld [vmem:[#allocation9 + $0xa8] sm:$0xff]
    %v12617 = vld [vmem:[#allocation9 + $0xb0] sm:$0xff]
    %v12618 = vld [vmem:[#allocation9 + $0xb8] sm:$0xff]
    %v12619 = vld [vmem:[#allocation9 + $0xc0] sm:$0xff]
    %v12620 = vld [vmem:[#allocation9 + $0xc8] sm:$0xff]
    %v12621 = vld [vmem:[#allocation9 + $0xd0] sm:$0xff]
    %v12622 = vld [vmem:[#allocation9 + $0xd8] sm:$0xff]
    %v12623 = vld [vmem:[#allocation9 + $0xe0] sm:$0xff]
    %v12624 = vld [vmem:[#allocation9 + $0xe8] sm:$0xff]
    %v12625 = vld [vmem:[#allocation9 + $0xf0] sm:$0xff]
    %v12626 = vld [vmem:[#allocation9 + $0xf8] sm:$0xff]
    %v12627 = vld [vmem:[#allocation12 + $0x7] ss:$0 sm:$0xff]
    %12628 = vmatpush.msra.mxu0 %v12610
    %12629 = vmatpush.msra.mxu0 %v12609
    %12630 = vmatpush.msra.mxu0 %v12608
    %12631 = vmatpush.msra.mxu0 %v12607
    %12632 = vmatpush.msra.mxu0 %v12606
    %12633 = vmatpush.msra.mxu0 %v12605
    %12634 = vmatpush.msra.mxu0 %v12604
    %12635 = vmatpush.msra.mxu0 %v12603
    %12636 = vmatpush.msra.mxu0 %v12602
    %12637 = vmatpush.msra.mxu0 %v12601
    %12638 = vmatpush.msra.mxu0 %v12600
    %12639 = vmatpush.msra.mxu0 %v12599
    %12640 = vmatpush.msra.mxu0 %v12598
    %12641 = vmatpush.msra.mxu0 %v12597
    %12642 = vmatpush.msra.mxu0 %v12596
    %12643 = vmatpush.msra.mxu0 %v12595
    %12644 = vmatmul.f32.gmra.mxu0 %v12593
    %v12645 = vpop.f32.mrf.mxu0
    %v12646 = vadd.f32 %v12627, %v12645
    %12647 = vdwg.mxu0
    %12648 = vmatpush.msra.mxu0 %v12626
    %12649 = vmatpush.msra.mxu0 %v12625
    %12650 = vmatpush.msra.mxu0 %v12624
    %12651 = vmatpush.msra.mxu0 %v12623
    %12652 = vmatpush.msra.mxu0 %v12622
    %12653 = vmatpush.msra.mxu0 %v12621
    %12654 = vmatpush.msra.mxu0 %v12620
    %12655 = vmatpush.msra.mxu0 %v12619
    %12656 = vmatpush.msra.mxu0 %v12618
    %12657 = vmatpush.msra.mxu0 %v12617
    %12658 = vmatpush.msra.mxu0 %v12616
    %12659 = vmatpush.msra.mxu0 %v12615
    %12660 = vmatpush.msra.mxu0 %v12614
    %12661 = vmatpush.msra.mxu0 %v12613
    %12662 = vmatpush.msra.mxu0 %v12612
    %12663 = vmatpush.msra.mxu0 %v12611
    %12664 = vmatmul.f32.gmra.mxu0 %v12594
    %v12665 = vpop.f32.mrf.mxu0
    %v12666 = vadd.f32 %v12646, %v12665
    %12667 = vdwg.mxu0
    %v12668 = vmax.f32 %v12666, 0.0
    %v12669 = vld [vmem:[%s6] sm:$0xff]
    %v12670 = vld [vmem:[%s6 + $0x8] sm:$0xff]
    %v12671 = vld [vmem:[%s6 + $0x10] sm:$0xff]
    %v12672 = vld [vmem:[%s6 + $0x18] sm:$0xff]
    %v12673 = vld [vmem:[%s6 + $0x20] sm:$0xff]
    %v12674 = vld [vmem:[%s6 + $0x28] sm:$0xff]
    %v12675 = vld [vmem:[%s6 + $0x30] sm:$0xff]
    %v12676 = vld [vmem:[%s6 + $0x38] sm:$0xff]
    %v12677 = vld [vmem:[%s6 + $0x40] sm:$0xff]
    %v12678 = vld [vmem:[%s6 + $0x48] sm:$0xff]
    %v12679 = vld [vmem:[%s6 + $0x50] sm:$0xff]
    %v12680 = vld [vmem:[%s6 + $0x58] sm:$0xff]
    %v12681 = vld [vmem:[%s6 + $0x60] sm:$0xff]
    %v12682 = vld [vmem:[%s6 + $0x68] sm:$0xff]
    %v12683 = vld [vmem:[%s6 + $0x70] sm:$0xff]
    %v12684 = vld [vmem:[%s6 + $0x78] sm:$0xff]
    %v12685 = vld [vmem:[#allocation12 + $0x20] ss:$0 sm:$0xff]
    %12686 = vmatpush.msra.mxu0 %v12684
    %12687 = vmatpush.msra.mxu0 %v12683
    %12688 = vmatpush.msra.mxu0 %v12682
    %12689 = vmatpush.msra.mxu0 %v12681
    %12690 = vmatpush.msra.mxu0 %v12680
    %12691 = vmatpush.msra.mxu0 %v12679
    %12692 = vmatpush.msra.mxu0 %v12678
    %12693 = vmatpush.msra.mxu0 %v12677
    %12694 = vmatpush.msra.mxu0 %v12676
    %12695 = vmatpush.msra.mxu0 %v12675
    %12696 = vmatpush.msra.mxu0 %v12674
    %12697 = vmatpush.msra.mxu0 %v12673
    %12698 = vmatpush.msra.mxu0 %v12672
    %12699 = vmatpush.msra.mxu0 %v12671
    %12700 = vmatpush.msra.mxu0 %v12670
    %12701 = vmatpush.msra.mxu0 %v12669
    %12702 = vmatmul.f32.gmra.mxu0 %v12668
    %v12703 = vpop.f32.mrf.mxu0
    %v12704 = vadd.f32 %v12685, %v12703
    %12705 = vdwg.mxu0
    %v12706 = vmax.f32 %v12704, 0.0
    %12707 = vst.msk [vmem:[%s10] sm:$0xff] %vm9570, %v12706
    // Predicated region
    $region70: #{global_features.1} parent=1 // pred_check
      _
    $region71: #{global_features.1} parent=1 // pred_check_branch
      %12709 = sbr.rel (0) target = $region73
    $region72: #{global_features.1} parent=1 // pred_region
      _
    $region73: #{global_features.1} parent=1 // pred_fallthru
      _
    // Predicated region
    $region74: #{global_features.1} parent=1 // pred_check
      _
    $region75: #{global_features.1} parent=1 // pred_check_branch
      %12711 = sbr.rel (0) target = $region77
    $region76: #{global_features.1} parent=1 // pred_region
      _
    $region77: #{global_features.1} parent=1 // pred_fallthru
      _
    %12712 = vsyncpa [#allocation3], 1
    %12713 = vsyncpa [#allocation5], 1
    %12714 = vsyncpa [#allocation8], 1
    %12715 = vsyncpa [#allocation11], 1

</llo_original>
